<compile_context>
chip_gen: v5e
topology: v5e:2x2
jax: 0.10.0
libtpu: 0.0.40
codegen_flags: <defaults>
</compile_context>

<pallas_src>
import jax
import jax.numpy as jnp
from jax.experimental import pallas as pl
from jax.experimental.pallas import tpu as pltpu

BN_EPS = 1e-5


# ----------------------------- Pallas kernels ------------------------------

def _conv_block_kernel(x_ref, w_ref, b_ref, o_ref):
    """Fused Conv3x3(pad=1) + folded-BN + SiLU + 2x2 max-pool for one batch block.

    x_ref: (bb, H+2, W+2, Cin)  bf16, spatially zero-padded input tile
    w_ref: (9, Cin, Cout)       bf16, BN scale already folded in
    b_ref: (1, Cout)            f32,  conv bias + BN shift folded
    o_ref: (bb, Ho, Wo, Cout)   bf16
    """
    bb, hp, wp, cin = x_ref.shape
    H, W = hp - 2, wp - 2
    Ho, Wo = H // 2, W // 2
    cout = o_ref.shape[-1]

    # In-kernel im2col: 9 shifted taps, each covering every output position
    # (all 4 pool phases fused into the same matmul rows). bf16 x bf16 -> f32.
    acc = jnp.zeros((bb * H * W, cout), jnp.float32)
    for k in range(9):
        ky, kx = divmod(k, 3)
        tap = x_ref[:, ky:ky + H, kx:kx + W, :].reshape(bb * H * W, cin)
        acc = acc + jnp.dot(tap, w_ref[k], preferred_element_type=jnp.float32)

    y = acc + b_ref[...]                       # folded conv-bias + BN affine
    y = y * (1.0 / (1.0 + jnp.exp(-y)))        # SiLU (f32, EUP exp + VPU)

    # 2x2 max-pool. Rows are (b, h, w) row-major.
    y = jnp.max(y.reshape(bb * H * Wo, 2, cout), axis=1)    # horizontal pairs
    y = y.reshape(bb * H, Wo, cout)
    y = jnp.max(y.reshape(bb * Ho, 2, Wo, cout), axis=1)    # vertical pairs
    o_ref[...] = y.reshape(bb, Ho, Wo, cout).astype(o_ref.dtype)


def _classifier_kernel(x_ref, w1_ref, b1_ref, w2_ref, b2_ref, o_ref):
    """Fused Linear -> SiLU -> Linear -> sigmoid (dropout = identity)."""
    h = jnp.dot(x_ref[...], w1_ref[...],
                preferred_element_type=jnp.float32) + b1_ref[...]
    h = h * (1.0 / (1.0 + jnp.exp(-h)))                      # SiLU in f32
    z = jnp.dot(h.astype(w2_ref.dtype), w2_ref[...],
                preferred_element_type=jnp.float32) + b2_ref[...]
    o_ref[...] = 1.0 / (1.0 + jnp.exp(-z))                   # sigmoid in f32


# ------------------------------- wrappers ----------------------------------

def _conv_block(x_nhwc, w9, bias, *, target_rows=256):
    """One conv block: (B,H,W,Cin) bf16 -> (B,H/2,W/2,Cout) bf16."""
    B, H, W, Cin = x_nhwc.shape
    Cout = w9.shape[-1]
    Ho, Wo = H // 2, W // 2

    # Conv2d padding=1 halo (cheap, ~1x input bytes; no im2col in HBM).
    xp = jnp.pad(x_nhwc, ((0, 0), (1, 1), (1, 1), (0, 0)))

    # Batch-block size: aim for ~target_rows matmul rows per grid step, keep
    # the grid exact (B % bb == 0). Per-step VMEM stays tiny (<< 32 MiB).
    bb = max(1, min(B, target_rows // (H * W)))
    while B % bb:
        bb -= 1

    return pl.pallas_call(
        _conv_block_kernel,
        out_shape=jax.ShapeDtypeStruct((B, Ho, Wo, Cout), jnp.bfloat16),
        grid=(B // bb,),
        in_specs=[
            pl.BlockSpec((bb, H + 2, W + 2, Cin), lambda i: (i, 0, 0, 0)),
            pl.BlockSpec((9, Cin, Cout), lambda i: (0, 0, 0)),
            pl.BlockSpec((1, Cout), lambda i: (0, 0)),
        ],
        out_specs=pl.BlockSpec((bb, Ho, Wo, Cout), lambda i: (i, 0, 0, 0)),
        compiler_params=pltpu.CompilerParams(
            dimension_semantics=("parallel",),          # shard across TCs (v7x)
            vmem_limit_bytes=32 * 1024 * 1024),
    )(xp, w9, bias)


def _classifier(flat_bf16, w1, b1, w2, b2):
    """(B, d_in) bf16 -> probabilities (B,). Tiny head: single VMEM block."""
    B = flat_bf16.shape[0]
    out = pl.pallas_call(
        _classifier_kernel,
        out_shape=jax.ShapeDtypeStruct((B, 1), jnp.float32),
        in_specs=[pl.BlockSpec(memory_space=pltpu.MemorySpace.VMEM)] * 5,
        out_specs=pl.BlockSpec(memory_space=pltpu.MemorySpace.VMEM),
    )(flat_bf16, w1, b1, w2, b2)
    return out[:, 0]


def prepare_params(params, *, input_size):
    """One-time weight prep (trace-time, outside the per-step path):
    fold BN scale/shift into conv weights/bias, fold the NCHW-flatten
    permutation + transposes into the FC weights, cast matmul operands to bf16.
    """
    fs = input_size // 8
    p = {}
    for i in range(3):
        w = params[f"conv{i}_w"]                       # (Cout, Cin, 3, 3)
        cout, cin = w.shape[0], w.shape[1]
        scale = params[f"bn{i}_g"] / jnp.sqrt(params[f"bn{i}_v"] + BN_EPS)
        wf = w * scale[:, None, None, None]            # fold BN scale
        # (Cout,Cin,ky,kx) -> (ky,kx,Cin,Cout) -> (9,Cin,Cout)
        p[f"conv{i}_w"] = (jnp.transpose(wf, (2, 3, 1, 0))
                           .reshape(9, cin, cout).astype(jnp.bfloat16))
        p[f"conv{i}_b"] = (params[f"bn{i}_b"]
                           + (params[f"conv{i}_b"] - params[f"bn{i}_m"]) * scale
                           ).reshape(1, cout).astype(jnp.float32)

    C = 128
    hidden = params["fc1_w"].shape[0]
    # PyTorch fc1 columns are ordered (c, h, w); permute once so the kernel can
    # consume the NHWC flatten directly (no runtime transpose of activations).
    w1 = params["fc1_w"].reshape(hidden, C, fs, fs)
    w1 = w1.transpose(0, 2, 3, 1).reshape(hidden, fs * fs * C)
    p["fc1_w"] = w1.T.astype(jnp.bfloat16)                      # (d_in, hidden)
    p["fc1_b"] = params["fc1_b"].reshape(1, hidden).astype(jnp.float32)
    p["fc2_w"] = params["fc2_w"].T.astype(jnp.bfloat16)         # (hidden, 1)
    p["fc2_b"] = params["fc2_b"].reshape(1, 1).astype(jnp.float32)
    return p


def bird_cnn_forward(prepped, x_nchw):
    x = jnp.transpose(x_nchw, (0, 2, 3, 1)).astype(jnp.bfloat16)   # NCHW -> NHWC
    for i in range(3):
        x = _conv_block(x, prepped[f"conv{i}_w"], prepped[f"conv{i}_b"])
    B = x.shape[0]
    flat = x.reshape(B, -1)   # NHWC flatten; fc1 columns pre-permuted to match
    # TODO(synk): Dropout(0.1/0.3) is identity at inference; train-mode RNG not implemented.
    return _classifier(flat, prepped["fc1_w"], prepped["fc1_b"],
                       prepped["fc2_w"], prepped["fc2_b"])


# ------------------------- params / reference ------------------------------

def init_params(key, input_channels=3, input_size=16):
    assert input_size % 8 == 0
    final = input_size // 8
    chans = [(input_channels, 32), (32, 64), (64, 128)]
    keys = iter(jax.random.split(key, 32))
    p = {}
    for i, (cin, cout) in enumerate(chans):
        p[f"conv{i}_w"] = 0.1 * jax.random.normal(next(keys), (cout, cin, 3, 3),
                                                  jnp.float32)
        p[f"conv{i}_b"] = 0.05 * jax.random.normal(next(keys), (cout,),
                                                   jnp.float32)
        p[f"bn{i}_g"] = 1.0 + 0.1 * jax.random.normal(next(keys), (cout,),
                                                      jnp.float32)
        p[f"bn{i}_b"] = 0.05 * jax.random.normal(next(keys), (cout,),
                                                 jnp.float32)
        p[f"bn{i}_m"] = 0.05 * jax.random.normal(next(keys), (cout,),
                                                 jnp.float32)
        p[f"bn{i}_v"] = 1.0 + 0.1 * jnp.abs(
            jax.random.normal(next(keys), (cout,), jnp.float32))
    d_in = 128 * final * final
    p["fc1_w"] = 0.05 * jax.random.normal(next(keys), (256, d_in), jnp.float32)
    p["fc1_b"] = 0.05 * jax.random.normal(next(keys), (256,), jnp.float32)
    p["fc2_w"] = 0.05 * jax.random.normal(next(keys), (1, 256), jnp.float32)
    p["fc2_b"] = 0.05 * jax.random.normal(next(keys), (1,), jnp.float32)
    return p


def reference_forward(params, x_nchw):
    """Plain-JAX/XLA f32 reference (inference semantics) for verification."""
    x = x_nchw.astype(jnp.float32)
    for i in range(3):
        w = params[f"conv{i}_w"]
        x = jax.lax.conv_general_dilated(
            x, w, (1, 1), ((1, 1), (1, 1)),
            dimension_numbers=("NCHW", "OIHW", "NCHW"))
        x = x + params[f"conv{i}_b"][None, :, None, None]
        g, bt = params[f"bn{i}_g"], params[f"bn{i}_b"]
        m, v = params[f"bn{i}_m"], params[f"bn{i}_v"]
        x = (x - m[None, :, None, None]) / jnp.sqrt(
            v[None, :, None, None] + BN_EPS) * g[None, :, None, None] \
            + bt[None, :, None, None]
        x = x * jax.nn.sigmoid(x)
        x = jax.lax.reduce_window(x, -jnp.inf, jax.lax.max,
                                  (1, 1, 2, 2), (1, 1, 2, 2), "VALID")
    B = x.shape[0]
    flat = x.reshape(B, -1)
    h = flat @ params["fc1_w"].T + params["fc1_b"]
    h = h * jax.nn.sigmoid(h)
    z = h @ params["fc2_w"].T + params["fc2_b"]
    return jax.nn.sigmoid(z)[:, 0]


if __name__ == "__main__":
    key = jax.random.PRNGKey(0)
    k_param, k_x = jax.random.split(key)

    INPUT_SIZE = 16          # divisible by 8 (small version of the 40px model)
    BATCH = 2
    params = init_params(k_param, input_channels=3, input_size=INPUT_SIZE)
    x = jax.random.normal(k_x, (BATCH, 3, INPUT_SIZE, INPUT_SIZE), jnp.float32)

    prepped = prepare_params(params, input_size=INPUT_SIZE)
    fwd = jax.jit(bird_cnn_forward)
    out = jax.block_until_ready(fwd(prepped, x))
    ref = jax.block_until_ready(reference_forward(params, x))

    assert out.shape == (BATCH,), out.shape
    # Kernel uses bf16 matmul operands / activations (f32 accumulation), so
    # compare against the f32 reference at a bf16-level tolerance.
    assert jnp.allclose(out, ref, rtol=2e-2, atol=2e-2), (out, ref)
    print("KERNEL_OK")
</pallas_src>

<mosaic_0001>
module attributes {stable_mosaic.version = 11 : i64} {
  func.func @_conv_block_kernel(%arg0: i32, %arg1: memref<1x18x18x3xbf16, #tpu.memory_space<vmem>>, %arg2: memref<9x3x32xbf16, #tpu.memory_space<vmem>>, %arg3: memref<1x32xf32, #tpu.memory_space<vmem>>, %arg4: memref<1x8x8x32xbf16, #tpu.memory_space<vmem>>) attributes {dimension_semantics = [#tpu.dimension_semantics<parallel>], iteration_bounds = array<i64: 2>, scalar_prefetch = 0 : i64, scratch_operands = 0 : i64, tpu.core_type = #tpu.core_type<tc>, window_params = [{transform_indices = @transform_0, window_bounds = array<i64: 1, 18, 18, 3>}, {pipeline_mode = #tpu.pipeline_mode<synchronous>, transform_indices = @transform_1, window_bounds = array<i64: 9, 3, 32>}, {pipeline_mode = #tpu.pipeline_mode<synchronous>, transform_indices = @transform_2, window_bounds = array<i64: 1, 32>}, {transform_indices = @transform_3, window_bounds = array<i64: 1, 8, 8, 32>}]} {
    %cst = arith.constant 0.000000e+00 : f32
    %0 = vector.broadcast %cst : f32 to vector<256x32xf32>
    %c0 = arith.constant 0 : index
    %c0_0 = arith.constant 0 : index
    %c0_1 = arith.constant 0 : index
    %c0_2 = arith.constant 0 : index
    %1 = vector.load %arg1[%c0, %c0_0, %c0_1, %c0_2] : memref<1x18x18x3xbf16, #tpu.memory_space<vmem>>, vector<1x16x16x3xbf16>
    %2 = vector.shape_cast %1 : vector<1x16x16x3xbf16> to vector<256x3xbf16>
    %c0_3 = arith.constant 0 : index
    %c0_4 = arith.constant 0 : index
    %c0_5 = arith.constant 0 : index
    %3 = vector.load %arg2[%c0_3, %c0_4, %c0_5] : memref<9x3x32xbf16, #tpu.memory_space<vmem>>, vector<1x3x32xbf16>
    %4 = vector.shape_cast %3 : vector<1x3x32xbf16> to vector<3x32xbf16>
    %cst_6 = arith.constant dense<0.000000e+00> : vector<256x32xf32>
    %5 = tpu.matmul %2, %4, %cst_6 {dimension_numbers = #tpu.dot_dimension_numbers<[1], [0], [0], [1], [0, 0, 1, 1], [], []>} : vector<256x3xbf16>, vector<3x32xbf16>, vector<256x32xf32> -> vector<256x32xf32>
    %6 = arith.addf %0, %5 : vector<256x32xf32>
    %c0_7 = arith.constant 0 : index
    %c0_8 = arith.constant 0 : index
    %c1 = arith.constant 1 : index
    %c0_9 = arith.constant 0 : index
    %7 = vector.load %arg1[%c0_7, %c0_8, %c1, %c0_9] : memref<1x18x18x3xbf16, #tpu.memory_space<vmem>>, vector<1x16x16x3xbf16>
    %8 = vector.shape_cast %7 : vector<1x16x16x3xbf16> to vector<256x3xbf16>
    %c1_10 = arith.constant 1 : index
    %c0_11 = arith.constant 0 : index
    %c0_12 = arith.constant 0 : index
    %9 = vector.load %arg2[%c1_10, %c0_11, %c0_12] : memref<9x3x32xbf16, #tpu.memory_space<vmem>>, vector<1x3x32xbf16>
    %10 = vector.shape_cast %9 : vector<1x3x32xbf16> to vector<3x32xbf16>
    %cst_13 = arith.constant dense<0.000000e+00> : vector<256x32xf32>
    %11 = tpu.matmul %8, %10, %cst_13 {dimension_numbers = #tpu.dot_dimension_numbers<[1], [0], [0], [1], [0, 0, 1, 1], [], []>} : vector<256x3xbf16>, vector<3x32xbf16>, vector<256x32xf32> -> vector<256x32xf32>
    %12 = arith.addf %6, %11 : vector<256x32xf32>
    %c0_14 = arith.constant 0 : index
    %c0_15 = arith.constant 0 : index
    %c2 = arith.constant 2 : index
    %c0_16 = arith.constant 0 : index
    %13 = vector.load %arg1[%c0_14, %c0_15, %c2, %c0_16] : memref<1x18x18x3xbf16, #tpu.memory_space<vmem>>, vector<1x16x16x3xbf16>
    %14 = vector.shape_cast %13 : vector<1x16x16x3xbf16> to vector<256x3xbf16>
    %c2_17 = arith.constant 2 : index
    %c0_18 = arith.constant 0 : index
    %c0_19 = arith.constant 0 : index
    %15 = vector.load %arg2[%c2_17, %c0_18, %c0_19] : memref<9x3x32xbf16, #tpu.memory_space<vmem>>, vector<1x3x32xbf16>
    %16 = vector.shape_cast %15 : vector<1x3x32xbf16> to vector<3x32xbf16>
    %cst_20 = arith.constant dense<0.000000e+00> : vector<256x32xf32>
    %17 = tpu.matmul %14, %16, %cst_20 {dimension_numbers = #tpu.dot_dimension_numbers<[1], [0], [0], [1], [0, 0, 1, 1], [], []>} : vector<256x3xbf16>, vector<3x32xbf16>, vector<256x32xf32> -> vector<256x32xf32>
    %18 = arith.addf %12, %17 : vector<256x32xf32>
    %c0_21 = arith.constant 0 : index
    %c1_22 = arith.constant 1 : index
    %c0_23 = arith.constant 0 : index
    %c0_24 = arith.constant 0 : index
    %19 = vector.load %arg1[%c0_21, %c1_22, %c0_23, %c0_24] : memref<1x18x18x3xbf16, #tpu.memory_space<vmem>>, vector<1x16x16x3xbf16>
    %20 = vector.shape_cast %19 : vector<1x16x16x3xbf16> to vector<256x3xbf16>
    %c3 = arith.constant 3 : index
    %c0_25 = arith.constant 0 : index
    %c0_26 = arith.constant 0 : index
    %21 = vector.load %arg2[%c3, %c0_25, %c0_26] : memref<9x3x32xbf16, #tpu.memory_space<vmem>>, vector<1x3x32xbf16>
    %22 = vector.shape_cast %21 : vector<1x3x32xbf16> to vector<3x32xbf16>
    %cst_27 = arith.constant dense<0.000000e+00> : vector<256x32xf32>
    %23 = tpu.matmul %20, %22, %cst_27 {dimension_numbers = #tpu.dot_dimension_numbers<[1], [0], [0], [1], [0, 0, 1, 1], [], []>} : vector<256x3xbf16>, vector<3x32xbf16>, vector<256x32xf32> -> vector<256x32xf32>
    %24 = arith.addf %18, %23 : vector<256x32xf32>
    %c0_28 = arith.constant 0 : index
    %c1_29 = arith.constant 1 : index
    %c1_30 = arith.constant 1 : index
    %c0_31 = arith.constant 0 : index
    %25 = vector.load %arg1[%c0_28, %c1_29, %c1_30, %c0_31] : memref<1x18x18x3xbf16, #tpu.memory_space<vmem>>, vector<1x16x16x3xbf16>
    %26 = vector.shape_cast %25 : vector<1x16x16x3xbf16> to vector<256x3xbf16>
    %c4 = arith.constant 4 : index
    %c0_32 = arith.constant 0 : index
    %c0_33 = arith.constant 0 : index
    %27 = vector.load %arg2[%c4, %c0_32, %c0_33] : memref<9x3x32xbf16, #tpu.memory_space<vmem>>, vector<1x3x32xbf16>
    %28 = vector.shape_cast %27 : vector<1x3x32xbf16> to vector<3x32xbf16>
    %cst_34 = arith.constant dense<0.000000e+00> : vector<256x32xf32>
    %29 = tpu.matmul %26, %28, %cst_34 {dimension_numbers = #tpu.dot_dimension_numbers<[1], [0], [0], [1], [0, 0, 1, 1], [], []>} : vector<256x3xbf16>, vector<3x32xbf16>, vector<256x32xf32> -> vector<256x32xf32>
    %30 = arith.addf %24, %29 : vector<256x32xf32>
    %c0_35 = arith.constant 0 : index
    %c1_36 = arith.constant 1 : index
    %c2_37 = arith.constant 2 : index
    %c0_38 = arith.constant 0 : index
    %31 = vector.load %arg1[%c0_35, %c1_36, %c2_37, %c0_38] : memref<1x18x18x3xbf16, #tpu.memory_space<vmem>>, vector<1x16x16x3xbf16>
    %32 = vector.shape_cast %31 : vector<1x16x16x3xbf16> to vector<256x3xbf16>
    %c5 = arith.constant 5 : index
    %c0_39 = arith.constant 0 : index
    %c0_40 = arith.constant 0 : index
    %33 = vector.load %arg2[%c5, %c0_39, %c0_40] : memref<9x3x32xbf16, #tpu.memory_space<vmem>>, vector<1x3x32xbf16>
    %34 = vector.shape_cast %33 : vector<1x3x32xbf16> to vector<3x32xbf16>
    %cst_41 = arith.constant dense<0.000000e+00> : vector<256x32xf32>
    %35 = tpu.matmul %32, %34, %cst_41 {dimension_numbers = #tpu.dot_dimension_numbers<[1], [0], [0], [1], [0, 0, 1, 1], [], []>} : vector<256x3xbf16>, vector<3x32xbf16>, vector<256x32xf32> -> vector<256x32xf32>
    %36 = arith.addf %30, %35 : vector<256x32xf32>
    %c0_42 = arith.constant 0 : index
    %c2_43 = arith.constant 2 : index
    %c0_44 = arith.constant 0 : index
    %c0_45 = arith.constant 0 : index
    %37 = vector.load %arg1[%c0_42, %c2_43, %c0_44, %c0_45] : memref<1x18x18x3xbf16, #tpu.memory_space<vmem>>, vector<1x16x16x3xbf16>
    %38 = vector.shape_cast %37 : vector<1x16x16x3xbf16> to vector<256x3xbf16>
    %c6 = arith.constant 6 : index
    %c0_46 = arith.constant 0 : index
    %c0_47 = arith.constant 0 : index
    %39 = vector.load %arg2[%c6, %c0_46, %c0_47] : memref<9x3x32xbf16, #tpu.memory_space<vmem>>, vector<1x3x32xbf16>
    %40 = vector.shape_cast %39 : vector<1x3x32xbf16> to vector<3x32xbf16>
    %cst_48 = arith.constant dense<0.000000e+00> : vector<256x32xf32>
    %41 = tpu.matmul %38, %40, %cst_48 {dimension_numbers = #tpu.dot_dimension_numbers<[1], [0], [0], [1], [0, 0, 1, 1], [], []>} : vector<256x3xbf16>, vector<3x32xbf16>, vector<256x32xf32> -> vector<256x32xf32>
    %42 = arith.addf %36, %41 : vector<256x32xf32>
    %c0_49 = arith.constant 0 : index
    %c2_50 = arith.constant 2 : index
    %c1_51 = arith.constant 1 : index
    %c0_52 = arith.constant 0 : index
    %43 = vector.load %arg1[%c0_49, %c2_50, %c1_51, %c0_52] : memref<1x18x18x3xbf16, #tpu.memory_space<vmem>>, vector<1x16x16x3xbf16>
    %44 = vector.shape_cast %43 : vector<1x16x16x3xbf16> to vector<256x3xbf16>
    %c7 = arith.constant 7 : index
    %c0_53 = arith.constant 0 : index
    %c0_54 = arith.constant 0 : index
    %45 = vector.load %arg2[%c7, %c0_53, %c0_54] : memref<9x3x32xbf16, #tpu.memory_space<vmem>>, vector<1x3x32xbf16>
    %46 = vector.shape_cast %45 : vector<1x3x32xbf16> to vector<3x32xbf16>
    %cst_55 = arith.constant dense<0.000000e+00> : vector<256x32xf32>
    %47 = tpu.matmul %44, %46, %cst_55 {dimension_numbers = #tpu.dot_dimension_numbers<[1], [0], [0], [1], [0, 0, 1, 1], [], []>} : vector<256x3xbf16>, vector<3x32xbf16>, vector<256x32xf32> -> vector<256x32xf32>
    %48 = arith.addf %42, %47 : vector<256x32xf32>
    %c0_56 = arith.constant 0 : index
    %c2_57 = arith.constant 2 : index
    %c2_58 = arith.constant 2 : index
    %c0_59 = arith.constant 0 : index
    %49 = vector.load %arg1[%c0_56, %c2_57, %c2_58, %c0_59] : memref<1x18x18x3xbf16, #tpu.memory_space<vmem>>, vector<1x16x16x3xbf16>
    %50 = vector.shape_cast %49 : vector<1x16x16x3xbf16> to vector<256x3xbf16>
    %c8 = arith.constant 8 : index
    %c0_60 = arith.constant 0 : index
    %c0_61 = arith.constant 0 : index
    %51 = vector.load %arg2[%c8, %c0_60, %c0_61] : memref<9x3x32xbf16, #tpu.memory_space<vmem>>, vector<1x3x32xbf16>
    %52 = vector.shape_cast %51 : vector<1x3x32xbf16> to vector<3x32xbf16>
    %cst_62 = arith.constant dense<0.000000e+00> : vector<256x32xf32>
    %53 = tpu.matmul %50, %52, %cst_62 {dimension_numbers = #tpu.dot_dimension_numbers<[1], [0], [0], [1], [0, 0, 1, 1], [], []>} : vector<256x3xbf16>, vector<3x32xbf16>, vector<256x32xf32> -> vector<256x32xf32>
    %54 = arith.addf %48, %53 : vector<256x32xf32>
    %c0_63 = arith.constant 0 : index
    %c0_64 = arith.constant 0 : index
    %55 = vector.load %arg3[%c0_63, %c0_64] : memref<1x32xf32, #tpu.memory_space<vmem>>, vector<1x32xf32>
    %56 = vector.broadcast %55 : vector<1x32xf32> to vector<256x32xf32>
    %57 = arith.addf %54, %56 : vector<256x32xf32>
    %cst_65 = arith.constant 0.000000e+00 : f32
    %58 = vector.broadcast %cst_65 : f32 to vector<256x32xf32>
    %59 = arith.subf %58, %57 : vector<256x32xf32>
    %60 = math.exp %59 : vector<256x32xf32>
    %cst_66 = arith.constant 1.000000e+00 : f32
    %61 = vector.broadcast %cst_66 : f32 to vector<256x32xf32>
    %62 = arith.addf %61, %60 : vector<256x32xf32>
    %cst_67 = arith.constant 1.000000e+00 : f32
    %63 = vector.broadcast %cst_67 : f32 to vector<256x32xf32>
    %64 = arith.divf %63, %62 : vector<256x32xf32>
    %65 = arith.mulf %57, %64 : vector<256x32xf32>
    %66 = vector.shape_cast %65 : vector<256x32xf32> to vector<128x2x32xf32>
    %cst_68 = arith.constant dense<0xFF800000> : vector<128x32xf32>
    %67 = vector.multi_reduction <maximumf>, %66, %cst_68 [1] : vector<128x2x32xf32> to vector<128x32xf32>
    %68 = vector.shape_cast %67 : vector<128x32xf32> to vector<16x8x32xf32>
    %69 = vector.shape_cast %68 : vector<16x8x32xf32> to vector<8x2x8x32xf32>
    %cst_69 = arith.constant dense<0xFF800000> : vector<8x8x32xf32>
    %70 = vector.multi_reduction <maximumf>, %69, %cst_69 [1] : vector<8x2x8x32xf32> to vector<8x8x32xf32>
    %71 = vector.shape_cast %70 : vector<8x8x32xf32> to vector<1x8x8x32xf32>
    %72 = arith.truncf %71 : vector<1x8x8x32xf32> to vector<1x8x8x32xbf16>
    %c0_70 = arith.constant 0 : index
    %c0_71 = arith.constant 0 : index
    %c0_72 = arith.constant 0 : index
    %c0_73 = arith.constant 0 : index
    %73 = vector.load %arg4[%c0_70, %c0_71, %c0_72, %c0_73] : memref<1x8x8x32xbf16, #tpu.memory_space<vmem>>, vector<1x8x8x32xbf16>
    tpu.vector_store %arg4[%c0_70, %c0_71, %c0_72, %c0_73], %72 {strides = array<i32>} : memref<1x8x8x32xbf16, #tpu.memory_space<vmem>>, vector<1x8x8x32xbf16>,
    return
  }
  func.func @transform_0(%arg0: i32) -> (i32, i32, i32, i32) {
    %c0_i32 = arith.constant 0 : i32
    %c0_i32_0 = arith.constant 0 : i32
    %c0_i32_1 = arith.constant 0 : i32
    %c0_i32_2 = arith.constant 0 : i32
    return %arg0, %c0_i32, %c0_i32_0, %c0_i32_1 : i32, i32, i32, i32
  }
  func.func @transform_1(%arg0: i32) -> (i32, i32, i32) {
    %c0_i32 = arith.constant 0 : i32
    %c0_i32_0 = arith.constant 0 : i32
    %c0_i32_1 = arith.constant 0 : i32
    %c0_i32_2 = arith.constant 0 : i32
    return %c0_i32, %c0_i32_0, %c0_i32_1 : i32, i32, i32
  }
  func.func @transform_2(%arg0: i32) -> (i32, i32) {
    %c0_i32 = arith.constant 0 : i32
    %c0_i32_0 = arith.constant 0 : i32
    %c0_i32_1 = arith.constant 0 : i32
    return %c0_i32, %c0_i32_0 : i32, i32
  }
  func.func @transform_3(%arg0: i32) -> (i32, i32, i32, i32) {
    %c0_i32 = arith.constant 0 : i32
    %c0_i32_0 = arith.constant 0 : i32
    %c0_i32_1 = arith.constant 0 : i32
    %c0_i32_2 = arith.constant 0 : i32
    return %arg0, %c0_i32, %c0_i32_0, %c0_i32_1 : i32, i32, i32, i32
  }
}

module attributes {stable_mosaic.version = 11 : i64} {
  func.func @_conv_block_kernel(%arg0: i32, %arg1: memref<2x10x10x32xbf16, #tpu.memory_space<vmem>>, %arg2: memref<9x32x64xbf16, #tpu.memory_space<vmem>>, %arg3: memref<1x64xf32, #tpu.memory_space<vmem>>, %arg4: memref<2x4x4x64xbf16, #tpu.memory_space<vmem>>) attributes {dimension_semantics = [#tpu.dimension_semantics<parallel>], iteration_bounds = array<i64: 1>, scalar_prefetch = 0 : i64, scratch_operands = 0 : i64, tpu.core_type = #tpu.core_type<tc>, window_params = [{transform_indices = @transform_0, window_bounds = array<i64: 2, 10, 10, 32>}, {pipeline_mode = #tpu.pipeline_mode<synchronous>, transform_indices = @transform_1, window_bounds = array<i64: 9, 32, 64>}, {pipeline_mode = #tpu.pipeline_mode<synchronous>, transform_indices = @transform_2, window_bounds = array<i64: 1, 64>}, {transform_indices = @transform_3, window_bounds = array<i64: 2, 4, 4, 64>}]} {
    %cst = arith.constant 0.000000e+00 : f32
    %0 = vector.broadcast %cst : f32 to vector<128x64xf32>
    %c0 = arith.constant 0 : index
    %c0_0 = arith.constant 0 : index
    %c0_1 = arith.constant 0 : index
    %c0_2 = arith.constant 0 : index
    %1 = vector.load %arg1[%c0, %c0_0, %c0_1, %c0_2] : memref<2x10x10x32xbf16, #tpu.memory_space<vmem>>, vector<2x8x8x32xbf16>
    %2 = vector.shape_cast %1 : vector<2x8x8x32xbf16> to vector<128x32xbf16>
    %c0_3 = arith.constant 0 : index
    %c0_4 = arith.constant 0 : index
    %c0_5 = arith.constant 0 : index
    %3 = vector.load %arg2[%c0_3, %c0_4, %c0_5] : memref<9x32x64xbf16, #tpu.memory_space<vmem>>, vector<1x32x64xbf16>
    %4 = vector.shape_cast %3 : vector<1x32x64xbf16> to vector<32x64xbf16>
    %cst_6 = arith.constant dense<0.000000e+00> : vector<128x64xf32>
    %5 = tpu.matmul %2, %4, %cst_6 {dimension_numbers = #tpu.dot_dimension_numbers<[1], [0], [0], [1], [0, 0, 1, 1], [], []>} : vector<128x32xbf16>, vector<32x64xbf16>, vector<128x64xf32> -> vector<128x64xf32>
    %6 = arith.addf %0, %5 : vector<128x64xf32>
    %c0_7 = arith.constant 0 : index
    %c0_8 = arith.constant 0 : index
    %c1 = arith.constant 1 : index
    %c0_9 = arith.constant 0 : index
    %7 = vector.load %arg1[%c0_7, %c0_8, %c1, %c0_9] : memref<2x10x10x32xbf16, #tpu.memory_space<vmem>>, vector<2x8x8x32xbf16>
    %8 = vector.shape_cast %7 : vector<2x8x8x32xbf16> to vector<128x32xbf16>
    %c1_10 = arith.constant 1 : index
    %c0_11 = arith.constant 0 : index
    %c0_12 = arith.constant 0 : index
    %9 = vector.load %arg2[%c1_10, %c0_11, %c0_12] : memref<9x32x64xbf16, #tpu.memory_space<vmem>>, vector<1x32x64xbf16>
    %10 = vector.shape_cast %9 : vector<1x32x64xbf16> to vector<32x64xbf16>
    %cst_13 = arith.constant dense<0.000000e+00> : vector<128x64xf32>
    %11 = tpu.matmul %8, %10, %cst_13 {dimension_numbers = #tpu.dot_dimension_numbers<[1], [0], [0], [1], [0, 0, 1, 1], [], []>} : vector<128x32xbf16>, vector<32x64xbf16>, vector<128x64xf32> -> vector<128x64xf32>
    %12 = arith.addf %6, %11 : vector<128x64xf32>
    %c0_14 = arith.constant 0 : index
    %c0_15 = arith.constant 0 : index
    %c2 = arith.constant 2 : index
    %c0_16 = arith.constant 0 : index
    %13 = vector.load %arg1[%c0_14, %c0_15, %c2, %c0_16] : memref<2x10x10x32xbf16, #tpu.memory_space<vmem>>, vector<2x8x8x32xbf16>
    %14 = vector.shape_cast %13 : vector<2x8x8x32xbf16> to vector<128x32xbf16>
    %c2_17 = arith.constant 2 : index
    %c0_18 = arith.constant 0 : index
    %c0_19 = arith.constant 0 : index
    %15 = vector.load %arg2[%c2_17, %c0_18, %c0_19] : memref<9x32x64xbf16, #tpu.memory_space<vmem>>, vector<1x32x64xbf16>
    %16 = vector.shape_cast %15 : vector<1x32x64xbf16> to vector<32x64xbf16>
    %cst_20 = arith.constant dense<0.000000e+00> : vector<128x64xf32>
    %17 = tpu.matmul %14, %16, %cst_20 {dimension_numbers = #tpu.dot_dimension_numbers<[1], [0], [0], [1], [0, 0, 1, 1], [], []>} : vector<128x32xbf16>, vector<32x64xbf16>, vector<128x64xf32> -> vector<128x64xf32>
    %18 = arith.addf %12, %17 : vector<128x64xf32>
    %c0_21 = arith.constant 0 : index
    %c1_22 = arith.constant 1 : index
    %c0_23 = arith.constant 0 : index
    %c0_24 = arith.constant 0 : index
    %19 = vector.load %arg1[%c0_21, %c1_22, %c0_23, %c0_24] : memref<2x10x10x32xbf16, #tpu.memory_space<vmem>>, vector<2x8x8x32xbf16>
    %20 = vector.shape_cast %19 : vector<2x8x8x32xbf16> to vector<128x32xbf16>
    %c3 = arith.constant 3 : index
    %c0_25 = arith.constant 0 : index
    %c0_26 = arith.constant 0 : index
    %21 = vector.load %arg2[%c3, %c0_25, %c0_26] : memref<9x32x64xbf16, #tpu.memory_space<vmem>>, vector<1x32x64xbf16>
    %22 = vector.shape_cast %21 : vector<1x32x64xbf16> to vector<32x64xbf16>
    %cst_27 = arith.constant dense<0.000000e+00> : vector<128x64xf32>
    %23 = tpu.matmul %20, %22, %cst_27 {dimension_numbers = #tpu.dot_dimension_numbers<[1], [0], [0], [1], [0, 0, 1, 1], [], []>} : vector<128x32xbf16>, vector<32x64xbf16>, vector<128x64xf32> -> vector<128x64xf32>
    %24 = arith.addf %18, %23 : vector<128x64xf32>
    %c0_28 = arith.constant 0 : index
    %c1_29 = arith.constant 1 : index
    %c1_30 = arith.constant 1 : index
    %c0_31 = arith.constant 0 : index
    %25 = vector.load %arg1[%c0_28, %c1_29, %c1_30, %c0_31] : memref<2x10x10x32xbf16, #tpu.memory_space<vmem>>, vector<2x8x8x32xbf16>
    %26 = vector.shape_cast %25 : vector<2x8x8x32xbf16> to vector<128x32xbf16>
    %c4 = arith.constant 4 : index
    %c0_32 = arith.constant 0 : index
    %c0_33 = arith.constant 0 : index
    %27 = vector.load %arg2[%c4, %c0_32, %c0_33] : memref<9x32x64xbf16, #tpu.memory_space<vmem>>, vector<1x32x64xbf16>
    %28 = vector.shape_cast %27 : vector<1x32x64xbf16> to vector<32x64xbf16>
    %cst_34 = arith.constant dense<0.000000e+00> : vector<128x64xf32>
    %29 = tpu.matmul %26, %28, %cst_34 {dimension_numbers = #tpu.dot_dimension_numbers<[1], [0], [0], [1], [0, 0, 1, 1], [], []>} : vector<128x32xbf16>, vector<32x64xbf16>, vector<128x64xf32> -> vector<128x64xf32>
    %30 = arith.addf %24, %29 : vector<128x64xf32>
    %c0_35 = arith.constant 0 : index
    %c1_36 = arith.constant 1 : index
    %c2_37 = arith.constant 2 : index
    %c0_38 = arith.constant 0 : index
    %31 = vector.load %arg1[%c0_35, %c1_36, %c2_37, %c0_38] : memref<2x10x10x32xbf16, #tpu.memory_space<vmem>>, vector<2x8x8x32xbf16>
    %32 = vector.shape_cast %31 : vector<2x8x8x32xbf16> to vector<128x32xbf16>
    %c5 = arith.constant 5 : index
    %c0_39 = arith.constant 0 : index
    %c0_40 = arith.constant 0 : index
    %33 = vector.load %arg2[%c5, %c0_39, %c0_40] : memref<9x32x64xbf16, #tpu.memory_space<vmem>>, vector<1x32x64xbf16>
    %34 = vector.shape_cast %33 : vector<1x32x64xbf16> to vector<32x64xbf16>
    %cst_41 = arith.constant dense<0.000000e+00> : vector<128x64xf32>
    %35 = tpu.matmul %32, %34, %cst_41 {dimension_numbers = #tpu.dot_dimension_numbers<[1], [0], [0], [1], [0, 0, 1, 1], [], []>} : vector<128x32xbf16>, vector<32x64xbf16>, vector<128x64xf32> -> vector<128x64xf32>
    %36 = arith.addf %30, %35 : vector<128x64xf32>
    %c0_42 = arith.constant 0 : index
    %c2_43 = arith.constant 2 : index
    %c0_44 = arith.constant 0 : index
    %c0_45 = arith.constant 0 : index
    %37 = vector.load %arg1[%c0_42, %c2_43, %c0_44, %c0_45] : memref<2x10x10x32xbf16, #tpu.memory_space<vmem>>, vector<2x8x8x32xbf16>
    %38 = vector.shape_cast %37 : vector<2x8x8x32xbf16> to vector<128x32xbf16>
    %c6 = arith.constant 6 : index
    %c0_46 = arith.constant 0 : index
    %c0_47 = arith.constant 0 : index
    %39 = vector.load %arg2[%c6, %c0_46, %c0_47] : memref<9x32x64xbf16, #tpu.memory_space<vmem>>, vector<1x32x64xbf16>
    %40 = vector.shape_cast %39 : vector<1x32x64xbf16> to vector<32x64xbf16>
    %cst_48 = arith.constant dense<0.000000e+00> : vector<128x64xf32>
    %41 = tpu.matmul %38, %40, %cst_48 {dimension_numbers = #tpu.dot_dimension_numbers<[1], [0], [0], [1], [0, 0, 1, 1], [], []>} : vector<128x32xbf16>, vector<32x64xbf16>, vector<128x64xf32> -> vector<128x64xf32>
    %42 = arith.addf %36, %41 : vector<128x64xf32>
    %c0_49 = arith.constant 0 : index
    %c2_50 = arith.constant 2 : index
    %c1_51 = arith.constant 1 : index
    %c0_52 = arith.constant 0 : index
    %43 = vector.load %arg1[%c0_49, %c2_50, %c1_51, %c0_52] : memref<2x10x10x32xbf16, #tpu.memory_space<vmem>>, vector<2x8x8x32xbf16>
    %44 = vector.shape_cast %43 : vector<2x8x8x32xbf16> to vector<128x32xbf16>
    %c7 = arith.constant 7 : index
    %c0_53 = arith.constant 0 : index
    %c0_54 = arith.constant 0 : index
    %45 = vector.load %arg2[%c7, %c0_53, %c0_54] : memref<9x32x64xbf16, #tpu.memory_space<vmem>>, vector<1x32x64xbf16>
    %46 = vector.shape_cast %45 : vector<1x32x64xbf16> to vector<32x64xbf16>
    %cst_55 = arith.constant dense<0.000000e+00> : vector<128x64xf32>
    %47 = tpu.matmul %44, %46, %cst_55 {dimension_numbers = #tpu.dot_dimension_numbers<[1], [0], [0], [1], [0, 0, 1, 1], [], []>} : vector<128x32xbf16>, vector<32x64xbf16>, vector<128x64xf32> -> vector<128x64xf32>
    %48 = arith.addf %42, %47 : vector<128x64xf32>
    %c0_56 = arith.constant 0 : index
    %c2_57 = arith.constant 2 : index
    %c2_58 = arith.constant 2 : index
    %c0_59 = arith.constant 0 : index
    %49 = vector.load %arg1[%c0_56, %c2_57, %c2_58, %c0_59] : memref<2x10x10x32xbf16, #tpu.memory_space<vmem>>, vector<2x8x8x32xbf16>
    %50 = vector.shape_cast %49 : vector<2x8x8x32xbf16> to vector<128x32xbf16>
    %c8 = arith.constant 8 : index
    %c0_60 = arith.constant 0 : index
    %c0_61 = arith.constant 0 : index
    %51 = vector.load %arg2[%c8, %c0_60, %c0_61] : memref<9x32x64xbf16, #tpu.memory_space<vmem>>, vector<1x32x64xbf16>
    %52 = vector.shape_cast %51 : vector<1x32x64xbf16> to vector<32x64xbf16>
    %cst_62 = arith.constant dense<0.000000e+00> : vector<128x64xf32>
    %53 = tpu.matmul %50, %52, %cst_62 {dimension_numbers = #tpu.dot_dimension_numbers<[1], [0], [0], [1], [0, 0, 1, 1], [], []>} : vector<128x32xbf16>, vector<32x64xbf16>, vector<128x64xf32> -> vector<128x64xf32>
    %54 = arith.addf %48, %53 : vector<128x64xf32>
    %c0_63 = arith.constant 0 : index
    %c0_64 = arith.constant 0 : index
    %55 = vector.load %arg3[%c0_63, %c0_64] : memref<1x64xf32, #tpu.memory_space<vmem>>, vector<1x64xf32>
    %56 = vector.broadcast %55 : vector<1x64xf32> to vector<128x64xf32>
    %57 = arith.addf %54, %56 : vector<128x64xf32>
    %cst_65 = arith.constant 0.000000e+00 : f32
    %58 = vector.broadcast %cst_65 : f32 to vector<128x64xf32>
    %59 = arith.subf %58, %57 : vector<128x64xf32>
    %60 = math.exp %59 : vector<128x64xf32>
    %cst_66 = arith.constant 1.000000e+00 : f32
    %61 = vector.broadcast %cst_66 : f32 to vector<128x64xf32>
    %62 = arith.addf %61, %60 : vector<128x64xf32>
    %cst_67 = arith.constant 1.000000e+00 : f32
    %63 = vector.broadcast %cst_67 : f32 to vector<128x64xf32>
    %64 = arith.divf %63, %62 : vector<128x64xf32>
    %65 = arith.mulf %57, %64 : vector<128x64xf32>
    %66 = vector.shape_cast %65 : vector<128x64xf32> to vector<64x2x64xf32>
    %cst_68 = arith.constant dense<0xFF800000> : vector<64x64xf32>
    %67 = vector.multi_reduction <maximumf>, %66, %cst_68 [1] : vector<64x2x64xf32> to vector<64x64xf32>
    %68 = vector.shape_cast %67 : vector<64x64xf32> to vector<16x4x64xf32>
    %69 = vector.shape_cast %68 : vector<16x4x64xf32> to vector<8x2x4x64xf32>
    %cst_69 = arith.constant dense<0xFF800000> : vector<8x4x64xf32>
    %70 = vector.multi_reduction <maximumf>, %69, %cst_69 [1] : vector<8x2x4x64xf32> to vector<8x4x64xf32>
    %71 = vector.shape_cast %70 : vector<8x4x64xf32> to vector<2x4x4x64xf32>
    %72 = arith.truncf %71 : vector<2x4x4x64xf32> to vector<2x4x4x64xbf16>
    %c0_70 = arith.constant 0 : index
    %c0_71 = arith.constant 0 : index
    %c0_72 = arith.constant 0 : index
    %c0_73 = arith.constant 0 : index
    %73 = vector.load %arg4[%c0_70, %c0_71, %c0_72, %c0_73] : memref<2x4x4x64xbf16, #tpu.memory_space<vmem>>, vector<2x4x4x64xbf16>
    tpu.vector_store %arg4[%c0_70, %c0_71, %c0_72, %c0_73], %72 {strides = array<i32>} : memref<2x4x4x64xbf16, #tpu.memory_space<vmem>>, vector<2x4x4x64xbf16>,
    return
  }
  func.func @transform_0(%arg0: i32) -> (i32, i32, i32, i32) {
    %c0_i32 = arith.constant 0 : i32
    %c0_i32_0 = arith.constant 0 : i32
    %c0_i32_1 = arith.constant 0 : i32
    %c0_i32_2 = arith.constant 0 : i32
    return %arg0, %c0_i32, %c0_i32_0, %c0_i32_1 : i32, i32, i32, i32
  }
  func.func @transform_1(%arg0: i32) -> (i32, i32, i32) {
    %c0_i32 = arith.constant 0 : i32
    %c0_i32_0 = arith.constant 0 : i32
    %c0_i32_1 = arith.constant 0 : i32
    %c0_i32_2 = arith.constant 0 : i32
    return %c0_i32, %c0_i32_0, %c0_i32_1 : i32, i32, i32
  }
  func.func @transform_2(%arg0: i32) -> (i32, i32) {
    %c0_i32 = arith.constant 0 : i32
    %c0_i32_0 = arith.constant 0 : i32
    %c0_i32_1 = arith.constant 0 : i32
    return %c0_i32, %c0_i32_0 : i32, i32
  }
  func.func @transform_3(%arg0: i32) -> (i32, i32, i32, i32) {
    %c0_i32 = arith.constant 0 : i32
    %c0_i32_0 = arith.constant 0 : i32
    %c0_i32_1 = arith.constant 0 : i32
    %c0_i32_2 = arith.constant 0 : i32
    return %arg0, %c0_i32, %c0_i32_0, %c0_i32_1 : i32, i32, i32, i32
  }
}

module attributes {stable_mosaic.version = 11 : i64} {
  func.func @_conv_block_kernel(%arg0: i32, %arg1: memref<2x6x6x64xbf16, #tpu.memory_space<vmem>>, %arg2: memref<9x64x128xbf16, #tpu.memory_space<vmem>>, %arg3: memref<1x128xf32, #tpu.memory_space<vmem>>, %arg4: memref<2x2x2x128xbf16, #tpu.memory_space<vmem>>) attributes {dimension_semantics = [#tpu.dimension_semantics<parallel>], iteration_bounds = array<i64: 1>, scalar_prefetch = 0 : i64, scratch_operands = 0 : i64, tpu.core_type = #tpu.core_type<tc>, window_params = [{transform_indices = @transform_0, window_bounds = array<i64: 2, 6, 6, 64>}, {pipeline_mode = #tpu.pipeline_mode<synchronous>, transform_indices = @transform_1, window_bounds = array<i64: 9, 64, 128>}, {pipeline_mode = #tpu.pipeline_mode<synchronous>, transform_indices = @transform_2, window_bounds = array<i64: 1, 128>}, {transform_indices = @transform_3, window_bounds = array<i64: 2, 2, 2, 128>}]} {
    %cst = arith.constant 0.000000e+00 : f32
    %0 = vector.broadcast %cst : f32 to vector<32x128xf32>
    %c0 = arith.constant 0 : index
    %c0_0 = arith.constant 0 : index
    %c0_1 = arith.constant 0 : index
    %c0_2 = arith.constant 0 : index
    %1 = vector.load %arg1[%c0, %c0_0, %c0_1, %c0_2] : memref<2x6x6x64xbf16, #tpu.memory_space<vmem>>, vector<2x4x4x64xbf16>
    %2 = vector.shape_cast %1 : vector<2x4x4x64xbf16> to vector<32x64xbf16>
    %c0_3 = arith.constant 0 : index
    %c0_4 = arith.constant 0 : index
    %c0_5 = arith.constant 0 : index
    %3 = vector.load %arg2[%c0_3, %c0_4, %c0_5] : memref<9x64x128xbf16, #tpu.memory_space<vmem>>, vector<1x64x128xbf16>
    %4 = vector.shape_cast %3 : vector<1x64x128xbf16> to vector<64x128xbf16>
    %cst_6 = arith.constant dense<0.000000e+00> : vector<32x128xf32>
    %5 = tpu.matmul %2, %4, %cst_6 {dimension_numbers = #tpu.dot_dimension_numbers<[1], [0], [0], [1], [0, 0, 1, 1], [], []>} : vector<32x64xbf16>, vector<64x128xbf16>, vector<32x128xf32> -> vector<32x128xf32>
    %6 = arith.addf %0, %5 : vector<32x128xf32>
    %c0_7 = arith.constant 0 : index
    %c0_8 = arith.constant 0 : index
    %c1 = arith.constant 1 : index
    %c0_9 = arith.constant 0 : index
    %7 = vector.load %arg1[%c0_7, %c0_8, %c1, %c0_9] : memref<2x6x6x64xbf16, #tpu.memory_space<vmem>>, vector<2x4x4x64xbf16>
    %8 = vector.shape_cast %7 : vector<2x4x4x64xbf16> to vector<32x64xbf16>
    %c1_10 = arith.constant 1 : index
    %c0_11 = arith.constant 0 : index
    %c0_12 = arith.constant 0 : index
    %9 = vector.load %arg2[%c1_10, %c0_11, %c0_12] : memref<9x64x128xbf16, #tpu.memory_space<vmem>>, vector<1x64x128xbf16>
    %10 = vector.shape_cast %9 : vector<1x64x128xbf16> to vector<64x128xbf16>
    %cst_13 = arith.constant dense<0.000000e+00> : vector<32x128xf32>
    %11 = tpu.matmul %8, %10, %cst_13 {dimension_numbers = #tpu.dot_dimension_numbers<[1], [0], [0], [1], [0, 0, 1, 1], [], []>} : vector<32x64xbf16>, vector<64x128xbf16>, vector<32x128xf32> -> vector<32x128xf32>
    %12 = arith.addf %6, %11 : vector<32x128xf32>
    %c0_14 = arith.constant 0 : index
    %c0_15 = arith.constant 0 : index
    %c2 = arith.constant 2 : index
    %c0_16 = arith.constant 0 : index
    %13 = vector.load %arg1[%c0_14, %c0_15, %c2, %c0_16] : memref<2x6x6x64xbf16, #tpu.memory_space<vmem>>, vector<2x4x4x64xbf16>
    %14 = vector.shape_cast %13 : vector<2x4x4x64xbf16> to vector<32x64xbf16>
    %c2_17 = arith.constant 2 : index
    %c0_18 = arith.constant 0 : index
    %c0_19 = arith.constant 0 : index
    %15 = vector.load %arg2[%c2_17, %c0_18, %c0_19] : memref<9x64x128xbf16, #tpu.memory_space<vmem>>, vector<1x64x128xbf16>
    %16 = vector.shape_cast %15 : vector<1x64x128xbf16> to vector<64x128xbf16>
    %cst_20 = arith.constant dense<0.000000e+00> : vector<32x128xf32>
    %17 = tpu.matmul %14, %16, %cst_20 {dimension_numbers = #tpu.dot_dimension_numbers<[1], [0], [0], [1], [0, 0, 1, 1], [], []>} : vector<32x64xbf16>, vector<64x128xbf16>, vector<32x128xf32> -> vector<32x128xf32>
    %18 = arith.addf %12, %17 : vector<32x128xf32>
    %c0_21 = arith.constant 0 : index
    %c1_22 = arith.constant 1 : index
    %c0_23 = arith.constant 0 : index
    %c0_24 = arith.constant 0 : index
    %19 = vector.load %arg1[%c0_21, %c1_22, %c0_23, %c0_24] : memref<2x6x6x64xbf16, #tpu.memory_space<vmem>>, vector<2x4x4x64xbf16>
    %20 = vector.shape_cast %19 : vector<2x4x4x64xbf16> to vector<32x64xbf16>
    %c3 = arith.constant 3 : index
    %c0_25 = arith.constant 0 : index
    %c0_26 = arith.constant 0 : index
    %21 = vector.load %arg2[%c3, %c0_25, %c0_26] : memref<9x64x128xbf16, #tpu.memory_space<vmem>>, vector<1x64x128xbf16>
    %22 = vector.shape_cast %21 : vector<1x64x128xbf16> to vector<64x128xbf16>
    %cst_27 = arith.constant dense<0.000000e+00> : vector<32x128xf32>
    %23 = tpu.matmul %20, %22, %cst_27 {dimension_numbers = #tpu.dot_dimension_numbers<[1], [0], [0], [1], [0, 0, 1, 1], [], []>} : vector<32x64xbf16>, vector<64x128xbf16>, vector<32x128xf32> -> vector<32x128xf32>
    %24 = arith.addf %18, %23 : vector<32x128xf32>
    %c0_28 = arith.constant 0 : index
    %c1_29 = arith.constant 1 : index
    %c1_30 = arith.constant 1 : index
    %c0_31 = arith.constant 0 : index
    %25 = vector.load %arg1[%c0_28, %c1_29, %c1_30, %c0_31] : memref<2x6x6x64xbf16, #tpu.memory_space<vmem>>, vector<2x4x4x64xbf16>
    %26 = vector.shape_cast %25 : vector<2x4x4x64xbf16> to vector<32x64xbf16>
    %c4 = arith.constant 4 : index
    %c0_32 = arith.constant 0 : index
    %c0_33 = arith.constant 0 : index
    %27 = vector.load %arg2[%c4, %c0_32, %c0_33] : memref<9x64x128xbf16, #tpu.memory_space<vmem>>, vector<1x64x128xbf16>
    %28 = vector.shape_cast %27 : vector<1x64x128xbf16> to vector<64x128xbf16>
    %cst_34 = arith.constant dense<0.000000e+00> : vector<32x128xf32>
    %29 = tpu.matmul %26, %28, %cst_34 {dimension_numbers = #tpu.dot_dimension_numbers<[1], [0], [0], [1], [0, 0, 1, 1], [], []>} : vector<32x64xbf16>, vector<64x128xbf16>, vector<32x128xf32> -> vector<32x128xf32>
    %30 = arith.addf %24, %29 : vector<32x128xf32>
    %c0_35 = arith.constant 0 : index
    %c1_36 = arith.constant 1 : index
    %c2_37 = arith.constant 2 : index
    %c0_38 = arith.constant 0 : index
    %31 = vector.load %arg1[%c0_35, %c1_36, %c2_37, %c0_38] : memref<2x6x6x64xbf16, #tpu.memory_space<vmem>>, vector<2x4x4x64xbf16>
    %32 = vector.shape_cast %31 : vector<2x4x4x64xbf16> to vector<32x64xbf16>
    %c5 = arith.constant 5 : index
    %c0_39 = arith.constant 0 : index
    %c0_40 = arith.constant 0 : index
    %33 = vector.load %arg2[%c5, %c0_39, %c0_40] : memref<9x64x128xbf16, #tpu.memory_space<vmem>>, vector<1x64x128xbf16>
    %34 = vector.shape_cast %33 : vector<1x64x128xbf16> to vector<64x128xbf16>
    %cst_41 = arith.constant dense<0.000000e+00> : vector<32x128xf32>
    %35 = tpu.matmul %32, %34, %cst_41 {dimension_numbers = #tpu.dot_dimension_numbers<[1], [0], [0], [1], [0, 0, 1, 1], [], []>} : vector<32x64xbf16>, vector<64x128xbf16>, vector<32x128xf32> -> vector<32x128xf32>
    %36 = arith.addf %30, %35 : vector<32x128xf32>
    %c0_42 = arith.constant 0 : index
    %c2_43 = arith.constant 2 : index
    %c0_44 = arith.constant 0 : index
    %c0_45 = arith.constant 0 : index
    %37 = vector.load %arg1[%c0_42, %c2_43, %c0_44, %c0_45] : memref<2x6x6x64xbf16, #tpu.memory_space<vmem>>, vector<2x4x4x64xbf16>
    %38 = vector.shape_cast %37 : vector<2x4x4x64xbf16> to vector<32x64xbf16>
    %c6 = arith.constant 6 : index
    %c0_46 = arith.constant 0 : index
    %c0_47 = arith.constant 0 : index
    %39 = vector.load %arg2[%c6, %c0_46, %c0_47] : memref<9x64x128xbf16, #tpu.memory_space<vmem>>, vector<1x64x128xbf16>
    %40 = vector.shape_cast %39 : vector<1x64x128xbf16> to vector<64x128xbf16>
    %cst_48 = arith.constant dense<0.000000e+00> : vector<32x128xf32>
    %41 = tpu.matmul %38, %40, %cst_48 {dimension_numbers = #tpu.dot_dimension_numbers<[1], [0], [0], [1], [0, 0, 1, 1], [], []>} : vector<32x64xbf16>, vector<64x128xbf16>, vector<32x128xf32> -> vector<32x128xf32>
    %42 = arith.addf %36, %41 : vector<32x128xf32>
    %c0_49 = arith.constant 0 : index
    %c2_50 = arith.constant 2 : index
    %c1_51 = arith.constant 1 : index
    %c0_52 = arith.constant 0 : index
    %43 = vector.load %arg1[%c0_49, %c2_50, %c1_51, %c0_52] : memref<2x6x6x64xbf16, #tpu.memory_space<vmem>>, vector<2x4x4x64xbf16>
    %44 = vector.shape_cast %43 : vector<2x4x4x64xbf16> to vector<32x64xbf16>
    %c7 = arith.constant 7 : index
    %c0_53 = arith.constant 0 : index
    %c0_54 = arith.constant 0 : index
    %45 = vector.load %arg2[%c7, %c0_53, %c0_54] : memref<9x64x128xbf16, #tpu.memory_space<vmem>>, vector<1x64x128xbf16>
    %46 = vector.shape_cast %45 : vector<1x64x128xbf16> to vector<64x128xbf16>
    %cst_55 = arith.constant dense<0.000000e+00> : vector<32x128xf32>
    %47 = tpu.matmul %44, %46, %cst_55 {dimension_numbers = #tpu.dot_dimension_numbers<[1], [0], [0], [1], [0, 0, 1, 1], [], []>} : vector<32x64xbf16>, vector<64x128xbf16>, vector<32x128xf32> -> vector<32x128xf32>
    %48 = arith.addf %42, %47 : vector<32x128xf32>
    %c0_56 = arith.constant 0 : index
    %c2_57 = arith.constant 2 : index
    %c2_58 = arith.constant 2 : index
    %c0_59 = arith.constant 0 : index
    %49 = vector.load %arg1[%c0_56, %c2_57, %c2_58, %c0_59] : memref<2x6x6x64xbf16, #tpu.memory_space<vmem>>, vector<2x4x4x64xbf16>
    %50 = vector.shape_cast %49 : vector<2x4x4x64xbf16> to vector<32x64xbf16>
    %c8 = arith.constant 8 : index
    %c0_60 = arith.constant 0 : index
    %c0_61 = arith.constant 0 : index
    %51 = vector.load %arg2[%c8, %c0_60, %c0_61] : memref<9x64x128xbf16, #tpu.memory_space<vmem>>, vector<1x64x128xbf16>
    %52 = vector.shape_cast %51 : vector<1x64x128xbf16> to vector<64x128xbf16>
    %cst_62 = arith.constant dense<0.000000e+00> : vector<32x128xf32>
    %53 = tpu.matmul %50, %52, %cst_62 {dimension_numbers = #tpu.dot_dimension_numbers<[1], [0], [0], [1], [0, 0, 1, 1], [], []>} : vector<32x64xbf16>, vector<64x128xbf16>, vector<32x128xf32> -> vector<32x128xf32>
    %54 = arith.addf %48, %53 : vector<32x128xf32>
    %c0_63 = arith.constant 0 : index
    %c0_64 = arith.constant 0 : index
    %55 = vector.load %arg3[%c0_63, %c0_64] : memref<1x128xf32, #tpu.memory_space<vmem>>, vector<1x128xf32>
    %56 = vector.broadcast %55 : vector<1x128xf32> to vector<32x128xf32>
    %57 = arith.addf %54, %56 : vector<32x128xf32>
    %cst_65 = arith.constant 0.000000e+00 : f32
    %58 = vector.broadcast %cst_65 : f32 to vector<32x128xf32>
    %59 = arith.subf %58, %57 : vector<32x128xf32>
    %60 = math.exp %59 : vector<32x128xf32>
    %cst_66 = arith.constant 1.000000e+00 : f32
    %61 = vector.broadcast %cst_66 : f32 to vector<32x128xf32>
    %62 = arith.addf %61, %60 : vector<32x128xf32>
    %cst_67 = arith.constant 1.000000e+00 : f32
    %63 = vector.broadcast %cst_67 : f32 to vector<32x128xf32>
    %64 = arith.divf %63, %62 : vector<32x128xf32>
    %65 = arith.mulf %57, %64 : vector<32x128xf32>
    %66 = vector.shape_cast %65 : vector<32x128xf32> to vector<16x2x128xf32>
    %cst_68 = arith.constant dense<0xFF800000> : vector<16x128xf32>
    %67 = vector.multi_reduction <maximumf>, %66, %cst_68 [1] : vector<16x2x128xf32> to vector<16x128xf32>
    %68 = vector.shape_cast %67 : vector<16x128xf32> to vector<8x2x128xf32>
    %69 = vector.shape_cast %68 : vector<8x2x128xf32> to vector<4x2x2x128xf32>
    %cst_69 = arith.constant dense<0xFF800000> : vector<4x2x128xf32>
    %70 = vector.multi_reduction <maximumf>, %69, %cst_69 [1] : vector<4x2x2x128xf32> to vector<4x2x128xf32>
    %71 = vector.shape_cast %70 : vector<4x2x128xf32> to vector<2x2x2x128xf32>
    %72 = arith.truncf %71 : vector<2x2x2x128xf32> to vector<2x2x2x128xbf16>
    %c0_70 = arith.constant 0 : index
    %c0_71 = arith.constant 0 : index
    %c0_72 = arith.constant 0 : index
    %c0_73 = arith.constant 0 : index
    %73 = vector.load %arg4[%c0_70, %c0_71, %c0_72, %c0_73] : memref<2x2x2x128xbf16, #tpu.memory_space<vmem>>, vector<2x2x2x128xbf16>
    tpu.vector_store %arg4[%c0_70, %c0_71, %c0_72, %c0_73], %72 {strides = array<i32>} : memref<2x2x2x128xbf16, #tpu.memory_space<vmem>>, vector<2x2x2x128xbf16>,
    return
  }
  func.func @transform_0(%arg0: i32) -> (i32, i32, i32, i32) {
    %c0_i32 = arith.constant 0 : i32
    %c0_i32_0 = arith.constant 0 : i32
    %c0_i32_1 = arith.constant 0 : i32
    %c0_i32_2 = arith.constant 0 : i32
    return %arg0, %c0_i32, %c0_i32_0, %c0_i32_1 : i32, i32, i32, i32
  }
  func.func @transform_1(%arg0: i32) -> (i32, i32, i32) {
    %c0_i32 = arith.constant 0 : i32
    %c0_i32_0 = arith.constant 0 : i32
    %c0_i32_1 = arith.constant 0 : i32
    %c0_i32_2 = arith.constant 0 : i32
    return %c0_i32, %c0_i32_0, %c0_i32_1 : i32, i32, i32
  }
  func.func @transform_2(%arg0: i32) -> (i32, i32) {
    %c0_i32 = arith.constant 0 : i32
    %c0_i32_0 = arith.constant 0 : i32
    %c0_i32_1 = arith.constant 0 : i32
    return %c0_i32, %c0_i32_0 : i32, i32
  }
  func.func @transform_3(%arg0: i32) -> (i32, i32, i32, i32) {
    %c0_i32 = arith.constant 0 : i32
    %c0_i32_0 = arith.constant 0 : i32
    %c0_i32_1 = arith.constant 0 : i32
    %c0_i32_2 = arith.constant 0 : i32
    return %arg0, %c0_i32, %c0_i32_0, %c0_i32_1 : i32, i32, i32, i32
  }
}

module attributes {stable_mosaic.version = 11 : i64} {
  func.func @_classifier_kernel(%arg0: memref<2x512xbf16, #tpu.memory_space<vmem>>, %arg1: memref<512x256xbf16, #tpu.memory_space<vmem>>, %arg2: memref<1x256xf32, #tpu.memory_space<vmem>>, %arg3: memref<256x1xbf16, #tpu.memory_space<vmem>>, %arg4: memref<1x1xf32, #tpu.memory_space<vmem>>, %arg5: memref<2x1xf32, #tpu.memory_space<vmem>>) attributes {dimension_semantics = [], scalar_prefetch = 0 : i64, scratch_operands = 0 : i64, tpu.core_type = #tpu.core_type<tc>} {
    %c0 = arith.constant 0 : index
    %c0_0 = arith.constant 0 : index
    %0 = vector.load %arg0[%c0, %c0_0] : memref<2x512xbf16, #tpu.memory_space<vmem>>, vector<2x512xbf16>
    %c0_1 = arith.constant 0 : index
    %c0_2 = arith.constant 0 : index
    %1 = vector.load %arg1[%c0_1, %c0_2] : memref<512x256xbf16, #tpu.memory_space<vmem>>, vector<512x256xbf16>
    %cst = arith.constant dense<0.000000e+00> : vector<2x256xf32>
    %2 = tpu.matmul %0, %1, %cst {dimension_numbers = #tpu.dot_dimension_numbers<[1], [0], [0], [1], [0, 0, 1, 1], [], []>} : vector<2x512xbf16>, vector<512x256xbf16>, vector<2x256xf32> -> vector<2x256xf32>
    %c0_3 = arith.constant 0 : index
    %c0_4 = arith.constant 0 : index
    %3 = vector.load %arg2[%c0_3, %c0_4] : memref<1x256xf32, #tpu.memory_space<vmem>>, vector<1x256xf32>
    %4 = vector.broadcast %3 : vector<1x256xf32> to vector<2x256xf32>
    %5 = arith.addf %2, %4 : vector<2x256xf32>
    %cst_5 = arith.constant 0.000000e+00 : f32
    %6 = vector.broadcast %cst_5 : f32 to vector<2x256xf32>
    %7 = arith.subf %6, %5 : vector<2x256xf32>
    %8 = math.exp %7 : vector<2x256xf32>
    %cst_6 = arith.constant 1.000000e+00 : f32
    %9 = vector.broadcast %cst_6 : f32 to vector<2x256xf32>
    %10 = arith.addf %9, %8 : vector<2x256xf32>
    %cst_7 = arith.constant 1.000000e+00 : f32
    %11 = vector.broadcast %cst_7 : f32 to vector<2x256xf32>
    %12 = arith.divf %11, %10 : vector<2x256xf32>
    %13 = arith.mulf %5, %12 : vector<2x256xf32>
    %14 = arith.truncf %13 : vector<2x256xf32> to vector<2x256xbf16>
    %c0_8 = arith.constant 0 : index
    %c0_9 = arith.constant 0 : index
    %15 = vector.load %arg3[%c0_8, %c0_9] : memref<256x1xbf16, #tpu.memory_space<vmem>>, vector<256x1xbf16>
    %cst_10 = arith.constant dense<0.000000e+00> : vector<2x1xf32>
    %16 = tpu.matmul %14, %15, %cst_10 {dimension_numbers = #tpu.dot_dimension_numbers<[1], [0], [0], [1], [0, 0, 1, 1], [], []>} : vector<2x256xbf16>, vector<256x1xbf16>, vector<2x1xf32> -> vector<2x1xf32>
    %c0_11 = arith.constant 0 : index
    %c0_12 = arith.constant 0 : index
    %17 = vector.load %arg4[%c0_11, %c0_12] : memref<1x1xf32, #tpu.memory_space<vmem>>, vector<1x1xf32>
    %18 = vector.broadcast %17 : vector<1x1xf32> to vector<2x1xf32>
    %19 = arith.addf %16, %18 : vector<2x1xf32>
    %cst_13 = arith.constant 0.000000e+00 : f32
    %20 = vector.broadcast %cst_13 : f32 to vector<2x1xf32>
    %21 = arith.subf %20, %19 : vector<2x1xf32>
    %22 = math.exp %21 : vector<2x1xf32>
    %cst_14 = arith.constant 1.000000e+00 : f32
    %23 = vector.broadcast %cst_14 : f32 to vector<2x1xf32>
    %24 = arith.addf %23, %22 : vector<2x1xf32>
    %cst_15 = arith.constant 1.000000e+00 : f32
    %25 = vector.broadcast %cst_15 : f32 to vector<2x1xf32>
    %26 = arith.divf %25, %24 : vector<2x1xf32>
    %c0_16 = arith.constant 0 : index
    %c0_17 = arith.constant 0 : index
    %27 = vector.load %arg5[%c0_16, %c0_17] : memref<2x1xf32, #tpu.memory_space<vmem>>, vector<2x1xf32>
    tpu.vector_store %arg5[%c0_16, %c0_17], %26 {strides = array<i32>} : memref<2x1xf32, #tpu.memory_space<vmem>>, vector<2x1xf32>,
    return
  }
}

</mosaic_0001>

<llo_original>
// kernel: bird_cnn_forward.7
$region0: #{bird_cnn_forward.7}
  #allocation0 [shape = 'u32[]', space=smem, size = 0x4, offset = 0x4, fixed_abs, tag = 'smem constant byte address 0x4 - core index']
  #allocation1 [shape = 'u32[72,128]{1,0:T(1,128)}', space=vmem, size = 0x9000, scoped, tag = 'internal scratch']
  #allocation2 [shape = 'f32[1,1]{1,0:T(1,128)S(1)}', space=vmem, size = 0x200, scoped, tag = 'scoped memory for bird_cnn_forward.7']
  %s0 = inlined_call_operand.vmem [shape: bf16[2,512], index: 0, kind: input, shape index: {}]
  %s1 = inlined_call_operand.vmem [shape: bf16[512,256], index: 1, kind: input, shape index: {}]
  %s2 = inlined_call_operand.vmem [shape: f32[1,256], index: 2, kind: input, shape index: {}]
  %s3 = inlined_call_operand.vmem [shape: bf16[256,1], index: 3, kind: input, shape index: {}]
  %s4 = inlined_call_operand.<no memory space> [shape: f32[1,1], index: 4, kind: input, shape index: {}]
  %s5 = inlined_call_operand.vmem [shape: f32[2,1], index: 5, kind: output, shape index: {}]
  %s6 = sld [smem:[#allocation0]]
  $region30: #{bird_cnn_forward.7} parent=0
    _
  %s8 = ssub.s32 1, %s6
  %s9 = scalar_select 0, %s8, %s6
  %v10 = vstv %s4
  %11 = vst [vmem:[#allocation2] sm:$0x1] %v10
  // Predicated region
  $region2: #{bird_cnn_forward.7} parent=0 // pred_check
    _
  $region3: #{bird_cnn_forward.7} parent=0 // pred_check_branch
    %13 = sbr.rel (0) target = $region5
  $region4: #{bird_cnn_forward.7} parent=0 // pred_region
    _
  $region5: #{bird_cnn_forward.7} parent=0 // pred_fallthru
    _
  // Predicated region
  $region6: #{bird_cnn_forward.7} parent=0 // pred_check
    _
  $region7: #{bird_cnn_forward.7} parent=0 // pred_check_branch
    %15 = sbr.rel (0) target = $region9
  $region8: #{bird_cnn_forward.7} parent=0 // pred_region
    _
  $region9: #{bird_cnn_forward.7} parent=0 // pred_fallthru
    _
  // Predicated region
  $region10: #{bird_cnn_forward.7} parent=0 // pred_check
    _
  $region11: #{bird_cnn_forward.7} parent=0 // pred_check_branch
    %17 = sbr.rel (0) target = $region13
  $region12: #{bird_cnn_forward.7} parent=0 // pred_region
    _
  $region13: #{bird_cnn_forward.7} parent=0 // pred_fallthru
    _
  // Predicated region
  $region14: #{bird_cnn_forward.7} parent=0 // pred_check
    _
  $region15: #{bird_cnn_forward.7} parent=0 // pred_check_branch
    %19 = sbr.rel (0) target = $region17
  $region16: #{bird_cnn_forward.7} parent=0 // pred_region
    _
  $region17: #{bird_cnn_forward.7} parent=0 // pred_fallthru
    _
  // Predicated region
  $region18: #{bird_cnn_forward.7} parent=0 // pred_check
    _
  $region19: #{bird_cnn_forward.7} parent=0 // pred_check_branch
    %21 = sbr.rel (0) target = $region21
  $region20: #{bird_cnn_forward.7} parent=0 // pred_region
    _
  $region21: #{bird_cnn_forward.7} parent=0 // pred_fallthru
    _
  %v22 = vld [vmem:[%s0] sm:$0xf]
  %v23 = vld [vmem:[%s1] sm:$0xff]
  %v24 = vld [vmem:[%s1 + $0x8] sm:$0xff]
  %v25 = vld [vmem:[%s1 + $0x10] sm:$0xff]
  %v26 = vld [vmem:[%s1 + $0x18] sm:$0xff]
  %v27 = vld [vmem:[%s1 + $0x20] sm:$0xff]
  %v28 = vld [vmem:[%s1 + $0x28] sm:$0xff]
  %v29 = vld [vmem:[%s1 + $0x30] sm:$0xff]
  %v30 = vld [vmem:[%s1 + $0x38] sm:$0xff]
  %v31 = vld [vmem:[%s1 + $0x40] sm:$0xff]
  %v32 = vld [vmem:[%s1 + $0x48] sm:$0xff]
  %v33 = vld [vmem:[%s1 + $0x50] sm:$0xff]
  %v34 = vld [vmem:[%s1 + $0x58] sm:$0xff]
  %v35 = vld [vmem:[%s1 + $0x60] sm:$0xff]
  %v36 = vld [vmem:[%s1 + $0x68] sm:$0xff]
  %v37 = vld [vmem:[%s1 + $0x70] sm:$0xff]
  %v38 = vld [vmem:[%s1 + $0x78] sm:$0xff]
  %v39 = vld [vmem:[%s1 + $0x80] sm:$0xff]
  %v40 = vld [vmem:[%s1 + $0x88] sm:$0xff]
  %v41 = vld [vmem:[%s1 + $0x90] sm:$0xff]
  %v42 = vld [vmem:[%s1 + $0x98] sm:$0xff]
  %v43 = vld [vmem:[%s1 + $0xa0] sm:$0xff]
  %v44 = vld [vmem:[%s1 + $0xa8] sm:$0xff]
  %v45 = vld [vmem:[%s1 + $0xb0] sm:$0xff]
  %v46 = vld [vmem:[%s1 + $0xb8] sm:$0xff]
  %v47 = vld [vmem:[%s1 + $0xc0] sm:$0xff]
  %v48 = vld [vmem:[%s1 + $0xc8] sm:$0xff]
  %v49 = vld [vmem:[%s1 + $0xd0] sm:$0xff]
  %v50 = vld [vmem:[%s1 + $0xd8] sm:$0xff]
  %v51 = vld [vmem:[%s1 + $0xe0] sm:$0xff]
  %v52 = vld [vmem:[%s1 + $0xe8] sm:$0xff]
  %v53 = vld [vmem:[%s1 + $0xf0] sm:$0xff]
  %v54 = vld [vmem:[%s1 + $0xf8] sm:$0xff]
  %v55 = vld [vmem:[%s1 + $0x100] sm:$0xff]
  %v56 = vld [vmem:[%s1 + $0x108] sm:$0xff]
  %v57 = vld [vmem:[%s1 + $0x110] sm:$0xff]
  %v58 = vld [vmem:[%s1 + $0x118] sm:$0xff]
  %v59 = vld [vmem:[%s1 + $0x120] sm:$0xff]
  %v60 = vld [vmem:[%s1 + $0x128] sm:$0xff]
  %v61 = vld [vmem:[%s1 + $0x130] sm:$0xff]
  %v62 = vld [vmem:[%s1 + $0x138] sm:$0xff]
  %v63 = vld [vmem:[%s1 + $0x140] sm:$0xff]
  %v64 = vld [vmem:[%s1 + $0x148] sm:$0xff]
  %v65 = vld [vmem:[%s1 + $0x150] sm:$0xff]
  %v66 = vld [vmem:[%s1 + $0x158] sm:$0xff]
  %v67 = vld [vmem:[%s1 + $0x160] sm:$0xff]
  %v68 = vld [vmem:[%s1 + $0x168] sm:$0xff]
  %v69 = vld [vmem:[%s1 + $0x170] sm:$0xff]
  %v70 = vld [vmem:[%s1 + $0x178] sm:$0xff]
  %v71 = vld [vmem:[%s1 + $0x180] sm:$0xff]
  %v72 = vld [vmem:[%s1 + $0x188] sm:$0xff]
  %v73 = vld [vmem:[%s1 + $0x190] sm:$0xff]
  %v74 = vld [vmem:[%s1 + $0x198] sm:$0xff]
  %v75 = vld [vmem:[%s1 + $0x1a0] sm:$0xff]
  %v76 = vld [vmem:[%s1 + $0x1a8] sm:$0xff]
  %v77 = vld [vmem:[%s1 + $0x1b0] sm:$0xff]
  %v78 = vld [vmem:[%s1 + $0x1b8] sm:$0xff]
  %v79 = vld [vmem:[%s1 + $0x1c0] sm:$0xff]
  %v80 = vld [vmem:[%s1 + $0x1c8] sm:$0xff]
  %v81 = vld [vmem:[%s1 + $0x1d0] sm:$0xff]
  %v82 = vld [vmem:[%s1 + $0x1d8] sm:$0xff]
  %v83 = vld [vmem:[%s1 + $0x1e0] sm:$0xff]
  %v84 = vld [vmem:[%s1 + $0x1e8] sm:$0xff]
  %v85 = vld [vmem:[%s1 + $0x1f0] sm:$0xff]
  %v86 = vld [vmem:[%s1 + $0x1f8] sm:$0xff]
  %v87 = vld [vmem:[%s2] sm:$0x3]
  %v89 = vperm.slane %v87, 0
  %v90 = vperm.slane %v87, 1
  %94 = vst [vmem:[#allocation1] ss:$9 sm:$0xff] %v22
  %v95 = vld [vmem:[#allocation1] sm:$0xff]
  %v96 = vld [vmem:[#allocation1 + $0x9] sm:$0xff]
  %v97 = vld [vmem:[#allocation1 + $0x12] sm:$0xff]
  %v98 = vld [vmem:[#allocation1 + $0x1b] sm:$0xff]
  %v167 = vunpack.c.l.b16 %v23
  %v168 = vunpack.c.h.b16 %v23
  %v169 = vunpack.c.l.b16 %v24
  %v170 = vunpack.c.h.b16 %v24
  %v171 = vunpack.c.l.b16 %v25
  %v172 = vunpack.c.h.b16 %v25
  %v173 = vunpack.c.l.b16 %v26
  %v174 = vunpack.c.h.b16 %v26
  %v175 = vunpack.c.l.b16 %v27
  %v176 = vunpack.c.h.b16 %v27
  %v177 = vunpack.c.l.b16 %v28
  %v178 = vunpack.c.h.b16 %v28
  %v179 = vunpack.c.l.b16 %v29
  %v180 = vunpack.c.h.b16 %v29
  %v181 = vunpack.c.l.b16 %v30
  %v182 = vunpack.c.h.b16 %v30
  %v183 = vunpack.c.l.b16 %v31
  %v184 = vunpack.c.h.b16 %v31
  %v185 = vunpack.c.l.b16 %v32
  %v186 = vunpack.c.h.b16 %v32
  %v187 = vunpack.c.l.b16 %v33
  %v188 = vunpack.c.h.b16 %v33
  %v189 = vunpack.c.l.b16 %v34
  %v190 = vunpack.c.h.b16 %v34
  %v191 = vunpack.c.l.b16 %v35
  %v192 = vunpack.c.h.b16 %v35
  %v193 = vunpack.c.l.b16 %v36
  %v194 = vunpack.c.h.b16 %v36
  %v195 = vunpack.c.l.b16 %v37
  %v196 = vunpack.c.h.b16 %v37
  %v197 = vunpack.c.l.b16 %v38
  %v198 = vunpack.c.h.b16 %v38
  %v199 = vunpack.c.l.b16 %v39
  %v200 = vunpack.c.h.b16 %v39
  %v201 = vunpack.c.l.b16 %v40
  %v202 = vunpack.c.h.b16 %v40
  %v203 = vunpack.c.l.b16 %v41
  %v204 = vunpack.c.h.b16 %v41
  %v205 = vunpack.c.l.b16 %v42
  %v206 = vunpack.c.h.b16 %v42
  %v207 = vunpack.c.l.b16 %v43
  %v208 = vunpack.c.h.b16 %v43
  %v209 = vunpack.c.l.b16 %v44
  %v210 = vunpack.c.h.b16 %v44
  %v211 = vunpack.c.l.b16 %v45
  %v212 = vunpack.c.h.b16 %v45
  %v213 = vunpack.c.l.b16 %v46
  %v214 = vunpack.c.h.b16 %v46
  %v215 = vunpack.c.l.b16 %v47
  %v216 = vunpack.c.h.b16 %v47
  %v217 = vunpack.c.l.b16 %v48
  %v218 = vunpack.c.h.b16 %v48
  %v219 = vunpack.c.l.b16 %v49
  %v220 = vunpack.c.h.b16 %v49
  %v221 = vunpack.c.l.b16 %v50
  %v222 = vunpack.c.h.b16 %v50
  %v223 = vunpack.c.l.b16 %v51
  %v224 = vunpack.c.h.b16 %v51
  %v225 = vunpack.c.l.b16 %v52
  %v226 = vunpack.c.h.b16 %v52
  %v227 = vunpack.c.l.b16 %v53
  %v228 = vunpack.c.h.b16 %v53
  %v229 = vunpack.c.l.b16 %v54
  %v230 = vunpack.c.h.b16 %v54
  %v231 = vunpack.c.l.b16 %v55
  %v232 = vunpack.c.h.b16 %v55
  %v233 = vunpack.c.l.b16 %v56
  %v234 = vunpack.c.h.b16 %v56
  %v235 = vunpack.c.l.b16 %v57
  %v236 = vunpack.c.h.b16 %v57
  %v237 = vunpack.c.l.b16 %v58
  %v238 = vunpack.c.h.b16 %v58
  %v239 = vunpack.c.l.b16 %v59
  %v240 = vunpack.c.h.b16 %v59
  %v241 = vunpack.c.l.b16 %v60
  %v242 = vunpack.c.h.b16 %v60
  %v243 = vunpack.c.l.b16 %v61
  %v244 = vunpack.c.h.b16 %v61
  %v245 = vunpack.c.l.b16 %v62
  %v246 = vunpack.c.h.b16 %v62
  %v247 = vunpack.c.l.b16 %v63
  %v248 = vunpack.c.h.b16 %v63
  %v249 = vunpack.c.l.b16 %v64
  %v250 = vunpack.c.h.b16 %v64
  %v251 = vunpack.c.l.b16 %v65
  %v252 = vunpack.c.h.b16 %v65
  %v253 = vunpack.c.l.b16 %v66
  %v254 = vunpack.c.h.b16 %v66
  %v255 = vunpack.c.l.b16 %v67
  %v256 = vunpack.c.h.b16 %v67
  %v257 = vunpack.c.l.b16 %v68
  %v258 = vunpack.c.h.b16 %v68
  %v259 = vunpack.c.l.b16 %v69
  %v260 = vunpack.c.h.b16 %v69
  %v261 = vunpack.c.l.b16 %v70
  %v262 = vunpack.c.h.b16 %v70
  %v263 = vunpack.c.l.b16 %v71
  %v264 = vunpack.c.h.b16 %v71
  %v265 = vunpack.c.l.b16 %v72
  %v266 = vunpack.c.h.b16 %v72
  %v267 = vunpack.c.l.b16 %v73
  %v268 = vunpack.c.h.b16 %v73
  %v269 = vunpack.c.l.b16 %v74
  %v270 = vunpack.c.h.b16 %v74
  %v271 = vunpack.c.l.b16 %v75
  %v272 = vunpack.c.h.b16 %v75
  %v273 = vunpack.c.l.b16 %v76
  %v274 = vunpack.c.h.b16 %v76
  %v275 = vunpack.c.l.b16 %v77
  %v276 = vunpack.c.h.b16 %v77
  %v277 = vunpack.c.l.b16 %v78
  %v278 = vunpack.c.h.b16 %v78
  %v279 = vunpack.c.l.b16 %v79
  %v280 = vunpack.c.h.b16 %v79
  %v281 = vunpack.c.l.b16 %v80
  %v282 = vunpack.c.h.b16 %v80
  %v283 = vunpack.c.l.b16 %v81
  %v284 = vunpack.c.h.b16 %v81
  %v285 = vunpack.c.l.b16 %v82
  %v286 = vunpack.c.h.b16 %v82
  %v287 = vunpack.c.l.b16 %v83
  %v288 = vunpack.c.h.b16 %v83
  %v289 = vunpack.c.l.b16 %v84
  %v290 = vunpack.c.h.b16 %v84
  %v291 = vunpack.c.l.b16 %v85
  %v292 = vunpack.c.h.b16 %v85
  %v293 = vunpack.c.l.b16 %v86
  %v294 = vunpack.c.h.b16 %v86
  %v295 = vpack.c.b16 %v169, %v167
  %v296 = vpack.c.b16 %v170, %v168
  %v297 = vpack.c.b16 %v173, %v171
  %v298 = vpack.c.b16 %v174, %v172
  %v299 = vpack.c.b16 %v177, %v175
  %v300 = vpack.c.b16 %v178, %v176
  %v301 = vpack.c.b16 %v181, %v179
  %v302 = vpack.c.b16 %v182, %v180
  %v303 = vpack.c.b16 %v185, %v183
  %v304 = vpack.c.b16 %v186, %v184
  %v305 = vpack.c.b16 %v189, %v187
  %v306 = vpack.c.b16 %v190, %v188
  %v307 = vpack.c.b16 %v193, %v191
  %v308 = vpack.c.b16 %v194, %v192
  %v309 = vpack.c.b16 %v197, %v195
  %v310 = vpack.c.b16 %v198, %v196
  %v311 = vpack.c.b16 %v201, %v199
  %v312 = vpack.c.b16 %v202, %v200
  %v313 = vpack.c.b16 %v205, %v203
  %v314 = vpack.c.b16 %v206, %v204
  %v315 = vpack.c.b16 %v209, %v207
  %v316 = vpack.c.b16 %v210, %v208
  %v317 = vpack.c.b16 %v213, %v211
  %v318 = vpack.c.b16 %v214, %v212
  %v319 = vpack.c.b16 %v217, %v215
  %v320 = vpack.c.b16 %v218, %v216
  %v321 = vpack.c.b16 %v221, %v219
  %v322 = vpack.c.b16 %v222, %v220
  %v323 = vpack.c.b16 %v225, %v223
  %v324 = vpack.c.b16 %v226, %v224
  %v325 = vpack.c.b16 %v229, %v227
  %v326 = vpack.c.b16 %v230, %v228
  %v327 = vpack.c.b16 %v233, %v231
  %v328 = vpack.c.b16 %v234, %v232
  %v329 = vpack.c.b16 %v237, %v235
  %v330 = vpack.c.b16 %v238, %v236
  %v331 = vpack.c.b16 %v241, %v239
  %v332 = vpack.c.b16 %v242, %v240
  %v333 = vpack.c.b16 %v245, %v243
  %v334 = vpack.c.b16 %v246, %v244
  %v335 = vpack.c.b16 %v249, %v247
  %v336 = vpack.c.b16 %v250, %v248
  %v337 = vpack.c.b16 %v253, %v251
  %v338 = vpack.c.b16 %v254, %v252
  %v339 = vpack.c.b16 %v257, %v255
  %v340 = vpack.c.b16 %v258, %v256
  %v341 = vpack.c.b16 %v261, %v259
  %v342 = vpack.c.b16 %v262, %v260
  %v343 = vpack.c.b16 %v265, %v263
  %v344 = vpack.c.b16 %v266, %v264
  %v345 = vpack.c.b16 %v269, %v267
  %v346 = vpack.c.b16 %v270, %v268
  %v347 = vpack.c.b16 %v273, %v271
  %v348 = vpack.c.b16 %v274, %v272
  %v349 = vpack.c.b16 %v277, %v275
  %v350 = vpack.c.b16 %v278, %v276
  %v351 = vpack.c.b16 %v281, %v279
  %v352 = vpack.c.b16 %v282, %v280
  %v353 = vpack.c.b16 %v285, %v283
  %v354 = vpack.c.b16 %v286, %v284
  %v355 = vpack.c.b16 %v289, %v287
  %v356 = vpack.c.b16 %v290, %v288
  %v357 = vpack.c.b16 %v293, %v291
  %v358 = vpack.c.b16 %v294, %v292
  %423 = vmatpush.bf16.msra.mxu0 %v309
  %424 = vmatpush.bf16.msra.mxu0 %v307
  %425 = vmatpush.bf16.msra.mxu0 %v305
  %426 = vmatpush.bf16.msra.mxu0 %v303
  %427 = vmatpush.bf16.msra.mxu0 %v301
  %428 = vmatpush.bf16.msra.mxu0 %v299
  %429 = vmatpush.bf16.msra.mxu0 %v297
  %430 = vmatpush.bf16.msra.mxu0 %v295
  %431 = vmatmul.bf16.gmra.mxu0 %v95
  %v432 = vpop.f32.mrf.mxu0
  %v433 = vadd.f32 %v89, %v432
  %v434 = vpop.f32.mrf.mxu0
  %435 = vdwg.mxu0
  %436 = vmatpush.bf16.msra.mxu0 %v325
  %437 = vmatpush.bf16.msra.mxu0 %v323
  %438 = vmatpush.bf16.msra.mxu0 %v321
  %439 = vmatpush.bf16.msra.mxu0 %v319
  %440 = vmatpush.bf16.msra.mxu0 %v317
  %441 = vmatpush.bf16.msra.mxu0 %v315
  %442 = vmatpush.bf16.msra.mxu0 %v313
  %443 = vmatpush.bf16.msra.mxu0 %v311
  %444 = vmatmul.bf16.gmra.mxu0 %v96
  %v445 = vpop.f32.mrf.mxu0
  %v446 = vadd.f32 %v433, %v445
  %v447 = vpop.f32.mrf.mxu0
  %448 = vdwg.mxu0
  %449 = vmatpush.bf16.msra.mxu0 %v341
  %450 = vmatpush.bf16.msra.mxu0 %v339
  %451 = vmatpush.bf16.msra.mxu0 %v337
  %452 = vmatpush.bf16.msra.mxu0 %v335
  %453 = vmatpush.bf16.msra.mxu0 %v333
  %454 = vmatpush.bf16.msra.mxu0 %v331
  %455 = vmatpush.bf16.msra.mxu0 %v329
  %456 = vmatpush.bf16.msra.mxu0 %v327
  %457 = vmatmul.bf16.gmra.mxu0 %v97
  %v458 = vpop.f32.mrf.mxu0
  %v459 = vadd.f32 %v446, %v458
  %v460 = vpop.f32.mrf.mxu0
  %461 = vdwg.mxu0
  %462 = vmatpush.bf16.msra.mxu0 %v357
  %463 = vmatpush.bf16.msra.mxu0 %v355
  %464 = vmatpush.bf16.msra.mxu0 %v353
  %465 = vmatpush.bf16.msra.mxu0 %v351
  %466 = vmatpush.bf16.msra.mxu0 %v349
  %467 = vmatpush.bf16.msra.mxu0 %v347
  %468 = vmatpush.bf16.msra.mxu0 %v345
  %469 = vmatpush.bf16.msra.mxu0 %v343
  %470 = vmatmul.bf16.gmra.mxu0 %v98
  %v471 = vpop.f32.mrf.mxu0
  %v472 = vadd.f32 %v459, %v471
  %v473 = vpop.f32.mrf.mxu0
  %474 = vdwg.mxu0
  %475 = vmatpush.bf16.msra.mxu0 %v310
  %476 = vmatpush.bf16.msra.mxu0 %v308
  %477 = vmatpush.bf16.msra.mxu0 %v306
  %478 = vmatpush.bf16.msra.mxu0 %v304
  %479 = vmatpush.bf16.msra.mxu0 %v302
  %480 = vmatpush.bf16.msra.mxu0 %v300
  %481 = vmatpush.bf16.msra.mxu0 %v298
  %482 = vmatpush.bf16.msra.mxu0 %v296
  %483 = vmatmul.bf16.gmra.mxu0 %v95
  %v484 = vpop.f32.mrf.mxu0
  %v485 = vadd.f32 %v90, %v484
  %v486 = vpop.f32.mrf.mxu0
  %487 = vdwg.mxu0
  %488 = vmatpush.bf16.msra.mxu0 %v326
  %489 = vmatpush.bf16.msra.mxu0 %v324
  %490 = vmatpush.bf16.msra.mxu0 %v322
  %491 = vmatpush.bf16.msra.mxu0 %v320
  %492 = vmatpush.bf16.msra.mxu0 %v318
  %493 = vmatpush.bf16.msra.mxu0 %v316
  %494 = vmatpush.bf16.msra.mxu0 %v314
  %495 = vmatpush.bf16.msra.mxu0 %v312
  %496 = vmatmul.bf16.gmra.mxu0 %v96
  %v497 = vpop.f32.mrf.mxu0
  %v498 = vadd.f32 %v485, %v497
  %v499 = vpop.f32.mrf.mxu0
  %500 = vdwg.mxu0
  %501 = vmatpush.bf16.msra.mxu0 %v342
  %502 = vmatpush.bf16.msra.mxu0 %v340
  %503 = vmatpush.bf16.msra.mxu0 %v338
  %504 = vmatpush.bf16.msra.mxu0 %v336
  %505 = vmatpush.bf16.msra.mxu0 %v334
  %506 = vmatpush.bf16.msra.mxu0 %v332
  %507 = vmatpush.bf16.msra.mxu0 %v330
  %508 = vmatpush.bf16.msra.mxu0 %v328
  %509 = vmatmul.bf16.gmra.mxu0 %v97
  %v510 = vpop.f32.mrf.mxu0
  %v511 = vadd.f32 %v498, %v510
  %v512 = vpop.f32.mrf.mxu0
  %513 = vdwg.mxu0
  %514 = vmatpush.bf16.msra.mxu0 %v358
  %515 = vmatpush.bf16.msra.mxu0 %v356
  %516 = vmatpush.bf16.msra.mxu0 %v354
  %517 = vmatpush.bf16.msra.mxu0 %v352
  %518 = vmatpush.bf16.msra.mxu0 %v350
  %519 = vmatpush.bf16.msra.mxu0 %v348
  %520 = vmatpush.bf16.msra.mxu0 %v346
  %521 = vmatpush.bf16.msra.mxu0 %v344
  %522 = vmatmul.bf16.gmra.mxu0 %v98
  %v523 = vpop.f32.mrf.mxu0
  %v524 = vadd.f32 %v511, %v523
  %v525 = vpop.f32.mrf.mxu0
  %526 = vdwg.mxu0
  %v527 = vsub.f32 0.0, %v472
  %v528 = vsub.f32 0.0, %v524
  %v529 = vmul.f32 %v527, 1.442695
  %v530 = vpow.pop %v529
  %v531 = vmul.f32 %v528, 1.442695
  %v532 = vpow.pop %v531
  %v533 = vadd.f32 %v530, 1.0
  %v534 = vadd.f32 %v532, 1.0
  %v535 = vrcp.pop %v533
  %v536 = vmul.f32 %v533, %v535
  %v537 = vsub.f32 1.0, %v536
  %v538 = vmul.f32 %v535, %v537
  %v539 = vadd.f32 %v535, %v538
  %vm540 = vweird.f32 %v533
  %vm541 = vweird.f32 %v535
  %vm542 = vmor %vm540, %vm541
  %v543 = vsel %vm542, %v535, %v539
  %v544 = vand.u32 2147483647, %v533
  %vm545 = vcmp.eq.f32.partialorder %v544, 8.507059e+37
  %v546 = vand.u32 %v533, 2147483648
  %v547 = vor.u32 1.1754944e-38, %v546
  %v548 = vsel %vm545, %v547, %v543
  %v549 = vmul.f32 1.0, %v548
  %v550 = vrcp.pop %v534
  %v551 = vmul.f32 %v534, %v550
  %v552 = vsub.f32 1.0, %v551
  %v553 = vmul.f32 %v550, %v552
  %v554 = vadd.f32 %v550, %v553
  %vm555 = vweird.f32 %v534
  %vm556 = vweird.f32 %v550
  %vm557 = vmor %vm555, %vm556
  %v558 = vsel %vm557, %v550, %v554
  %v559 = vand.u32 2147483647, %v534
  %vm560 = vcmp.eq.f32.partialorder %v559, 8.507059e+37
  %v561 = vand.u32 %v534, 2147483648
  %v562 = vor.u32 1.1754944e-38, %v561
  %v563 = vsel %vm560, %v562, %v558
  %v564 = vmul.f32 1.0, %v563
  %v565 = vmul.f32 %v472, %v549
  %v566 = vmul.f32 %v524, %v564
  %v567 = vpack.c.bf16 %v565, %v565
  %v568 = vpack.c.bf16 %v566, %v566
  %v569 = vld [vmem:[%s3] sm:$0xf]
  %v570 = vld [vmem:[%s3 + $0x4] sm:$0xf]
  %v571 = vld [vmem:[%s3 + $0x8] sm:$0xf]
  %v572 = vld [vmem:[%s3 + $0xc] sm:$0xf]
  %v573 = vld [vmem:[%s3 + $0x10] sm:$0xf]
  %v574 = vld [vmem:[%s3 + $0x14] sm:$0xf]
  %v575 = vld [vmem:[%s3 + $0x18] sm:$0xf]
  %v576 = vld [vmem:[%s3 + $0x1c] sm:$0xf]
  %v577 = vld [vmem:[%s3 + $0x20] sm:$0xf]
  %v578 = vld [vmem:[%s3 + $0x24] sm:$0xf]
  %v579 = vld [vmem:[%s3 + $0x28] sm:$0xf]
  %v580 = vld [vmem:[%s3 + $0x2c] sm:$0xf]
  %v581 = vld [vmem:[%s3 + $0x30] sm:$0xf]
  %v582 = vld [vmem:[%s3 + $0x34] sm:$0xf]
  %v583 = vld [vmem:[%s3 + $0x38] sm:$0xf]
  %v584 = vld [vmem:[%s3 + $0x3c] sm:$0xf]
  %v585 = vld [vmem:[%s3 + $0x40] sm:$0xf]
  %v586 = vld [vmem:[%s3 + $0x44] sm:$0xf]
  %v587 = vld [vmem:[%s3 + $0x48] sm:$0xf]
  %v588 = vld [vmem:[%s3 + $0x4c] sm:$0xf]
  %v589 = vld [vmem:[%s3 + $0x50] sm:$0xf]
  %v590 = vld [vmem:[%s3 + $0x54] sm:$0xf]
  %v591 = vld [vmem:[%s3 + $0x58] sm:$0xf]
  %v592 = vld [vmem:[%s3 + $0x5c] sm:$0xf]
  %v593 = vld [vmem:[%s3 + $0x60] sm:$0xf]
  %v594 = vld [vmem:[%s3 + $0x64] sm:$0xf]
  %v595 = vld [vmem:[%s3 + $0x68] sm:$0xf]
  %v596 = vld [vmem:[%s3 + $0x6c] sm:$0xf]
  %v597 = vld [vmem:[%s3 + $0x70] sm:$0xf]
  %v598 = vld [vmem:[%s3 + $0x74] sm:$0xf]
  %v599 = vld [vmem:[%s3 + $0x78] sm:$0xf]
  %v600 = vld [vmem:[%s3 + $0x7c] sm:$0xf]
  %v601 = vld [vmem:[#allocation2] sm:$0x1]
  %v603 = vperm.slane %v601, 0
  %v637 = vunpack.c.l.b16 %v569
  %v638 = vunpack.c.l.b16 %v570
  %v639 = vunpack.c.l.b16 %v571
  %v640 = vunpack.c.l.b16 %v572
  %v641 = vunpack.c.l.b16 %v573
  %v642 = vunpack.c.l.b16 %v574
  %v643 = vunpack.c.l.b16 %v575
  %v644 = vunpack.c.l.b16 %v576
  %v645 = vunpack.c.l.b16 %v577
  %v646 = vunpack.c.l.b16 %v578
  %v647 = vunpack.c.l.b16 %v579
  %v648 = vunpack.c.l.b16 %v580
  %v649 = vunpack.c.l.b16 %v581
  %v650 = vunpack.c.l.b16 %v582
  %v651 = vunpack.c.l.b16 %v583
  %v652 = vunpack.c.l.b16 %v584
  %v653 = vunpack.c.l.b16 %v585
  %v654 = vunpack.c.l.b16 %v586
  %v655 = vunpack.c.l.b16 %v587
  %v656 = vunpack.c.l.b16 %v588
  %v657 = vunpack.c.l.b16 %v589
  %v658 = vunpack.c.l.b16 %v590
  %v659 = vunpack.c.l.b16 %v591
  %v660 = vunpack.c.l.b16 %v592
  %v661 = vunpack.c.l.b16 %v593
  %v662 = vunpack.c.l.b16 %v594
  %v663 = vunpack.c.l.b16 %v595
  %v664 = vunpack.c.l.b16 %v596
  %v665 = vunpack.c.l.b16 %v597
  %v666 = vunpack.c.l.b16 %v598
  %v667 = vunpack.c.l.b16 %v599
  %v668 = vunpack.c.l.b16 %v600
  %v669 = vpack.c.b16 %v638, %v637
  %v670 = vpack.c.b16 %v640, %v639
  %v671 = vpack.c.b16 %v642, %v641
  %v672 = vpack.c.b16 %v644, %v643
  %v673 = vpack.c.b16 %v646, %v645
  %v674 = vpack.c.b16 %v648, %v647
  %v675 = vpack.c.b16 %v650, %v649
  %v676 = vpack.c.b16 %v652, %v651
  %v677 = vpack.c.b16 %v654, %v653
  %v678 = vpack.c.b16 %v656, %v655
  %v679 = vpack.c.b16 %v658, %v657
  %v680 = vpack.c.b16 %v660, %v659
  %v681 = vpack.c.b16 %v662, %v661
  %v682 = vpack.c.b16 %v664, %v663
  %v683 = vpack.c.b16 %v666, %v665
  %v684 = vpack.c.b16 %v668, %v667
  %701 = vmatpush.bf16.msra.mxu0 %v676
  %702 = vmatpush.bf16.msra.mxu0 %v675
  %703 = vmatpush.bf16.msra.mxu0 %v674
  %704 = vmatpush.bf16.msra.mxu0 %v673
  %705 = vmatpush.bf16.msra.mxu0 %v672
  %706 = vmatpush.bf16.msra.mxu0 %v671
  %707 = vmatpush.bf16.msra.mxu0 %v670
  %708 = vmatpush.bf16.msra.mxu0 %v669
  %709 = vmatmul.bf16.gmra.mxu0 %v567
  %v710 = vpop.f32.mrf.mxu0
  %v711 = vadd.f32 %v603, %v710
  %v712 = vpop.f32.mrf.mxu0
  %713 = vdwg.mxu0
  %714 = vmatpush.bf16.msra.mxu0 %v684
  %715 = vmatpush.bf16.msra.mxu0 %v683
  %716 = vmatpush.bf16.msra.mxu0 %v682
  %717 = vmatpush.bf16.msra.mxu0 %v681
  %718 = vmatpush.bf16.msra.mxu0 %v680
  %719 = vmatpush.bf16.msra.mxu0 %v679
  %720 = vmatpush.bf16.msra.mxu0 %v678
  %721 = vmatpush.bf16.msra.mxu0 %v677
  %722 = vmatmul.bf16.gmra.mxu0 %v568
  %v723 = vpop.f32.mrf.mxu0
  %v724 = vadd.f32 %v711, %v723
  %v725 = vpop.f32.mrf.mxu0
  %726 = vdwg.mxu0
  %v727 = vsub.f32 0.0, %v724
  %v728 = vmul.f32 %v727, 1.442695
  %v729 = vpow.pop %v728
  %v730 = vadd.f32 %v729, 1.0
  %v731 = vrcp.pop %v730
  %v732 = vmul.f32 %v730, %v731
  %v733 = vsub.f32 1.0, %v732
  %v734 = vmul.f32 %v731, %v733
  %v735 = vadd.f32 %v731, %v734
  %vm736 = vweird.f32 %v730
  %vm737 = vweird.f32 %v731
  %vm738 = vmor %vm736, %vm737
  %v739 = vsel %vm738, %v731, %v735
  %v740 = vand.u32 2147483647, %v730
  %vm741 = vcmp.eq.f32.partialorder %v740, 8.507059e+37
  %v742 = vand.u32 %v730, 2147483648
  %v743 = vor.u32 1.1754944e-38, %v742
  %v744 = vsel %vm741, %v743, %v739
  %v745 = vmul.f32 1.0, %v744
  %vm746 = vcmask 1024
  %747 = vst.msk [vmem:[%s5] sm:$0x3] %vm746, %v745
  // Predicated region
  $region22: #{bird_cnn_forward.7} parent=0 // pred_check
    _
  $region23: #{bird_cnn_forward.7} parent=0 // pred_check_branch
    %749 = sbr.rel (0) target = $region25
  $region24: #{bird_cnn_forward.7} parent=0 // pred_region
    _
  $region25: #{bird_cnn_forward.7} parent=0 // pred_fallthru
    _
  // Predicated region
  $region26: #{bird_cnn_forward.7} parent=0 // pred_check
    _
  $region27: #{bird_cnn_forward.7} parent=0 // pred_check_branch
    %751 = sbr.rel (0) target = $region29
  $region28: #{bird_cnn_forward.7} parent=0 // pred_region
    _
  $region29: #{bird_cnn_forward.7} parent=0 // pred_fallthru
    _

// kernel: bird_cnn_forward.6
$region0: #{bird_cnn_forward.6}
  #allocation0 [shape = 'u32[]', space=smem, size = 0x4, offset = 0x4, fixed_abs, tag = 'smem constant byte address 0x4 - core index']
  #allocation1 [shape = 'u32[72,128]{1,0:T(1,128)}', space=vmem, size = 0x9000, scoped, tag = 'internal scratch']
  %s0 = inlined_call_operand.vmem [shape: bf16[2,6,6,64], index: 0, kind: input, shape index: {}]
  %s1 = inlined_call_operand.vmem [shape: bf16[9,64,128], index: 1, kind: input, shape index: {}]
  %s2 = inlined_call_operand.vmem [shape: f32[1,128], index: 2, kind: input, shape index: {}]
  %s3 = inlined_call_operand.vmem [shape: bf16[2,2,2,128], index: 3, kind: output, shape index: {}]
  %s4 = sld [smem:[#allocation0]]
  $region22: #{bird_cnn_forward.6} parent=0
    _
  %s6 = ssub.s32 1, %s4
  %s7 = scalar_select 0, %s6, %s4
  // Predicated region
  $region2: #{bird_cnn_forward.6} parent=0 // pred_check
    _
  $region3: #{bird_cnn_forward.6} parent=0 // pred_check_branch
    %9 = sbr.rel (0) target = $region5
  $region4: #{bird_cnn_forward.6} parent=0 // pred_region
    _
  $region5: #{bird_cnn_forward.6} parent=0 // pred_fallthru
    _
  // Predicated region
  $region6: #{bird_cnn_forward.6} parent=0 // pred_check
    _
  $region7: #{bird_cnn_forward.6} parent=0 // pred_check_branch
    %11 = sbr.rel (0) target = $region9
  $region8: #{bird_cnn_forward.6} parent=0 // pred_region
    _
  $region9: #{bird_cnn_forward.6} parent=0 // pred_fallthru
    _
  // Predicated region
  $region10: #{bird_cnn_forward.6} parent=0 // pred_check
    _
  $region11: #{bird_cnn_forward.6} parent=0 // pred_check_branch
    %13 = sbr.rel (0) target = $region13
  $region12: #{bird_cnn_forward.6} parent=0 // pred_region
    _
  $region13: #{bird_cnn_forward.6} parent=0 // pred_fallthru
    _
  %v15 = vld [vmem:[%s0] sm:$0x3]
  %v16 = vld [vmem:[%s0 + $0x4] sm:$0x3]
  %v17 = vld [vmem:[%s0 + $0x8] sm:$0x3]
  %v18 = vld [vmem:[%s0 + $0xc] sm:$0x3]
  %v19 = vld [vmem:[%s0 + $0x18] sm:$0x3]
  %v20 = vld [vmem:[%s0 + $0x1c] sm:$0x3]
  %v21 = vld [vmem:[%s0 + $0x20] sm:$0x3]
  %v22 = vld [vmem:[%s0 + $0x24] sm:$0x3]
  %v23 = vld [vmem:[%s1] sm:$0xf]
  %v24 = vld [vmem:[%s1 + $0x4] sm:$0xf]
  %v25 = vld [vmem:[%s1 + $0x8] sm:$0xf]
  %v26 = vld [vmem:[%s1 + $0xc] sm:$0xf]
  %v27 = vld [vmem:[%s1 + $0x10] sm:$0xf]
  %v28 = vld [vmem:[%s1 + $0x14] sm:$0xf]
  %v29 = vld [vmem:[%s1 + $0x18] sm:$0xf]
  %v30 = vld [vmem:[%s1 + $0x1c] sm:$0xf]
  %v31 = vld [vmem:[%s0] sm:$0x7]
  %v32 = vld [vmem:[%s0 + $0x4] sm:$0x7]
  %v33 = vld [vmem:[%s0 + $0x8] sm:$0x7]
  %v34 = vld [vmem:[%s0 + $0xc] sm:$0x7]
  %v35 = vld [vmem:[%s0 + $0x18] sm:$0x7]
  %v36 = vld [vmem:[%s0 + $0x1c] sm:$0x7]
  %v37 = vld [vmem:[%s0 + $0x20] sm:$0x7]
  %v38 = vld [vmem:[%s0 + $0x24] sm:$0x7]
  %v47 = vrot.slane %v31, 2
  %v48 = vrot.slane %v32, 2
  %v49 = vrot.slane %v33, 2
  %v50 = vrot.slane %v34, 2
  %v51 = vrot.slane %v35, 2
  %v52 = vrot.slane %v36, 2
  %v53 = vrot.slane %v37, 2
  %v54 = vrot.slane %v38, 2
  %vm55 = vcmask 1041408
  %v58 = vsel %vm55, %v31, %v47
  %vm59 = vcmask 1043458
  %v60 = vsel %vm59, %v31, %v47
  %v62 = vrot.slane %v60, 2
  %v65 = vsel %vm55, %v32, %v48
  %v66 = vsel %vm59, %v32, %v48
  %v68 = vrot.slane %v66, 2
  %v71 = vsel %vm55, %v33, %v49
  %v72 = vsel %vm59, %v33, %v49
  %v74 = vrot.slane %v72, 2
  %v77 = vsel %vm55, %v34, %v50
  %v78 = vsel %vm59, %v34, %v50
  %v80 = vrot.slane %v78, 2
  %v83 = vsel %vm55, %v35, %v51
  %v84 = vsel %vm59, %v35, %v51
  %v86 = vrot.slane %v84, 2
  %v89 = vsel %vm55, %v36, %v52
  %v90 = vsel %vm59, %v36, %v52
  %v92 = vrot.slane %v90, 2
  %v95 = vsel %vm55, %v37, %v53
  %v96 = vsel %vm59, %v37, %v53
  %v98 = vrot.slane %v96, 2
  %v101 = vsel %vm55, %v38, %v54
  %v102 = vsel %vm59, %v38, %v54
  %v104 = vrot.slane %v102, 2
  %vm105 = vsmask.f32 1280
  %vm106 = vsmask.f32 3336
  %vm107 = vmor %vm105, %vm106
  %vm108 = vsmask.f32 5392
  %vm109 = vmor %vm107, %vm108
  %vm110 = vsmask.f32 7448
  %vm111 = vmor %vm109, %vm110
  %v112 = vshrl.u32 %v58, 16
  %v114 = vrot.slane %v112, 6
  %v115 = vshll.u32 %v58, 16
  %v117 = vrot.slane %v115, 7
  %v118 = vor.u32 %v114, %v117
  %v119 = vrot.slane %v118, 2
  %v121 = vshll.u32 %v62, 16
  %v123 = vrot.slane %v121, 7
  %v124 = vsel %vm111, %v119, %v123
  %v125 = vshrl.u32 %v65, 16
  %v127 = vrot.slane %v125, 6
  %v128 = vshll.u32 %v65, 16
  %v130 = vrot.slane %v128, 7
  %v131 = vor.u32 %v127, %v130
  %v132 = vrot.slane %v131, 2
  %v134 = vshll.u32 %v68, 16
  %v136 = vrot.slane %v134, 7
  %v137 = vsel %vm111, %v132, %v136
  %v138 = vshrl.u32 %v71, 16
  %v140 = vrot.slane %v138, 6
  %v141 = vshll.u32 %v71, 16
  %v143 = vrot.slane %v141, 7
  %v144 = vor.u32 %v140, %v143
  %v145 = vrot.slane %v144, 2
  %v147 = vshll.u32 %v74, 16
  %v149 = vrot.slane %v147, 7
  %v150 = vsel %vm111, %v145, %v149
  %v151 = vshrl.u32 %v77, 16
  %v153 = vrot.slane %v151, 6
  %v154 = vshll.u32 %v77, 16
  %v156 = vrot.slane %v154, 7
  %v157 = vor.u32 %v153, %v156
  %v158 = vrot.slane %v157, 2
  %v160 = vshll.u32 %v80, 16
  %v162 = vrot.slane %v160, 7
  %v163 = vsel %vm111, %v158, %v162
  %v164 = vshrl.u32 %v83, 16
  %v166 = vrot.slane %v164, 6
  %v167 = vshll.u32 %v83, 16
  %v169 = vrot.slane %v167, 7
  %v170 = vor.u32 %v166, %v169
  %v171 = vrot.slane %v170, 2
  %v173 = vshll.u32 %v86, 16
  %v175 = vrot.slane %v173, 7
  %v176 = vsel %vm111, %v171, %v175
  %v177 = vshrl.u32 %v89, 16
  %v179 = vrot.slane %v177, 6
  %v180 = vshll.u32 %v89, 16
  %v182 = vrot.slane %v180, 7
  %v183 = vor.u32 %v179, %v182
  %v184 = vrot.slane %v183, 2
  %v186 = vshll.u32 %v92, 16
  %v188 = vrot.slane %v186, 7
  %v189 = vsel %vm111, %v184, %v188
  %v190 = vshrl.u32 %v95, 16
  %v192 = vrot.slane %v190, 6
  %v193 = vshll.u32 %v95, 16
  %v195 = vrot.slane %v193, 7
  %v196 = vor.u32 %v192, %v195
  %v197 = vrot.slane %v196, 2
  %v199 = vshll.u32 %v98, 16
  %v201 = vrot.slane %v199, 7
  %v202 = vsel %vm111, %v197, %v201
  %v203 = vshrl.u32 %v101, 16
  %v205 = vrot.slane %v203, 6
  %v206 = vshll.u32 %v101, 16
  %v208 = vrot.slane %v206, 7
  %v209 = vor.u32 %v205, %v208
  %v210 = vrot.slane %v209, 2
  %v212 = vshll.u32 %v104, 16
  %v214 = vrot.slane %v212, 7
  %v215 = vsel %vm111, %v210, %v214
  %s216 = scalar_lea.vmem %s1, 32
  %v217 = vld [vmem:[%s216] sm:$0xf]
  %v218 = vld [vmem:[%s216 + $0x4] sm:$0xf]
  %v219 = vld [vmem:[%s216 + $0x8] sm:$0xf]
  %v220 = vld [vmem:[%s216 + $0xc] sm:$0xf]
  %v221 = vld [vmem:[%s216 + $0x10] sm:$0xf]
  %v222 = vld [vmem:[%s216 + $0x14] sm:$0xf]
  %v223 = vld [vmem:[%s216 + $0x18] sm:$0xf]
  %v224 = vld [vmem:[%s216 + $0x1c] sm:$0xf]
  %226 = vst [vmem:[#allocation1] ss:$4 sm:$0xff] %v124
  %s228 = scalar_lea.vmem [#allocation1], 1
  %229 = vst [vmem:[%s228] ss:$4 sm:$0xff] %v137
  %s231 = scalar_lea.vmem [#allocation1], 2
  %232 = vst [vmem:[%s231] ss:$4 sm:$0xff] %v150
  %s234 = scalar_lea.vmem [#allocation1], 3
  %235 = vst [vmem:[%s234] ss:$4 sm:$0xff] %v163
  %s237 = scalar_lea.vmem [#allocation1], 32
  %238 = vst [vmem:[%s237] ss:$4 sm:$0xff] %v176
  %s240 = scalar_lea.vmem [#allocation1], 33
  %241 = vst [vmem:[%s240] ss:$4 sm:$0xff] %v189
  %s243 = scalar_lea.vmem [#allocation1], 34
  %244 = vst [vmem:[%s243] ss:$4 sm:$0xff] %v202
  %s246 = scalar_lea.vmem [#allocation1], 35
  %247 = vst [vmem:[%s246] ss:$4 sm:$0xff] %v215
  %v248 = vld.sshfl [vmem:[#allocation1] sm:$0xff pattern:$0x73625140]
  %v249 = vld.sshfl [vmem:[#allocation1 + $0x20] sm:$0xff pattern:$0x73625140]
  %v258 = vunpack.c.l.b16 %v217
  %v259 = vunpack.c.l.b16 %v218
  %v260 = vunpack.c.l.b16 %v219
  %v261 = vunpack.c.l.b16 %v220
  %v262 = vunpack.c.l.b16 %v221
  %v263 = vunpack.c.l.b16 %v222
  %v264 = vunpack.c.l.b16 %v223
  %v265 = vunpack.c.l.b16 %v224
  %v266 = vpack.c.b16 %v259, %v258
  %v267 = vpack.c.b16 %v261, %v260
  %v268 = vpack.c.b16 %v263, %v262
  %v269 = vpack.c.b16 %v265, %v264
  %vm274 = vcmask 523264
  %v275 = vsel %vm274, %v248, 0
  %v277 = vsel %vm274, %v249, 0
  %279 = vmatpush.bf16.msra.mxu0 0
  %280 = vmatpush.bf16.msra.mxu0 0
  %281 = vmatpush.bf16.msra.mxu0 0
  %282 = vmatpush.bf16.msra.mxu0 0
  %283 = vmatpush.bf16.msra.mxu0 %v269
  %284 = vmatpush.bf16.msra.mxu0 %v268
  %285 = vmatpush.bf16.msra.mxu0 %v267
  %286 = vmatpush.bf16.msra.mxu0 %v266
  %287 = vmatmul.bf16.gmra.mxu0 %v275
  %v288 = vpop.f32.mrf.mxu0
  %v289 = vadd.f32 0.0, %v288
  %v290 = vpop.f32.mrf.mxu0
  %v291 = vadd.f32 0.0, %v290
  %292 = vmatmul.bf16.gmra.mxu0 %v277
  %v293 = vpop.f32.mrf.mxu0
  %v294 = vadd.f32 0.0, %v293
  %v295 = vpop.f32.mrf.mxu0
  %v296 = vadd.f32 0.0, %v295
  %297 = vdwg.mxu0
  %299 = vst [vmem:[#allocation1] ss:$4 sm:$0xff] %v15
  %s301 = scalar_lea.vmem [#allocation1], 1
  %302 = vst [vmem:[%s301] ss:$4 sm:$0xff] %v16
  %s304 = scalar_lea.vmem [#allocation1], 2
  %305 = vst [vmem:[%s304] ss:$4 sm:$0xff] %v17
  %s307 = scalar_lea.vmem [#allocation1], 3
  %308 = vst [vmem:[%s307] ss:$4 sm:$0xff] %v18
  %s310 = scalar_lea.vmem [#allocation1], 32
  %311 = vst [vmem:[%s310] ss:$4 sm:$0xff] %v19
  %s313 = scalar_lea.vmem [#allocation1], 33
  %314 = vst [vmem:[%s313] ss:$4 sm:$0xff] %v20
  %s316 = scalar_lea.vmem [#allocation1], 34
  %317 = vst [vmem:[%s316] ss:$4 sm:$0xff] %v21
  %s319 = scalar_lea.vmem [#allocation1], 35
  %320 = vst [vmem:[%s319] ss:$4 sm:$0xff] %v22
  %v321 = vld.sshfl [vmem:[#allocation1] sm:$0xff pattern:$0x73625140]
  %v322 = vld.sshfl [vmem:[#allocation1 + $0x20] sm:$0xff pattern:$0x73625140]
  %v331 = vunpack.c.l.b16 %v23
  %v332 = vunpack.c.l.b16 %v24
  %v333 = vunpack.c.l.b16 %v25
  %v334 = vunpack.c.l.b16 %v26
  %v335 = vunpack.c.l.b16 %v27
  %v336 = vunpack.c.l.b16 %v28
  %v337 = vunpack.c.l.b16 %v29
  %v338 = vunpack.c.l.b16 %v30
  %v339 = vpack.c.b16 %v332, %v331
  %v340 = vpack.c.b16 %v334, %v333
  %v341 = vpack.c.b16 %v336, %v335
  %v342 = vpack.c.b16 %v338, %v337
  %v347 = vsel %vm274, %v321, 0
  %v349 = vsel %vm274, %v322, 0
  %351 = vmatpush.bf16.msra.mxu0 0
  %352 = vmatpush.bf16.msra.mxu0 0
  %353 = vmatpush.bf16.msra.mxu0 0
  %354 = vmatpush.bf16.msra.mxu0 0
  %355 = vmatpush.bf16.msra.mxu0 %v342
  %356 = vmatpush.bf16.msra.mxu0 %v341
  %357 = vmatpush.bf16.msra.mxu0 %v340
  %358 = vmatpush.bf16.msra.mxu0 %v339
  %359 = vmatmul.bf16.gmra.mxu0 %v347
  %v360 = vpop.f32.mrf.mxu0
  %v361 = vadd.f32 %v289, %v360
  %v362 = vpop.f32.mrf.mxu0
  %v363 = vadd.f32 %v291, %v362
  %364 = vmatmul.bf16.gmra.mxu0 %v349
  %v365 = vpop.f32.mrf.mxu0
  %v366 = vadd.f32 %v294, %v365
  %v367 = vpop.f32.mrf.mxu0
  %v368 = vadd.f32 %v296, %v367
  %369 = vdwg.mxu0
  %v370 = vld [vmem:[%s0] sm:$0x6]
  %v371 = vld [vmem:[%s0 + $0x4] sm:$0x6]
  %v372 = vld [vmem:[%s0 + $0x8] sm:$0x6]
  %v373 = vld [vmem:[%s0 + $0xc] sm:$0x6]
  %v374 = vld [vmem:[%s0 + $0x18] sm:$0x6]
  %v375 = vld [vmem:[%s0 + $0x1c] sm:$0x6]
  %v376 = vld [vmem:[%s0 + $0x20] sm:$0x6]
  %v377 = vld [vmem:[%s0 + $0x24] sm:$0x6]
  %v386 = vrot.slane %v370, 2
  %v387 = vrot.slane %v371, 2
  %v388 = vrot.slane %v372, 2
  %v389 = vrot.slane %v373, 2
  %v390 = vrot.slane %v374, 2
  %v391 = vrot.slane %v375, 2
  %v392 = vrot.slane %v376, 2
  %v393 = vrot.slane %v377, 2
  %v396 = vsel %vm55, %v370, %v386
  %v398 = vsel %vm59, %v370, %v386
  %v400 = vrot.slane %v398, 2
  %v403 = vsel %vm55, %v371, %v387
  %v405 = vsel %vm59, %v371, %v387
  %v407 = vrot.slane %v405, 2
  %v410 = vsel %vm55, %v372, %v388
  %v412 = vsel %vm59, %v372, %v388
  %v414 = vrot.slane %v412, 2
  %v417 = vsel %vm55, %v373, %v389
  %v419 = vsel %vm59, %v373, %v389
  %v421 = vrot.slane %v419, 2
  %v424 = vsel %vm55, %v374, %v390
  %v426 = vsel %vm59, %v374, %v390
  %v428 = vrot.slane %v426, 2
  %v431 = vsel %vm55, %v375, %v391
  %v433 = vsel %vm59, %v375, %v391
  %v435 = vrot.slane %v433, 2
  %v438 = vsel %vm55, %v376, %v392
  %v440 = vsel %vm59, %v376, %v392
  %v442 = vrot.slane %v440, 2
  %v445 = vsel %vm55, %v377, %v393
  %v447 = vsel %vm59, %v377, %v393
  %v449 = vrot.slane %v447, 2
  %vm450 = vcmask 1040384
  %vm451 = vcmask 1042434
  %vm452 = vmor %vm450, %vm451
  %vm453 = vcmask 1044484
  %vm454 = vmor %vm452, %vm453
  %vm455 = vcmask 1046534
  %vm456 = vmor %vm454, %vm455
  %v457 = vrot.slane %v396, 7
  %v458 = vrot.slane %v457, 2
  %v459 = vrot.slane %v400, 7
  %v460 = vsel %vm456, %v458, %v459
  %v461 = vrot.slane %v403, 7
  %v462 = vrot.slane %v461, 2
  %v463 = vrot.slane %v407, 7
  %v464 = vsel %vm456, %v462, %v463
  %v465 = vrot.slane %v410, 7
  %v466 = vrot.slane %v465, 2
  %v467 = vrot.slane %v414, 7
  %v468 = vsel %vm456, %v466, %v467
  %v469 = vrot.slane %v417, 7
  %v470 = vrot.slane %v469, 2
  %v471 = vrot.slane %v421, 7
  %v472 = vsel %vm456, %v470, %v471
  %v473 = vrot.slane %v424, 7
  %v474 = vrot.slane %v473, 2
  %v475 = vrot.slane %v428, 7
  %v476 = vsel %vm456, %v474, %v475
  %v477 = vrot.slane %v431, 7
  %v478 = vrot.slane %v477, 2
  %v479 = vrot.slane %v435, 7
  %v480 = vsel %vm456, %v478, %v479
  %v481 = vrot.slane %v438, 7
  %v482 = vrot.slane %v481, 2
  %v483 = vrot.slane %v442, 7
  %v484 = vsel %vm456, %v482, %v483
  %v485 = vrot.slane %v445, 7
  %v486 = vrot.slane %v485, 2
  %v487 = vrot.slane %v449, 7
  %v488 = vsel %vm456, %v486, %v487
  %s489 = scalar_lea.vmem %s1, 64
  %v490 = vld [vmem:[%s489] sm:$0xf]
  %v491 = vld [vmem:[%s489 + $0x4] sm:$0xf]
  %v492 = vld [vmem:[%s489 + $0x8] sm:$0xf]
  %v493 = vld [vmem:[%s489 + $0xc] sm:$0xf]
  %v494 = vld [vmem:[%s489 + $0x10] sm:$0xf]
  %v495 = vld [vmem:[%s489 + $0x14] sm:$0xf]
  %v496 = vld [vmem:[%s489 + $0x18] sm:$0xf]
  %v497 = vld [vmem:[%s489 + $0x1c] sm:$0xf]
  %499 = vst [vmem:[#allocation1] ss:$4 sm:$0xff] %v460
  %s501 = scalar_lea.vmem [#allocation1], 1
  %502 = vst [vmem:[%s501] ss:$4 sm:$0xff] %v464
  %s504 = scalar_lea.vmem [#allocation1], 2
  %505 = vst [vmem:[%s504] ss:$4 sm:$0xff] %v468
  %s507 = scalar_lea.vmem [#allocation1], 3
  %508 = vst [vmem:[%s507] ss:$4 sm:$0xff] %v472
  %s510 = scalar_lea.vmem [#allocation1], 32
  %511 = vst [vmem:[%s510] ss:$4 sm:$0xff] %v476
  %s513 = scalar_lea.vmem [#allocation1], 33
  %514 = vst [vmem:[%s513] ss:$4 sm:$0xff] %v480
  %s516 = scalar_lea.vmem [#allocation1], 34
  %517 = vst [vmem:[%s516] ss:$4 sm:$0xff] %v484
  %s519 = scalar_lea.vmem [#allocation1], 35
  %520 = vst [vmem:[%s519] ss:$4 sm:$0xff] %v488
  %v521 = vld.sshfl [vmem:[#allocation1] sm:$0xff pattern:$0x73625140]
  %v522 = vld.sshfl [vmem:[#allocation1 + $0x20] sm:$0xff pattern:$0x73625140]
  %v531 = vunpack.c.l.b16 %v490
  %v532 = vunpack.c.l.b16 %v491
  %v533 = vunpack.c.l.b16 %v492
  %v534 = vunpack.c.l.b16 %v493
  %v535 = vunpack.c.l.b16 %v494
  %v536 = vunpack.c.l.b16 %v495
  %v537 = vunpack.c.l.b16 %v496
  %v538 = vunpack.c.l.b16 %v497
  %v539 = vpack.c.b16 %v532, %v531
  %v540 = vpack.c.b16 %v534, %v533
  %v541 = vpack.c.b16 %v536, %v535
  %v542 = vpack.c.b16 %v538, %v537
  %v547 = vsel %vm274, %v521, 0
  %v549 = vsel %vm274, %v522, 0
  %551 = vmatpush.bf16.msra.mxu0 0
  %552 = vmatpush.bf16.msra.mxu0 0
  %553 = vmatpush.bf16.msra.mxu0 0
  %554 = vmatpush.bf16.msra.mxu0 0
  %555 = vmatpush.bf16.msra.mxu0 %v542
  %556 = vmatpush.bf16.msra.mxu0 %v541
  %557 = vmatpush.bf16.msra.mxu0 %v540
  %558 = vmatpush.bf16.msra.mxu0 %v539
  %559 = vmatmul.bf16.gmra.mxu0 %v547
  %v560 = vpop.f32.mrf.mxu0
  %v561 = vadd.f32 0.0, %v560
  %v562 = vpop.f32.mrf.mxu0
  %v563 = vadd.f32 0.0, %v562
  %564 = vmatmul.bf16.gmra.mxu0 %v549
  %v565 = vpop.f32.mrf.mxu0
  %v566 = vadd.f32 0.0, %v565
  %v567 = vpop.f32.mrf.mxu0
  %v568 = vadd.f32 0.0, %v567
  %569 = vdwg.mxu0
  %v570 = vadd.f32 %v361, %v561
  %v571 = vadd.f32 %v363, %v563
  %v572 = vadd.f32 %v366, %v566
  %v573 = vadd.f32 %v368, %v568
  %s574 = scalar_lea.vmem %s0, 4
  %v575 = vld [vmem:[%s574] sm:$0x3]
  %v576 = vld [vmem:[%s574 + $0x4] sm:$0x3]
  %v577 = vld [vmem:[%s574 + $0x8] sm:$0x3]
  %v578 = vld [vmem:[%s574 + $0xc] sm:$0x3]
  %v579 = vld [vmem:[%s574 + $0x18] sm:$0x3]
  %v580 = vld [vmem:[%s574 + $0x1c] sm:$0x3]
  %v581 = vld [vmem:[%s574 + $0x20] sm:$0x3]
  %v582 = vld [vmem:[%s574 + $0x24] sm:$0x3]
  %s583 = scalar_lea.vmem %s1, 96
  %v584 = vld [vmem:[%s583] sm:$0xf]
  %v585 = vld [vmem:[%s583 + $0x4] sm:$0xf]
  %v586 = vld [vmem:[%s583 + $0x8] sm:$0xf]
  %v587 = vld [vmem:[%s583 + $0xc] sm:$0xf]
  %v588 = vld [vmem:[%s583 + $0x10] sm:$0xf]
  %v589 = vld [vmem:[%s583 + $0x14] sm:$0xf]
  %v590 = vld [vmem:[%s583 + $0x18] sm:$0xf]
  %v591 = vld [vmem:[%s583 + $0x1c] sm:$0xf]
  %593 = vst [vmem:[#allocation1] ss:$4 sm:$0xff] %v575
  %s595 = scalar_lea.vmem [#allocation1], 1
  %596 = vst [vmem:[%s595] ss:$4 sm:$0xff] %v576
  %s598 = scalar_lea.vmem [#allocation1], 2
  %599 = vst [vmem:[%s598] ss:$4 sm:$0xff] %v577
  %s601 = scalar_lea.vmem [#allocation1], 3
  %602 = vst [vmem:[%s601] ss:$4 sm:$0xff] %v578
  %s604 = scalar_lea.vmem [#allocation1], 32
  %605 = vst [vmem:[%s604] ss:$4 sm:$0xff] %v579
  %s607 = scalar_lea.vmem [#allocation1], 33
  %608 = vst [vmem:[%s607] ss:$4 sm:$0xff] %v580
  %s610 = scalar_lea.vmem [#allocation1], 34
  %611 = vst [vmem:[%s610] ss:$4 sm:$0xff] %v581
  %s613 = scalar_lea.vmem [#allocation1], 35
  %614 = vst [vmem:[%s613] ss:$4 sm:$0xff] %v582
  %v615 = vld.sshfl [vmem:[#allocation1] sm:$0xff pattern:$0x73625140]
  %v616 = vld.sshfl [vmem:[#allocation1 + $0x20] sm:$0xff pattern:$0x73625140]
  %v625 = vunpack.c.l.b16 %v584
  %v626 = vunpack.c.l.b16 %v585
  %v627 = vunpack.c.l.b16 %v586
  %v628 = vunpack.c.l.b16 %v587
  %v629 = vunpack.c.l.b16 %v588
  %v630 = vunpack.c.l.b16 %v589
  %v631 = vunpack.c.l.b16 %v590
  %v632 = vunpack.c.l.b16 %v591
  %v633 = vpack.c.b16 %v626, %v625
  %v634 = vpack.c.b16 %v628, %v627
  %v635 = vpack.c.b16 %v630, %v629
  %v636 = vpack.c.b16 %v632, %v631
  %v641 = vsel %vm274, %v615, 0
  %v643 = vsel %vm274, %v616, 0
  %645 = vmatpush.bf16.msra.mxu0 0
  %646 = vmatpush.bf16.msra.mxu0 0
  %647 = vmatpush.bf16.msra.mxu0 0
  %648 = vmatpush.bf16.msra.mxu0 0
  %649 = vmatpush.bf16.msra.mxu0 %v636
  %650 = vmatpush.bf16.msra.mxu0 %v635
  %651 = vmatpush.bf16.msra.mxu0 %v634
  %652 = vmatpush.bf16.msra.mxu0 %v633
  %653 = vmatmul.bf16.gmra.mxu0 %v641
  %v654 = vpop.f32.mrf.mxu0
  %v655 = vadd.f32 0.0, %v654
  %v656 = vpop.f32.mrf.mxu0
  %v657 = vadd.f32 0.0, %v656
  %658 = vmatmul.bf16.gmra.mxu0 %v643
  %v659 = vpop.f32.mrf.mxu0
  %v660 = vadd.f32 0.0, %v659
  %v661 = vpop.f32.mrf.mxu0
  %v662 = vadd.f32 0.0, %v661
  %663 = vdwg.mxu0
  %v664 = vadd.f32 %v570, %v655
  %v665 = vadd.f32 %v571, %v657
  %v666 = vadd.f32 %v572, %v660
  %v667 = vadd.f32 %v573, %v662
  %v668 = vld [vmem:[%s574] sm:$0x7]
  %v669 = vld [vmem:[%s574 + $0x4] sm:$0x7]
  %v670 = vld [vmem:[%s574 + $0x8] sm:$0x7]
  %v671 = vld [vmem:[%s574 + $0xc] sm:$0x7]
  %v672 = vld [vmem:[%s574 + $0x18] sm:$0x7]
  %v673 = vld [vmem:[%s574 + $0x1c] sm:$0x7]
  %v674 = vld [vmem:[%s574 + $0x20] sm:$0x7]
  %v675 = vld [vmem:[%s574 + $0x24] sm:$0x7]
  %v684 = vrot.slane %v668, 2
  %v685 = vrot.slane %v669, 2
  %v686 = vrot.slane %v670, 2
  %v687 = vrot.slane %v671, 2
  %v688 = vrot.slane %v672, 2
  %v689 = vrot.slane %v673, 2
  %v690 = vrot.slane %v674, 2
  %v691 = vrot.slane %v675, 2
  %v694 = vsel %vm55, %v668, %v684
  %v695 = vsel %vm59, %v668, %v684
  %v697 = vrot.slane %v695, 2
  %v700 = vsel %vm55, %v669, %v685
  %v701 = vsel %vm59, %v669, %v685
  %v703 = vrot.slane %v701, 2
  %v706 = vsel %vm55, %v670, %v686
  %v707 = vsel %vm59, %v670, %v686
  %v709 = vrot.slane %v707, 2
  %v712 = vsel %vm55, %v671, %v687
  %v713 = vsel %vm59, %v671, %v687
  %v715 = vrot.slane %v713, 2
  %v718 = vsel %vm55, %v672, %v688
  %v719 = vsel %vm59, %v672, %v688
  %v721 = vrot.slane %v719, 2
  %v724 = vsel %vm55, %v673, %v689
  %v725 = vsel %vm59, %v673, %v689
  %v727 = vrot.slane %v725, 2
  %v730 = vsel %vm55, %v674, %v690
  %v731 = vsel %vm59, %v674, %v690
  %v733 = vrot.slane %v731, 2
  %v736 = vsel %vm55, %v675, %v691
  %v737 = vsel %vm59, %v675, %v691
  %v739 = vrot.slane %v737, 2
  %v740 = vshrl.u32 %v694, 16
  %v742 = vrot.slane %v740, 6
  %v743 = vshll.u32 %v694, 16
  %v745 = vrot.slane %v743, 7
  %v746 = vor.u32 %v742, %v745
  %v747 = vrot.slane %v746, 2
  %v749 = vshll.u32 %v697, 16
  %v751 = vrot.slane %v749, 7
  %v752 = vsel %vm111, %v747, %v751
  %v753 = vshrl.u32 %v700, 16
  %v755 = vrot.slane %v753, 6
  %v756 = vshll.u32 %v700, 16
  %v758 = vrot.slane %v756, 7
  %v759 = vor.u32 %v755, %v758
  %v760 = vrot.slane %v759, 2
  %v762 = vshll.u32 %v703, 16
  %v764 = vrot.slane %v762, 7
  %v765 = vsel %vm111, %v760, %v764
  %v766 = vshrl.u32 %v706, 16
  %v768 = vrot.slane %v766, 6
  %v769 = vshll.u32 %v706, 16
  %v771 = vrot.slane %v769, 7
  %v772 = vor.u32 %v768, %v771
  %v773 = vrot.slane %v772, 2
  %v775 = vshll.u32 %v709, 16
  %v777 = vrot.slane %v775, 7
  %v778 = vsel %vm111, %v773, %v777
  %v779 = vshrl.u32 %v712, 16
  %v781 = vrot.slane %v779, 6
  %v782 = vshll.u32 %v712, 16
  %v784 = vrot.slane %v782, 7
  %v785 = vor.u32 %v781, %v784
  %v786 = vrot.slane %v785, 2
  %v788 = vshll.u32 %v715, 16
  %v790 = vrot.slane %v788, 7
  %v791 = vsel %vm111, %v786, %v790
  %v792 = vshrl.u32 %v718, 16
  %v794 = vrot.slane %v792, 6
  %v795 = vshll.u32 %v718, 16
  %v797 = vrot.slane %v795, 7
  %v798 = vor.u32 %v794, %v797
  %v799 = vrot.slane %v798, 2
  %v801 = vshll.u32 %v721, 16
  %v803 = vrot.slane %v801, 7
  %v804 = vsel %vm111, %v799, %v803
  %v805 = vshrl.u32 %v724, 16
  %v807 = vrot.slane %v805, 6
  %v808 = vshll.u32 %v724, 16
  %v810 = vrot.slane %v808, 7
  %v811 = vor.u32 %v807, %v810
  %v812 = vrot.slane %v811, 2
  %v814 = vshll.u32 %v727, 16
  %v816 = vrot.slane %v814, 7
  %v817 = vsel %vm111, %v812, %v816
  %v818 = vshrl.u32 %v730, 16
  %v820 = vrot.slane %v818, 6
  %v821 = vshll.u32 %v730, 16
  %v823 = vrot.slane %v821, 7
  %v824 = vor.u32 %v820, %v823
  %v825 = vrot.slane %v824, 2
  %v827 = vshll.u32 %v733, 16
  %v829 = vrot.slane %v827, 7
  %v830 = vsel %vm111, %v825, %v829
  %v831 = vshrl.u32 %v736, 16
  %v833 = vrot.slane %v831, 6
  %v834 = vshll.u32 %v736, 16
  %v836 = vrot.slane %v834, 7
  %v837 = vor.u32 %v833, %v836
  %v838 = vrot.slane %v837, 2
  %v840 = vshll.u32 %v739, 16
  %v842 = vrot.slane %v840, 7
  %v843 = vsel %vm111, %v838, %v842
  %s844 = scalar_lea.vmem %s1, 128
  %v845 = vld [vmem:[%s844] sm:$0xf]
  %v846 = vld [vmem:[%s844 + $0x4] sm:$0xf]
  %v847 = vld [vmem:[%s844 + $0x8] sm:$0xf]
  %v848 = vld [vmem:[%s844 + $0xc] sm:$0xf]
  %v849 = vld [vmem:[%s844 + $0x10] sm:$0xf]
  %v850 = vld [vmem:[%s844 + $0x14] sm:$0xf]
  %v851 = vld [vmem:[%s844 + $0x18] sm:$0xf]
  %v852 = vld [vmem:[%s844 + $0x1c] sm:$0xf]
  %854 = vst [vmem:[#allocation1] ss:$4 sm:$0xff] %v752
  %s856 = scalar_lea.vmem [#allocation1], 1
  %857 = vst [vmem:[%s856] ss:$4 sm:$0xff] %v765
  %s859 = scalar_lea.vmem [#allocation1], 2
  %860 = vst [vmem:[%s859] ss:$4 sm:$0xff] %v778
  %s862 = scalar_lea.vmem [#allocation1], 3
  %863 = vst [vmem:[%s862] ss:$4 sm:$0xff] %v791
  %s865 = scalar_lea.vmem [#allocation1], 32
  %866 = vst [vmem:[%s865] ss:$4 sm:$0xff] %v804
  %s868 = scalar_lea.vmem [#allocation1], 33
  %869 = vst [vmem:[%s868] ss:$4 sm:$0xff] %v817
  %s871 = scalar_lea.vmem [#allocation1], 34
  %872 = vst [vmem:[%s871] ss:$4 sm:$0xff] %v830
  %s874 = scalar_lea.vmem [#allocation1], 35
  %875 = vst [vmem:[%s874] ss:$4 sm:$0xff] %v843
  %v876 = vld.sshfl [vmem:[#allocation1] sm:$0xff pattern:$0x73625140]
  %v877 = vld.sshfl [vmem:[#allocation1 + $0x20] sm:$0xff pattern:$0x73625140]
  %v886 = vunpack.c.l.b16 %v845
  %v887 = vunpack.c.l.b16 %v846
  %v888 = vunpack.c.l.b16 %v847
  %v889 = vunpack.c.l.b16 %v848
  %v890 = vunpack.c.l.b16 %v849
  %v891 = vunpack.c.l.b16 %v850
  %v892 = vunpack.c.l.b16 %v851
  %v893 = vunpack.c.l.b16 %v852
  %v894 = vpack.c.b16 %v887, %v886
  %v895 = vpack.c.b16 %v889, %v888
  %v896 = vpack.c.b16 %v891, %v890
  %v897 = vpack.c.b16 %v893, %v892
  %v902 = vsel %vm274, %v876, 0
  %v904 = vsel %vm274, %v877, 0
  %906 = vmatpush.bf16.msra.mxu0 0
  %907 = vmatpush.bf16.msra.mxu0 0
  %908 = vmatpush.bf16.msra.mxu0 0
  %909 = vmatpush.bf16.msra.mxu0 0
  %910 = vmatpush.bf16.msra.mxu0 %v897
  %911 = vmatpush.bf16.msra.mxu0 %v896
  %912 = vmatpush.bf16.msra.mxu0 %v895
  %913 = vmatpush.bf16.msra.mxu0 %v894
  %914 = vmatmul.bf16.gmra.mxu0 %v902
  %v915 = vpop.f32.mrf.mxu0
  %v916 = vadd.f32 0.0, %v915
  %v917 = vpop.f32.mrf.mxu0
  %v918 = vadd.f32 0.0, %v917
  %919 = vmatmul.bf16.gmra.mxu0 %v904
  %v920 = vpop.f32.mrf.mxu0
  %v921 = vadd.f32 0.0, %v920
  %v922 = vpop.f32.mrf.mxu0
  %v923 = vadd.f32 0.0, %v922
  %924 = vdwg.mxu0
  %v925 = vadd.f32 %v664, %v916
  %v926 = vadd.f32 %v665, %v918
  %v927 = vadd.f32 %v666, %v921
  %v928 = vadd.f32 %v667, %v923
  %v929 = vld [vmem:[%s574] sm:$0x6]
  %v930 = vld [vmem:[%s574 + $0x4] sm:$0x6]
  %v931 = vld [vmem:[%s574 + $0x8] sm:$0x6]
  %v932 = vld [vmem:[%s574 + $0xc] sm:$0x6]
  %v933 = vld [vmem:[%s574 + $0x18] sm:$0x6]
  %v934 = vld [vmem:[%s574 + $0x1c] sm:$0x6]
  %v935 = vld [vmem:[%s574 + $0x20] sm:$0x6]
  %v936 = vld [vmem:[%s574 + $0x24] sm:$0x6]
  %v945 = vrot.slane %v929, 2
  %v946 = vrot.slane %v930, 2
  %v947 = vrot.slane %v931, 2
  %v948 = vrot.slane %v932, 2
  %v949 = vrot.slane %v933, 2
  %v950 = vrot.slane %v934, 2
  %v951 = vrot.slane %v935, 2
  %v952 = vrot.slane %v936, 2
  %v955 = vsel %vm55, %v929, %v945
  %v957 = vsel %vm59, %v929, %v945
  %v959 = vrot.slane %v957, 2
  %v962 = vsel %vm55, %v930, %v946
  %v964 = vsel %vm59, %v930, %v946
  %v966 = vrot.slane %v964, 2
  %v969 = vsel %vm55, %v931, %v947
  %v971 = vsel %vm59, %v931, %v947
  %v973 = vrot.slane %v971, 2
  %v976 = vsel %vm55, %v932, %v948
  %v978 = vsel %vm59, %v932, %v948
  %v980 = vrot.slane %v978, 2
  %v983 = vsel %vm55, %v933, %v949
  %v985 = vsel %vm59, %v933, %v949
  %v987 = vrot.slane %v985, 2
  %v990 = vsel %vm55, %v934, %v950
  %v992 = vsel %vm59, %v934, %v950
  %v994 = vrot.slane %v992, 2
  %v997 = vsel %vm55, %v935, %v951
  %v999 = vsel %vm59, %v935, %v951
  %v1001 = vrot.slane %v999, 2
  %v1004 = vsel %vm55, %v936, %v952
  %v1006 = vsel %vm59, %v936, %v952
  %v1008 = vrot.slane %v1006, 2
  %v1009 = vrot.slane %v955, 7
  %v1010 = vrot.slane %v1009, 2
  %v1011 = vrot.slane %v959, 7
  %v1012 = vsel %vm456, %v1010, %v1011
  %v1013 = vrot.slane %v962, 7
  %v1014 = vrot.slane %v1013, 2
  %v1015 = vrot.slane %v966, 7
  %v1016 = vsel %vm456, %v1014, %v1015
  %v1017 = vrot.slane %v969, 7
  %v1018 = vrot.slane %v1017, 2
  %v1019 = vrot.slane %v973, 7
  %v1020 = vsel %vm456, %v1018, %v1019
  %v1021 = vrot.slane %v976, 7
  %v1022 = vrot.slane %v1021, 2
  %v1023 = vrot.slane %v980, 7
  %v1024 = vsel %vm456, %v1022, %v1023
  %v1025 = vrot.slane %v983, 7
  %v1026 = vrot.slane %v1025, 2
  %v1027 = vrot.slane %v987, 7
  %v1028 = vsel %vm456, %v1026, %v1027
  %v1029 = vrot.slane %v990, 7
  %v1030 = vrot.slane %v1029, 2
  %v1031 = vrot.slane %v994, 7
  %v1032 = vsel %vm456, %v1030, %v1031
  %v1033 = vrot.slane %v997, 7
  %v1034 = vrot.slane %v1033, 2
  %v1035 = vrot.slane %v1001, 7
  %v1036 = vsel %vm456, %v1034, %v1035
  %v1037 = vrot.slane %v1004, 7
  %v1038 = vrot.slane %v1037, 2
  %v1039 = vrot.slane %v1008, 7
  %v1040 = vsel %vm456, %v1038, %v1039
  %s1041 = scalar_lea.vmem %s1, 160
  %v1042 = vld [vmem:[%s1041] sm:$0xf]
  %v1043 = vld [vmem:[%s1041 + $0x4] sm:$0xf]
  %v1044 = vld [vmem:[%s1041 + $0x8] sm:$0xf]
  %v1045 = vld [vmem:[%s1041 + $0xc] sm:$0xf]
  %v1046 = vld [vmem:[%s1041 + $0x10] sm:$0xf]
  %v1047 = vld [vmem:[%s1041 + $0x14] sm:$0xf]
  %v1048 = vld [vmem:[%s1041 + $0x18] sm:$0xf]
  %v1049 = vld [vmem:[%s1041 + $0x1c] sm:$0xf]
  %1051 = vst [vmem:[#allocation1] ss:$4 sm:$0xff] %v1012
  %s1053 = scalar_lea.vmem [#allocation1], 1
  %1054 = vst [vmem:[%s1053] ss:$4 sm:$0xff] %v1016
  %s1056 = scalar_lea.vmem [#allocation1], 2
  %1057 = vst [vmem:[%s1056] ss:$4 sm:$0xff] %v1020
  %s1059 = scalar_lea.vmem [#allocation1], 3
  %1060 = vst [vmem:[%s1059] ss:$4 sm:$0xff] %v1024
  %s1062 = scalar_lea.vmem [#allocation1], 32
  %1063 = vst [vmem:[%s1062] ss:$4 sm:$0xff] %v1028
  %s1065 = scalar_lea.vmem [#allocation1], 33
  %1066 = vst [vmem:[%s1065] ss:$4 sm:$0xff] %v1032
  %s1068 = scalar_lea.vmem [#allocation1], 34
  %1069 = vst [vmem:[%s1068] ss:$4 sm:$0xff] %v1036
  %s1071 = scalar_lea.vmem [#allocation1], 35
  %1072 = vst [vmem:[%s1071] ss:$4 sm:$0xff] %v1040
  %v1073 = vld.sshfl [vmem:[#allocation1] sm:$0xff pattern:$0x73625140]
  %v1074 = vld.sshfl [vmem:[#allocation1 + $0x20] sm:$0xff pattern:$0x73625140]
  %v1083 = vunpack.c.l.b16 %v1042
  %v1084 = vunpack.c.l.b16 %v1043
  %v1085 = vunpack.c.l.b16 %v1044
  %v1086 = vunpack.c.l.b16 %v1045
  %v1087 = vunpack.c.l.b16 %v1046
  %v1088 = vunpack.c.l.b16 %v1047
  %v1089 = vunpack.c.l.b16 %v1048
  %v1090 = vunpack.c.l.b16 %v1049
  %v1091 = vpack.c.b16 %v1084, %v1083
  %v1092 = vpack.c.b16 %v1086, %v1085
  %v1093 = vpack.c.b16 %v1088, %v1087
  %v1094 = vpack.c.b16 %v1090, %v1089
  %v1099 = vsel %vm274, %v1073, 0
  %v1101 = vsel %vm274, %v1074, 0
  %1103 = vmatpush.bf16.msra.mxu0 0
  %1104 = vmatpush.bf16.msra.mxu0 0
  %1105 = vmatpush.bf16.msra.mxu0 0
  %1106 = vmatpush.bf16.msra.mxu0 0
  %1107 = vmatpush.bf16.msra.mxu0 %v1094
  %1108 = vmatpush.bf16.msra.mxu0 %v1093
  %1109 = vmatpush.bf16.msra.mxu0 %v1092
  %1110 = vmatpush.bf16.msra.mxu0 %v1091
  %1111 = vmatmul.bf16.gmra.mxu0 %v1099
  %v1112 = vpop.f32.mrf.mxu0
  %v1113 = vadd.f32 0.0, %v1112
  %v1114 = vpop.f32.mrf.mxu0
  %v1115 = vadd.f32 0.0, %v1114
  %1116 = vmatmul.bf16.gmra.mxu0 %v1101
  %v1117 = vpop.f32.mrf.mxu0
  %v1118 = vadd.f32 0.0, %v1117
  %v1119 = vpop.f32.mrf.mxu0
  %v1120 = vadd.f32 0.0, %v1119
  %1121 = vdwg.mxu0
  %v1122 = vadd.f32 %v925, %v1113
  %v1123 = vadd.f32 %v926, %v1115
  %v1124 = vadd.f32 %v927, %v1118
  %v1125 = vadd.f32 %v928, %v1120
  %s1126 = scalar_lea.vmem %s0, 8
  %v1127 = vld [vmem:[%s1126] sm:$0x3]
  %v1128 = vld [vmem:[%s1126 + $0x4] sm:$0x3]
  %v1129 = vld [vmem:[%s1126 + $0x8] sm:$0x3]
  %v1130 = vld [vmem:[%s1126 + $0xc] sm:$0x3]
  %v1131 = vld [vmem:[%s1126 + $0x18] sm:$0x3]
  %v1132 = vld [vmem:[%s1126 + $0x1c] sm:$0x3]
  %v1133 = vld [vmem:[%s1126 + $0x20] sm:$0x3]
  %v1134 = vld [vmem:[%s1126 + $0x24] sm:$0x3]
  %s1135 = scalar_lea.vmem %s1, 192
  %v1136 = vld [vmem:[%s1135] sm:$0xf]
  %v1137 = vld [vmem:[%s1135 + $0x4] sm:$0xf]
  %v1138 = vld [vmem:[%s1135 + $0x8] sm:$0xf]
  %v1139 = vld [vmem:[%s1135 + $0xc] sm:$0xf]
  %v1140 = vld [vmem:[%s1135 + $0x10] sm:$0xf]
  %v1141 = vld [vmem:[%s1135 + $0x14] sm:$0xf]
  %v1142 = vld [vmem:[%s1135 + $0x18] sm:$0xf]
  %v1143 = vld [vmem:[%s1135 + $0x1c] sm:$0xf]
  %1145 = vst [vmem:[#allocation1] ss:$4 sm:$0xff] %v1127
  %s1147 = scalar_lea.vmem [#allocation1], 1
  %1148 = vst [vmem:[%s1147] ss:$4 sm:$0xff] %v1128
  %s1150 = scalar_lea.vmem [#allocation1], 2
  %1151 = vst [vmem:[%s1150] ss:$4 sm:$0xff] %v1129
  %s1153 = scalar_lea.vmem [#allocation1], 3
  %1154 = vst [vmem:[%s1153] ss:$4 sm:$0xff] %v1130
  %s1156 = scalar_lea.vmem [#allocation1], 32
  %1157 = vst [vmem:[%s1156] ss:$4 sm:$0xff] %v1131
  %s1159 = scalar_lea.vmem [#allocation1], 33
  %1160 = vst [vmem:[%s1159] ss:$4 sm:$0xff] %v1132
  %s1162 = scalar_lea.vmem [#allocation1], 34
  %1163 = vst [vmem:[%s1162] ss:$4 sm:$0xff] %v1133
  %s1165 = scalar_lea.vmem [#allocation1], 35
  %1166 = vst [vmem:[%s1165] ss:$4 sm:$0xff] %v1134
  %v1167 = vld.sshfl [vmem:[#allocation1] sm:$0xff pattern:$0x73625140]
  %v1168 = vld.sshfl [vmem:[#allocation1 + $0x20] sm:$0xff pattern:$0x73625140]
  %v1177 = vunpack.c.l.b16 %v1136
  %v1178 = vunpack.c.l.b16 %v1137
  %v1179 = vunpack.c.l.b16 %v1138
  %v1180 = vunpack.c.l.b16 %v1139
  %v1181 = vunpack.c.l.b16 %v1140
  %v1182 = vunpack.c.l.b16 %v1141
  %v1183 = vunpack.c.l.b16 %v1142
  %v1184 = vunpack.c.l.b16 %v1143
  %v1185 = vpack.c.b16 %v1178, %v1177
  %v1186 = vpack.c.b16 %v1180, %v1179
  %v1187 = vpack.c.b16 %v1182, %v1181
  %v1188 = vpack.c.b16 %v1184, %v1183
  %v1193 = vsel %vm274, %v1167, 0
  %v1195 = vsel %vm274, %v1168, 0
  %1197 = vmatpush.bf16.msra.mxu0 0
  %1198 = vmatpush.bf16.msra.mxu0 0
  %1199 = vmatpush.bf16.msra.mxu0 0
  %1200 = vmatpush.bf16.msra.mxu0 0
  %1201 = vmatpush.bf16.msra.mxu0 %v1188
  %1202 = vmatpush.bf16.msra.mxu0 %v1187
  %1203 = vmatpush.bf16.msra.mxu0 %v1186
  %1204 = vmatpush.bf16.msra.mxu0 %v1185
  %1205 = vmatmul.bf16.gmra.mxu0 %v1193
  %v1206 = vpop.f32.mrf.mxu0
  %v1207 = vadd.f32 0.0, %v1206
  %v1208 = vpop.f32.mrf.mxu0
  %v1209 = vadd.f32 0.0, %v1208
  %1210 = vmatmul.bf16.gmra.mxu0 %v1195
  %v1211 = vpop.f32.mrf.mxu0
  %v1212 = vadd.f32 0.0, %v1211
  %v1213 = vpop.f32.mrf.mxu0
  %v1214 = vadd.f32 0.0, %v1213
  %1215 = vdwg.mxu0
  %v1216 = vadd.f32 %v1122, %v1207
  %v1217 = vadd.f32 %v1123, %v1209
  %v1218 = vadd.f32 %v1124, %v1212
  %v1219 = vadd.f32 %v1125, %v1214
  %v1220 = vld [vmem:[%s1126] sm:$0x7]
  %v1221 = vld [vmem:[%s1126 + $0x4] sm:$0x7]
  %v1222 = vld [vmem:[%s1126 + $0x8] sm:$0x7]
  %v1223 = vld [vmem:[%s1126 + $0xc] sm:$0x7]
  %v1224 = vld [vmem:[%s1126 + $0x18] sm:$0x7]
  %v1225 = vld [vmem:[%s1126 + $0x1c] sm:$0x7]
  %v1226 = vld [vmem:[%s1126 + $0x20] sm:$0x7]
  %v1227 = vld [vmem:[%s1126 + $0x24] sm:$0x7]
  %v1236 = vrot.slane %v1220, 2
  %v1237 = vrot.slane %v1221, 2
  %v1238 = vrot.slane %v1222, 2
  %v1239 = vrot.slane %v1223, 2
  %v1240 = vrot.slane %v1224, 2
  %v1241 = vrot.slane %v1225, 2
  %v1242 = vrot.slane %v1226, 2
  %v1243 = vrot.slane %v1227, 2
  %v1246 = vsel %vm55, %v1220, %v1236
  %v1247 = vsel %vm59, %v1220, %v1236
  %v1249 = vrot.slane %v1247, 2
  %v1252 = vsel %vm55, %v1221, %v1237
  %v1253 = vsel %vm59, %v1221, %v1237
  %v1255 = vrot.slane %v1253, 2
  %v1258 = vsel %vm55, %v1222, %v1238
  %v1259 = vsel %vm59, %v1222, %v1238
  %v1261 = vrot.slane %v1259, 2
  %v1264 = vsel %vm55, %v1223, %v1239
  %v1265 = vsel %vm59, %v1223, %v1239
  %v1267 = vrot.slane %v1265, 2
  %v1270 = vsel %vm55, %v1224, %v1240
  %v1271 = vsel %vm59, %v1224, %v1240
  %v1273 = vrot.slane %v1271, 2
  %v1276 = vsel %vm55, %v1225, %v1241
  %v1277 = vsel %vm59, %v1225, %v1241
  %v1279 = vrot.slane %v1277, 2
  %v1282 = vsel %vm55, %v1226, %v1242
  %v1283 = vsel %vm59, %v1226, %v1242
  %v1285 = vrot.slane %v1283, 2
  %v1288 = vsel %vm55, %v1227, %v1243
  %v1289 = vsel %vm59, %v1227, %v1243
  %v1291 = vrot.slane %v1289, 2
  %v1292 = vshrl.u32 %v1246, 16
  %v1294 = vrot.slane %v1292, 6
  %v1295 = vshll.u32 %v1246, 16
  %v1297 = vrot.slane %v1295, 7
  %v1298 = vor.u32 %v1294, %v1297
  %v1299 = vrot.slane %v1298, 2
  %v1301 = vshll.u32 %v1249, 16
  %v1303 = vrot.slane %v1301, 7
  %v1304 = vsel %vm111, %v1299, %v1303
  %v1305 = vshrl.u32 %v1252, 16
  %v1307 = vrot.slane %v1305, 6
  %v1308 = vshll.u32 %v1252, 16
  %v1310 = vrot.slane %v1308, 7
  %v1311 = vor.u32 %v1307, %v1310
  %v1312 = vrot.slane %v1311, 2
  %v1314 = vshll.u32 %v1255, 16
  %v1316 = vrot.slane %v1314, 7
  %v1317 = vsel %vm111, %v1312, %v1316
  %v1318 = vshrl.u32 %v1258, 16
  %v1320 = vrot.slane %v1318, 6
  %v1321 = vshll.u32 %v1258, 16
  %v1323 = vrot.slane %v1321, 7
  %v1324 = vor.u32 %v1320, %v1323
  %v1325 = vrot.slane %v1324, 2
  %v1327 = vshll.u32 %v1261, 16
  %v1329 = vrot.slane %v1327, 7
  %v1330 = vsel %vm111, %v1325, %v1329
  %v1331 = vshrl.u32 %v1264, 16
  %v1333 = vrot.slane %v1331, 6
  %v1334 = vshll.u32 %v1264, 16
  %v1336 = vrot.slane %v1334, 7
  %v1337 = vor.u32 %v1333, %v1336
  %v1338 = vrot.slane %v1337, 2
  %v1340 = vshll.u32 %v1267, 16
  %v1342 = vrot.slane %v1340, 7
  %v1343 = vsel %vm111, %v1338, %v1342
  %v1344 = vshrl.u32 %v1270, 16
  %v1346 = vrot.slane %v1344, 6
  %v1347 = vshll.u32 %v1270, 16
  %v1349 = vrot.slane %v1347, 7
  %v1350 = vor.u32 %v1346, %v1349
  %v1351 = vrot.slane %v1350, 2
  %v1353 = vshll.u32 %v1273, 16
  %v1355 = vrot.slane %v1353, 7
  %v1356 = vsel %vm111, %v1351, %v1355
  %v1357 = vshrl.u32 %v1276, 16
  %v1359 = vrot.slane %v1357, 6
  %v1360 = vshll.u32 %v1276, 16
  %v1362 = vrot.slane %v1360, 7
  %v1363 = vor.u32 %v1359, %v1362
  %v1364 = vrot.slane %v1363, 2
  %v1366 = vshll.u32 %v1279, 16
  %v1368 = vrot.slane %v1366, 7
  %v1369 = vsel %vm111, %v1364, %v1368
  %v1370 = vshrl.u32 %v1282, 16
  %v1372 = vrot.slane %v1370, 6
  %v1373 = vshll.u32 %v1282, 16
  %v1375 = vrot.slane %v1373, 7
  %v1376 = vor.u32 %v1372, %v1375
  %v1377 = vrot.slane %v1376, 2
  %v1379 = vshll.u32 %v1285, 16
  %v1381 = vrot.slane %v1379, 7
  %v1382 = vsel %vm111, %v1377, %v1381
  %v1383 = vshrl.u32 %v1288, 16
  %v1385 = vrot.slane %v1383, 6
  %v1386 = vshll.u32 %v1288, 16
  %v1388 = vrot.slane %v1386, 7
  %v1389 = vor.u32 %v1385, %v1388
  %v1390 = vrot.slane %v1389, 2
  %v1392 = vshll.u32 %v1291, 16
  %v1394 = vrot.slane %v1392, 7
  %v1395 = vsel %vm111, %v1390, %v1394
  %s1396 = scalar_lea.vmem %s1, 224
  %v1397 = vld [vmem:[%s1396] sm:$0xf]
  %v1398 = vld [vmem:[%s1396 + $0x4] sm:$0xf]
  %v1399 = vld [vmem:[%s1396 + $0x8] sm:$0xf]
  %v1400 = vld [vmem:[%s1396 + $0xc] sm:$0xf]
  %v1401 = vld [vmem:[%s1396 + $0x10] sm:$0xf]
  %v1402 = vld [vmem:[%s1396 + $0x14] sm:$0xf]
  %v1403 = vld [vmem:[%s1396 + $0x18] sm:$0xf]
  %v1404 = vld [vmem:[%s1396 + $0x1c] sm:$0xf]
  %1406 = vst [vmem:[#allocation1] ss:$4 sm:$0xff] %v1304
  %s1408 = scalar_lea.vmem [#allocation1], 1
  %1409 = vst [vmem:[%s1408] ss:$4 sm:$0xff] %v1317
  %s1411 = scalar_lea.vmem [#allocation1], 2
  %1412 = vst [vmem:[%s1411] ss:$4 sm:$0xff] %v1330
  %s1414 = scalar_lea.vmem [#allocation1], 3
  %1415 = vst [vmem:[%s1414] ss:$4 sm:$0xff] %v1343
  %s1417 = scalar_lea.vmem [#allocation1], 32
  %1418 = vst [vmem:[%s1417] ss:$4 sm:$0xff] %v1356
  %s1420 = scalar_lea.vmem [#allocation1], 33
  %1421 = vst [vmem:[%s1420] ss:$4 sm:$0xff] %v1369
  %s1423 = scalar_lea.vmem [#allocation1], 34
  %1424 = vst [vmem:[%s1423] ss:$4 sm:$0xff] %v1382
  %s1426 = scalar_lea.vmem [#allocation1], 35
  %1427 = vst [vmem:[%s1426] ss:$4 sm:$0xff] %v1395
  %v1428 = vld.sshfl [vmem:[#allocation1] sm:$0xff pattern:$0x73625140]
  %v1429 = vld.sshfl [vmem:[#allocation1 + $0x20] sm:$0xff pattern:$0x73625140]
  %v1438 = vunpack.c.l.b16 %v1397
  %v1439 = vunpack.c.l.b16 %v1398
  %v1440 = vunpack.c.l.b16 %v1399
  %v1441 = vunpack.c.l.b16 %v1400
  %v1442 = vunpack.c.l.b16 %v1401
  %v1443 = vunpack.c.l.b16 %v1402
  %v1444 = vunpack.c.l.b16 %v1403
  %v1445 = vunpack.c.l.b16 %v1404
  %v1446 = vpack.c.b16 %v1439, %v1438
  %v1447 = vpack.c.b16 %v1441, %v1440
  %v1448 = vpack.c.b16 %v1443, %v1442
  %v1449 = vpack.c.b16 %v1445, %v1444
  %v1454 = vsel %vm274, %v1428, 0
  %v1456 = vsel %vm274, %v1429, 0
  %1458 = vmatpush.bf16.msra.mxu0 0
  %1459 = vmatpush.bf16.msra.mxu0 0
  %1460 = vmatpush.bf16.msra.mxu0 0
  %1461 = vmatpush.bf16.msra.mxu0 0
  %1462 = vmatpush.bf16.msra.mxu0 %v1449
  %1463 = vmatpush.bf16.msra.mxu0 %v1448
  %1464 = vmatpush.bf16.msra.mxu0 %v1447
  %1465 = vmatpush.bf16.msra.mxu0 %v1446
  %1466 = vmatmul.bf16.gmra.mxu0 %v1454
  %v1467 = vpop.f32.mrf.mxu0
  %v1468 = vadd.f32 0.0, %v1467
  %v1469 = vpop.f32.mrf.mxu0
  %v1470 = vadd.f32 0.0, %v1469
  %1471 = vmatmul.bf16.gmra.mxu0 %v1456
  %v1472 = vpop.f32.mrf.mxu0
  %v1473 = vadd.f32 0.0, %v1472
  %v1474 = vpop.f32.mrf.mxu0
  %v1475 = vadd.f32 0.0, %v1474
  %1476 = vdwg.mxu0
  %v1477 = vadd.f32 %v1216, %v1468
  %v1478 = vadd.f32 %v1217, %v1470
  %v1479 = vadd.f32 %v1218, %v1473
  %v1480 = vadd.f32 %v1219, %v1475
  %v1481 = vld [vmem:[%s1126] sm:$0x6]
  %v1482 = vld [vmem:[%s1126 + $0x4] sm:$0x6]
  %v1483 = vld [vmem:[%s1126 + $0x8] sm:$0x6]
  %v1484 = vld [vmem:[%s1126 + $0xc] sm:$0x6]
  %v1485 = vld [vmem:[%s1126 + $0x18] sm:$0x6]
  %v1486 = vld [vmem:[%s1126 + $0x1c] sm:$0x6]
  %v1487 = vld [vmem:[%s1126 + $0x20] sm:$0x6]
  %v1488 = vld [vmem:[%s1126 + $0x24] sm:$0x6]
  %v1497 = vrot.slane %v1481, 2
  %v1498 = vrot.slane %v1482, 2
  %v1499 = vrot.slane %v1483, 2
  %v1500 = vrot.slane %v1484, 2
  %v1501 = vrot.slane %v1485, 2
  %v1502 = vrot.slane %v1486, 2
  %v1503 = vrot.slane %v1487, 2
  %v1504 = vrot.slane %v1488, 2
  %v1507 = vsel %vm55, %v1481, %v1497
  %v1509 = vsel %vm59, %v1481, %v1497
  %v1511 = vrot.slane %v1509, 2
  %v1514 = vsel %vm55, %v1482, %v1498
  %v1516 = vsel %vm59, %v1482, %v1498
  %v1518 = vrot.slane %v1516, 2
  %v1521 = vsel %vm55, %v1483, %v1499
  %v1523 = vsel %vm59, %v1483, %v1499
  %v1525 = vrot.slane %v1523, 2
  %v1528 = vsel %vm55, %v1484, %v1500
  %v1530 = vsel %vm59, %v1484, %v1500
  %v1532 = vrot.slane %v1530, 2
  %v1535 = vsel %vm55, %v1485, %v1501
  %v1537 = vsel %vm59, %v1485, %v1501
  %v1539 = vrot.slane %v1537, 2
  %v1542 = vsel %vm55, %v1486, %v1502
  %v1544 = vsel %vm59, %v1486, %v1502
  %v1546 = vrot.slane %v1544, 2
  %v1549 = vsel %vm55, %v1487, %v1503
  %v1551 = vsel %vm59, %v1487, %v1503
  %v1553 = vrot.slane %v1551, 2
  %v1556 = vsel %vm55, %v1488, %v1504
  %v1558 = vsel %vm59, %v1488, %v1504
  %v1560 = vrot.slane %v1558, 2
  %v1561 = vrot.slane %v1507, 7
  %v1562 = vrot.slane %v1561, 2
  %v1563 = vrot.slane %v1511, 7
  %v1564 = vsel %vm456, %v1562, %v1563
  %v1565 = vrot.slane %v1514, 7
  %v1566 = vrot.slane %v1565, 2
  %v1567 = vrot.slane %v1518, 7
  %v1568 = vsel %vm456, %v1566, %v1567
  %v1569 = vrot.slane %v1521, 7
  %v1570 = vrot.slane %v1569, 2
  %v1571 = vrot.slane %v1525, 7
  %v1572 = vsel %vm456, %v1570, %v1571
  %v1573 = vrot.slane %v1528, 7
  %v1574 = vrot.slane %v1573, 2
  %v1575 = vrot.slane %v1532, 7
  %v1576 = vsel %vm456, %v1574, %v1575
  %v1577 = vrot.slane %v1535, 7
  %v1578 = vrot.slane %v1577, 2
  %v1579 = vrot.slane %v1539, 7
  %v1580 = vsel %vm456, %v1578, %v1579
  %v1581 = vrot.slane %v1542, 7
  %v1582 = vrot.slane %v1581, 2
  %v1583 = vrot.slane %v1546, 7
  %v1584 = vsel %vm456, %v1582, %v1583
  %v1585 = vrot.slane %v1549, 7
  %v1586 = vrot.slane %v1585, 2
  %v1587 = vrot.slane %v1553, 7
  %v1588 = vsel %vm456, %v1586, %v1587
  %v1589 = vrot.slane %v1556, 7
  %v1590 = vrot.slane %v1589, 2
  %v1591 = vrot.slane %v1560, 7
  %v1592 = vsel %vm456, %v1590, %v1591
  %s1593 = scalar_lea.vmem %s1, 256
  %v1594 = vld [vmem:[%s1593] sm:$0xf]
  %v1595 = vld [vmem:[%s1593 + $0x4] sm:$0xf]
  %v1596 = vld [vmem:[%s1593 + $0x8] sm:$0xf]
  %v1597 = vld [vmem:[%s1593 + $0xc] sm:$0xf]
  %v1598 = vld [vmem:[%s1593 + $0x10] sm:$0xf]
  %v1599 = vld [vmem:[%s1593 + $0x14] sm:$0xf]
  %v1600 = vld [vmem:[%s1593 + $0x18] sm:$0xf]
  %v1601 = vld [vmem:[%s1593 + $0x1c] sm:$0xf]
  %1603 = vst [vmem:[#allocation1] ss:$4 sm:$0xff] %v1564
  %s1605 = scalar_lea.vmem [#allocation1], 1
  %1606 = vst [vmem:[%s1605] ss:$4 sm:$0xff] %v1568
  %s1608 = scalar_lea.vmem [#allocation1], 2
  %1609 = vst [vmem:[%s1608] ss:$4 sm:$0xff] %v1572
  %s1611 = scalar_lea.vmem [#allocation1], 3
  %1612 = vst [vmem:[%s1611] ss:$4 sm:$0xff] %v1576
  %s1614 = scalar_lea.vmem [#allocation1], 32
  %1615 = vst [vmem:[%s1614] ss:$4 sm:$0xff] %v1580
  %s1617 = scalar_lea.vmem [#allocation1], 33
  %1618 = vst [vmem:[%s1617] ss:$4 sm:$0xff] %v1584
  %s1620 = scalar_lea.vmem [#allocation1], 34
  %1621 = vst [vmem:[%s1620] ss:$4 sm:$0xff] %v1588
  %s1623 = scalar_lea.vmem [#allocation1], 35
  %1624 = vst [vmem:[%s1623] ss:$4 sm:$0xff] %v1592
  %v1625 = vld.sshfl [vmem:[#allocation1] sm:$0xff pattern:$0x73625140]
  %v1626 = vld.sshfl [vmem:[#allocation1 + $0x20] sm:$0xff pattern:$0x73625140]
  %v1635 = vunpack.c.l.b16 %v1594
  %v1636 = vunpack.c.l.b16 %v1595
  %v1637 = vunpack.c.l.b16 %v1596
  %v1638 = vunpack.c.l.b16 %v1597
  %v1639 = vunpack.c.l.b16 %v1598
  %v1640 = vunpack.c.l.b16 %v1599
  %v1641 = vunpack.c.l.b16 %v1600
  %v1642 = vunpack.c.l.b16 %v1601
  %v1643 = vpack.c.b16 %v1636, %v1635
  %v1644 = vpack.c.b16 %v1638, %v1637
  %v1645 = vpack.c.b16 %v1640, %v1639
  %v1646 = vpack.c.b16 %v1642, %v1641
  %v1651 = vsel %vm274, %v1625, 0
  %v1653 = vsel %vm274, %v1626, 0
  %1655 = vmatpush.bf16.msra.mxu0 0
  %1656 = vmatpush.bf16.msra.mxu0 0
  %1657 = vmatpush.bf16.msra.mxu0 0
  %1658 = vmatpush.bf16.msra.mxu0 0
  %1659 = vmatpush.bf16.msra.mxu0 %v1646
  %1660 = vmatpush.bf16.msra.mxu0 %v1645
  %1661 = vmatpush.bf16.msra.mxu0 %v1644
  %1662 = vmatpush.bf16.msra.mxu0 %v1643
  %1663 = vmatmul.bf16.gmra.mxu0 %v1651
  %v1664 = vpop.f32.mrf.mxu0
  %v1665 = vadd.f32 0.0, %v1664
  %v1666 = vpop.f32.mrf.mxu0
  %v1667 = vadd.f32 0.0, %v1666
  %1668 = vmatmul.bf16.gmra.mxu0 %v1653
  %v1669 = vpop.f32.mrf.mxu0
  %v1670 = vadd.f32 0.0, %v1669
  %v1671 = vpop.f32.mrf.mxu0
  %v1672 = vadd.f32 0.0, %v1671
  %1673 = vdwg.mxu0
  %v1674 = vadd.f32 %v1477, %v1665
  %v1675 = vadd.f32 %v1478, %v1667
  %v1676 = vadd.f32 %v1479, %v1670
  %v1677 = vadd.f32 %v1480, %v1672
  %v1678 = vld [vmem:[%s2] sm:$0x1]
  %v1680 = vperm.slane %v1678, 0
  %v1682 = vadd.f32 %v1674, %v1680
  %v1683 = vadd.f32 %v1675, %v1680
  %v1684 = vadd.f32 %v1676, %v1680
  %v1685 = vadd.f32 %v1677, %v1680
  %v1686 = vsub.f32 0.0, %v1682
  %v1687 = vsub.f32 0.0, %v1683
  %v1688 = vsub.f32 0.0, %v1684
  %v1689 = vsub.f32 0.0, %v1685
  %v1690 = vmul.f32 %v1686, 1.442695
  %v1691 = vpow.pop %v1690
  %v1692 = vmul.f32 %v1687, 1.442695
  %v1693 = vpow.pop %v1692
  %v1694 = vmul.f32 %v1688, 1.442695
  %v1695 = vpow.pop %v1694
  %v1696 = vmul.f32 %v1689, 1.442695
  %v1697 = vpow.pop %v1696
  %v1698 = vadd.f32 %v1691, 1.0
  %v1699 = vadd.f32 %v1693, 1.0
  %v1700 = vadd.f32 %v1695, 1.0
  %v1701 = vadd.f32 %v1697, 1.0
  %v1702 = vrcp.pop %v1698
  %v1703 = vmul.f32 %v1698, %v1702
  %v1704 = vsub.f32 1.0, %v1703
  %v1705 = vmul.f32 %v1702, %v1704
  %v1706 = vadd.f32 %v1702, %v1705
  %vm1707 = vweird.f32 %v1698
  %vm1708 = vweird.f32 %v1702
  %vm1709 = vmor %vm1707, %vm1708
  %v1710 = vsel %vm1709, %v1702, %v1706
  %v1711 = vand.u32 2147483647, %v1698
  %vm1712 = vcmp.eq.f32.partialorder %v1711, 8.507059e+37
  %v1713 = vand.u32 %v1698, 2147483648
  %v1714 = vor.u32 1.1754944e-38, %v1713
  %v1715 = vsel %vm1712, %v1714, %v1710
  %v1716 = vmul.f32 1.0, %v1715
  %v1717 = vrcp.pop %v1699
  %v1718 = vmul.f32 %v1699, %v1717
  %v1719 = vsub.f32 1.0, %v1718
  %v1720 = vmul.f32 %v1717, %v1719
  %v1721 = vadd.f32 %v1717, %v1720
  %vm1722 = vweird.f32 %v1699
  %vm1723 = vweird.f32 %v1717
  %vm1724 = vmor %vm1722, %vm1723
  %v1725 = vsel %vm1724, %v1717, %v1721
  %v1726 = vand.u32 2147483647, %v1699
  %vm1727 = vcmp.eq.f32.partialorder %v1726, 8.507059e+37
  %v1728 = vand.u32 %v1699, 2147483648
  %v1729 = vor.u32 1.1754944e-38, %v1728
  %v1730 = vsel %vm1727, %v1729, %v1725
  %v1731 = vmul.f32 1.0, %v1730
  %v1732 = vrcp.pop %v1700
  %v1733 = vmul.f32 %v1700, %v1732
  %v1734 = vsub.f32 1.0, %v1733
  %v1735 = vmul.f32 %v1732, %v1734
  %v1736 = vadd.f32 %v1732, %v1735
  %vm1737 = vweird.f32 %v1700
  %vm1738 = vweird.f32 %v1732
  %vm1739 = vmor %vm1737, %vm1738
  %v1740 = vsel %vm1739, %v1732, %v1736
  %v1741 = vand.u32 2147483647, %v1700
  %vm1742 = vcmp.eq.f32.partialorder %v1741, 8.507059e+37
  %v1743 = vand.u32 %v1700, 2147483648
  %v1744 = vor.u32 1.1754944e-38, %v1743
  %v1745 = vsel %vm1742, %v1744, %v1740
  %v1746 = vmul.f32 1.0, %v1745
  %v1747 = vrcp.pop %v1701
  %v1748 = vmul.f32 %v1701, %v1747
  %v1749 = vsub.f32 1.0, %v1748
  %v1750 = vmul.f32 %v1747, %v1749
  %v1751 = vadd.f32 %v1747, %v1750
  %vm1752 = vweird.f32 %v1701
  %vm1753 = vweird.f32 %v1747
  %vm1754 = vmor %vm1752, %vm1753
  %v1755 = vsel %vm1754, %v1747, %v1751
  %v1756 = vand.u32 2147483647, %v1701
  %vm1757 = vcmp.eq.f32.partialorder %v1756, 8.507059e+37
  %v1758 = vand.u32 %v1701, 2147483648
  %v1759 = vor.u32 1.1754944e-38, %v1758
  %v1760 = vsel %vm1757, %v1759, %v1755
  %v1761 = vmul.f32 1.0, %v1760
  %v1762 = vmul.f32 %v1682, %v1716
  %v1763 = vmul.f32 %v1683, %v1731
  %v1764 = vmul.f32 %v1684, %v1746
  %v1765 = vmul.f32 %v1685, %v1761
  %v1770 = vrot.slane %v1762, 2
  %v1771 = vrot.slane %v1762, 4
  %v1772 = vrot.slane %v1762, 6
  %v1773 = vrot.slane %v1763, 2
  %v1774 = vrot.slane %v1763, 4
  %v1775 = vrot.slane %v1763, 6
  %v1776 = vrot.slane %v1764, 2
  %v1777 = vrot.slane %v1764, 4
  %v1778 = vrot.slane %v1764, 6
  %v1779 = vrot.slane %v1765, 2
  %v1780 = vrot.slane %v1765, 4
  %v1781 = vrot.slane %v1765, 6
  %v1794 = vsel %vm55, %v1762, -inf
  %v1795 = vrot.slane %v1794, 4
  %v1796 = vmax.f32 %v1794, %v1795
  %v1797 = vrot.slane %v1796, 2
  %v1798 = vmax.f32 %v1796, %v1797
  %v1799 = vrot.slane %v1798, 1
  %v1800 = vmax.f32 %v1798, %v1799
  %v1801 = vsel %vm55, %v1770, -inf
  %v1802 = vrot.slane %v1801, 4
  %v1803 = vmax.f32 %v1801, %v1802
  %v1804 = vrot.slane %v1803, 2
  %v1805 = vmax.f32 %v1803, %v1804
  %v1806 = vrot.slane %v1805, 1
  %v1807 = vmax.f32 %v1805, %v1806
  %v1808 = vsel %vm55, %v1771, -inf
  %v1809 = vrot.slane %v1808, 4
  %v1810 = vmax.f32 %v1808, %v1809
  %v1811 = vrot.slane %v1810, 2
  %v1812 = vmax.f32 %v1810, %v1811
  %v1813 = vrot.slane %v1812, 1
  %v1814 = vmax.f32 %v1812, %v1813
  %v1815 = vsel %vm55, %v1772, -inf
  %v1816 = vrot.slane %v1815, 4
  %v1817 = vmax.f32 %v1815, %v1816
  %v1818 = vrot.slane %v1817, 2
  %v1819 = vmax.f32 %v1817, %v1818
  %v1820 = vrot.slane %v1819, 1
  %v1821 = vmax.f32 %v1819, %v1820
  %v1822 = vsel %vm55, %v1763, -inf
  %v1823 = vrot.slane %v1822, 4
  %v1824 = vmax.f32 %v1822, %v1823
  %v1825 = vrot.slane %v1824, 2
  %v1826 = vmax.f32 %v1824, %v1825
  %v1827 = vrot.slane %v1826, 1
  %v1828 = vmax.f32 %v1826, %v1827
  %v1829 = vsel %vm55, %v1773, -inf
  %v1830 = vrot.slane %v1829, 4
  %v1831 = vmax.f32 %v1829, %v1830
  %v1832 = vrot.slane %v1831, 2
  %v1833 = vmax.f32 %v1831, %v1832
  %v1834 = vrot.slane %v1833, 1
  %v1835 = vmax.f32 %v1833, %v1834
  %v1836 = vsel %vm55, %v1774, -inf
  %v1837 = vrot.slane %v1836, 4
  %v1838 = vmax.f32 %v1836, %v1837
  %v1839 = vrot.slane %v1838, 2
  %v1840 = vmax.f32 %v1838, %v1839
  %v1841 = vrot.slane %v1840, 1
  %v1842 = vmax.f32 %v1840, %v1841
  %v1843 = vsel %vm55, %v1775, -inf
  %v1844 = vrot.slane %v1843, 4
  %v1845 = vmax.f32 %v1843, %v1844
  %v1846 = vrot.slane %v1845, 2
  %v1847 = vmax.f32 %v1845, %v1846
  %v1848 = vrot.slane %v1847, 1
  %v1849 = vmax.f32 %v1847, %v1848
  %v1850 = vsel %vm55, %v1764, -inf
  %v1851 = vrot.slane %v1850, 4
  %v1852 = vmax.f32 %v1850, %v1851
  %v1853 = vrot.slane %v1852, 2
  %v1854 = vmax.f32 %v1852, %v1853
  %v1855 = vrot.slane %v1854, 1
  %v1856 = vmax.f32 %v1854, %v1855
  %v1857 = vsel %vm55, %v1776, -inf
  %v1858 = vrot.slane %v1857, 4
  %v1859 = vmax.f32 %v1857, %v1858
  %v1860 = vrot.slane %v1859, 2
  %v1861 = vmax.f32 %v1859, %v1860
  %v1862 = vrot.slane %v1861, 1
  %v1863 = vmax.f32 %v1861, %v1862
  %v1864 = vsel %vm55, %v1777, -inf
  %v1865 = vrot.slane %v1864, 4
  %v1866 = vmax.f32 %v1864, %v1865
  %v1867 = vrot.slane %v1866, 2
  %v1868 = vmax.f32 %v1866, %v1867
  %v1869 = vrot.slane %v1868, 1
  %v1870 = vmax.f32 %v1868, %v1869
  %v1871 = vsel %vm55, %v1778, -inf
  %v1872 = vrot.slane %v1871, 4
  %v1873 = vmax.f32 %v1871, %v1872
  %v1874 = vrot.slane %v1873, 2
  %v1875 = vmax.f32 %v1873, %v1874
  %v1876 = vrot.slane %v1875, 1
  %v1877 = vmax.f32 %v1875, %v1876
  %v1878 = vsel %vm55, %v1765, -inf
  %v1879 = vrot.slane %v1878, 4
  %v1880 = vmax.f32 %v1878, %v1879
  %v1881 = vrot.slane %v1880, 2
  %v1882 = vmax.f32 %v1880, %v1881
  %v1883 = vrot.slane %v1882, 1
  %v1884 = vmax.f32 %v1882, %v1883
  %v1885 = vsel %vm55, %v1779, -inf
  %v1886 = vrot.slane %v1885, 4
  %v1887 = vmax.f32 %v1885, %v1886
  %v1888 = vrot.slane %v1887, 2
  %v1889 = vmax.f32 %v1887, %v1888
  %v1890 = vrot.slane %v1889, 1
  %v1891 = vmax.f32 %v1889, %v1890
  %v1892 = vsel %vm55, %v1780, -inf
  %v1893 = vrot.slane %v1892, 4
  %v1894 = vmax.f32 %v1892, %v1893
  %v1895 = vrot.slane %v1894, 2
  %v1896 = vmax.f32 %v1894, %v1895
  %v1897 = vrot.slane %v1896, 1
  %v1898 = vmax.f32 %v1896, %v1897
  %v1899 = vsel %vm55, %v1781, -inf
  %v1900 = vrot.slane %v1899, 4
  %v1901 = vmax.f32 %v1899, %v1900
  %v1902 = vrot.slane %v1901, 2
  %v1903 = vmax.f32 %v1901, %v1902
  %v1904 = vrot.slane %v1903, 1
  %v1905 = vmax.f32 %v1903, %v1904
  %v1906 = vmax.f32 %v1800, %v1814
  %v1907 = vmax.f32 %v1807, %v1821
  %v1908 = vmax.f32 %v1828, %v1842
  %v1909 = vmax.f32 %v1835, %v1849
  %v1910 = vmax.f32 %v1856, %v1870
  %v1911 = vmax.f32 %v1863, %v1877
  %v1912 = vmax.f32 %v1884, %v1898
  %v1913 = vmax.f32 %v1891, %v1905
  %v1914 = vpack.c.bf16 %v1906, %v1906
  %v1915 = vpack.c.bf16 %v1907, %v1907
  %v1916 = vpack.c.bf16 %v1908, %v1908
  %v1917 = vpack.c.bf16 %v1909, %v1909
  %v1918 = vpack.c.bf16 %v1910, %v1910
  %v1919 = vpack.c.bf16 %v1911, %v1911
  %v1920 = vpack.c.bf16 %v1912, %v1912
  %v1921 = vpack.c.bf16 %v1913, %v1913
  %v1930 = vrot.slane %v1914, 3
  %v1931 = vrot.slane %v1915, 3
  %v1932 = vrot.slane %v1916, 3
  %v1933 = vrot.slane %v1917, 3
  %v1934 = vrot.slane %v1918, 3
  %v1935 = vrot.slane %v1919, 3
  %v1936 = vrot.slane %v1920, 3
  %v1937 = vrot.slane %v1921, 3
  %vm1938 = vcmask 1040384
  %v1941 = vsel %vm1938, %v1914, %v1930
  %v1944 = vsel %vm1938, %v1915, %v1931
  %v1947 = vsel %vm1938, %v1916, %v1932
  %v1950 = vsel %vm1938, %v1917, %v1933
  %v1953 = vsel %vm1938, %v1918, %v1934
  %v1956 = vsel %vm1938, %v1919, %v1935
  %v1959 = vsel %vm1938, %v1920, %v1936
  %v1962 = vsel %vm1938, %v1921, %v1937
  %1963 = vst [vmem:[#allocation1] ss:$4 sm:$0xff] %v1941
  %v1964 = vld [vmem:[#allocation1] sm:$0xff]
  %s1966 = scalar_lea.vmem [#allocation1], 32
  %1967 = vst [vmem:[%s1966] ss:$4 sm:$0xff] %v1944
  %v1968 = vld [vmem:[#allocation1 + $0x20] sm:$0xff]
  %1970 = vst [vmem:[#allocation1] ss:$4 sm:$0xff] %v1947
  %v1971 = vld [vmem:[#allocation1] sm:$0xff]
  %1973 = vst [vmem:[%s1966] ss:$4 sm:$0xff] %v1950
  %v1974 = vld [vmem:[#allocation1 + $0x20] sm:$0xff]
  %1976 = vst [vmem:[#allocation1] ss:$4 sm:$0xff] %v1953
  %v1977 = vld [vmem:[#allocation1] sm:$0xff]
  %1979 = vst [vmem:[%s1966] ss:$4 sm:$0xff] %v1956
  %v1980 = vld [vmem:[#allocation1 + $0x20] sm:$0xff]
  %1982 = vst [vmem:[#allocation1] ss:$4 sm:$0xff] %v1959
  %v1983 = vld [vmem:[#allocation1] sm:$0xff]
  %1985 = vst [vmem:[%s1966] ss:$4 sm:$0xff] %v1962
  %v1986 = vld [vmem:[#allocation1 + $0x20] sm:$0xff]
  %v1988 = vunpack.c.l.b16 %v1964
  %v1989 = vunpack.c.l.b16 %v1968
  %v1990 = vunpack.c.l.b16 %v1971
  %v1991 = vunpack.c.l.b16 %v1974
  %v1992 = vunpack.c.l.b16 %v1977
  %v1993 = vunpack.c.l.b16 %v1980
  %v1994 = vunpack.c.l.b16 %v1983
  %v1995 = vunpack.c.l.b16 %v1986
  %v1996 = vrot.slane %v1989, 7
  %vm1997 = vcmask 1041409
  %v1998 = vsel %vm1997, %v1996, %v1988
  %v1999 = vrot.slane %v1991, 7
  %v2000 = vsel %vm1997, %v1999, %v1990
  %v2001 = vrot.slane %v1993, 7
  %v2002 = vsel %vm1997, %v2001, %v1992
  %v2003 = vrot.slane %v1995, 7
  %v2004 = vsel %vm1997, %v2003, %v1994
  %v2005 = vpack.c.b16 %v1998, %v1998
  %v2006 = vpack.c.b16 %v2000, %v2000
  %v2007 = vpack.c.b16 %v2002, %v2002
  %v2008 = vpack.c.b16 %v2004, %v2004
  %v2009 = vrot.slane %v2005, 3
  %v2010 = vrot.slane %v2006, 3
  %v2011 = vrot.slane %v2007, 3
  %v2012 = vrot.slane %v2008, 3
  %v2015 = vsel %vm1938, %v2005, %v2009
  %v2018 = vsel %vm1938, %v2006, %v2010
  %v2021 = vsel %vm1938, %v2007, %v2011
  %v2024 = vsel %vm1938, %v2008, %v2012
  %2029 = vst [vmem:[%s3] sm:$0x1] %v2015
  %2030 = vst [vmem:[%s3 + $0x1] sm:$0x1] %v2018
  %2031 = vst [vmem:[%s3 + $0x2] sm:$0x1] %v2021
  %2032 = vst [vmem:[%s3 + $0x3] sm:$0x1] %v2024
  // Predicated region
  $region14: #{bird_cnn_forward.6} parent=0 // pred_check
    _
  $region15: #{bird_cnn_forward.6} parent=0 // pred_check_branch
    %2034 = sbr.rel (0) target = $region17
  $region16: #{bird_cnn_forward.6} parent=0 // pred_region
    _
  $region17: #{bird_cnn_forward.6} parent=0 // pred_fallthru
    _
  // Predicated region
  $region18: #{bird_cnn_forward.6} parent=0 // pred_check
    _
  $region19: #{bird_cnn_forward.6} parent=0 // pred_check_branch
    %2036 = sbr.rel (0) target = $region21
  $region20: #{bird_cnn_forward.6} parent=0 // pred_region
    _
  $region21: #{bird_cnn_forward.6} parent=0 // pred_fallthru
    _

// kernel: bird_cnn_forward.4
$region0: #{bird_cnn_forward.4}
  #allocation0 [shape = 'u32[]', space=smem, size = 0x4, offset = 0x4, fixed_abs, tag = 'smem constant byte address 0x4 - core index']
  #allocation1 [shape = 'u32[72,128]{1,0:T(1,128)}', space=vmem, size = 0x9000, scoped, tag = 'internal scratch']
  %s0 = inlined_call_operand.vmem [shape: bf16[2,18,18,3], index: 0, kind: input, shape index: {}]
  %s1 = inlined_call_operand.vmem [shape: bf16[9,3,32], index: 1, kind: input, shape index: {}]
  %s2 = inlined_call_operand.vmem [shape: f32[1,32], index: 2, kind: input, shape index: {}]
  %s3 = inlined_call_operand.vmem [shape: bf16[2,8,8,32], index: 3, kind: output, shape index: {}]
  %s4 = sld [smem:[#allocation0]]
  $region45: #{bird_cnn_forward.4} parent=0
    _
  %s6 = ssub.s32 1, %s4
  %s7 = scalar_select 0, %s6, %s4
  loop: start=0, step=1, limit=4
  $region2: #{bird_cnn_forward.4} parent=0 // loop_pre_header
    _
  $region3: #{bird_cnn_forward.4} parent=0 // loop_header
    %s9 = sphi 0, %s13
    %p10 = scmp.ge.s32.totalorder %s9, 4
    %s19 = sphi 0, %s21
    %s22 = sphi 0, %s19
    %s23 = sphi 0, %s22
    %s39 = sphi 0, %s23
    %s43 = sphi 0, %s43
    %s45 = sphi 0, %s43
    %s46 = sphi 0, %s45
    %s60 = sphi 0, %s46
    %s64 = sphi 0, %s64
    %s66 = sphi 0, %s64
    %s67 = sphi 0, %s66
    %s81 = sphi 0, %s67
    %s87 = sphi 0, %s89
    %s90 = sphi 0, %s87
    %s91 = sphi 0, %s90
    %s107 = sphi 0, %s91
  $region4: #{bird_cnn_forward.4} parent=0 // loop_header_branch
    %12 = sbr.rel (%p10) target = $region8
  $region5: #{bird_cnn_forward.4} parent=0 // loop_body
    %s14 = ssub.s32 %s9, 1
    %s15 = ssub.s32 %s9, 2
    %s16 = sadd.s32 %s9, 1
    %s17 = ssub.s32 %s9, %s16
    %p18 = scmp.eq.s32.totalorder %s17, 0
    %s20 = sadd.s32 %s19, 1
    %s21 = scalar_select %p18, %s19, %s20
    %p24 = pneg %p18
    %p25 = scmp.eq.s32.totalorder %s9, 1
    %p26 = por %p24, %p25
    %p27 = scmp.ne.s32.totalorder %s19, %s22
    %p28 = scmp.eq.s32.totalorder %s9, 0
    %p29 = por %p27, %p28
    %p30 = scmp.ne.s32.totalorder %s19, %s22
    %p31 = scmp.eq.s32.totalorder %s14, 1
    %p32 = por %p30, %p31
    %p33 = scmp.ne.s32.totalorder %s22, %s23
    %p34 = scmp.eq.s32.totalorder %s14, 0
    %p35 = por %p33, %p34
    %p36 = scmp.ne.s32.totalorder %s22, %s23
    %p37 = scmp.eq.s32.totalorder %s15, 1
    %p38 = por %p36, %p37
    %p40 = scmp.ne.s32.totalorder %s23, %s39
    %p41 = scmp.eq.s32.totalorder %s15, 0
    %p42 = por %p40, %p41
    %s44 = sadd.s32 %s43, 1
    %p47 = scmp.eq.s32.totalorder %s9, 1
    %p48 = scmp.ne.s32.totalorder %s43, %s45
    %p49 = scmp.eq.s32.totalorder %s9, 0
    %p50 = por %p48, %p49
    %p51 = scmp.ne.s32.totalorder %s43, %s45
    %p52 = scmp.eq.s32.totalorder %s14, 1
    %p53 = por %p51, %p52
    %p54 = scmp.ne.s32.totalorder %s45, %s46
    %p55 = scmp.eq.s32.totalorder %s14, 0
    %p56 = por %p54, %p55
    %p57 = scmp.ne.s32.totalorder %s45, %s46
    %p58 = scmp.eq.s32.totalorder %s15, 1
    %p59 = por %p57, %p58
    %p61 = scmp.ne.s32.totalorder %s46, %s60
    %p62 = scmp.eq.s32.totalorder %s15, 0
    %p63 = por %p61, %p62
    %s65 = sadd.s32 %s64, 1
    %p68 = scmp.eq.s32.totalorder %s9, 1
    %p69 = scmp.ne.s32.totalorder %s64, %s66
    %p70 = scmp.eq.s32.totalorder %s9, 0
    %p71 = por %p69, %p70
    %p72 = scmp.ne.s32.totalorder %s64, %s66
    %p73 = scmp.eq.s32.totalorder %s14, 1
    %p74 = por %p72, %p73
    %p75 = scmp.ne.s32.totalorder %s66, %s67
    %p76 = scmp.eq.s32.totalorder %s14, 0
    %p77 = por %p75, %p76
    %p78 = scmp.ne.s32.totalorder %s66, %s67
    %p79 = scmp.eq.s32.totalorder %s15, 1
    %p80 = por %p78, %p79
    %p82 = scmp.ne.s32.totalorder %s67, %s81
    %p83 = scmp.eq.s32.totalorder %s15, 0
    %p84 = por %p82, %p83
    %s85 = ssub.s32 %s9, %s16
    %p86 = scmp.eq.s32.totalorder %s85, 0
    %s88 = sadd.s32 %s87, 1
    %s89 = scalar_select %p86, %s87, %s88
    %p92 = pneg %p86
    %p93 = scmp.eq.s32.totalorder %s9, 1
    %p94 = por %p92, %p93
    %p95 = scmp.ne.s32.totalorder %s87, %s90
    %p96 = scmp.eq.s32.totalorder %s9, 0
    %p97 = por %p95, %p96
    %p98 = scmp.ne.s32.totalorder %s87, %s90
    %p99 = scmp.eq.s32.totalorder %s14, 1
    %p100 = por %p98, %p99
    %p101 = scmp.ne.s32.totalorder %s90, %s91
    %p102 = scmp.eq.s32.totalorder %s14, 0
    %p103 = por %p101, %p102
    %p104 = scmp.ne.s32.totalorder %s90, %s91
    %p105 = scmp.eq.s32.totalorder %s15, 1
    %p106 = por %p104, %p105
    %p108 = scmp.ne.s32.totalorder %s91, %s107
    %p109 = scmp.eq.s32.totalorder %s15, 0
    %p110 = por %p108, %p109
    %p111 = scmp.le.s32.totalorder 1, %s9
    %p112 = scmp.lt.s32.totalorder %s9, 3
    %p113 = pnand %p111, %p112
    %p114 = pneg %p113
    // Predicated region
    $region9: #{bird_cnn_forward.4} parent=5 // pred_check
      _
    $region10: #{bird_cnn_forward.4} parent=5 // pred_check_branch
      %116 = sbr.rel (%p113) target = $region12
    $region11: #{bird_cnn_forward.4} parent=5 // pred_region
      %s117 = ssub.s32 %s9, 1
      // Predicated region
      $region13: #{bird_cnn_forward.4} parent=11 // pred_check
        %p118 = pneg %p56
      $region14: #{bird_cnn_forward.4} parent=11 // pred_check_branch
        %120 = sbr.rel (%p118) target = $region16
      $region15: #{bird_cnn_forward.4} parent=11 // pred_region
        _
      $region16: #{bird_cnn_forward.4} parent=11 // pred_fallthru
        _
      // Predicated region
      $region17: #{bird_cnn_forward.4} parent=11 // pred_check
        %p121 = pneg %p77
      $region18: #{bird_cnn_forward.4} parent=11 // pred_check_branch
        %123 = sbr.rel (%p121) target = $region20
      $region19: #{bird_cnn_forward.4} parent=11 // pred_region
        _
      $region20: #{bird_cnn_forward.4} parent=11 // pred_fallthru
        _
    $region12: #{bird_cnn_forward.4} parent=5 // pred_fallthru
      _
    %p124 = scmp.lt.s32.totalorder %s9, 2
    // Predicated region
    $region21: #{bird_cnn_forward.4} parent=5 // pred_check
      %p125 = pneg %p124
    $region22: #{bird_cnn_forward.4} parent=5 // pred_check_branch
      %127 = sbr.rel (%p125) target = $region24
    $region23: #{bird_cnn_forward.4} parent=5 // pred_region
      // Predicated region
      $region25: #{bird_cnn_forward.4} parent=23 // pred_check
        %p128 = pneg %p29
      $region26: #{bird_cnn_forward.4} parent=23 // pred_check_branch
        %130 = sbr.rel (%p128) target = $region28
      $region27: #{bird_cnn_forward.4} parent=23 // pred_region
        %p131 = scmp.lt.s32.totalorder %s9, 1
        %s132 = scalar_select %p131, %s9, 1
        %s133 = smul.addr %s132, 54
        %s134 = smul.addr %s133, 4
        %s135 = scalar_lea.vmem %s0, %s134
      $region28: #{bird_cnn_forward.4} parent=23 // pred_fallthru
        _
    $region24: #{bird_cnn_forward.4} parent=5 // pred_fallthru
      _
    %p136 = scmp.le.s32.totalorder 1, %s9
    %p137 = scmp.lt.s32.totalorder %s9, 3
    %p138 = pnand %p136, %p137
    %p139 = pneg %p138
    // Predicated region
    $region29: #{bird_cnn_forward.4} parent=5 // pred_check
      _
    $region30: #{bird_cnn_forward.4} parent=5 // pred_check_branch
      %141 = sbr.rel (%p138) target = $region32
    $region31: #{bird_cnn_forward.4} parent=5 // pred_region
      %s142 = ssub.s32 %s9, 1
      %p143 = scmp.lt.s32.totalorder %s14, 1
      %s144 = scalar_select %p143, %s14, 1
      %s145 = smul.addr %s144, 54
      %s146 = smul.addr %s145, 4
      %s147 = scalar_lea.vmem %s0, %s146
      %p148 = pneg %p35
      %p149 = pneg %p32
      %p150 = pneg %p56
      %p151 = pneg %p53
      %p152 = pneg %p77
      %p153 = pneg %p74
      %p154 = pneg %p103
      %p155 = pneg %p100
      %p156 = scmp.lt.s32.totalorder %s14, 1
      %s157 = scalar_select %p156, %s14, 1
      %s158 = smul.addr %s157, 8
      %s159 = smul.addr %s158, 4
      %s160 = scalar_lea.vmem %s3, %s159
      %p161 = scmp.lt.s32.totalorder %s14, 1
      %s162 = scalar_select %p161, %s14, 1
      %s163 = smul.addr %s162, 54
      %s164 = smul.addr %s163, 4
      %s165 = scalar_lea.vmem %s0, %s164
      %p166 = scmp.lt.s32.totalorder %s14, 1
      %s167 = scalar_select %p166, %s14, 1
      %s168 = smul.addr %s167, 8
      %s169 = smul.addr %s168, 4
      %s170 = scalar_lea.vmem %s3, %s169
      %v172 = vld [vmem:[%s165] sm:$0xf]
      %v173 = vld [vmem:[%s165 + $0x4] sm:$0xf]
      %v174 = vld [vmem:[%s165 + $0xc] sm:$0xf]
      %v175 = vld [vmem:[%s165 + $0x10] sm:$0xf]
      %v176 = vld [vmem:[%s165 + $0x18] sm:$0xf]
      %v177 = vld [vmem:[%s165 + $0x1c] sm:$0xf]
      %v178 = vld [vmem:[%s165 + $0x24] sm:$0xf]
      %v179 = vld [vmem:[%s165 + $0x28] sm:$0xf]
      %v180 = vld [vmem:[%s165 + $0x30] sm:$0xf]
      %v181 = vld [vmem:[%s165 + $0x34] sm:$0xf]
      %v182 = vld [vmem:[%s165 + $0x3c] sm:$0xf]
      %v183 = vld [vmem:[%s165 + $0x40] sm:$0xf]
      %v184 = vld [vmem:[%s165 + $0x48] sm:$0xf]
      %v185 = vld [vmem:[%s165 + $0x4c] sm:$0xf]
      %v186 = vld [vmem:[%s165 + $0x54] sm:$0xf]
      %v187 = vld [vmem:[%s165 + $0x58] sm:$0xf]
      %v188 = vld [vmem:[%s165 + $0x60] sm:$0xf]
      %v189 = vld [vmem:[%s165 + $0x64] sm:$0xf]
      %v190 = vld [vmem:[%s165 + $0x6c] sm:$0xf]
      %v191 = vld [vmem:[%s165 + $0x70] sm:$0xf]
      %v192 = vld [vmem:[%s165 + $0x78] sm:$0xf]
      %v193 = vld [vmem:[%s165 + $0x7c] sm:$0xf]
      %v194 = vld [vmem:[%s165 + $0x84] sm:$0xf]
      %v195 = vld [vmem:[%s165 + $0x88] sm:$0xf]
      %v196 = vld [vmem:[%s165 + $0x90] sm:$0xf]
      %v197 = vld [vmem:[%s165 + $0x94] sm:$0xf]
      %v198 = vld [vmem:[%s165 + $0x9c] sm:$0xf]
      %v199 = vld [vmem:[%s165 + $0xa0] sm:$0xf]
      %v200 = vld [vmem:[%s165 + $0xa8] sm:$0xf]
      %v201 = vld [vmem:[%s165 + $0xac] sm:$0xf]
      %v202 = vld [vmem:[%s165 + $0xb4] sm:$0xf]
      %v203 = vld [vmem:[%s165 + $0xb8] sm:$0xf]
      %v204 = vld [vmem:[%s1] sm:$0x3]
      %v205 = vld [vmem:[%s165 + $0x8] sm:$0x1]
      %v206 = vld [vmem:[%s165 + $0x14] sm:$0x1]
      %v207 = vld [vmem:[%s165 + $0x20] sm:$0x1]
      %v208 = vld [vmem:[%s165 + $0x2c] sm:$0x1]
      %v209 = vld [vmem:[%s165 + $0x38] sm:$0x1]
      %v210 = vld [vmem:[%s165 + $0x44] sm:$0x1]
      %v211 = vld [vmem:[%s165 + $0x50] sm:$0x1]
      %v212 = vld [vmem:[%s165 + $0x5c] sm:$0x1]
      %v213 = vld [vmem:[%s165 + $0x68] sm:$0x1]
      %v214 = vld [vmem:[%s165 + $0x74] sm:$0x1]
      %v215 = vld [vmem:[%s165 + $0x80] sm:$0x1]
      %v216 = vld [vmem:[%s165 + $0x8c] sm:$0x1]
      %v217 = vld [vmem:[%s165 + $0x98] sm:$0x1]
      %v218 = vld [vmem:[%s165 + $0xa4] sm:$0x1]
      %v219 = vld [vmem:[%s165 + $0xb0] sm:$0x1]
      %v220 = vld [vmem:[%s165 + $0xbc] sm:$0x1]
      %vm221 = vsmask.f32 3328
      %vm222 = vsmask.f32 7440
      %vm223 = vmor %vm221, %vm222
      %v225 = vshrl.u32 %v172, 16
      %v227 = vrot.slane %v225, 4
      %v228 = vshll.u32 %v172, 16
      %v230 = vrot.slane %v228, 5
      %v231 = vor.u32 %v227, %v230
      %v232 = vrot.slane %v231, 4
      %v234 = vshll.u32 %v173, 16
      %v236 = vrot.slane %v234, 5
      %v237 = vsel %vm223, %v232, %v236
      %v238 = vshrl.u32 %v173, 16
      %v240 = vrot.slane %v238, 4
      %v241 = vor.u32 %v240, %v236
      %v242 = vrot.slane %v241, 4
      %v244 = vshll.u32 %v205, 16
      %v246 = vrot.slane %v244, 5
      %v247 = vsel %vm223, %v242, %v246
      %v249 = vshrl.u32 %v174, 16
      %v251 = vrot.slane %v249, 4
      %v252 = vshll.u32 %v174, 16
      %v254 = vrot.slane %v252, 5
      %v255 = vor.u32 %v251, %v254
      %v256 = vrot.slane %v255, 4
      %v258 = vshll.u32 %v175, 16
      %v260 = vrot.slane %v258, 5
      %v261 = vsel %vm223, %v256, %v260
      %v262 = vshrl.u32 %v175, 16
      %v264 = vrot.slane %v262, 4
      %v265 = vor.u32 %v264, %v260
      %v266 = vrot.slane %v265, 4
      %v268 = vshll.u32 %v206, 16
      %v270 = vrot.slane %v268, 5
      %v271 = vsel %vm223, %v266, %v270
      %v273 = vshrl.u32 %v176, 16
      %v275 = vrot.slane %v273, 4
      %v276 = vshll.u32 %v176, 16
      %v278 = vrot.slane %v276, 5
      %v279 = vor.u32 %v275, %v278
      %v280 = vrot.slane %v279, 4
      %v282 = vshll.u32 %v177, 16
      %v284 = vrot.slane %v282, 5
      %v285 = vsel %vm223, %v280, %v284
      %v286 = vshrl.u32 %v177, 16
      %v288 = vrot.slane %v286, 4
      %v289 = vor.u32 %v288, %v284
      %v290 = vrot.slane %v289, 4
      %v292 = vshll.u32 %v207, 16
      %v294 = vrot.slane %v292, 5
      %v295 = vsel %vm223, %v290, %v294
      %v297 = vshrl.u32 %v178, 16
      %v299 = vrot.slane %v297, 4
      %v300 = vshll.u32 %v178, 16
      %v302 = vrot.slane %v300, 5
      %v303 = vor.u32 %v299, %v302
      %v304 = vrot.slane %v303, 4
      %v306 = vshll.u32 %v179, 16
      %v308 = vrot.slane %v306, 5
      %v309 = vsel %vm223, %v304, %v308
      %v310 = vshrl.u32 %v179, 16
      %v312 = vrot.slane %v310, 4
      %v313 = vor.u32 %v312, %v308
      %v314 = vrot.slane %v313, 4
      %v316 = vshll.u32 %v208, 16
      %v318 = vrot.slane %v316, 5
      %v319 = vsel %vm223, %v314, %v318
      %v321 = vshrl.u32 %v180, 16
      %v323 = vrot.slane %v321, 4
      %v324 = vshll.u32 %v180, 16
      %v326 = vrot.slane %v324, 5
      %v327 = vor.u32 %v323, %v326
      %v328 = vrot.slane %v327, 4
      %v330 = vshll.u32 %v181, 16
      %v332 = vrot.slane %v330, 5
      %v333 = vsel %vm223, %v328, %v332
      %v334 = vshrl.u32 %v181, 16
      %v336 = vrot.slane %v334, 4
      %v337 = vor.u32 %v336, %v332
      %v338 = vrot.slane %v337, 4
      %v340 = vshll.u32 %v209, 16
      %v342 = vrot.slane %v340, 5
      %v343 = vsel %vm223, %v338, %v342
      %v345 = vshrl.u32 %v182, 16
      %v347 = vrot.slane %v345, 4
      %v348 = vshll.u32 %v182, 16
      %v350 = vrot.slane %v348, 5
      %v351 = vor.u32 %v347, %v350
      %v352 = vrot.slane %v351, 4
      %v354 = vshll.u32 %v183, 16
      %v356 = vrot.slane %v354, 5
      %v357 = vsel %vm223, %v352, %v356
      %v358 = vshrl.u32 %v183, 16
      %v360 = vrot.slane %v358, 4
      %v361 = vor.u32 %v360, %v356
      %v362 = vrot.slane %v361, 4
      %v364 = vshll.u32 %v210, 16
      %v366 = vrot.slane %v364, 5
      %v367 = vsel %vm223, %v362, %v366
      %v369 = vshrl.u32 %v184, 16
      %v371 = vrot.slane %v369, 4
      %v372 = vshll.u32 %v184, 16
      %v374 = vrot.slane %v372, 5
      %v375 = vor.u32 %v371, %v374
      %v376 = vrot.slane %v375, 4
      %v378 = vshll.u32 %v185, 16
      %v380 = vrot.slane %v378, 5
      %v381 = vsel %vm223, %v376, %v380
      %v382 = vshrl.u32 %v185, 16
      %v384 = vrot.slane %v382, 4
      %v385 = vor.u32 %v384, %v380
      %v386 = vrot.slane %v385, 4
      %v388 = vshll.u32 %v211, 16
      %v390 = vrot.slane %v388, 5
      %v391 = vsel %vm223, %v386, %v390
      %v393 = vshrl.u32 %v186, 16
      %v395 = vrot.slane %v393, 4
      %v396 = vshll.u32 %v186, 16
      %v398 = vrot.slane %v396, 5
      %v399 = vor.u32 %v395, %v398
      %v400 = vrot.slane %v399, 4
      %v402 = vshll.u32 %v187, 16
      %v404 = vrot.slane %v402, 5
      %v405 = vsel %vm223, %v400, %v404
      %v406 = vshrl.u32 %v187, 16
      %v408 = vrot.slane %v406, 4
      %v409 = vor.u32 %v408, %v404
      %v410 = vrot.slane %v409, 4
      %v412 = vshll.u32 %v212, 16
      %v414 = vrot.slane %v412, 5
      %v415 = vsel %vm223, %v410, %v414
      %v417 = vshrl.u32 %v188, 16
      %v419 = vrot.slane %v417, 4
      %v420 = vshll.u32 %v188, 16
      %v422 = vrot.slane %v420, 5
      %v423 = vor.u32 %v419, %v422
      %v424 = vrot.slane %v423, 4
      %v426 = vshll.u32 %v189, 16
      %v428 = vrot.slane %v426, 5
      %v429 = vsel %vm223, %v424, %v428
      %v430 = vshrl.u32 %v189, 16
      %v432 = vrot.slane %v430, 4
      %v433 = vor.u32 %v432, %v428
      %v434 = vrot.slane %v433, 4
      %v436 = vshll.u32 %v213, 16
      %v438 = vrot.slane %v436, 5
      %v439 = vsel %vm223, %v434, %v438
      %v441 = vshrl.u32 %v190, 16
      %v443 = vrot.slane %v441, 4
      %v444 = vshll.u32 %v190, 16
      %v446 = vrot.slane %v444, 5
      %v447 = vor.u32 %v443, %v446
      %v448 = vrot.slane %v447, 4
      %v450 = vshll.u32 %v191, 16
      %v452 = vrot.slane %v450, 5
      %v453 = vsel %vm223, %v448, %v452
      %v454 = vshrl.u32 %v191, 16
      %v456 = vrot.slane %v454, 4
      %v457 = vor.u32 %v456, %v452
      %v458 = vrot.slane %v457, 4
      %v460 = vshll.u32 %v214, 16
      %v462 = vrot.slane %v460, 5
      %v463 = vsel %vm223, %v458, %v462
      %v465 = vshrl.u32 %v192, 16
      %v467 = vrot.slane %v465, 4
      %v468 = vshll.u32 %v192, 16
      %v470 = vrot.slane %v468, 5
      %v471 = vor.u32 %v467, %v470
      %v472 = vrot.slane %v471, 4
      %v474 = vshll.u32 %v193, 16
      %v476 = vrot.slane %v474, 5
      %v477 = vsel %vm223, %v472, %v476
      %v478 = vshrl.u32 %v193, 16
      %v480 = vrot.slane %v478, 4
      %v481 = vor.u32 %v480, %v476
      %v482 = vrot.slane %v481, 4
      %v484 = vshll.u32 %v215, 16
      %v486 = vrot.slane %v484, 5
      %v487 = vsel %vm223, %v482, %v486
      %v489 = vshrl.u32 %v194, 16
      %v491 = vrot.slane %v489, 4
      %v492 = vshll.u32 %v194, 16
      %v494 = vrot.slane %v492, 5
      %v495 = vor.u32 %v491, %v494
      %v496 = vrot.slane %v495, 4
      %v498 = vshll.u32 %v195, 16
      %v500 = vrot.slane %v498, 5
      %v501 = vsel %vm223, %v496, %v500
      %v502 = vshrl.u32 %v195, 16
      %v504 = vrot.slane %v502, 4
      %v505 = vor.u32 %v504, %v500
      %v506 = vrot.slane %v505, 4
      %v508 = vshll.u32 %v216, 16
      %v510 = vrot.slane %v508, 5
      %v511 = vsel %vm223, %v506, %v510
      %v513 = vshrl.u32 %v196, 16
      %v515 = vrot.slane %v513, 4
      %v516 = vshll.u32 %v196, 16
      %v518 = vrot.slane %v516, 5
      %v519 = vor.u32 %v515, %v518
      %v520 = vrot.slane %v519, 4
      %v522 = vshll.u32 %v197, 16
      %v524 = vrot.slane %v522, 5
      %v525 = vsel %vm223, %v520, %v524
      %v526 = vshrl.u32 %v197, 16
      %v528 = vrot.slane %v526, 4
      %v529 = vor.u32 %v528, %v524
      %v530 = vrot.slane %v529, 4
      %v532 = vshll.u32 %v217, 16
      %v534 = vrot.slane %v532, 5
      %v535 = vsel %vm223, %v530, %v534
      %v537 = vshrl.u32 %v198, 16
      %v539 = vrot.slane %v537, 4
      %v540 = vshll.u32 %v198, 16
      %v542 = vrot.slane %v540, 5
      %v543 = vor.u32 %v539, %v542
      %v544 = vrot.slane %v543, 4
      %v546 = vshll.u32 %v199, 16
      %v548 = vrot.slane %v546, 5
      %v549 = vsel %vm223, %v544, %v548
      %v550 = vshrl.u32 %v199, 16
      %v552 = vrot.slane %v550, 4
      %v553 = vor.u32 %v552, %v548
      %v554 = vrot.slane %v553, 4
      %v556 = vshll.u32 %v218, 16
      %v558 = vrot.slane %v556, 5
      %v559 = vsel %vm223, %v554, %v558
      %v561 = vshrl.u32 %v200, 16
      %v563 = vrot.slane %v561, 4
      %v564 = vshll.u32 %v200, 16
      %v566 = vrot.slane %v564, 5
      %v567 = vor.u32 %v563, %v566
      %v568 = vrot.slane %v567, 4
      %v570 = vshll.u32 %v201, 16
      %v572 = vrot.slane %v570, 5
      %v573 = vsel %vm223, %v568, %v572
      %v574 = vshrl.u32 %v201, 16
      %v576 = vrot.slane %v574, 4
      %v577 = vor.u32 %v576, %v572
      %v578 = vrot.slane %v577, 4
      %v580 = vshll.u32 %v219, 16
      %v582 = vrot.slane %v580, 5
      %v583 = vsel %vm223, %v578, %v582
      %v585 = vshrl.u32 %v202, 16
      %v587 = vrot.slane %v585, 4
      %v588 = vshll.u32 %v202, 16
      %v590 = vrot.slane %v588, 5
      %v591 = vor.u32 %v587, %v590
      %v592 = vrot.slane %v591, 4
      %v594 = vshll.u32 %v203, 16
      %v596 = vrot.slane %v594, 5
      %v597 = vsel %vm223, %v592, %v596
      %v598 = vshrl.u32 %v203, 16
      %v600 = vrot.slane %v598, 4
      %v601 = vor.u32 %v600, %v596
      %v602 = vrot.slane %v601, 4
      %v604 = vshll.u32 %v220, 16
      %v606 = vrot.slane %v604, 5
      %v607 = vsel %vm223, %v602, %v606
      %s608 = scalar_lea.vmem %s1, 2
      %v609 = vld [vmem:[%s608] sm:$0x3]
      %v610 = vunpack.c.l.b16 %v237
      %v611 = vunpack.c.l.b16 %v247
      %v612 = vunpack.c.l.b16 %v261
      %v613 = vunpack.c.l.b16 %v271
      %v614 = vunpack.c.l.b16 %v285
      %v615 = vunpack.c.l.b16 %v295
      %v616 = vunpack.c.l.b16 %v309
      %v617 = vunpack.c.l.b16 %v319
      %v618 = vunpack.c.l.b16 %v333
      %v619 = vunpack.c.l.b16 %v343
      %v620 = vunpack.c.l.b16 %v357
      %v621 = vunpack.c.l.b16 %v367
      %v622 = vunpack.c.l.b16 %v381
      %v623 = vunpack.c.l.b16 %v391
      %v624 = vunpack.c.l.b16 %v405
      %v625 = vunpack.c.l.b16 %v415
      %v626 = vunpack.c.l.b16 %v429
      %v627 = vunpack.c.l.b16 %v439
      %v628 = vunpack.c.l.b16 %v453
      %v629 = vunpack.c.l.b16 %v463
      %v630 = vunpack.c.l.b16 %v477
      %v631 = vunpack.c.l.b16 %v487
      %v632 = vunpack.c.l.b16 %v501
      %v633 = vunpack.c.l.b16 %v511
      %v634 = vunpack.c.l.b16 %v525
      %v635 = vunpack.c.l.b16 %v535
      %v636 = vunpack.c.l.b16 %v549
      %v637 = vunpack.c.l.b16 %v559
      %v638 = vunpack.c.l.b16 %v573
      %v639 = vunpack.c.l.b16 %v583
      %v640 = vunpack.c.l.b16 %v597
      %v641 = vunpack.c.l.b16 %v607
      %v642 = vpack.c.b16 %v611, %v610
      %v643 = vpack.c.b16 %v613, %v612
      %v644 = vpack.c.b16 %v615, %v614
      %v645 = vpack.c.b16 %v617, %v616
      %v646 = vpack.c.b16 %v619, %v618
      %v647 = vpack.c.b16 %v621, %v620
      %v648 = vpack.c.b16 %v623, %v622
      %v649 = vpack.c.b16 %v625, %v624
      %v650 = vpack.c.b16 %v627, %v626
      %v651 = vpack.c.b16 %v629, %v628
      %v652 = vpack.c.b16 %v631, %v630
      %v653 = vpack.c.b16 %v633, %v632
      %v654 = vpack.c.b16 %v635, %v634
      %v655 = vpack.c.b16 %v637, %v636
      %v656 = vpack.c.b16 %v639, %v638
      %v657 = vpack.c.b16 %v641, %v640
      %vm658 = vcmask 23552
      %v660 = vsel %vm658, %v642, 0
      %v663 = vsel %vm658, %v643, 0
      %v666 = vsel %vm658, %v644, 0
      %v669 = vsel %vm658, %v645, 0
      %v672 = vsel %vm658, %v646, 0
      %v675 = vsel %vm658, %v647, 0
      %v678 = vsel %vm658, %v648, 0
      %v681 = vsel %vm658, %v649, 0
      %v684 = vsel %vm658, %v650, 0
      %v687 = vsel %vm658, %v651, 0
      %v690 = vsel %vm658, %v652, 0
      %v693 = vsel %vm658, %v653, 0
      %v696 = vsel %vm658, %v654, 0
      %v699 = vsel %vm658, %v655, 0
      %v702 = vsel %vm658, %v656, 0
      %v705 = vsel %vm658, %v657, 0
      %vm707 = vcmask 1040384
      %vm708 = vcmask 1041408
      %v709 = vsel %vm707, 4294967295, 65535
      %v710 = vsel %vm708, %v709, 0
      %v712 = vand.u32 %v609, %v710
      %714 = vmatpush.bf16.msra.mxu0 0
      %715 = vmatpush.bf16.msra.mxu0 0
      %716 = vmatpush.bf16.msra.mxu0 0
      %717 = vmatpush.bf16.msra.mxu0 0
      %718 = vmatpush.bf16.msra.mxu0 0
      %719 = vmatpush.bf16.msra.mxu0 0
      %720 = vmatpush.bf16.msra.mxu0 0
      %721 = vmatpush.bf16.msra.mxu0 %v712
      %722 = vmatmul.bf16.gmra.mxu0 %v660
      %v723 = vpop.f32.mrf.mxu0
      %v724 = vadd.f32 0.0, %v723
      %v725 = vpop.f32.mrf.mxu0
      %v726 = vadd.f32 0.0, %v725
      %727 = vmatmul.bf16.gmra.mxu0 %v663
      %v728 = vpop.f32.mrf.mxu0
      %v729 = vadd.f32 0.0, %v728
      %v730 = vpop.f32.mrf.mxu0
      %v731 = vadd.f32 0.0, %v730
      %732 = vmatmul.bf16.gmra.mxu0 %v666
      %v733 = vpop.f32.mrf.mxu0
      %v734 = vadd.f32 0.0, %v733
      %v735 = vpop.f32.mrf.mxu0
      %v736 = vadd.f32 0.0, %v735
      %737 = vmatmul.bf16.gmra.mxu0 %v669
      %v738 = vpop.f32.mrf.mxu0
      %v739 = vadd.f32 0.0, %v738
      %v740 = vpop.f32.mrf.mxu0
      %v741 = vadd.f32 0.0, %v740
      %742 = vmatmul.bf16.gmra.mxu0 %v672
      %v743 = vpop.f32.mrf.mxu0
      %v744 = vadd.f32 0.0, %v743
      %v745 = vpop.f32.mrf.mxu0
      %v746 = vadd.f32 0.0, %v745
      %747 = vmatmul.bf16.gmra.mxu0 %v675
      %v748 = vpop.f32.mrf.mxu0
      %v749 = vadd.f32 0.0, %v748
      %v750 = vpop.f32.mrf.mxu0
      %v751 = vadd.f32 0.0, %v750
      %752 = vmatmul.bf16.gmra.mxu0 %v678
      %v753 = vpop.f32.mrf.mxu0
      %v754 = vadd.f32 0.0, %v753
      %v755 = vpop.f32.mrf.mxu0
      %v756 = vadd.f32 0.0, %v755
      %757 = vmatmul.bf16.gmra.mxu0 %v681
      %v758 = vpop.f32.mrf.mxu0
      %v759 = vadd.f32 0.0, %v758
      %v760 = vpop.f32.mrf.mxu0
      %v761 = vadd.f32 0.0, %v760
      %762 = vmatmul.bf16.gmra.mxu0 %v684
      %v763 = vpop.f32.mrf.mxu0
      %v764 = vadd.f32 0.0, %v763
      %v765 = vpop.f32.mrf.mxu0
      %v766 = vadd.f32 0.0, %v765
      %767 = vmatmul.bf16.gmra.mxu0 %v687
      %v768 = vpop.f32.mrf.mxu0
      %v769 = vadd.f32 0.0, %v768
      %v770 = vpop.f32.mrf.mxu0
      %v771 = vadd.f32 0.0, %v770
      %772 = vmatmul.bf16.gmra.mxu0 %v690
      %v773 = vpop.f32.mrf.mxu0
      %v774 = vadd.f32 0.0, %v773
      %v775 = vpop.f32.mrf.mxu0
      %v776 = vadd.f32 0.0, %v775
      %777 = vmatmul.bf16.gmra.mxu0 %v693
      %v778 = vpop.f32.mrf.mxu0
      %v779 = vadd.f32 0.0, %v778
      %v780 = vpop.f32.mrf.mxu0
      %v781 = vadd.f32 0.0, %v780
      %782 = vmatmul.bf16.gmra.mxu0 %v696
      %v783 = vpop.f32.mrf.mxu0
      %v784 = vadd.f32 0.0, %v783
      %v785 = vpop.f32.mrf.mxu0
      %v786 = vadd.f32 0.0, %v785
      %787 = vmatmul.bf16.gmra.mxu0 %v699
      %v788 = vpop.f32.mrf.mxu0
      %v789 = vadd.f32 0.0, %v788
      %v790 = vpop.f32.mrf.mxu0
      %v791 = vadd.f32 0.0, %v790
      %792 = vmatmul.bf16.gmra.mxu0 %v702
      %v793 = vpop.f32.mrf.mxu0
      %v794 = vadd.f32 0.0, %v793
      %v795 = vpop.f32.mrf.mxu0
      %v796 = vadd.f32 0.0, %v795
      %797 = vmatmul.bf16.gmra.mxu0 %v705
      %v798 = vpop.f32.mrf.mxu0
      %v799 = vadd.f32 0.0, %v798
      %v800 = vpop.f32.mrf.mxu0
      %v801 = vadd.f32 0.0, %v800
      %802 = vdwg.mxu0
      %v835 = vunpack.c.l.b16 %v172
      %v836 = vunpack.c.l.b16 %v173
      %v837 = vunpack.c.l.b16 %v174
      %v838 = vunpack.c.l.b16 %v175
      %v839 = vunpack.c.l.b16 %v176
      %v840 = vunpack.c.l.b16 %v177
      %v841 = vunpack.c.l.b16 %v178
      %v842 = vunpack.c.l.b16 %v179
      %v843 = vunpack.c.l.b16 %v180
      %v844 = vunpack.c.l.b16 %v181
      %v845 = vunpack.c.l.b16 %v182
      %v846 = vunpack.c.l.b16 %v183
      %v847 = vunpack.c.l.b16 %v184
      %v848 = vunpack.c.l.b16 %v185
      %v849 = vunpack.c.l.b16 %v186
      %v850 = vunpack.c.l.b16 %v187
      %v851 = vunpack.c.l.b16 %v188
      %v852 = vunpack.c.l.b16 %v189
      %v853 = vunpack.c.l.b16 %v190
      %v854 = vunpack.c.l.b16 %v191
      %v855 = vunpack.c.l.b16 %v192
      %v856 = vunpack.c.l.b16 %v193
      %v857 = vunpack.c.l.b16 %v194
      %v858 = vunpack.c.l.b16 %v195
      %v859 = vunpack.c.l.b16 %v196
      %v860 = vunpack.c.l.b16 %v197
      %v861 = vunpack.c.l.b16 %v198
      %v862 = vunpack.c.l.b16 %v199
      %v863 = vunpack.c.l.b16 %v200
      %v864 = vunpack.c.l.b16 %v201
      %v865 = vunpack.c.l.b16 %v202
      %v866 = vunpack.c.l.b16 %v203
      %v867 = vpack.c.b16 %v836, %v835
      %v868 = vpack.c.b16 %v838, %v837
      %v869 = vpack.c.b16 %v840, %v839
      %v870 = vpack.c.b16 %v842, %v841
      %v871 = vpack.c.b16 %v844, %v843
      %v872 = vpack.c.b16 %v846, %v845
      %v873 = vpack.c.b16 %v848, %v847
      %v874 = vpack.c.b16 %v850, %v849
      %v875 = vpack.c.b16 %v852, %v851
      %v876 = vpack.c.b16 %v854, %v853
      %v877 = vpack.c.b16 %v856, %v855
      %v878 = vpack.c.b16 %v858, %v857
      %v879 = vpack.c.b16 %v860, %v859
      %v880 = vpack.c.b16 %v862, %v861
      %v881 = vpack.c.b16 %v864, %v863
      %v882 = vpack.c.b16 %v866, %v865
      %v884 = vsel %vm658, %v867, 0
      %v887 = vsel %vm658, %v868, 0
      %v890 = vsel %vm658, %v869, 0
      %v893 = vsel %vm658, %v870, 0
      %v896 = vsel %vm658, %v871, 0
      %v899 = vsel %vm658, %v872, 0
      %v902 = vsel %vm658, %v873, 0
      %v905 = vsel %vm658, %v874, 0
      %v908 = vsel %vm658, %v875, 0
      %v911 = vsel %vm658, %v876, 0
      %v914 = vsel %vm658, %v877, 0
      %v917 = vsel %vm658, %v878, 0
      %v920 = vsel %vm658, %v879, 0
      %v923 = vsel %vm658, %v880, 0
      %v926 = vsel %vm658, %v881, 0
      %v929 = vsel %vm658, %v882, 0
      %v932 = vand.u32 %v204, %v710
      %934 = vmatpush.bf16.msra.mxu0 0
      %935 = vmatpush.bf16.msra.mxu0 0
      %936 = vmatpush.bf16.msra.mxu0 0
      %937 = vmatpush.bf16.msra.mxu0 0
      %938 = vmatpush.bf16.msra.mxu0 0
      %939 = vmatpush.bf16.msra.mxu0 0
      %940 = vmatpush.bf16.msra.mxu0 0
      %941 = vmatpush.bf16.msra.mxu0 %v932
      %942 = vmatmul.bf16.gmra.mxu0 %v884
      %v943 = vpop.f32.mrf.mxu0
      %v944 = vadd.f32 %v724, %v943
      %v945 = vpop.f32.mrf.mxu0
      %v946 = vadd.f32 %v726, %v945
      %947 = vmatmul.bf16.gmra.mxu0 %v887
      %v948 = vpop.f32.mrf.mxu0
      %v949 = vadd.f32 %v729, %v948
      %v950 = vpop.f32.mrf.mxu0
      %v951 = vadd.f32 %v731, %v950
      %952 = vmatmul.bf16.gmra.mxu0 %v890
      %v953 = vpop.f32.mrf.mxu0
      %v954 = vadd.f32 %v734, %v953
      %v955 = vpop.f32.mrf.mxu0
      %v956 = vadd.f32 %v736, %v955
      %957 = vmatmul.bf16.gmra.mxu0 %v893
      %v958 = vpop.f32.mrf.mxu0
      %v959 = vadd.f32 %v739, %v958
      %v960 = vpop.f32.mrf.mxu0
      %v961 = vadd.f32 %v741, %v960
      %962 = vmatmul.bf16.gmra.mxu0 %v896
      %v963 = vpop.f32.mrf.mxu0
      %v964 = vadd.f32 %v744, %v963
      %v965 = vpop.f32.mrf.mxu0
      %v966 = vadd.f32 %v746, %v965
      %967 = vmatmul.bf16.gmra.mxu0 %v899
      %v968 = vpop.f32.mrf.mxu0
      %v969 = vadd.f32 %v749, %v968
      %v970 = vpop.f32.mrf.mxu0
      %v971 = vadd.f32 %v751, %v970
      %972 = vmatmul.bf16.gmra.mxu0 %v902
      %v973 = vpop.f32.mrf.mxu0
      %v974 = vadd.f32 %v754, %v973
      %v975 = vpop.f32.mrf.mxu0
      %v976 = vadd.f32 %v756, %v975
      %977 = vmatmul.bf16.gmra.mxu0 %v905
      %v978 = vpop.f32.mrf.mxu0
      %v979 = vadd.f32 %v759, %v978
      %v980 = vpop.f32.mrf.mxu0
      %v981 = vadd.f32 %v761, %v980
      %982 = vmatmul.bf16.gmra.mxu0 %v908
      %v983 = vpop.f32.mrf.mxu0
      %v984 = vadd.f32 %v764, %v983
      %v985 = vpop.f32.mrf.mxu0
      %v986 = vadd.f32 %v766, %v985
      %987 = vmatmul.bf16.gmra.mxu0 %v911
      %v988 = vpop.f32.mrf.mxu0
      %v989 = vadd.f32 %v769, %v988
      %v990 = vpop.f32.mrf.mxu0
      %v991 = vadd.f32 %v771, %v990
      %992 = vmatmul.bf16.gmra.mxu0 %v914
      %v993 = vpop.f32.mrf.mxu0
      %v994 = vadd.f32 %v774, %v993
      %v995 = vpop.f32.mrf.mxu0
      %v996 = vadd.f32 %v776, %v995
      %997 = vmatmul.bf16.gmra.mxu0 %v917
      %v998 = vpop.f32.mrf.mxu0
      %v999 = vadd.f32 %v779, %v998
      %v1000 = vpop.f32.mrf.mxu0
      %v1001 = vadd.f32 %v781, %v1000
      %1002 = vmatmul.bf16.gmra.mxu0 %v920
      %v1003 = vpop.f32.mrf.mxu0
      %v1004 = vadd.f32 %v784, %v1003
      %v1005 = vpop.f32.mrf.mxu0
      %v1006 = vadd.f32 %v786, %v1005
      %1007 = vmatmul.bf16.gmra.mxu0 %v923
      %v1008 = vpop.f32.mrf.mxu0
      %v1009 = vadd.f32 %v789, %v1008
      %v1010 = vpop.f32.mrf.mxu0
      %v1011 = vadd.f32 %v791, %v1010
      %1012 = vmatmul.bf16.gmra.mxu0 %v926
      %v1013 = vpop.f32.mrf.mxu0
      %v1014 = vadd.f32 %v794, %v1013
      %v1015 = vpop.f32.mrf.mxu0
      %v1016 = vadd.f32 %v796, %v1015
      %1017 = vmatmul.bf16.gmra.mxu0 %v929
      %v1018 = vpop.f32.mrf.mxu0
      %v1019 = vadd.f32 %v799, %v1018
      %v1020 = vpop.f32.mrf.mxu0
      %v1021 = vadd.f32 %v801, %v1020
      %1022 = vdwg.mxu0
      %v1023 = vld [vmem:[%s165] sm:$0xe]
      %v1024 = vld [vmem:[%s165 + $0xc] sm:$0xe]
      %v1025 = vld [vmem:[%s165 + $0x18] sm:$0xe]
      %v1026 = vld [vmem:[%s165 + $0x24] sm:$0xe]
      %v1027 = vld [vmem:[%s165 + $0x30] sm:$0xe]
      %v1028 = vld [vmem:[%s165 + $0x3c] sm:$0xe]
      %v1029 = vld [vmem:[%s165 + $0x48] sm:$0xe]
      %v1030 = vld [vmem:[%s165 + $0x54] sm:$0xe]
      %v1031 = vld [vmem:[%s165 + $0x60] sm:$0xe]
      %v1032 = vld [vmem:[%s165 + $0x6c] sm:$0xe]
      %v1033 = vld [vmem:[%s165 + $0x78] sm:$0xe]
      %v1034 = vld [vmem:[%s165 + $0x84] sm:$0xe]
      %v1035 = vld [vmem:[%s165 + $0x90] sm:$0xe]
      %v1036 = vld [vmem:[%s165 + $0x9c] sm:$0xe]
      %v1037 = vld [vmem:[%s165 + $0xa8] sm:$0xe]
      %v1038 = vld [vmem:[%s165 + $0xb4] sm:$0xe]
      %vm1071 = vcmask 1042432
      %vm1072 = vcmask 1046532
      %vm1073 = vmor %vm1071, %vm1072
      %v1074 = vrot.slane %v1023, 5
      %v1075 = vrot.slane %v1074, 4
      %v1076 = vrot.slane %v173, 5
      %v1077 = vsel %vm1073, %v1075, %v1076
      %v1078 = vrot.slane %v1076, 4
      %v1079 = vrot.slane %v205, 5
      %v1080 = vsel %vm1073, %v1078, %v1079
      %v1081 = vrot.slane %v1024, 5
      %v1082 = vrot.slane %v1081, 4
      %v1083 = vrot.slane %v175, 5
      %v1084 = vsel %vm1073, %v1082, %v1083
      %v1085 = vrot.slane %v1083, 4
      %v1086 = vrot.slane %v206, 5
      %v1087 = vsel %vm1073, %v1085, %v1086
      %v1088 = vrot.slane %v1025, 5
      %v1089 = vrot.slane %v1088, 4
      %v1090 = vrot.slane %v177, 5
      %v1091 = vsel %vm1073, %v1089, %v1090
      %v1092 = vrot.slane %v1090, 4
      %v1093 = vrot.slane %v207, 5
      %v1094 = vsel %vm1073, %v1092, %v1093
      %v1095 = vrot.slane %v1026, 5
      %v1096 = vrot.slane %v1095, 4
      %v1097 = vrot.slane %v179, 5
      %v1098 = vsel %vm1073, %v1096, %v1097
      %v1099 = vrot.slane %v1097, 4
      %v1100 = vrot.slane %v208, 5
      %v1101 = vsel %vm1073, %v1099, %v1100
      %v1102 = vrot.slane %v1027, 5
      %v1103 = vrot.slane %v1102, 4
      %v1104 = vrot.slane %v181, 5
      %v1105 = vsel %vm1073, %v1103, %v1104
      %v1106 = vrot.slane %v1104, 4
      %v1107 = vrot.slane %v209, 5
      %v1108 = vsel %vm1073, %v1106, %v1107
      %v1109 = vrot.slane %v1028, 5
      %v1110 = vrot.slane %v1109, 4
      %v1111 = vrot.slane %v183, 5
      %v1112 = vsel %vm1073, %v1110, %v1111
      %v1113 = vrot.slane %v1111, 4
      %v1114 = vrot.slane %v210, 5
      %v1115 = vsel %vm1073, %v1113, %v1114
      %v1116 = vrot.slane %v1029, 5
      %v1117 = vrot.slane %v1116, 4
      %v1118 = vrot.slane %v185, 5
      %v1119 = vsel %vm1073, %v1117, %v1118
      %v1120 = vrot.slane %v1118, 4
      %v1121 = vrot.slane %v211, 5
      %v1122 = vsel %vm1073, %v1120, %v1121
      %v1123 = vrot.slane %v1030, 5
      %v1124 = vrot.slane %v1123, 4
      %v1125 = vrot.slane %v187, 5
      %v1126 = vsel %vm1073, %v1124, %v1125
      %v1127 = vrot.slane %v1125, 4
      %v1128 = vrot.slane %v212, 5
      %v1129 = vsel %vm1073, %v1127, %v1128
      %v1130 = vrot.slane %v1031, 5
      %v1131 = vrot.slane %v1130, 4
      %v1132 = vrot.slane %v189, 5
      %v1133 = vsel %vm1073, %v1131, %v1132
      %v1134 = vrot.slane %v1132, 4
      %v1135 = vrot.slane %v213, 5
      %v1136 = vsel %vm1073, %v1134, %v1135
      %v1137 = vrot.slane %v1032, 5
      %v1138 = vrot.slane %v1137, 4
      %v1139 = vrot.slane %v191, 5
      %v1140 = vsel %vm1073, %v1138, %v1139
      %v1141 = vrot.slane %v1139, 4
      %v1142 = vrot.slane %v214, 5
      %v1143 = vsel %vm1073, %v1141, %v1142
      %v1144 = vrot.slane %v1033, 5
      %v1145 = vrot.slane %v1144, 4
      %v1146 = vrot.slane %v193, 5
      %v1147 = vsel %vm1073, %v1145, %v1146
      %v1148 = vrot.slane %v1146, 4
      %v1149 = vrot.slane %v215, 5
      %v1150 = vsel %vm1073, %v1148, %v1149
      %v1151 = vrot.slane %v1034, 5
      %v1152 = vrot.slane %v1151, 4
      %v1153 = vrot.slane %v195, 5
      %v1154 = vsel %vm1073, %v1152, %v1153
      %v1155 = vrot.slane %v1153, 4
      %v1156 = vrot.slane %v216, 5
      %v1157 = vsel %vm1073, %v1155, %v1156
      %v1158 = vrot.slane %v1035, 5
      %v1159 = vrot.slane %v1158, 4
      %v1160 = vrot.slane %v197, 5
      %v1161 = vsel %vm1073, %v1159, %v1160
      %v1162 = vrot.slane %v1160, 4
      %v1163 = vrot.slane %v217, 5
      %v1164 = vsel %vm1073, %v1162, %v1163
      %v1165 = vrot.slane %v1036, 5
      %v1166 = vrot.slane %v1165, 4
      %v1167 = vrot.slane %v199, 5
      %v1168 = vsel %vm1073, %v1166, %v1167
      %v1169 = vrot.slane %v1167, 4
      %v1170 = vrot.slane %v218, 5
      %v1171 = vsel %vm1073, %v1169, %v1170
      %v1172 = vrot.slane %v1037, 5
      %v1173 = vrot.slane %v1172, 4
      %v1174 = vrot.slane %v201, 5
      %v1175 = vsel %vm1073, %v1173, %v1174
      %v1176 = vrot.slane %v1174, 4
      %v1177 = vrot.slane %v219, 5
      %v1178 = vsel %vm1073, %v1176, %v1177
      %v1179 = vrot.slane %v1038, 5
      %v1180 = vrot.slane %v1179, 4
      %v1181 = vrot.slane %v203, 5
      %v1182 = vsel %vm1073, %v1180, %v1181
      %v1183 = vrot.slane %v1181, 4
      %v1184 = vrot.slane %v220, 5
      %v1185 = vsel %vm1073, %v1183, %v1184
      %s1186 = scalar_lea.vmem %s1, 4
      %v1187 = vld [vmem:[%s1186] sm:$0x3]
      %v1188 = vunpack.c.l.b16 %v1077
      %v1189 = vunpack.c.l.b16 %v1080
      %v1190 = vunpack.c.l.b16 %v1084
      %v1191 = vunpack.c.l.b16 %v1087
      %v1192 = vunpack.c.l.b16 %v1091
      %v1193 = vunpack.c.l.b16 %v1094
      %v1194 = vunpack.c.l.b16 %v1098
      %v1195 = vunpack.c.l.b16 %v1101
      %v1196 = vunpack.c.l.b16 %v1105
      %v1197 = vunpack.c.l.b16 %v1108
      %v1198 = vunpack.c.l.b16 %v1112
      %v1199 = vunpack.c.l.b16 %v1115
      %v1200 = vunpack.c.l.b16 %v1119
      %v1201 = vunpack.c.l.b16 %v1122
      %v1202 = vunpack.c.l.b16 %v1126
      %v1203 = vunpack.c.l.b16 %v1129
      %v1204 = vunpack.c.l.b16 %v1133
      %v1205 = vunpack.c.l.b16 %v1136
      %v1206 = vunpack.c.l.b16 %v1140
      %v1207 = vunpack.c.l.b16 %v1143
      %v1208 = vunpack.c.l.b16 %v1147
      %v1209 = vunpack.c.l.b16 %v1150
      %v1210 = vunpack.c.l.b16 %v1154
      %v1211 = vunpack.c.l.b16 %v1157
      %v1212 = vunpack.c.l.b16 %v1161
      %v1213 = vunpack.c.l.b16 %v1164
      %v1214 = vunpack.c.l.b16 %v1168
      %v1215 = vunpack.c.l.b16 %v1171
      %v1216 = vunpack.c.l.b16 %v1175
      %v1217 = vunpack.c.l.b16 %v1178
      %v1218 = vunpack.c.l.b16 %v1182
      %v1219 = vunpack.c.l.b16 %v1185
      %v1220 = vpack.c.b16 %v1189, %v1188
      %v1221 = vpack.c.b16 %v1191, %v1190
      %v1222 = vpack.c.b16 %v1193, %v1192
      %v1223 = vpack.c.b16 %v1195, %v1194
      %v1224 = vpack.c.b16 %v1197, %v1196
      %v1225 = vpack.c.b16 %v1199, %v1198
      %v1226 = vpack.c.b16 %v1201, %v1200
      %v1227 = vpack.c.b16 %v1203, %v1202
      %v1228 = vpack.c.b16 %v1205, %v1204
      %v1229 = vpack.c.b16 %v1207, %v1206
      %v1230 = vpack.c.b16 %v1209, %v1208
      %v1231 = vpack.c.b16 %v1211, %v1210
      %v1232 = vpack.c.b16 %v1213, %v1212
      %v1233 = vpack.c.b16 %v1215, %v1214
      %v1234 = vpack.c.b16 %v1217, %v1216
      %v1235 = vpack.c.b16 %v1219, %v1218
      %v1237 = vsel %vm658, %v1220, 0
      %v1240 = vsel %vm658, %v1221, 0
      %v1243 = vsel %vm658, %v1222, 0
      %v1246 = vsel %vm658, %v1223, 0
      %v1249 = vsel %vm658, %v1224, 0
      %v1252 = vsel %vm658, %v1225, 0
      %v1255 = vsel %vm658, %v1226, 0
      %v1258 = vsel %vm658, %v1227, 0
      %v1261 = vsel %vm658, %v1228, 0
      %v1264 = vsel %vm658, %v1229, 0
      %v1267 = vsel %vm658, %v1230, 0
      %v1270 = vsel %vm658, %v1231, 0
      %v1273 = vsel %vm658, %v1232, 0
      %v1276 = vsel %vm658, %v1233, 0
      %v1279 = vsel %vm658, %v1234, 0
      %v1282 = vsel %vm658, %v1235, 0
      %v1285 = vand.u32 %v1187, %v710
      %1287 = vmatpush.bf16.msra.mxu0 0
      %1288 = vmatpush.bf16.msra.mxu0 0
      %1289 = vmatpush.bf16.msra.mxu0 0
      %1290 = vmatpush.bf16.msra.mxu0 0
      %1291 = vmatpush.bf16.msra.mxu0 0
      %1292 = vmatpush.bf16.msra.mxu0 0
      %1293 = vmatpush.bf16.msra.mxu0 0
      %1294 = vmatpush.bf16.msra.mxu0 %v1285
      %1295 = vmatmul.bf16.gmra.mxu0 %v1237
      %v1296 = vpop.f32.mrf.mxu0
      %v1297 = vadd.f32 0.0, %v1296
      %v1298 = vpop.f32.mrf.mxu0
      %v1299 = vadd.f32 0.0, %v1298
      %1300 = vmatmul.bf16.gmra.mxu0 %v1240
      %v1301 = vpop.f32.mrf.mxu0
      %v1302 = vadd.f32 0.0, %v1301
      %v1303 = vpop.f32.mrf.mxu0
      %v1304 = vadd.f32 0.0, %v1303
      %1305 = vmatmul.bf16.gmra.mxu0 %v1243
      %v1306 = vpop.f32.mrf.mxu0
      %v1307 = vadd.f32 0.0, %v1306
      %v1308 = vpop.f32.mrf.mxu0
      %v1309 = vadd.f32 0.0, %v1308
      %1310 = vmatmul.bf16.gmra.mxu0 %v1246
      %v1311 = vpop.f32.mrf.mxu0
      %v1312 = vadd.f32 0.0, %v1311
      %v1313 = vpop.f32.mrf.mxu0
      %v1314 = vadd.f32 0.0, %v1313
      %1315 = vmatmul.bf16.gmra.mxu0 %v1249
      %v1316 = vpop.f32.mrf.mxu0
      %v1317 = vadd.f32 0.0, %v1316
      %v1318 = vpop.f32.mrf.mxu0
      %v1319 = vadd.f32 0.0, %v1318
      %1320 = vmatmul.bf16.gmra.mxu0 %v1252
      %v1321 = vpop.f32.mrf.mxu0
      %v1322 = vadd.f32 0.0, %v1321
      %v1323 = vpop.f32.mrf.mxu0
      %v1324 = vadd.f32 0.0, %v1323
      %1325 = vmatmul.bf16.gmra.mxu0 %v1255
      %v1326 = vpop.f32.mrf.mxu0
      %v1327 = vadd.f32 0.0, %v1326
      %v1328 = vpop.f32.mrf.mxu0
      %v1329 = vadd.f32 0.0, %v1328
      %1330 = vmatmul.bf16.gmra.mxu0 %v1258
      %v1331 = vpop.f32.mrf.mxu0
      %v1332 = vadd.f32 0.0, %v1331
      %v1333 = vpop.f32.mrf.mxu0
      %v1334 = vadd.f32 0.0, %v1333
      %1335 = vmatmul.bf16.gmra.mxu0 %v1261
      %v1336 = vpop.f32.mrf.mxu0
      %v1337 = vadd.f32 0.0, %v1336
      %v1338 = vpop.f32.mrf.mxu0
      %v1339 = vadd.f32 0.0, %v1338
      %1340 = vmatmul.bf16.gmra.mxu0 %v1264
      %v1341 = vpop.f32.mrf.mxu0
      %v1342 = vadd.f32 0.0, %v1341
      %v1343 = vpop.f32.mrf.mxu0
      %v1344 = vadd.f32 0.0, %v1343
      %1345 = vmatmul.bf16.gmra.mxu0 %v1267
      %v1346 = vpop.f32.mrf.mxu0
      %v1347 = vadd.f32 0.0, %v1346
      %v1348 = vpop.f32.mrf.mxu0
      %v1349 = vadd.f32 0.0, %v1348
      %1350 = vmatmul.bf16.gmra.mxu0 %v1270
      %v1351 = vpop.f32.mrf.mxu0
      %v1352 = vadd.f32 0.0, %v1351
      %v1353 = vpop.f32.mrf.mxu0
      %v1354 = vadd.f32 0.0, %v1353
      %1355 = vmatmul.bf16.gmra.mxu0 %v1273
      %v1356 = vpop.f32.mrf.mxu0
      %v1357 = vadd.f32 0.0, %v1356
      %v1358 = vpop.f32.mrf.mxu0
      %v1359 = vadd.f32 0.0, %v1358
      %1360 = vmatmul.bf16.gmra.mxu0 %v1276
      %v1361 = vpop.f32.mrf.mxu0
      %v1362 = vadd.f32 0.0, %v1361
      %v1363 = vpop.f32.mrf.mxu0
      %v1364 = vadd.f32 0.0, %v1363
      %1365 = vmatmul.bf16.gmra.mxu0 %v1279
      %v1366 = vpop.f32.mrf.mxu0
      %v1367 = vadd.f32 0.0, %v1366
      %v1368 = vpop.f32.mrf.mxu0
      %v1369 = vadd.f32 0.0, %v1368
      %1370 = vmatmul.bf16.gmra.mxu0 %v1282
      %v1371 = vpop.f32.mrf.mxu0
      %v1372 = vadd.f32 0.0, %v1371
      %v1373 = vpop.f32.mrf.mxu0
      %v1374 = vadd.f32 0.0, %v1373
      %1375 = vdwg.mxu0
      %v1376 = vadd.f32 %v944, %v1297
      %v1377 = vadd.f32 %v946, %v1299
      %v1378 = vadd.f32 %v949, %v1302
      %v1379 = vadd.f32 %v951, %v1304
      %v1380 = vadd.f32 %v954, %v1307
      %v1381 = vadd.f32 %v956, %v1309
      %v1382 = vadd.f32 %v959, %v1312
      %v1383 = vadd.f32 %v961, %v1314
      %v1384 = vadd.f32 %v964, %v1317
      %v1385 = vadd.f32 %v966, %v1319
      %v1386 = vadd.f32 %v969, %v1322
      %v1387 = vadd.f32 %v971, %v1324
      %v1388 = vadd.f32 %v974, %v1327
      %v1389 = vadd.f32 %v976, %v1329
      %v1390 = vadd.f32 %v979, %v1332
      %v1391 = vadd.f32 %v981, %v1334
      %v1392 = vadd.f32 %v984, %v1337
      %v1393 = vadd.f32 %v986, %v1339
      %v1394 = vadd.f32 %v989, %v1342
      %v1395 = vadd.f32 %v991, %v1344
      %v1396 = vadd.f32 %v994, %v1347
      %v1397 = vadd.f32 %v996, %v1349
      %v1398 = vadd.f32 %v999, %v1352
      %v1399 = vadd.f32 %v1001, %v1354
      %v1400 = vadd.f32 %v1004, %v1357
      %v1401 = vadd.f32 %v1006, %v1359
      %v1402 = vadd.f32 %v1009, %v1362
      %v1403 = vadd.f32 %v1011, %v1364
      %v1404 = vadd.f32 %v1014, %v1367
      %v1405 = vadd.f32 %v1016, %v1369
      %v1406 = vadd.f32 %v1019, %v1372
      %v1407 = vadd.f32 %v1021, %v1374
      %s1408 = scalar_lea.vmem %s165, 12
      %v1409 = vld [vmem:[%s1408] sm:$0xf]
      %v1410 = vld [vmem:[%s1408 + $0x4] sm:$0xf]
      %v1411 = vld [vmem:[%s1408 + $0xc] sm:$0xf]
      %v1412 = vld [vmem:[%s1408 + $0x10] sm:$0xf]
      %v1413 = vld [vmem:[%s1408 + $0x18] sm:$0xf]
      %v1414 = vld [vmem:[%s1408 + $0x1c] sm:$0xf]
      %v1415 = vld [vmem:[%s1408 + $0x24] sm:$0xf]
      %v1416 = vld [vmem:[%s1408 + $0x28] sm:$0xf]
      %v1417 = vld [vmem:[%s1408 + $0x30] sm:$0xf]
      %v1418 = vld [vmem:[%s1408 + $0x34] sm:$0xf]
      %v1419 = vld [vmem:[%s1408 + $0x3c] sm:$0xf]
      %v1420 = vld [vmem:[%s1408 + $0x40] sm:$0xf]
      %v1421 = vld [vmem:[%s1408 + $0x48] sm:$0xf]
      %v1422 = vld [vmem:[%s1408 + $0x4c] sm:$0xf]
      %v1423 = vld [vmem:[%s1408 + $0x54] sm:$0xf]
      %v1424 = vld [vmem:[%s1408 + $0x58] sm:$0xf]
      %v1425 = vld [vmem:[%s1408 + $0x60] sm:$0xf]
      %v1426 = vld [vmem:[%s1408 + $0x64] sm:$0xf]
      %v1427 = vld [vmem:[%s1408 + $0x6c] sm:$0xf]
      %v1428 = vld [vmem:[%s1408 + $0x70] sm:$0xf]
      %v1429 = vld [vmem:[%s1408 + $0x78] sm:$0xf]
      %v1430 = vld [vmem:[%s1408 + $0x7c] sm:$0xf]
      %v1431 = vld [vmem:[%s1408 + $0x84] sm:$0xf]
      %v1432 = vld [vmem:[%s1408 + $0x88] sm:$0xf]
      %v1433 = vld [vmem:[%s1408 + $0x90] sm:$0xf]
      %v1434 = vld [vmem:[%s1408 + $0x94] sm:$0xf]
      %v1435 = vld [vmem:[%s1408 + $0x9c] sm:$0xf]
      %v1436 = vld [vmem:[%s1408 + $0xa0] sm:$0xf]
      %v1437 = vld [vmem:[%s1408 + $0xa8] sm:$0xf]
      %v1438 = vld [vmem:[%s1408 + $0xac] sm:$0xf]
      %v1439 = vld [vmem:[%s1408 + $0xb4] sm:$0xf]
      %v1440 = vld [vmem:[%s1408 + $0xb8] sm:$0xf]
      %s1441 = scalar_lea.vmem %s1, 6
      %v1442 = vld [vmem:[%s1441] sm:$0x3]
      %v1475 = vunpack.c.l.b16 %v1409
      %v1476 = vunpack.c.l.b16 %v1410
      %v1477 = vunpack.c.l.b16 %v1411
      %v1478 = vunpack.c.l.b16 %v1412
      %v1479 = vunpack.c.l.b16 %v1413
      %v1480 = vunpack.c.l.b16 %v1414
      %v1481 = vunpack.c.l.b16 %v1415
      %v1482 = vunpack.c.l.b16 %v1416
      %v1483 = vunpack.c.l.b16 %v1417
      %v1484 = vunpack.c.l.b16 %v1418
      %v1485 = vunpack.c.l.b16 %v1419
      %v1486 = vunpack.c.l.b16 %v1420
      %v1487 = vunpack.c.l.b16 %v1421
      %v1488 = vunpack.c.l.b16 %v1422
      %v1489 = vunpack.c.l.b16 %v1423
      %v1490 = vunpack.c.l.b16 %v1424
      %v1491 = vunpack.c.l.b16 %v1425
      %v1492 = vunpack.c.l.b16 %v1426
      %v1493 = vunpack.c.l.b16 %v1427
      %v1494 = vunpack.c.l.b16 %v1428
      %v1495 = vunpack.c.l.b16 %v1429
      %v1496 = vunpack.c.l.b16 %v1430
      %v1497 = vunpack.c.l.b16 %v1431
      %v1498 = vunpack.c.l.b16 %v1432
      %v1499 = vunpack.c.l.b16 %v1433
      %v1500 = vunpack.c.l.b16 %v1434
      %v1501 = vunpack.c.l.b16 %v1435
      %v1502 = vunpack.c.l.b16 %v1436
      %v1503 = vunpack.c.l.b16 %v1437
      %v1504 = vunpack.c.l.b16 %v1438
      %v1505 = vunpack.c.l.b16 %v1439
      %v1506 = vunpack.c.l.b16 %v1440
      %v1507 = vpack.c.b16 %v1476, %v1475
      %v1508 = vpack.c.b16 %v1478, %v1477
      %v1509 = vpack.c.b16 %v1480, %v1479
      %v1510 = vpack.c.b16 %v1482, %v1481
      %v1511 = vpack.c.b16 %v1484, %v1483
      %v1512 = vpack.c.b16 %v1486, %v1485
      %v1513 = vpack.c.b16 %v1488, %v1487
      %v1514 = vpack.c.b16 %v1490, %v1489
      %v1515 = vpack.c.b16 %v1492, %v1491
      %v1516 = vpack.c.b16 %v1494, %v1493
      %v1517 = vpack.c.b16 %v1496, %v1495
      %v1518 = vpack.c.b16 %v1498, %v1497
      %v1519 = vpack.c.b16 %v1500, %v1499
      %v1520 = vpack.c.b16 %v1502, %v1501
      %v1521 = vpack.c.b16 %v1504, %v1503
      %v1522 = vpack.c.b16 %v1506, %v1505
      %v1524 = vsel %vm658, %v1507, 0
      %v1527 = vsel %vm658, %v1508, 0
      %v1530 = vsel %vm658, %v1509, 0
      %v1533 = vsel %vm658, %v1510, 0
      %v1536 = vsel %vm658, %v1511, 0
      %v1539 = vsel %vm658, %v1512, 0
      %v1542 = vsel %vm658, %v1513, 0
      %v1545 = vsel %vm658, %v1514, 0
      %v1548 = vsel %vm658, %v1515, 0
      %v1551 = vsel %vm658, %v1516, 0
      %v1554 = vsel %vm658, %v1517, 0
      %v1557 = vsel %vm658, %v1518, 0
      %v1560 = vsel %vm658, %v1519, 0
      %v1563 = vsel %vm658, %v1520, 0
      %v1566 = vsel %vm658, %v1521, 0
      %v1569 = vsel %vm658, %v1522, 0
      %v1572 = vand.u32 %v1442, %v710
      %1574 = vmatpush.bf16.msra.mxu0 0
      %1575 = vmatpush.bf16.msra.mxu0 0
      %1576 = vmatpush.bf16.msra.mxu0 0
      %1577 = vmatpush.bf16.msra.mxu0 0
      %1578 = vmatpush.bf16.msra.mxu0 0
      %1579 = vmatpush.bf16.msra.mxu0 0
      %1580 = vmatpush.bf16.msra.mxu0 0
      %1581 = vmatpush.bf16.msra.mxu0 %v1572
      %1582 = vmatmul.bf16.gmra.mxu0 %v1524
      %v1583 = vpop.f32.mrf.mxu0
      %v1584 = vadd.f32 0.0, %v1583
      %v1585 = vpop.f32.mrf.mxu0
      %v1586 = vadd.f32 0.0, %v1585
      %1587 = vmatmul.bf16.gmra.mxu0 %v1527
      %v1588 = vpop.f32.mrf.mxu0
      %v1589 = vadd.f32 0.0, %v1588
      %v1590 = vpop.f32.mrf.mxu0
      %v1591 = vadd.f32 0.0, %v1590
      %1592 = vmatmul.bf16.gmra.mxu0 %v1530
      %v1593 = vpop.f32.mrf.mxu0
      %v1594 = vadd.f32 0.0, %v1593
      %v1595 = vpop.f32.mrf.mxu0
      %v1596 = vadd.f32 0.0, %v1595
      %1597 = vmatmul.bf16.gmra.mxu0 %v1533
      %v1598 = vpop.f32.mrf.mxu0
      %v1599 = vadd.f32 0.0, %v1598
      %v1600 = vpop.f32.mrf.mxu0
      %v1601 = vadd.f32 0.0, %v1600
      %1602 = vmatmul.bf16.gmra.mxu0 %v1536
      %v1603 = vpop.f32.mrf.mxu0
      %v1604 = vadd.f32 0.0, %v1603
      %v1605 = vpop.f32.mrf.mxu0
      %v1606 = vadd.f32 0.0, %v1605
      %1607 = vmatmul.bf16.gmra.mxu0 %v1539
      %v1608 = vpop.f32.mrf.mxu0
      %v1609 = vadd.f32 0.0, %v1608
      %v1610 = vpop.f32.mrf.mxu0
      %v1611 = vadd.f32 0.0, %v1610
      %1612 = vmatmul.bf16.gmra.mxu0 %v1542
      %v1613 = vpop.f32.mrf.mxu0
      %v1614 = vadd.f32 0.0, %v1613
      %v1615 = vpop.f32.mrf.mxu0
      %v1616 = vadd.f32 0.0, %v1615
      %1617 = vmatmul.bf16.gmra.mxu0 %v1545
      %v1618 = vpop.f32.mrf.mxu0
      %v1619 = vadd.f32 0.0, %v1618
      %v1620 = vpop.f32.mrf.mxu0
      %v1621 = vadd.f32 0.0, %v1620
      %1622 = vmatmul.bf16.gmra.mxu0 %v1548
      %v1623 = vpop.f32.mrf.mxu0
      %v1624 = vadd.f32 0.0, %v1623
      %v1625 = vpop.f32.mrf.mxu0
      %v1626 = vadd.f32 0.0, %v1625
      %1627 = vmatmul.bf16.gmra.mxu0 %v1551
      %v1628 = vpop.f32.mrf.mxu0
      %v1629 = vadd.f32 0.0, %v1628
      %v1630 = vpop.f32.mrf.mxu0
      %v1631 = vadd.f32 0.0, %v1630
      %1632 = vmatmul.bf16.gmra.mxu0 %v1554
      %v1633 = vpop.f32.mrf.mxu0
      %v1634 = vadd.f32 0.0, %v1633
      %v1635 = vpop.f32.mrf.mxu0
      %v1636 = vadd.f32 0.0, %v1635
      %1637 = vmatmul.bf16.gmra.mxu0 %v1557
      %v1638 = vpop.f32.mrf.mxu0
      %v1639 = vadd.f32 0.0, %v1638
      %v1640 = vpop.f32.mrf.mxu0
      %v1641 = vadd.f32 0.0, %v1640
      %1642 = vmatmul.bf16.gmra.mxu0 %v1560
      %v1643 = vpop.f32.mrf.mxu0
      %v1644 = vadd.f32 0.0, %v1643
      %v1645 = vpop.f32.mrf.mxu0
      %v1646 = vadd.f32 0.0, %v1645
      %1647 = vmatmul.bf16.gmra.mxu0 %v1563
      %v1648 = vpop.f32.mrf.mxu0
      %v1649 = vadd.f32 0.0, %v1648
      %v1650 = vpop.f32.mrf.mxu0
      %v1651 = vadd.f32 0.0, %v1650
      %1652 = vmatmul.bf16.gmra.mxu0 %v1566
      %v1653 = vpop.f32.mrf.mxu0
      %v1654 = vadd.f32 0.0, %v1653
      %v1655 = vpop.f32.mrf.mxu0
      %v1656 = vadd.f32 0.0, %v1655
      %1657 = vmatmul.bf16.gmra.mxu0 %v1569
      %v1658 = vpop.f32.mrf.mxu0
      %v1659 = vadd.f32 0.0, %v1658
      %v1660 = vpop.f32.mrf.mxu0
      %v1661 = vadd.f32 0.0, %v1660
      %1662 = vdwg.mxu0
      %v1663 = vadd.f32 %v1376, %v1584
      %v1664 = vadd.f32 %v1377, %v1586
      %v1665 = vadd.f32 %v1378, %v1589
      %v1666 = vadd.f32 %v1379, %v1591
      %v1667 = vadd.f32 %v1380, %v1594
      %v1668 = vadd.f32 %v1381, %v1596
      %v1669 = vadd.f32 %v1382, %v1599
      %v1670 = vadd.f32 %v1383, %v1601
      %v1671 = vadd.f32 %v1384, %v1604
      %v1672 = vadd.f32 %v1385, %v1606
      %v1673 = vadd.f32 %v1386, %v1609
      %v1674 = vadd.f32 %v1387, %v1611
      %v1675 = vadd.f32 %v1388, %v1614
      %v1676 = vadd.f32 %v1389, %v1616
      %v1677 = vadd.f32 %v1390, %v1619
      %v1678 = vadd.f32 %v1391, %v1621
      %v1679 = vadd.f32 %v1392, %v1624
      %v1680 = vadd.f32 %v1393, %v1626
      %v1681 = vadd.f32 %v1394, %v1629
      %v1682 = vadd.f32 %v1395, %v1631
      %v1683 = vadd.f32 %v1396, %v1634
      %v1684 = vadd.f32 %v1397, %v1636
      %v1685 = vadd.f32 %v1398, %v1639
      %v1686 = vadd.f32 %v1399, %v1641
      %v1687 = vadd.f32 %v1400, %v1644
      %v1688 = vadd.f32 %v1401, %v1646
      %v1689 = vadd.f32 %v1402, %v1649
      %v1690 = vadd.f32 %v1403, %v1651
      %v1691 = vadd.f32 %v1404, %v1654
      %v1692 = vadd.f32 %v1405, %v1656
      %v1693 = vadd.f32 %v1406, %v1659
      %v1694 = vadd.f32 %v1407, %v1661
      %v1695 = vld [vmem:[%s1408] sm:$0xf]
      %v1696 = vld [vmem:[%s1408 + $0x4] sm:$0xf]
      %v1697 = vld [vmem:[%s1408 + $0x8] sm:$0x1]
      %v1698 = vld [vmem:[%s1408 + $0xc] sm:$0xf]
      %v1699 = vld [vmem:[%s1408 + $0x10] sm:$0xf]
      %v1700 = vld [vmem:[%s1408 + $0x14] sm:$0x1]
      %v1701 = vld [vmem:[%s1408 + $0x18] sm:$0xf]
      %v1702 = vld [vmem:[%s1408 + $0x1c] sm:$0xf]
      %v1703 = vld [vmem:[%s1408 + $0x20] sm:$0x1]
      %v1704 = vld [vmem:[%s1408 + $0x24] sm:$0xf]
      %v1705 = vld [vmem:[%s1408 + $0x28] sm:$0xf]
      %v1706 = vld [vmem:[%s1408 + $0x2c] sm:$0x1]
      %v1707 = vld [vmem:[%s1408 + $0x30] sm:$0xf]
      %v1708 = vld [vmem:[%s1408 + $0x34] sm:$0xf]
      %v1709 = vld [vmem:[%s1408 + $0x38] sm:$0x1]
      %v1710 = vld [vmem:[%s1408 + $0x3c] sm:$0xf]
      %v1711 = vld [vmem:[%s1408 + $0x40] sm:$0xf]
      %v1712 = vld [vmem:[%s1408 + $0x44] sm:$0x1]
      %v1713 = vld [vmem:[%s1408 + $0x48] sm:$0xf]
      %v1714 = vld [vmem:[%s1408 + $0x4c] sm:$0xf]
      %v1715 = vld [vmem:[%s1408 + $0x50] sm:$0x1]
      %v1716 = vld [vmem:[%s1408 + $0x54] sm:$0xf]
      %v1717 = vld [vmem:[%s1408 + $0x58] sm:$0xf]
      %v1718 = vld [vmem:[%s1408 + $0x5c] sm:$0x1]
      %v1719 = vld [vmem:[%s1408 + $0x60] sm:$0xf]
      %v1720 = vld [vmem:[%s1408 + $0x64] sm:$0xf]
      %v1721 = vld [vmem:[%s1408 + $0x68] sm:$0x1]
      %v1722 = vld [vmem:[%s1408 + $0x6c] sm:$0xf]
      %v1723 = vld [vmem:[%s1408 + $0x70] sm:$0xf]
      %v1724 = vld [vmem:[%s1408 + $0x74] sm:$0x1]
      %v1725 = vld [vmem:[%s1408 + $0x78] sm:$0xf]
      %v1726 = vld [vmem:[%s1408 + $0x7c] sm:$0xf]
      %v1727 = vld [vmem:[%s1408 + $0x80] sm:$0x1]
      %v1728 = vld [vmem:[%s1408 + $0x84] sm:$0xf]
      %v1729 = vld [vmem:[%s1408 + $0x88] sm:$0xf]
      %v1730 = vld [vmem:[%s1408 + $0x8c] sm:$0x1]
      %v1731 = vld [vmem:[%s1408 + $0x90] sm:$0xf]
      %v1732 = vld [vmem:[%s1408 + $0x94] sm:$0xf]
      %v1733 = vld [vmem:[%s1408 + $0x98] sm:$0x1]
      %v1734 = vld [vmem:[%s1408 + $0x9c] sm:$0xf]
      %v1735 = vld [vmem:[%s1408 + $0xa0] sm:$0xf]
      %v1736 = vld [vmem:[%s1408 + $0xa4] sm:$0x1]
      %v1737 = vld [vmem:[%s1408 + $0xa8] sm:$0xf]
      %v1738 = vld [vmem:[%s1408 + $0xac] sm:$0xf]
      %v1739 = vld [vmem:[%s1408 + $0xb0] sm:$0x1]
      %v1740 = vld [vmem:[%s1408 + $0xb4] sm:$0xf]
      %v1741 = vld [vmem:[%s1408 + $0xb8] sm:$0xf]
      %v1742 = vld [vmem:[%s1408 + $0xbc] sm:$0x1]
      %v1744 = vshrl.u32 %v1695, 16
      %v1746 = vrot.slane %v1744, 4
      %v1747 = vshll.u32 %v1695, 16
      %v1749 = vrot.slane %v1747, 5
      %v1750 = vor.u32 %v1746, %v1749
      %v1751 = vrot.slane %v1750, 4
      %v1753 = vshll.u32 %v1696, 16
      %v1755 = vrot.slane %v1753, 5
      %v1756 = vsel %vm223, %v1751, %v1755
      %v1757 = vshrl.u32 %v1696, 16
      %v1759 = vrot.slane %v1757, 4
      %v1760 = vor.u32 %v1759, %v1755
      %v1761 = vrot.slane %v1760, 4
      %v1763 = vshll.u32 %v1697, 16
      %v1765 = vrot.slane %v1763, 5
      %v1766 = vsel %vm223, %v1761, %v1765
      %v1768 = vshrl.u32 %v1698, 16
      %v1770 = vrot.slane %v1768, 4
      %v1771 = vshll.u32 %v1698, 16
      %v1773 = vrot.slane %v1771, 5
      %v1774 = vor.u32 %v1770, %v1773
      %v1775 = vrot.slane %v1774, 4
      %v1777 = vshll.u32 %v1699, 16
      %v1779 = vrot.slane %v1777, 5
      %v1780 = vsel %vm223, %v1775, %v1779
      %v1781 = vshrl.u32 %v1699, 16
      %v1783 = vrot.slane %v1781, 4
      %v1784 = vor.u32 %v1783, %v1779
      %v1785 = vrot.slane %v1784, 4
      %v1787 = vshll.u32 %v1700, 16
      %v1789 = vrot.slane %v1787, 5
      %v1790 = vsel %vm223, %v1785, %v1789
      %v1792 = vshrl.u32 %v1701, 16
      %v1794 = vrot.slane %v1792, 4
      %v1795 = vshll.u32 %v1701, 16
      %v1797 = vrot.slane %v1795, 5
      %v1798 = vor.u32 %v1794, %v1797
      %v1799 = vrot.slane %v1798, 4
      %v1801 = vshll.u32 %v1702, 16
      %v1803 = vrot.slane %v1801, 5
      %v1804 = vsel %vm223, %v1799, %v1803
      %v1805 = vshrl.u32 %v1702, 16
      %v1807 = vrot.slane %v1805, 4
      %v1808 = vor.u32 %v1807, %v1803
      %v1809 = vrot.slane %v1808, 4
      %v1811 = vshll.u32 %v1703, 16
      %v1813 = vrot.slane %v1811, 5
      %v1814 = vsel %vm223, %v1809, %v1813
      %v1816 = vshrl.u32 %v1704, 16
      %v1818 = vrot.slane %v1816, 4
      %v1819 = vshll.u32 %v1704, 16
      %v1821 = vrot.slane %v1819, 5
      %v1822 = vor.u32 %v1818, %v1821
      %v1823 = vrot.slane %v1822, 4
      %v1825 = vshll.u32 %v1705, 16
      %v1827 = vrot.slane %v1825, 5
      %v1828 = vsel %vm223, %v1823, %v1827
      %v1829 = vshrl.u32 %v1705, 16
      %v1831 = vrot.slane %v1829, 4
      %v1832 = vor.u32 %v1831, %v1827
      %v1833 = vrot.slane %v1832, 4
      %v1835 = vshll.u32 %v1706, 16
      %v1837 = vrot.slane %v1835, 5
      %v1838 = vsel %vm223, %v1833, %v1837
      %v1840 = vshrl.u32 %v1707, 16
      %v1842 = vrot.slane %v1840, 4
      %v1843 = vshll.u32 %v1707, 16
      %v1845 = vrot.slane %v1843, 5
      %v1846 = vor.u32 %v1842, %v1845
      %v1847 = vrot.slane %v1846, 4
      %v1849 = vshll.u32 %v1708, 16
      %v1851 = vrot.slane %v1849, 5
      %v1852 = vsel %vm223, %v1847, %v1851
      %v1853 = vshrl.u32 %v1708, 16
      %v1855 = vrot.slane %v1853, 4
      %v1856 = vor.u32 %v1855, %v1851
      %v1857 = vrot.slane %v1856, 4
      %v1859 = vshll.u32 %v1709, 16
      %v1861 = vrot.slane %v1859, 5
      %v1862 = vsel %vm223, %v1857, %v1861
      %v1864 = vshrl.u32 %v1710, 16
      %v1866 = vrot.slane %v1864, 4
      %v1867 = vshll.u32 %v1710, 16
      %v1869 = vrot.slane %v1867, 5
      %v1870 = vor.u32 %v1866, %v1869
      %v1871 = vrot.slane %v1870, 4
      %v1873 = vshll.u32 %v1711, 16
      %v1875 = vrot.slane %v1873, 5
      %v1876 = vsel %vm223, %v1871, %v1875
      %v1877 = vshrl.u32 %v1711, 16
      %v1879 = vrot.slane %v1877, 4
      %v1880 = vor.u32 %v1879, %v1875
      %v1881 = vrot.slane %v1880, 4
      %v1883 = vshll.u32 %v1712, 16
      %v1885 = vrot.slane %v1883, 5
      %v1886 = vsel %vm223, %v1881, %v1885
      %v1888 = vshrl.u32 %v1713, 16
      %v1890 = vrot.slane %v1888, 4
      %v1891 = vshll.u32 %v1713, 16
      %v1893 = vrot.slane %v1891, 5
      %v1894 = vor.u32 %v1890, %v1893
      %v1895 = vrot.slane %v1894, 4
      %v1897 = vshll.u32 %v1714, 16
      %v1899 = vrot.slane %v1897, 5
      %v1900 = vsel %vm223, %v1895, %v1899
      %v1901 = vshrl.u32 %v1714, 16
      %v1903 = vrot.slane %v1901, 4
      %v1904 = vor.u32 %v1903, %v1899
      %v1905 = vrot.slane %v1904, 4
      %v1907 = vshll.u32 %v1715, 16
      %v1909 = vrot.slane %v1907, 5
      %v1910 = vsel %vm223, %v1905, %v1909
      %v1912 = vshrl.u32 %v1716, 16
      %v1914 = vrot.slane %v1912, 4
      %v1915 = vshll.u32 %v1716, 16
      %v1917 = vrot.slane %v1915, 5
      %v1918 = vor.u32 %v1914, %v1917
      %v1919 = vrot.slane %v1918, 4
      %v1921 = vshll.u32 %v1717, 16
      %v1923 = vrot.slane %v1921, 5
      %v1924 = vsel %vm223, %v1919, %v1923
      %v1925 = vshrl.u32 %v1717, 16
      %v1927 = vrot.slane %v1925, 4
      %v1928 = vor.u32 %v1927, %v1923
      %v1929 = vrot.slane %v1928, 4
      %v1931 = vshll.u32 %v1718, 16
      %v1933 = vrot.slane %v1931, 5
      %v1934 = vsel %vm223, %v1929, %v1933
      %v1936 = vshrl.u32 %v1719, 16
      %v1938 = vrot.slane %v1936, 4
      %v1939 = vshll.u32 %v1719, 16
      %v1941 = vrot.slane %v1939, 5
      %v1942 = vor.u32 %v1938, %v1941
      %v1943 = vrot.slane %v1942, 4
      %v1945 = vshll.u32 %v1720, 16
      %v1947 = vrot.slane %v1945, 5
      %v1948 = vsel %vm223, %v1943, %v1947
      %v1949 = vshrl.u32 %v1720, 16
      %v1951 = vrot.slane %v1949, 4
      %v1952 = vor.u32 %v1951, %v1947
      %v1953 = vrot.slane %v1952, 4
      %v1955 = vshll.u32 %v1721, 16
      %v1957 = vrot.slane %v1955, 5
      %v1958 = vsel %vm223, %v1953, %v1957
      %v1960 = vshrl.u32 %v1722, 16
      %v1962 = vrot.slane %v1960, 4
      %v1963 = vshll.u32 %v1722, 16
      %v1965 = vrot.slane %v1963, 5
      %v1966 = vor.u32 %v1962, %v1965
      %v1967 = vrot.slane %v1966, 4
      %v1969 = vshll.u32 %v1723, 16
      %v1971 = vrot.slane %v1969, 5
      %v1972 = vsel %vm223, %v1967, %v1971
      %v1973 = vshrl.u32 %v1723, 16
      %v1975 = vrot.slane %v1973, 4
      %v1976 = vor.u32 %v1975, %v1971
      %v1977 = vrot.slane %v1976, 4
      %v1979 = vshll.u32 %v1724, 16
      %v1981 = vrot.slane %v1979, 5
      %v1982 = vsel %vm223, %v1977, %v1981
      %v1984 = vshrl.u32 %v1725, 16
      %v1986 = vrot.slane %v1984, 4
      %v1987 = vshll.u32 %v1725, 16
      %v1989 = vrot.slane %v1987, 5
      %v1990 = vor.u32 %v1986, %v1989
      %v1991 = vrot.slane %v1990, 4
      %v1993 = vshll.u32 %v1726, 16
      %v1995 = vrot.slane %v1993, 5
      %v1996 = vsel %vm223, %v1991, %v1995
      %v1997 = vshrl.u32 %v1726, 16
      %v1999 = vrot.slane %v1997, 4
      %v2000 = vor.u32 %v1999, %v1995
      %v2001 = vrot.slane %v2000, 4
      %v2003 = vshll.u32 %v1727, 16
      %v2005 = vrot.slane %v2003, 5
      %v2006 = vsel %vm223, %v2001, %v2005
      %v2008 = vshrl.u32 %v1728, 16
      %v2010 = vrot.slane %v2008, 4
      %v2011 = vshll.u32 %v1728, 16
      %v2013 = vrot.slane %v2011, 5
      %v2014 = vor.u32 %v2010, %v2013
      %v2015 = vrot.slane %v2014, 4
      %v2017 = vshll.u32 %v1729, 16
      %v2019 = vrot.slane %v2017, 5
      %v2020 = vsel %vm223, %v2015, %v2019
      %v2021 = vshrl.u32 %v1729, 16
      %v2023 = vrot.slane %v2021, 4
      %v2024 = vor.u32 %v2023, %v2019
      %v2025 = vrot.slane %v2024, 4
      %v2027 = vshll.u32 %v1730, 16
      %v2029 = vrot.slane %v2027, 5
      %v2030 = vsel %vm223, %v2025, %v2029
      %v2032 = vshrl.u32 %v1731, 16
      %v2034 = vrot.slane %v2032, 4
      %v2035 = vshll.u32 %v1731, 16
      %v2037 = vrot.slane %v2035, 5
      %v2038 = vor.u32 %v2034, %v2037
      %v2039 = vrot.slane %v2038, 4
      %v2041 = vshll.u32 %v1732, 16
      %v2043 = vrot.slane %v2041, 5
      %v2044 = vsel %vm223, %v2039, %v2043
      %v2045 = vshrl.u32 %v1732, 16
      %v2047 = vrot.slane %v2045, 4
      %v2048 = vor.u32 %v2047, %v2043
      %v2049 = vrot.slane %v2048, 4
      %v2051 = vshll.u32 %v1733, 16
      %v2053 = vrot.slane %v2051, 5
      %v2054 = vsel %vm223, %v2049, %v2053
      %v2056 = vshrl.u32 %v1734, 16
      %v2058 = vrot.slane %v2056, 4
      %v2059 = vshll.u32 %v1734, 16
      %v2061 = vrot.slane %v2059, 5
      %v2062 = vor.u32 %v2058, %v2061
      %v2063 = vrot.slane %v2062, 4
      %v2065 = vshll.u32 %v1735, 16
      %v2067 = vrot.slane %v2065, 5
      %v2068 = vsel %vm223, %v2063, %v2067
      %v2069 = vshrl.u32 %v1735, 16
      %v2071 = vrot.slane %v2069, 4
      %v2072 = vor.u32 %v2071, %v2067
      %v2073 = vrot.slane %v2072, 4
      %v2075 = vshll.u32 %v1736, 16
      %v2077 = vrot.slane %v2075, 5
      %v2078 = vsel %vm223, %v2073, %v2077
      %v2080 = vshrl.u32 %v1737, 16
      %v2082 = vrot.slane %v2080, 4
      %v2083 = vshll.u32 %v1737, 16
      %v2085 = vrot.slane %v2083, 5
      %v2086 = vor.u32 %v2082, %v2085
      %v2087 = vrot.slane %v2086, 4
      %v2089 = vshll.u32 %v1738, 16
      %v2091 = vrot.slane %v2089, 5
      %v2092 = vsel %vm223, %v2087, %v2091
      %v2093 = vshrl.u32 %v1738, 16
      %v2095 = vrot.slane %v2093, 4
      %v2096 = vor.u32 %v2095, %v2091
      %v2097 = vrot.slane %v2096, 4
      %v2099 = vshll.u32 %v1739, 16
      %v2101 = vrot.slane %v2099, 5
      %v2102 = vsel %vm223, %v2097, %v2101
      %v2104 = vshrl.u32 %v1740, 16
      %v2106 = vrot.slane %v2104, 4
      %v2107 = vshll.u32 %v1740, 16
      %v2109 = vrot.slane %v2107, 5
      %v2110 = vor.u32 %v2106, %v2109
      %v2111 = vrot.slane %v2110, 4
      %v2113 = vshll.u32 %v1741, 16
      %v2115 = vrot.slane %v2113, 5
      %v2116 = vsel %vm223, %v2111, %v2115
      %v2117 = vshrl.u32 %v1741, 16
      %v2119 = vrot.slane %v2117, 4
      %v2120 = vor.u32 %v2119, %v2115
      %v2121 = vrot.slane %v2120, 4
      %v2123 = vshll.u32 %v1742, 16
      %v2125 = vrot.slane %v2123, 5
      %v2126 = vsel %vm223, %v2121, %v2125
      %s2127 = scalar_lea.vmem %s1, 8
      %v2128 = vld [vmem:[%s2127] sm:$0x3]
      %v2129 = vunpack.c.l.b16 %v1756
      %v2130 = vunpack.c.l.b16 %v1766
      %v2131 = vunpack.c.l.b16 %v1780
      %v2132 = vunpack.c.l.b16 %v1790
      %v2133 = vunpack.c.l.b16 %v1804
      %v2134 = vunpack.c.l.b16 %v1814
      %v2135 = vunpack.c.l.b16 %v1828
      %v2136 = vunpack.c.l.b16 %v1838
      %v2137 = vunpack.c.l.b16 %v1852
      %v2138 = vunpack.c.l.b16 %v1862
      %v2139 = vunpack.c.l.b16 %v1876
      %v2140 = vunpack.c.l.b16 %v1886
      %v2141 = vunpack.c.l.b16 %v1900
      %v2142 = vunpack.c.l.b16 %v1910
      %v2143 = vunpack.c.l.b16 %v1924
      %v2144 = vunpack.c.l.b16 %v1934
      %v2145 = vunpack.c.l.b16 %v1948
      %v2146 = vunpack.c.l.b16 %v1958
      %v2147 = vunpack.c.l.b16 %v1972
      %v2148 = vunpack.c.l.b16 %v1982
      %v2149 = vunpack.c.l.b16 %v1996
      %v2150 = vunpack.c.l.b16 %v2006
      %v2151 = vunpack.c.l.b16 %v2020
      %v2152 = vunpack.c.l.b16 %v2030
      %v2153 = vunpack.c.l.b16 %v2044
      %v2154 = vunpack.c.l.b16 %v2054
      %v2155 = vunpack.c.l.b16 %v2068
      %v2156 = vunpack.c.l.b16 %v2078
      %v2157 = vunpack.c.l.b16 %v2092
      %v2158 = vunpack.c.l.b16 %v2102
      %v2159 = vunpack.c.l.b16 %v2116
      %v2160 = vunpack.c.l.b16 %v2126
      %v2161 = vpack.c.b16 %v2130, %v2129
      %v2162 = vpack.c.b16 %v2132, %v2131
      %v2163 = vpack.c.b16 %v2134, %v2133
      %v2164 = vpack.c.b16 %v2136, %v2135
      %v2165 = vpack.c.b16 %v2138, %v2137
      %v2166 = vpack.c.b16 %v2140, %v2139
      %v2167 = vpack.c.b16 %v2142, %v2141
      %v2168 = vpack.c.b16 %v2144, %v2143
      %v2169 = vpack.c.b16 %v2146, %v2145
      %v2170 = vpack.c.b16 %v2148, %v2147
      %v2171 = vpack.c.b16 %v2150, %v2149
      %v2172 = vpack.c.b16 %v2152, %v2151
      %v2173 = vpack.c.b16 %v2154, %v2153
      %v2174 = vpack.c.b16 %v2156, %v2155
      %v2175 = vpack.c.b16 %v2158, %v2157
      %v2176 = vpack.c.b16 %v2160, %v2159
      %v2178 = vsel %vm658, %v2161, 0
      %v2181 = vsel %vm658, %v2162, 0
      %v2184 = vsel %vm658, %v2163, 0
      %v2187 = vsel %vm658, %v2164, 0
      %v2190 = vsel %vm658, %v2165, 0
      %v2193 = vsel %vm658, %v2166, 0
      %v2196 = vsel %vm658, %v2167, 0
      %v2199 = vsel %vm658, %v2168, 0
      %v2202 = vsel %vm658, %v2169, 0
      %v2205 = vsel %vm658, %v2170, 0
      %v2208 = vsel %vm658, %v2171, 0
      %v2211 = vsel %vm658, %v2172, 0
      %v2214 = vsel %vm658, %v2173, 0
      %v2217 = vsel %vm658, %v2174, 0
      %v2220 = vsel %vm658, %v2175, 0
      %v2223 = vsel %vm658, %v2176, 0
      %v2226 = vand.u32 %v2128, %v710
      %2228 = vmatpush.bf16.msra.mxu0 0
      %2229 = vmatpush.bf16.msra.mxu0 0
      %2230 = vmatpush.bf16.msra.mxu0 0
      %2231 = vmatpush.bf16.msra.mxu0 0
      %2232 = vmatpush.bf16.msra.mxu0 0
      %2233 = vmatpush.bf16.msra.mxu0 0
      %2234 = vmatpush.bf16.msra.mxu0 0
      %2235 = vmatpush.bf16.msra.mxu0 %v2226
      %2236 = vmatmul.bf16.gmra.mxu0 %v2178
      %v2237 = vpop.f32.mrf.mxu0
      %v2238 = vadd.f32 0.0, %v2237
      %v2239 = vpop.f32.mrf.mxu0
      %v2240 = vadd.f32 0.0, %v2239
      %2241 = vmatmul.bf16.gmra.mxu0 %v2181
      %v2242 = vpop.f32.mrf.mxu0
      %v2243 = vadd.f32 0.0, %v2242
      %v2244 = vpop.f32.mrf.mxu0
      %v2245 = vadd.f32 0.0, %v2244
      %2246 = vmatmul.bf16.gmra.mxu0 %v2184
      %v2247 = vpop.f32.mrf.mxu0
      %v2248 = vadd.f32 0.0, %v2247
      %v2249 = vpop.f32.mrf.mxu0
      %v2250 = vadd.f32 0.0, %v2249
      %2251 = vmatmul.bf16.gmra.mxu0 %v2187
      %v2252 = vpop.f32.mrf.mxu0
      %v2253 = vadd.f32 0.0, %v2252
      %v2254 = vpop.f32.mrf.mxu0
      %v2255 = vadd.f32 0.0, %v2254
      %2256 = vmatmul.bf16.gmra.mxu0 %v2190
      %v2257 = vpop.f32.mrf.mxu0
      %v2258 = vadd.f32 0.0, %v2257
      %v2259 = vpop.f32.mrf.mxu0
      %v2260 = vadd.f32 0.0, %v2259
      %2261 = vmatmul.bf16.gmra.mxu0 %v2193
      %v2262 = vpop.f32.mrf.mxu0
      %v2263 = vadd.f32 0.0, %v2262
      %v2264 = vpop.f32.mrf.mxu0
      %v2265 = vadd.f32 0.0, %v2264
      %2266 = vmatmul.bf16.gmra.mxu0 %v2196
      %v2267 = vpop.f32.mrf.mxu0
      %v2268 = vadd.f32 0.0, %v2267
      %v2269 = vpop.f32.mrf.mxu0
      %v2270 = vadd.f32 0.0, %v2269
      %2271 = vmatmul.bf16.gmra.mxu0 %v2199
      %v2272 = vpop.f32.mrf.mxu0
      %v2273 = vadd.f32 0.0, %v2272
      %v2274 = vpop.f32.mrf.mxu0
      %v2275 = vadd.f32 0.0, %v2274
      %2276 = vmatmul.bf16.gmra.mxu0 %v2202
      %v2277 = vpop.f32.mrf.mxu0
      %v2278 = vadd.f32 0.0, %v2277
      %v2279 = vpop.f32.mrf.mxu0
      %v2280 = vadd.f32 0.0, %v2279
      %2281 = vmatmul.bf16.gmra.mxu0 %v2205
      %v2282 = vpop.f32.mrf.mxu0
      %v2283 = vadd.f32 0.0, %v2282
      %v2284 = vpop.f32.mrf.mxu0
      %v2285 = vadd.f32 0.0, %v2284
      %2286 = vmatmul.bf16.gmra.mxu0 %v2208
      %v2287 = vpop.f32.mrf.mxu0
      %v2288 = vadd.f32 0.0, %v2287
      %v2289 = vpop.f32.mrf.mxu0
      %v2290 = vadd.f32 0.0, %v2289
      %2291 = vmatmul.bf16.gmra.mxu0 %v2211
      %v2292 = vpop.f32.mrf.mxu0
      %v2293 = vadd.f32 0.0, %v2292
      %v2294 = vpop.f32.mrf.mxu0
      %v2295 = vadd.f32 0.0, %v2294
      %2296 = vmatmul.bf16.gmra.mxu0 %v2214
      %v2297 = vpop.f32.mrf.mxu0
      %v2298 = vadd.f32 0.0, %v2297
      %v2299 = vpop.f32.mrf.mxu0
      %v2300 = vadd.f32 0.0, %v2299
      %2301 = vmatmul.bf16.gmra.mxu0 %v2217
      %v2302 = vpop.f32.mrf.mxu0
      %v2303 = vadd.f32 0.0, %v2302
      %v2304 = vpop.f32.mrf.mxu0
      %v2305 = vadd.f32 0.0, %v2304
      %2306 = vmatmul.bf16.gmra.mxu0 %v2220
      %v2307 = vpop.f32.mrf.mxu0
      %v2308 = vadd.f32 0.0, %v2307
      %v2309 = vpop.f32.mrf.mxu0
      %v2310 = vadd.f32 0.0, %v2309
      %2311 = vmatmul.bf16.gmra.mxu0 %v2223
      %v2312 = vpop.f32.mrf.mxu0
      %v2313 = vadd.f32 0.0, %v2312
      %v2314 = vpop.f32.mrf.mxu0
      %v2315 = vadd.f32 0.0, %v2314
      %2316 = vdwg.mxu0
      %v2317 = vadd.f32 %v1663, %v2238
      %v2318 = vadd.f32 %v1664, %v2240
      %v2319 = vadd.f32 %v1665, %v2243
      %v2320 = vadd.f32 %v1666, %v2245
      %v2321 = vadd.f32 %v1667, %v2248
      %v2322 = vadd.f32 %v1668, %v2250
      %v2323 = vadd.f32 %v1669, %v2253
      %v2324 = vadd.f32 %v1670, %v2255
      %v2325 = vadd.f32 %v1671, %v2258
      %v2326 = vadd.f32 %v1672, %v2260
      %v2327 = vadd.f32 %v1673, %v2263
      %v2328 = vadd.f32 %v1674, %v2265
      %v2329 = vadd.f32 %v1675, %v2268
      %v2330 = vadd.f32 %v1676, %v2270
      %v2331 = vadd.f32 %v1677, %v2273
      %v2332 = vadd.f32 %v1678, %v2275
      %v2333 = vadd.f32 %v1679, %v2278
      %v2334 = vadd.f32 %v1680, %v2280
      %v2335 = vadd.f32 %v1681, %v2283
      %v2336 = vadd.f32 %v1682, %v2285
      %v2337 = vadd.f32 %v1683, %v2288
      %v2338 = vadd.f32 %v1684, %v2290
      %v2339 = vadd.f32 %v1685, %v2293
      %v2340 = vadd.f32 %v1686, %v2295
      %v2341 = vadd.f32 %v1687, %v2298
      %v2342 = vadd.f32 %v1688, %v2300
      %v2343 = vadd.f32 %v1689, %v2303
      %v2344 = vadd.f32 %v1690, %v2305
      %v2345 = vadd.f32 %v1691, %v2308
      %v2346 = vadd.f32 %v1692, %v2310
      %v2347 = vadd.f32 %v1693, %v2313
      %v2348 = vadd.f32 %v1694, %v2315
      %v2349 = vld [vmem:[%s1408] sm:$0xe]
      %v2350 = vld [vmem:[%s1408 + $0xc] sm:$0xe]
      %v2351 = vld [vmem:[%s1408 + $0x18] sm:$0xe]
      %v2352 = vld [vmem:[%s1408 + $0x24] sm:$0xe]
      %v2353 = vld [vmem:[%s1408 + $0x30] sm:$0xe]
      %v2354 = vld [vmem:[%s1408 + $0x3c] sm:$0xe]
      %v2355 = vld [vmem:[%s1408 + $0x48] sm:$0xe]
      %v2356 = vld [vmem:[%s1408 + $0x54] sm:$0xe]
      %v2357 = vld [vmem:[%s1408 + $0x60] sm:$0xe]
      %v2358 = vld [vmem:[%s1408 + $0x6c] sm:$0xe]
      %v2359 = vld [vmem:[%s1408 + $0x78] sm:$0xe]
      %v2360 = vld [vmem:[%s1408 + $0x84] sm:$0xe]
      %v2361 = vld [vmem:[%s1408 + $0x90] sm:$0xe]
      %v2362 = vld [vmem:[%s1408 + $0x9c] sm:$0xe]
      %v2363 = vld [vmem:[%s1408 + $0xa8] sm:$0xe]
      %v2364 = vld [vmem:[%s1408 + $0xb4] sm:$0xe]
      %v2413 = vrot.slane %v2349, 5
      %v2414 = vrot.slane %v2413, 4
      %v2415 = vrot.slane %v1696, 5
      %v2416 = vsel %vm1073, %v2414, %v2415
      %v2417 = vrot.slane %v2415, 4
      %v2418 = vrot.slane %v1697, 5
      %v2419 = vsel %vm1073, %v2417, %v2418
      %v2420 = vrot.slane %v2350, 5
      %v2421 = vrot.slane %v2420, 4
      %v2422 = vrot.slane %v1699, 5
      %v2423 = vsel %vm1073, %v2421, %v2422
      %v2424 = vrot.slane %v2422, 4
      %v2425 = vrot.slane %v1700, 5
      %v2426 = vsel %vm1073, %v2424, %v2425
      %v2427 = vrot.slane %v2351, 5
      %v2428 = vrot.slane %v2427, 4
      %v2429 = vrot.slane %v1702, 5
      %v2430 = vsel %vm1073, %v2428, %v2429
      %v2431 = vrot.slane %v2429, 4
      %v2432 = vrot.slane %v1703, 5
      %v2433 = vsel %vm1073, %v2431, %v2432
      %v2434 = vrot.slane %v2352, 5
      %v2435 = vrot.slane %v2434, 4
      %v2436 = vrot.slane %v1705, 5
      %v2437 = vsel %vm1073, %v2435, %v2436
      %v2438 = vrot.slane %v2436, 4
      %v2439 = vrot.slane %v1706, 5
      %v2440 = vsel %vm1073, %v2438, %v2439
      %v2441 = vrot.slane %v2353, 5
      %v2442 = vrot.slane %v2441, 4
      %v2443 = vrot.slane %v1708, 5
      %v2444 = vsel %vm1073, %v2442, %v2443
      %v2445 = vrot.slane %v2443, 4
      %v2446 = vrot.slane %v1709, 5
      %v2447 = vsel %vm1073, %v2445, %v2446
      %v2448 = vrot.slane %v2354, 5
      %v2449 = vrot.slane %v2448, 4
      %v2450 = vrot.slane %v1711, 5
      %v2451 = vsel %vm1073, %v2449, %v2450
      %v2452 = vrot.slane %v2450, 4
      %v2453 = vrot.slane %v1712, 5
      %v2454 = vsel %vm1073, %v2452, %v2453
      %v2455 = vrot.slane %v2355, 5
      %v2456 = vrot.slane %v2455, 4
      %v2457 = vrot.slane %v1714, 5
      %v2458 = vsel %vm1073, %v2456, %v2457
      %v2459 = vrot.slane %v2457, 4
      %v2460 = vrot.slane %v1715, 5
      %v2461 = vsel %vm1073, %v2459, %v2460
      %v2462 = vrot.slane %v2356, 5
      %v2463 = vrot.slane %v2462, 4
      %v2464 = vrot.slane %v1717, 5
      %v2465 = vsel %vm1073, %v2463, %v2464
      %v2466 = vrot.slane %v2464, 4
      %v2467 = vrot.slane %v1718, 5
      %v2468 = vsel %vm1073, %v2466, %v2467
      %v2469 = vrot.slane %v2357, 5
      %v2470 = vrot.slane %v2469, 4
      %v2471 = vrot.slane %v1720, 5
      %v2472 = vsel %vm1073, %v2470, %v2471
      %v2473 = vrot.slane %v2471, 4
      %v2474 = vrot.slane %v1721, 5
      %v2475 = vsel %vm1073, %v2473, %v2474
      %v2476 = vrot.slane %v2358, 5
      %v2477 = vrot.slane %v2476, 4
      %v2478 = vrot.slane %v1723, 5
      %v2479 = vsel %vm1073, %v2477, %v2478
      %v2480 = vrot.slane %v2478, 4
      %v2481 = vrot.slane %v1724, 5
      %v2482 = vsel %vm1073, %v2480, %v2481
      %v2483 = vrot.slane %v2359, 5
      %v2484 = vrot.slane %v2483, 4
      %v2485 = vrot.slane %v1726, 5
      %v2486 = vsel %vm1073, %v2484, %v2485
      %v2487 = vrot.slane %v2485, 4
      %v2488 = vrot.slane %v1727, 5
      %v2489 = vsel %vm1073, %v2487, %v2488
      %v2490 = vrot.slane %v2360, 5
      %v2491 = vrot.slane %v2490, 4
      %v2492 = vrot.slane %v1729, 5
      %v2493 = vsel %vm1073, %v2491, %v2492
      %v2494 = vrot.slane %v2492, 4
      %v2495 = vrot.slane %v1730, 5
      %v2496 = vsel %vm1073, %v2494, %v2495
      %v2497 = vrot.slane %v2361, 5
      %v2498 = vrot.slane %v2497, 4
      %v2499 = vrot.slane %v1732, 5
      %v2500 = vsel %vm1073, %v2498, %v2499
      %v2501 = vrot.slane %v2499, 4
      %v2502 = vrot.slane %v1733, 5
      %v2503 = vsel %vm1073, %v2501, %v2502
      %v2504 = vrot.slane %v2362, 5
      %v2505 = vrot.slane %v2504, 4
      %v2506 = vrot.slane %v1735, 5
      %v2507 = vsel %vm1073, %v2505, %v2506
      %v2508 = vrot.slane %v2506, 4
      %v2509 = vrot.slane %v1736, 5
      %v2510 = vsel %vm1073, %v2508, %v2509
      %v2511 = vrot.slane %v2363, 5
      %v2512 = vrot.slane %v2511, 4
      %v2513 = vrot.slane %v1738, 5
      %v2514 = vsel %vm1073, %v2512, %v2513
      %v2515 = vrot.slane %v2513, 4
      %v2516 = vrot.slane %v1739, 5
      %v2517 = vsel %vm1073, %v2515, %v2516
      %v2518 = vrot.slane %v2364, 5
      %v2519 = vrot.slane %v2518, 4
      %v2520 = vrot.slane %v1741, 5
      %v2521 = vsel %vm1073, %v2519, %v2520
      %v2522 = vrot.slane %v2520, 4
      %v2523 = vrot.slane %v1742, 5
      %v2524 = vsel %vm1073, %v2522, %v2523
      %s2525 = scalar_lea.vmem %s1, 10
      %v2526 = vld [vmem:[%s2525] sm:$0x3]
      %v2527 = vunpack.c.l.b16 %v2416
      %v2528 = vunpack.c.l.b16 %v2419
      %v2529 = vunpack.c.l.b16 %v2423
      %v2530 = vunpack.c.l.b16 %v2426
      %v2531 = vunpack.c.l.b16 %v2430
      %v2532 = vunpack.c.l.b16 %v2433
      %v2533 = vunpack.c.l.b16 %v2437
      %v2534 = vunpack.c.l.b16 %v2440
      %v2535 = vunpack.c.l.b16 %v2444
      %v2536 = vunpack.c.l.b16 %v2447
      %v2537 = vunpack.c.l.b16 %v2451
      %v2538 = vunpack.c.l.b16 %v2454
      %v2539 = vunpack.c.l.b16 %v2458
      %v2540 = vunpack.c.l.b16 %v2461
      %v2541 = vunpack.c.l.b16 %v2465
      %v2542 = vunpack.c.l.b16 %v2468
      %v2543 = vunpack.c.l.b16 %v2472
      %v2544 = vunpack.c.l.b16 %v2475
      %v2545 = vunpack.c.l.b16 %v2479
      %v2546 = vunpack.c.l.b16 %v2482
      %v2547 = vunpack.c.l.b16 %v2486
      %v2548 = vunpack.c.l.b16 %v2489
      %v2549 = vunpack.c.l.b16 %v2493
      %v2550 = vunpack.c.l.b16 %v2496
      %v2551 = vunpack.c.l.b16 %v2500
      %v2552 = vunpack.c.l.b16 %v2503
      %v2553 = vunpack.c.l.b16 %v2507
      %v2554 = vunpack.c.l.b16 %v2510
      %v2555 = vunpack.c.l.b16 %v2514
      %v2556 = vunpack.c.l.b16 %v2517
      %v2557 = vunpack.c.l.b16 %v2521
      %v2558 = vunpack.c.l.b16 %v2524
      %v2559 = vpack.c.b16 %v2528, %v2527
      %v2560 = vpack.c.b16 %v2530, %v2529
      %v2561 = vpack.c.b16 %v2532, %v2531
      %v2562 = vpack.c.b16 %v2534, %v2533
      %v2563 = vpack.c.b16 %v2536, %v2535
      %v2564 = vpack.c.b16 %v2538, %v2537
      %v2565 = vpack.c.b16 %v2540, %v2539
      %v2566 = vpack.c.b16 %v2542, %v2541
      %v2567 = vpack.c.b16 %v2544, %v2543
      %v2568 = vpack.c.b16 %v2546, %v2545
      %v2569 = vpack.c.b16 %v2548, %v2547
      %v2570 = vpack.c.b16 %v2550, %v2549
      %v2571 = vpack.c.b16 %v2552, %v2551
      %v2572 = vpack.c.b16 %v2554, %v2553
      %v2573 = vpack.c.b16 %v2556, %v2555
      %v2574 = vpack.c.b16 %v2558, %v2557
      %v2576 = vsel %vm658, %v2559, 0
      %v2579 = vsel %vm658, %v2560, 0
      %v2582 = vsel %vm658, %v2561, 0
      %v2585 = vsel %vm658, %v2562, 0
      %v2588 = vsel %vm658, %v2563, 0
      %v2591 = vsel %vm658, %v2564, 0
      %v2594 = vsel %vm658, %v2565, 0
      %v2597 = vsel %vm658, %v2566, 0
      %v2600 = vsel %vm658, %v2567, 0
      %v2603 = vsel %vm658, %v2568, 0
      %v2606 = vsel %vm658, %v2569, 0
      %v2609 = vsel %vm658, %v2570, 0
      %v2612 = vsel %vm658, %v2571, 0
      %v2615 = vsel %vm658, %v2572, 0
      %v2618 = vsel %vm658, %v2573, 0
      %v2621 = vsel %vm658, %v2574, 0
      %v2624 = vand.u32 %v2526, %v710
      %2626 = vmatpush.bf16.msra.mxu0 0
      %2627 = vmatpush.bf16.msra.mxu0 0
      %2628 = vmatpush.bf16.msra.mxu0 0
      %2629 = vmatpush.bf16.msra.mxu0 0
      %2630 = vmatpush.bf16.msra.mxu0 0
      %2631 = vmatpush.bf16.msra.mxu0 0
      %2632 = vmatpush.bf16.msra.mxu0 0
      %2633 = vmatpush.bf16.msra.mxu0 %v2624
      %2634 = vmatmul.bf16.gmra.mxu0 %v2576
      %v2635 = vpop.f32.mrf.mxu0
      %v2636 = vadd.f32 0.0, %v2635
      %v2637 = vpop.f32.mrf.mxu0
      %v2638 = vadd.f32 0.0, %v2637
      %2639 = vmatmul.bf16.gmra.mxu0 %v2579
      %v2640 = vpop.f32.mrf.mxu0
      %v2641 = vadd.f32 0.0, %v2640
      %v2642 = vpop.f32.mrf.mxu0
      %v2643 = vadd.f32 0.0, %v2642
      %2644 = vmatmul.bf16.gmra.mxu0 %v2582
      %v2645 = vpop.f32.mrf.mxu0
      %v2646 = vadd.f32 0.0, %v2645
      %v2647 = vpop.f32.mrf.mxu0
      %v2648 = vadd.f32 0.0, %v2647
      %2649 = vmatmul.bf16.gmra.mxu0 %v2585
      %v2650 = vpop.f32.mrf.mxu0
      %v2651 = vadd.f32 0.0, %v2650
      %v2652 = vpop.f32.mrf.mxu0
      %v2653 = vadd.f32 0.0, %v2652
      %2654 = vmatmul.bf16.gmra.mxu0 %v2588
      %v2655 = vpop.f32.mrf.mxu0
      %v2656 = vadd.f32 0.0, %v2655
      %v2657 = vpop.f32.mrf.mxu0
      %v2658 = vadd.f32 0.0, %v2657
      %2659 = vmatmul.bf16.gmra.mxu0 %v2591
      %v2660 = vpop.f32.mrf.mxu0
      %v2661 = vadd.f32 0.0, %v2660
      %v2662 = vpop.f32.mrf.mxu0
      %v2663 = vadd.f32 0.0, %v2662
      %2664 = vmatmul.bf16.gmra.mxu0 %v2594
      %v2665 = vpop.f32.mrf.mxu0
      %v2666 = vadd.f32 0.0, %v2665
      %v2667 = vpop.f32.mrf.mxu0
      %v2668 = vadd.f32 0.0, %v2667
      %2669 = vmatmul.bf16.gmra.mxu0 %v2597
      %v2670 = vpop.f32.mrf.mxu0
      %v2671 = vadd.f32 0.0, %v2670
      %v2672 = vpop.f32.mrf.mxu0
      %v2673 = vadd.f32 0.0, %v2672
      %2674 = vmatmul.bf16.gmra.mxu0 %v2600
      %v2675 = vpop.f32.mrf.mxu0
      %v2676 = vadd.f32 0.0, %v2675
      %v2677 = vpop.f32.mrf.mxu0
      %v2678 = vadd.f32 0.0, %v2677
      %2679 = vmatmul.bf16.gmra.mxu0 %v2603
      %v2680 = vpop.f32.mrf.mxu0
      %v2681 = vadd.f32 0.0, %v2680
      %v2682 = vpop.f32.mrf.mxu0
      %v2683 = vadd.f32 0.0, %v2682
      %2684 = vmatmul.bf16.gmra.mxu0 %v2606
      %v2685 = vpop.f32.mrf.mxu0
      %v2686 = vadd.f32 0.0, %v2685
      %v2687 = vpop.f32.mrf.mxu0
      %v2688 = vadd.f32 0.0, %v2687
      %2689 = vmatmul.bf16.gmra.mxu0 %v2609
      %v2690 = vpop.f32.mrf.mxu0
      %v2691 = vadd.f32 0.0, %v2690
      %v2692 = vpop.f32.mrf.mxu0
      %v2693 = vadd.f32 0.0, %v2692
      %2694 = vmatmul.bf16.gmra.mxu0 %v2612
      %v2695 = vpop.f32.mrf.mxu0
      %v2696 = vadd.f32 0.0, %v2695
      %v2697 = vpop.f32.mrf.mxu0
      %v2698 = vadd.f32 0.0, %v2697
      %2699 = vmatmul.bf16.gmra.mxu0 %v2615
      %v2700 = vpop.f32.mrf.mxu0
      %v2701 = vadd.f32 0.0, %v2700
      %v2702 = vpop.f32.mrf.mxu0
      %v2703 = vadd.f32 0.0, %v2702
      %2704 = vmatmul.bf16.gmra.mxu0 %v2618
      %v2705 = vpop.f32.mrf.mxu0
      %v2706 = vadd.f32 0.0, %v2705
      %v2707 = vpop.f32.mrf.mxu0
      %v2708 = vadd.f32 0.0, %v2707
      %2709 = vmatmul.bf16.gmra.mxu0 %v2621
      %v2710 = vpop.f32.mrf.mxu0
      %v2711 = vadd.f32 0.0, %v2710
      %v2712 = vpop.f32.mrf.mxu0
      %v2713 = vadd.f32 0.0, %v2712
      %2714 = vdwg.mxu0
      %v2715 = vadd.f32 %v2317, %v2636
      %v2716 = vadd.f32 %v2318, %v2638
      %v2717 = vadd.f32 %v2319, %v2641
      %v2718 = vadd.f32 %v2320, %v2643
      %v2719 = vadd.f32 %v2321, %v2646
      %v2720 = vadd.f32 %v2322, %v2648
      %v2721 = vadd.f32 %v2323, %v2651
      %v2722 = vadd.f32 %v2324, %v2653
      %v2723 = vadd.f32 %v2325, %v2656
      %v2724 = vadd.f32 %v2326, %v2658
      %v2725 = vadd.f32 %v2327, %v2661
      %v2726 = vadd.f32 %v2328, %v2663
      %v2727 = vadd.f32 %v2329, %v2666
      %v2728 = vadd.f32 %v2330, %v2668
      %v2729 = vadd.f32 %v2331, %v2671
      %v2730 = vadd.f32 %v2332, %v2673
      %v2731 = vadd.f32 %v2333, %v2676
      %v2732 = vadd.f32 %v2334, %v2678
      %v2733 = vadd.f32 %v2335, %v2681
      %v2734 = vadd.f32 %v2336, %v2683
      %v2735 = vadd.f32 %v2337, %v2686
      %v2736 = vadd.f32 %v2338, %v2688
      %v2737 = vadd.f32 %v2339, %v2691
      %v2738 = vadd.f32 %v2340, %v2693
      %v2739 = vadd.f32 %v2341, %v2696
      %v2740 = vadd.f32 %v2342, %v2698
      %v2741 = vadd.f32 %v2343, %v2701
      %v2742 = vadd.f32 %v2344, %v2703
      %v2743 = vadd.f32 %v2345, %v2706
      %v2744 = vadd.f32 %v2346, %v2708
      %v2745 = vadd.f32 %v2347, %v2711
      %v2746 = vadd.f32 %v2348, %v2713
      %s2747 = scalar_lea.vmem %s165, 24
      %v2748 = vld [vmem:[%s2747] sm:$0xf]
      %v2749 = vld [vmem:[%s2747 + $0x4] sm:$0xf]
      %v2750 = vld [vmem:[%s2747 + $0xc] sm:$0xf]
      %v2751 = vld [vmem:[%s2747 + $0x10] sm:$0xf]
      %v2752 = vld [vmem:[%s2747 + $0x18] sm:$0xf]
      %v2753 = vld [vmem:[%s2747 + $0x1c] sm:$0xf]
      %v2754 = vld [vmem:[%s2747 + $0x24] sm:$0xf]
      %v2755 = vld [vmem:[%s2747 + $0x28] sm:$0xf]
      %v2756 = vld [vmem:[%s2747 + $0x30] sm:$0xf]
      %v2757 = vld [vmem:[%s2747 + $0x34] sm:$0xf]
      %v2758 = vld [vmem:[%s2747 + $0x3c] sm:$0xf]
      %v2759 = vld [vmem:[%s2747 + $0x40] sm:$0xf]
      %v2760 = vld [vmem:[%s2747 + $0x48] sm:$0xf]
      %v2761 = vld [vmem:[%s2747 + $0x4c] sm:$0xf]
      %v2762 = vld [vmem:[%s2747 + $0x54] sm:$0xf]
      %v2763 = vld [vmem:[%s2747 + $0x58] sm:$0xf]
      %v2764 = vld [vmem:[%s2747 + $0x60] sm:$0xf]
      %v2765 = vld [vmem:[%s2747 + $0x64] sm:$0xf]
      %v2766 = vld [vmem:[%s2747 + $0x6c] sm:$0xf]
      %v2767 = vld [vmem:[%s2747 + $0x70] sm:$0xf]
      %v2768 = vld [vmem:[%s2747 + $0x78] sm:$0xf]
      %v2769 = vld [vmem:[%s2747 + $0x7c] sm:$0xf]
      %v2770 = vld [vmem:[%s2747 + $0x84] sm:$0xf]
      %v2771 = vld [vmem:[%s2747 + $0x88] sm:$0xf]
      %v2772 = vld [vmem:[%s2747 + $0x90] sm:$0xf]
      %v2773 = vld [vmem:[%s2747 + $0x94] sm:$0xf]
      %v2774 = vld [vmem:[%s2747 + $0x9c] sm:$0xf]
      %v2775 = vld [vmem:[%s2747 + $0xa0] sm:$0xf]
      %v2776 = vld [vmem:[%s2747 + $0xa8] sm:$0xf]
      %v2777 = vld [vmem:[%s2747 + $0xac] sm:$0xf]
      %v2778 = vld [vmem:[%s2747 + $0xb4] sm:$0xf]
      %v2779 = vld [vmem:[%s2747 + $0xb8] sm:$0xf]
      %s2780 = scalar_lea.vmem %s1, 12
      %v2781 = vld [vmem:[%s2780] sm:$0x3]
      %v2814 = vunpack.c.l.b16 %v2748
      %v2815 = vunpack.c.l.b16 %v2749
      %v2816 = vunpack.c.l.b16 %v2750
      %v2817 = vunpack.c.l.b16 %v2751
      %v2818 = vunpack.c.l.b16 %v2752
      %v2819 = vunpack.c.l.b16 %v2753
      %v2820 = vunpack.c.l.b16 %v2754
      %v2821 = vunpack.c.l.b16 %v2755
      %v2822 = vunpack.c.l.b16 %v2756
      %v2823 = vunpack.c.l.b16 %v2757
      %v2824 = vunpack.c.l.b16 %v2758
      %v2825 = vunpack.c.l.b16 %v2759
      %v2826 = vunpack.c.l.b16 %v2760
      %v2827 = vunpack.c.l.b16 %v2761
      %v2828 = vunpack.c.l.b16 %v2762
      %v2829 = vunpack.c.l.b16 %v2763
      %v2830 = vunpack.c.l.b16 %v2764
      %v2831 = vunpack.c.l.b16 %v2765
      %v2832 = vunpack.c.l.b16 %v2766
      %v2833 = vunpack.c.l.b16 %v2767
      %v2834 = vunpack.c.l.b16 %v2768
      %v2835 = vunpack.c.l.b16 %v2769
      %v2836 = vunpack.c.l.b16 %v2770
      %v2837 = vunpack.c.l.b16 %v2771
      %v2838 = vunpack.c.l.b16 %v2772
      %v2839 = vunpack.c.l.b16 %v2773
      %v2840 = vunpack.c.l.b16 %v2774
      %v2841 = vunpack.c.l.b16 %v2775
      %v2842 = vunpack.c.l.b16 %v2776
      %v2843 = vunpack.c.l.b16 %v2777
      %v2844 = vunpack.c.l.b16 %v2778
      %v2845 = vunpack.c.l.b16 %v2779
      %v2846 = vpack.c.b16 %v2815, %v2814
      %v2847 = vpack.c.b16 %v2817, %v2816
      %v2848 = vpack.c.b16 %v2819, %v2818
      %v2849 = vpack.c.b16 %v2821, %v2820
      %v2850 = vpack.c.b16 %v2823, %v2822
      %v2851 = vpack.c.b16 %v2825, %v2824
      %v2852 = vpack.c.b16 %v2827, %v2826
      %v2853 = vpack.c.b16 %v2829, %v2828
      %v2854 = vpack.c.b16 %v2831, %v2830
      %v2855 = vpack.c.b16 %v2833, %v2832
      %v2856 = vpack.c.b16 %v2835, %v2834
      %v2857 = vpack.c.b16 %v2837, %v2836
      %v2858 = vpack.c.b16 %v2839, %v2838
      %v2859 = vpack.c.b16 %v2841, %v2840
      %v2860 = vpack.c.b16 %v2843, %v2842
      %v2861 = vpack.c.b16 %v2845, %v2844
      %v2863 = vsel %vm658, %v2846, 0
      %v2866 = vsel %vm658, %v2847, 0
      %v2869 = vsel %vm658, %v2848, 0
      %v2872 = vsel %vm658, %v2849, 0
      %v2875 = vsel %vm658, %v2850, 0
      %v2878 = vsel %vm658, %v2851, 0
      %v2881 = vsel %vm658, %v2852, 0
      %v2884 = vsel %vm658, %v2853, 0
      %v2887 = vsel %vm658, %v2854, 0
      %v2890 = vsel %vm658, %v2855, 0
      %v2893 = vsel %vm658, %v2856, 0
      %v2896 = vsel %vm658, %v2857, 0
      %v2899 = vsel %vm658, %v2858, 0
      %v2902 = vsel %vm658, %v2859, 0
      %v2905 = vsel %vm658, %v2860, 0
      %v2908 = vsel %vm658, %v2861, 0
      %v2911 = vand.u32 %v2781, %v710
      %2913 = vmatpush.bf16.msra.mxu0 0
      %2914 = vmatpush.bf16.msra.mxu0 0
      %2915 = vmatpush.bf16.msra.mxu0 0
      %2916 = vmatpush.bf16.msra.mxu0 0
      %2917 = vmatpush.bf16.msra.mxu0 0
      %2918 = vmatpush.bf16.msra.mxu0 0
      %2919 = vmatpush.bf16.msra.mxu0 0
      %2920 = vmatpush.bf16.msra.mxu0 %v2911
      %2921 = vmatmul.bf16.gmra.mxu0 %v2863
      %v2922 = vpop.f32.mrf.mxu0
      %v2923 = vadd.f32 0.0, %v2922
      %v2924 = vpop.f32.mrf.mxu0
      %v2925 = vadd.f32 0.0, %v2924
      %2926 = vmatmul.bf16.gmra.mxu0 %v2866
      %v2927 = vpop.f32.mrf.mxu0
      %v2928 = vadd.f32 0.0, %v2927
      %v2929 = vpop.f32.mrf.mxu0
      %v2930 = vadd.f32 0.0, %v2929
      %2931 = vmatmul.bf16.gmra.mxu0 %v2869
      %v2932 = vpop.f32.mrf.mxu0
      %v2933 = vadd.f32 0.0, %v2932
      %v2934 = vpop.f32.mrf.mxu0
      %v2935 = vadd.f32 0.0, %v2934
      %2936 = vmatmul.bf16.gmra.mxu0 %v2872
      %v2937 = vpop.f32.mrf.mxu0
      %v2938 = vadd.f32 0.0, %v2937
      %v2939 = vpop.f32.mrf.mxu0
      %v2940 = vadd.f32 0.0, %v2939
      %2941 = vmatmul.bf16.gmra.mxu0 %v2875
      %v2942 = vpop.f32.mrf.mxu0
      %v2943 = vadd.f32 0.0, %v2942
      %v2944 = vpop.f32.mrf.mxu0
      %v2945 = vadd.f32 0.0, %v2944
      %2946 = vmatmul.bf16.gmra.mxu0 %v2878
      %v2947 = vpop.f32.mrf.mxu0
      %v2948 = vadd.f32 0.0, %v2947
      %v2949 = vpop.f32.mrf.mxu0
      %v2950 = vadd.f32 0.0, %v2949
      %2951 = vmatmul.bf16.gmra.mxu0 %v2881
      %v2952 = vpop.f32.mrf.mxu0
      %v2953 = vadd.f32 0.0, %v2952
      %v2954 = vpop.f32.mrf.mxu0
      %v2955 = vadd.f32 0.0, %v2954
      %2956 = vmatmul.bf16.gmra.mxu0 %v2884
      %v2957 = vpop.f32.mrf.mxu0
      %v2958 = vadd.f32 0.0, %v2957
      %v2959 = vpop.f32.mrf.mxu0
      %v2960 = vadd.f32 0.0, %v2959
      %2961 = vmatmul.bf16.gmra.mxu0 %v2887
      %v2962 = vpop.f32.mrf.mxu0
      %v2963 = vadd.f32 0.0, %v2962
      %v2964 = vpop.f32.mrf.mxu0
      %v2965 = vadd.f32 0.0, %v2964
      %2966 = vmatmul.bf16.gmra.mxu0 %v2890
      %v2967 = vpop.f32.mrf.mxu0
      %v2968 = vadd.f32 0.0, %v2967
      %v2969 = vpop.f32.mrf.mxu0
      %v2970 = vadd.f32 0.0, %v2969
      %2971 = vmatmul.bf16.gmra.mxu0 %v2893
      %v2972 = vpop.f32.mrf.mxu0
      %v2973 = vadd.f32 0.0, %v2972
      %v2974 = vpop.f32.mrf.mxu0
      %v2975 = vadd.f32 0.0, %v2974
      %2976 = vmatmul.bf16.gmra.mxu0 %v2896
      %v2977 = vpop.f32.mrf.mxu0
      %v2978 = vadd.f32 0.0, %v2977
      %v2979 = vpop.f32.mrf.mxu0
      %v2980 = vadd.f32 0.0, %v2979
      %2981 = vmatmul.bf16.gmra.mxu0 %v2899
      %v2982 = vpop.f32.mrf.mxu0
      %v2983 = vadd.f32 0.0, %v2982
      %v2984 = vpop.f32.mrf.mxu0
      %v2985 = vadd.f32 0.0, %v2984
      %2986 = vmatmul.bf16.gmra.mxu0 %v2902
      %v2987 = vpop.f32.mrf.mxu0
      %v2988 = vadd.f32 0.0, %v2987
      %v2989 = vpop.f32.mrf.mxu0
      %v2990 = vadd.f32 0.0, %v2989
      %2991 = vmatmul.bf16.gmra.mxu0 %v2905
      %v2992 = vpop.f32.mrf.mxu0
      %v2993 = vadd.f32 0.0, %v2992
      %v2994 = vpop.f32.mrf.mxu0
      %v2995 = vadd.f32 0.0, %v2994
      %2996 = vmatmul.bf16.gmra.mxu0 %v2908
      %v2997 = vpop.f32.mrf.mxu0
      %v2998 = vadd.f32 0.0, %v2997
      %v2999 = vpop.f32.mrf.mxu0
      %v3000 = vadd.f32 0.0, %v2999
      %3001 = vdwg.mxu0
      %v3002 = vadd.f32 %v2715, %v2923
      %v3003 = vadd.f32 %v2716, %v2925
      %v3004 = vadd.f32 %v2717, %v2928
      %v3005 = vadd.f32 %v2718, %v2930
      %v3006 = vadd.f32 %v2719, %v2933
      %v3007 = vadd.f32 %v2720, %v2935
      %v3008 = vadd.f32 %v2721, %v2938
      %v3009 = vadd.f32 %v2722, %v2940
      %v3010 = vadd.f32 %v2723, %v2943
      %v3011 = vadd.f32 %v2724, %v2945
      %v3012 = vadd.f32 %v2725, %v2948
      %v3013 = vadd.f32 %v2726, %v2950
      %v3014 = vadd.f32 %v2727, %v2953
      %v3015 = vadd.f32 %v2728, %v2955
      %v3016 = vadd.f32 %v2729, %v2958
      %v3017 = vadd.f32 %v2730, %v2960
      %v3018 = vadd.f32 %v2731, %v2963
      %v3019 = vadd.f32 %v2732, %v2965
      %v3020 = vadd.f32 %v2733, %v2968
      %v3021 = vadd.f32 %v2734, %v2970
      %v3022 = vadd.f32 %v2735, %v2973
      %v3023 = vadd.f32 %v2736, %v2975
      %v3024 = vadd.f32 %v2737, %v2978
      %v3025 = vadd.f32 %v2738, %v2980
      %v3026 = vadd.f32 %v2739, %v2983
      %v3027 = vadd.f32 %v2740, %v2985
      %v3028 = vadd.f32 %v2741, %v2988
      %v3029 = vadd.f32 %v2742, %v2990
      %v3030 = vadd.f32 %v2743, %v2993
      %v3031 = vadd.f32 %v2744, %v2995
      %v3032 = vadd.f32 %v2745, %v2998
      %v3033 = vadd.f32 %v2746, %v3000
      %v3034 = vld [vmem:[%s2747] sm:$0xf]
      %v3035 = vld [vmem:[%s2747 + $0x4] sm:$0xf]
      %v3036 = vld [vmem:[%s2747 + $0x8] sm:$0x1]
      %v3037 = vld [vmem:[%s2747 + $0xc] sm:$0xf]
      %v3038 = vld [vmem:[%s2747 + $0x10] sm:$0xf]
      %v3039 = vld [vmem:[%s2747 + $0x14] sm:$0x1]
      %v3040 = vld [vmem:[%s2747 + $0x18] sm:$0xf]
      %v3041 = vld [vmem:[%s2747 + $0x1c] sm:$0xf]
      %v3042 = vld [vmem:[%s2747 + $0x20] sm:$0x1]
      %v3043 = vld [vmem:[%s2747 + $0x24] sm:$0xf]
      %v3044 = vld [vmem:[%s2747 + $0x28] sm:$0xf]
      %v3045 = vld [vmem:[%s2747 + $0x2c] sm:$0x1]
      %v3046 = vld [vmem:[%s2747 + $0x30] sm:$0xf]
      %v3047 = vld [vmem:[%s2747 + $0x34] sm:$0xf]
      %v3048 = vld [vmem:[%s2747 + $0x38] sm:$0x1]
      %v3049 = vld [vmem:[%s2747 + $0x3c] sm:$0xf]
      %v3050 = vld [vmem:[%s2747 + $0x40] sm:$0xf]
      %v3051 = vld [vmem:[%s2747 + $0x44] sm:$0x1]
      %v3052 = vld [vmem:[%s2747 + $0x48] sm:$0xf]
      %v3053 = vld [vmem:[%s2747 + $0x4c] sm:$0xf]
      %v3054 = vld [vmem:[%s2747 + $0x50] sm:$0x1]
      %v3055 = vld [vmem:[%s2747 + $0x54] sm:$0xf]
      %v3056 = vld [vmem:[%s2747 + $0x58] sm:$0xf]
      %v3057 = vld [vmem:[%s2747 + $0x5c] sm:$0x1]
      %v3058 = vld [vmem:[%s2747 + $0x60] sm:$0xf]
      %v3059 = vld [vmem:[%s2747 + $0x64] sm:$0xf]
      %v3060 = vld [vmem:[%s2747 + $0x68] sm:$0x1]
      %v3061 = vld [vmem:[%s2747 + $0x6c] sm:$0xf]
      %v3062 = vld [vmem:[%s2747 + $0x70] sm:$0xf]
      %v3063 = vld [vmem:[%s2747 + $0x74] sm:$0x1]
      %v3064 = vld [vmem:[%s2747 + $0x78] sm:$0xf]
      %v3065 = vld [vmem:[%s2747 + $0x7c] sm:$0xf]
      %v3066 = vld [vmem:[%s2747 + $0x80] sm:$0x1]
      %v3067 = vld [vmem:[%s2747 + $0x84] sm:$0xf]
      %v3068 = vld [vmem:[%s2747 + $0x88] sm:$0xf]
      %v3069 = vld [vmem:[%s2747 + $0x8c] sm:$0x1]
      %v3070 = vld [vmem:[%s2747 + $0x90] sm:$0xf]
      %v3071 = vld [vmem:[%s2747 + $0x94] sm:$0xf]
      %v3072 = vld [vmem:[%s2747 + $0x98] sm:$0x1]
      %v3073 = vld [vmem:[%s2747 + $0x9c] sm:$0xf]
      %v3074 = vld [vmem:[%s2747 + $0xa0] sm:$0xf]
      %v3075 = vld [vmem:[%s2747 + $0xa4] sm:$0x1]
      %v3076 = vld [vmem:[%s2747 + $0xa8] sm:$0xf]
      %v3077 = vld [vmem:[%s2747 + $0xac] sm:$0xf]
      %v3078 = vld [vmem:[%s2747 + $0xb0] sm:$0x1]
      %v3079 = vld [vmem:[%s2747 + $0xb4] sm:$0xf]
      %v3080 = vld [vmem:[%s2747 + $0xb8] sm:$0xf]
      %v3081 = vld [vmem:[%s2747 + $0xbc] sm:$0x1]
      %v3083 = vshrl.u32 %v3034, 16
      %v3085 = vrot.slane %v3083, 4
      %v3086 = vshll.u32 %v3034, 16
      %v3088 = vrot.slane %v3086, 5
      %v3089 = vor.u32 %v3085, %v3088
      %v3090 = vrot.slane %v3089, 4
      %v3092 = vshll.u32 %v3035, 16
      %v3094 = vrot.slane %v3092, 5
      %v3095 = vsel %vm223, %v3090, %v3094
      %v3096 = vshrl.u32 %v3035, 16
      %v3098 = vrot.slane %v3096, 4
      %v3099 = vor.u32 %v3098, %v3094
      %v3100 = vrot.slane %v3099, 4
      %v3102 = vshll.u32 %v3036, 16
      %v3104 = vrot.slane %v3102, 5
      %v3105 = vsel %vm223, %v3100, %v3104
      %v3107 = vshrl.u32 %v3037, 16
      %v3109 = vrot.slane %v3107, 4
      %v3110 = vshll.u32 %v3037, 16
      %v3112 = vrot.slane %v3110, 5
      %v3113 = vor.u32 %v3109, %v3112
      %v3114 = vrot.slane %v3113, 4
      %v3116 = vshll.u32 %v3038, 16
      %v3118 = vrot.slane %v3116, 5
      %v3119 = vsel %vm223, %v3114, %v3118
      %v3120 = vshrl.u32 %v3038, 16
      %v3122 = vrot.slane %v3120, 4
      %v3123 = vor.u32 %v3122, %v3118
      %v3124 = vrot.slane %v3123, 4
      %v3126 = vshll.u32 %v3039, 16
      %v3128 = vrot.slane %v3126, 5
      %v3129 = vsel %vm223, %v3124, %v3128
      %v3131 = vshrl.u32 %v3040, 16
      %v3133 = vrot.slane %v3131, 4
      %v3134 = vshll.u32 %v3040, 16
      %v3136 = vrot.slane %v3134, 5
      %v3137 = vor.u32 %v3133, %v3136
      %v3138 = vrot.slane %v3137, 4
      %v3140 = vshll.u32 %v3041, 16
      %v3142 = vrot.slane %v3140, 5
      %v3143 = vsel %vm223, %v3138, %v3142
      %v3144 = vshrl.u32 %v3041, 16
      %v3146 = vrot.slane %v3144, 4
      %v3147 = vor.u32 %v3146, %v3142
      %v3148 = vrot.slane %v3147, 4
      %v3150 = vshll.u32 %v3042, 16
      %v3152 = vrot.slane %v3150, 5
      %v3153 = vsel %vm223, %v3148, %v3152
      %v3155 = vshrl.u32 %v3043, 16
      %v3157 = vrot.slane %v3155, 4
      %v3158 = vshll.u32 %v3043, 16
      %v3160 = vrot.slane %v3158, 5
      %v3161 = vor.u32 %v3157, %v3160
      %v3162 = vrot.slane %v3161, 4
      %v3164 = vshll.u32 %v3044, 16
      %v3166 = vrot.slane %v3164, 5
      %v3167 = vsel %vm223, %v3162, %v3166
      %v3168 = vshrl.u32 %v3044, 16
      %v3170 = vrot.slane %v3168, 4
      %v3171 = vor.u32 %v3170, %v3166
      %v3172 = vrot.slane %v3171, 4
      %v3174 = vshll.u32 %v3045, 16
      %v3176 = vrot.slane %v3174, 5
      %v3177 = vsel %vm223, %v3172, %v3176
      %v3179 = vshrl.u32 %v3046, 16
      %v3181 = vrot.slane %v3179, 4
      %v3182 = vshll.u32 %v3046, 16
      %v3184 = vrot.slane %v3182, 5
      %v3185 = vor.u32 %v3181, %v3184
      %v3186 = vrot.slane %v3185, 4
      %v3188 = vshll.u32 %v3047, 16
      %v3190 = vrot.slane %v3188, 5
      %v3191 = vsel %vm223, %v3186, %v3190
      %v3192 = vshrl.u32 %v3047, 16
      %v3194 = vrot.slane %v3192, 4
      %v3195 = vor.u32 %v3194, %v3190
      %v3196 = vrot.slane %v3195, 4
      %v3198 = vshll.u32 %v3048, 16
      %v3200 = vrot.slane %v3198, 5
      %v3201 = vsel %vm223, %v3196, %v3200
      %v3203 = vshrl.u32 %v3049, 16
      %v3205 = vrot.slane %v3203, 4
      %v3206 = vshll.u32 %v3049, 16
      %v3208 = vrot.slane %v3206, 5
      %v3209 = vor.u32 %v3205, %v3208
      %v3210 = vrot.slane %v3209, 4
      %v3212 = vshll.u32 %v3050, 16
      %v3214 = vrot.slane %v3212, 5
      %v3215 = vsel %vm223, %v3210, %v3214
      %v3216 = vshrl.u32 %v3050, 16
      %v3218 = vrot.slane %v3216, 4
      %v3219 = vor.u32 %v3218, %v3214
      %v3220 = vrot.slane %v3219, 4
      %v3222 = vshll.u32 %v3051, 16
      %v3224 = vrot.slane %v3222, 5
      %v3225 = vsel %vm223, %v3220, %v3224
      %v3227 = vshrl.u32 %v3052, 16
      %v3229 = vrot.slane %v3227, 4
      %v3230 = vshll.u32 %v3052, 16
      %v3232 = vrot.slane %v3230, 5
      %v3233 = vor.u32 %v3229, %v3232
      %v3234 = vrot.slane %v3233, 4
      %v3236 = vshll.u32 %v3053, 16
      %v3238 = vrot.slane %v3236, 5
      %v3239 = vsel %vm223, %v3234, %v3238
      %v3240 = vshrl.u32 %v3053, 16
      %v3242 = vrot.slane %v3240, 4
      %v3243 = vor.u32 %v3242, %v3238
      %v3244 = vrot.slane %v3243, 4
      %v3246 = vshll.u32 %v3054, 16
      %v3248 = vrot.slane %v3246, 5
      %v3249 = vsel %vm223, %v3244, %v3248
      %v3251 = vshrl.u32 %v3055, 16
      %v3253 = vrot.slane %v3251, 4
      %v3254 = vshll.u32 %v3055, 16
      %v3256 = vrot.slane %v3254, 5
      %v3257 = vor.u32 %v3253, %v3256
      %v3258 = vrot.slane %v3257, 4
      %v3260 = vshll.u32 %v3056, 16
      %v3262 = vrot.slane %v3260, 5
      %v3263 = vsel %vm223, %v3258, %v3262
      %v3264 = vshrl.u32 %v3056, 16
      %v3266 = vrot.slane %v3264, 4
      %v3267 = vor.u32 %v3266, %v3262
      %v3268 = vrot.slane %v3267, 4
      %v3270 = vshll.u32 %v3057, 16
      %v3272 = vrot.slane %v3270, 5
      %v3273 = vsel %vm223, %v3268, %v3272
      %v3275 = vshrl.u32 %v3058, 16
      %v3277 = vrot.slane %v3275, 4
      %v3278 = vshll.u32 %v3058, 16
      %v3280 = vrot.slane %v3278, 5
      %v3281 = vor.u32 %v3277, %v3280
      %v3282 = vrot.slane %v3281, 4
      %v3284 = vshll.u32 %v3059, 16
      %v3286 = vrot.slane %v3284, 5
      %v3287 = vsel %vm223, %v3282, %v3286
      %v3288 = vshrl.u32 %v3059, 16
      %v3290 = vrot.slane %v3288, 4
      %v3291 = vor.u32 %v3290, %v3286
      %v3292 = vrot.slane %v3291, 4
      %v3294 = vshll.u32 %v3060, 16
      %v3296 = vrot.slane %v3294, 5
      %v3297 = vsel %vm223, %v3292, %v3296
      %v3299 = vshrl.u32 %v3061, 16
      %v3301 = vrot.slane %v3299, 4
      %v3302 = vshll.u32 %v3061, 16
      %v3304 = vrot.slane %v3302, 5
      %v3305 = vor.u32 %v3301, %v3304
      %v3306 = vrot.slane %v3305, 4
      %v3308 = vshll.u32 %v3062, 16
      %v3310 = vrot.slane %v3308, 5
      %v3311 = vsel %vm223, %v3306, %v3310
      %v3312 = vshrl.u32 %v3062, 16
      %v3314 = vrot.slane %v3312, 4
      %v3315 = vor.u32 %v3314, %v3310
      %v3316 = vrot.slane %v3315, 4
      %v3318 = vshll.u32 %v3063, 16
      %v3320 = vrot.slane %v3318, 5
      %v3321 = vsel %vm223, %v3316, %v3320
      %v3323 = vshrl.u32 %v3064, 16
      %v3325 = vrot.slane %v3323, 4
      %v3326 = vshll.u32 %v3064, 16
      %v3328 = vrot.slane %v3326, 5
      %v3329 = vor.u32 %v3325, %v3328
      %v3330 = vrot.slane %v3329, 4
      %v3332 = vshll.u32 %v3065, 16
      %v3334 = vrot.slane %v3332, 5
      %v3335 = vsel %vm223, %v3330, %v3334
      %v3336 = vshrl.u32 %v3065, 16
      %v3338 = vrot.slane %v3336, 4
      %v3339 = vor.u32 %v3338, %v3334
      %v3340 = vrot.slane %v3339, 4
      %v3342 = vshll.u32 %v3066, 16
      %v3344 = vrot.slane %v3342, 5
      %v3345 = vsel %vm223, %v3340, %v3344
      %v3347 = vshrl.u32 %v3067, 16
      %v3349 = vrot.slane %v3347, 4
      %v3350 = vshll.u32 %v3067, 16
      %v3352 = vrot.slane %v3350, 5
      %v3353 = vor.u32 %v3349, %v3352
      %v3354 = vrot.slane %v3353, 4
      %v3356 = vshll.u32 %v3068, 16
      %v3358 = vrot.slane %v3356, 5
      %v3359 = vsel %vm223, %v3354, %v3358
      %v3360 = vshrl.u32 %v3068, 16
      %v3362 = vrot.slane %v3360, 4
      %v3363 = vor.u32 %v3362, %v3358
      %v3364 = vrot.slane %v3363, 4
      %v3366 = vshll.u32 %v3069, 16
      %v3368 = vrot.slane %v3366, 5
      %v3369 = vsel %vm223, %v3364, %v3368
      %v3371 = vshrl.u32 %v3070, 16
      %v3373 = vrot.slane %v3371, 4
      %v3374 = vshll.u32 %v3070, 16
      %v3376 = vrot.slane %v3374, 5
      %v3377 = vor.u32 %v3373, %v3376
      %v3378 = vrot.slane %v3377, 4
      %v3380 = vshll.u32 %v3071, 16
      %v3382 = vrot.slane %v3380, 5
      %v3383 = vsel %vm223, %v3378, %v3382
      %v3384 = vshrl.u32 %v3071, 16
      %v3386 = vrot.slane %v3384, 4
      %v3387 = vor.u32 %v3386, %v3382
      %v3388 = vrot.slane %v3387, 4
      %v3390 = vshll.u32 %v3072, 16
      %v3392 = vrot.slane %v3390, 5
      %v3393 = vsel %vm223, %v3388, %v3392
      %v3395 = vshrl.u32 %v3073, 16
      %v3397 = vrot.slane %v3395, 4
      %v3398 = vshll.u32 %v3073, 16
      %v3400 = vrot.slane %v3398, 5
      %v3401 = vor.u32 %v3397, %v3400
      %v3402 = vrot.slane %v3401, 4
      %v3404 = vshll.u32 %v3074, 16
      %v3406 = vrot.slane %v3404, 5
      %v3407 = vsel %vm223, %v3402, %v3406
      %v3408 = vshrl.u32 %v3074, 16
      %v3410 = vrot.slane %v3408, 4
      %v3411 = vor.u32 %v3410, %v3406
      %v3412 = vrot.slane %v3411, 4
      %v3414 = vshll.u32 %v3075, 16
      %v3416 = vrot.slane %v3414, 5
      %v3417 = vsel %vm223, %v3412, %v3416
      %v3419 = vshrl.u32 %v3076, 16
      %v3421 = vrot.slane %v3419, 4
      %v3422 = vshll.u32 %v3076, 16
      %v3424 = vrot.slane %v3422, 5
      %v3425 = vor.u32 %v3421, %v3424
      %v3426 = vrot.slane %v3425, 4
      %v3428 = vshll.u32 %v3077, 16
      %v3430 = vrot.slane %v3428, 5
      %v3431 = vsel %vm223, %v3426, %v3430
      %v3432 = vshrl.u32 %v3077, 16
      %v3434 = vrot.slane %v3432, 4
      %v3435 = vor.u32 %v3434, %v3430
      %v3436 = vrot.slane %v3435, 4
      %v3438 = vshll.u32 %v3078, 16
      %v3440 = vrot.slane %v3438, 5
      %v3441 = vsel %vm223, %v3436, %v3440
      %v3443 = vshrl.u32 %v3079, 16
      %v3445 = vrot.slane %v3443, 4
      %v3446 = vshll.u32 %v3079, 16
      %v3448 = vrot.slane %v3446, 5
      %v3449 = vor.u32 %v3445, %v3448
      %v3450 = vrot.slane %v3449, 4
      %v3452 = vshll.u32 %v3080, 16
      %v3454 = vrot.slane %v3452, 5
      %v3455 = vsel %vm223, %v3450, %v3454
      %v3456 = vshrl.u32 %v3080, 16
      %v3458 = vrot.slane %v3456, 4
      %v3459 = vor.u32 %v3458, %v3454
      %v3460 = vrot.slane %v3459, 4
      %v3462 = vshll.u32 %v3081, 16
      %v3464 = vrot.slane %v3462, 5
      %v3465 = vsel %vm223, %v3460, %v3464
      %s3466 = scalar_lea.vmem %s1, 14
      %v3467 = vld [vmem:[%s3466] sm:$0x3]
      %v3468 = vunpack.c.l.b16 %v3095
      %v3469 = vunpack.c.l.b16 %v3105
      %v3470 = vunpack.c.l.b16 %v3119
      %v3471 = vunpack.c.l.b16 %v3129
      %v3472 = vunpack.c.l.b16 %v3143
      %v3473 = vunpack.c.l.b16 %v3153
      %v3474 = vunpack.c.l.b16 %v3167
      %v3475 = vunpack.c.l.b16 %v3177
      %v3476 = vunpack.c.l.b16 %v3191
      %v3477 = vunpack.c.l.b16 %v3201
      %v3478 = vunpack.c.l.b16 %v3215
      %v3479 = vunpack.c.l.b16 %v3225
      %v3480 = vunpack.c.l.b16 %v3239
      %v3481 = vunpack.c.l.b16 %v3249
      %v3482 = vunpack.c.l.b16 %v3263
      %v3483 = vunpack.c.l.b16 %v3273
      %v3484 = vunpack.c.l.b16 %v3287
      %v3485 = vunpack.c.l.b16 %v3297
      %v3486 = vunpack.c.l.b16 %v3311
      %v3487 = vunpack.c.l.b16 %v3321
      %v3488 = vunpack.c.l.b16 %v3335
      %v3489 = vunpack.c.l.b16 %v3345
      %v3490 = vunpack.c.l.b16 %v3359
      %v3491 = vunpack.c.l.b16 %v3369
      %v3492 = vunpack.c.l.b16 %v3383
      %v3493 = vunpack.c.l.b16 %v3393
      %v3494 = vunpack.c.l.b16 %v3407
      %v3495 = vunpack.c.l.b16 %v3417
      %v3496 = vunpack.c.l.b16 %v3431
      %v3497 = vunpack.c.l.b16 %v3441
      %v3498 = vunpack.c.l.b16 %v3455
      %v3499 = vunpack.c.l.b16 %v3465
      %v3500 = vpack.c.b16 %v3469, %v3468
      %v3501 = vpack.c.b16 %v3471, %v3470
      %v3502 = vpack.c.b16 %v3473, %v3472
      %v3503 = vpack.c.b16 %v3475, %v3474
      %v3504 = vpack.c.b16 %v3477, %v3476
      %v3505 = vpack.c.b16 %v3479, %v3478
      %v3506 = vpack.c.b16 %v3481, %v3480
      %v3507 = vpack.c.b16 %v3483, %v3482
      %v3508 = vpack.c.b16 %v3485, %v3484
      %v3509 = vpack.c.b16 %v3487, %v3486
      %v3510 = vpack.c.b16 %v3489, %v3488
      %v3511 = vpack.c.b16 %v3491, %v3490
      %v3512 = vpack.c.b16 %v3493, %v3492
      %v3513 = vpack.c.b16 %v3495, %v3494
      %v3514 = vpack.c.b16 %v3497, %v3496
      %v3515 = vpack.c.b16 %v3499, %v3498
      %v3517 = vsel %vm658, %v3500, 0
      %v3520 = vsel %vm658, %v3501, 0
      %v3523 = vsel %vm658, %v3502, 0
      %v3526 = vsel %vm658, %v3503, 0
      %v3529 = vsel %vm658, %v3504, 0
      %v3532 = vsel %vm658, %v3505, 0
      %v3535 = vsel %vm658, %v3506, 0
      %v3538 = vsel %vm658, %v3507, 0
      %v3541 = vsel %vm658, %v3508, 0
      %v3544 = vsel %vm658, %v3509, 0
      %v3547 = vsel %vm658, %v3510, 0
      %v3550 = vsel %vm658, %v3511, 0
      %v3553 = vsel %vm658, %v3512, 0
      %v3556 = vsel %vm658, %v3513, 0
      %v3559 = vsel %vm658, %v3514, 0
      %v3562 = vsel %vm658, %v3515, 0
      %v3565 = vand.u32 %v3467, %v710
      %3567 = vmatpush.bf16.msra.mxu0 0
      %3568 = vmatpush.bf16.msra.mxu0 0
      %3569 = vmatpush.bf16.msra.mxu0 0
      %3570 = vmatpush.bf16.msra.mxu0 0
      %3571 = vmatpush.bf16.msra.mxu0 0
      %3572 = vmatpush.bf16.msra.mxu0 0
      %3573 = vmatpush.bf16.msra.mxu0 0
      %3574 = vmatpush.bf16.msra.mxu0 %v3565
      %3575 = vmatmul.bf16.gmra.mxu0 %v3517
      %v3576 = vpop.f32.mrf.mxu0
      %v3577 = vadd.f32 0.0, %v3576
      %v3578 = vpop.f32.mrf.mxu0
      %v3579 = vadd.f32 0.0, %v3578
      %3580 = vmatmul.bf16.gmra.mxu0 %v3520
      %v3581 = vpop.f32.mrf.mxu0
      %v3582 = vadd.f32 0.0, %v3581
      %v3583 = vpop.f32.mrf.mxu0
      %v3584 = vadd.f32 0.0, %v3583
      %3585 = vmatmul.bf16.gmra.mxu0 %v3523
      %v3586 = vpop.f32.mrf.mxu0
      %v3587 = vadd.f32 0.0, %v3586
      %v3588 = vpop.f32.mrf.mxu0
      %v3589 = vadd.f32 0.0, %v3588
      %3590 = vmatmul.bf16.gmra.mxu0 %v3526
      %v3591 = vpop.f32.mrf.mxu0
      %v3592 = vadd.f32 0.0, %v3591
      %v3593 = vpop.f32.mrf.mxu0
      %v3594 = vadd.f32 0.0, %v3593
      %3595 = vmatmul.bf16.gmra.mxu0 %v3529
      %v3596 = vpop.f32.mrf.mxu0
      %v3597 = vadd.f32 0.0, %v3596
      %v3598 = vpop.f32.mrf.mxu0
      %v3599 = vadd.f32 0.0, %v3598
      %3600 = vmatmul.bf16.gmra.mxu0 %v3532
      %v3601 = vpop.f32.mrf.mxu0
      %v3602 = vadd.f32 0.0, %v3601
      %v3603 = vpop.f32.mrf.mxu0
      %v3604 = vadd.f32 0.0, %v3603
      %3605 = vmatmul.bf16.gmra.mxu0 %v3535
      %v3606 = vpop.f32.mrf.mxu0
      %v3607 = vadd.f32 0.0, %v3606
      %v3608 = vpop.f32.mrf.mxu0
      %v3609 = vadd.f32 0.0, %v3608
      %3610 = vmatmul.bf16.gmra.mxu0 %v3538
      %v3611 = vpop.f32.mrf.mxu0
      %v3612 = vadd.f32 0.0, %v3611
      %v3613 = vpop.f32.mrf.mxu0
      %v3614 = vadd.f32 0.0, %v3613
      %3615 = vmatmul.bf16.gmra.mxu0 %v3541
      %v3616 = vpop.f32.mrf.mxu0
      %v3617 = vadd.f32 0.0, %v3616
      %v3618 = vpop.f32.mrf.mxu0
      %v3619 = vadd.f32 0.0, %v3618
      %3620 = vmatmul.bf16.gmra.mxu0 %v3544
      %v3621 = vpop.f32.mrf.mxu0
      %v3622 = vadd.f32 0.0, %v3621
      %v3623 = vpop.f32.mrf.mxu0
      %v3624 = vadd.f32 0.0, %v3623
      %3625 = vmatmul.bf16.gmra.mxu0 %v3547
      %v3626 = vpop.f32.mrf.mxu0
      %v3627 = vadd.f32 0.0, %v3626
      %v3628 = vpop.f32.mrf.mxu0
      %v3629 = vadd.f32 0.0, %v3628
      %3630 = vmatmul.bf16.gmra.mxu0 %v3550
      %v3631 = vpop.f32.mrf.mxu0
      %v3632 = vadd.f32 0.0, %v3631
      %v3633 = vpop.f32.mrf.mxu0
      %v3634 = vadd.f32 0.0, %v3633
      %3635 = vmatmul.bf16.gmra.mxu0 %v3553
      %v3636 = vpop.f32.mrf.mxu0
      %v3637 = vadd.f32 0.0, %v3636
      %v3638 = vpop.f32.mrf.mxu0
      %v3639 = vadd.f32 0.0, %v3638
      %3640 = vmatmul.bf16.gmra.mxu0 %v3556
      %v3641 = vpop.f32.mrf.mxu0
      %v3642 = vadd.f32 0.0, %v3641
      %v3643 = vpop.f32.mrf.mxu0
      %v3644 = vadd.f32 0.0, %v3643
      %3645 = vmatmul.bf16.gmra.mxu0 %v3559
      %v3646 = vpop.f32.mrf.mxu0
      %v3647 = vadd.f32 0.0, %v3646
      %v3648 = vpop.f32.mrf.mxu0
      %v3649 = vadd.f32 0.0, %v3648
      %3650 = vmatmul.bf16.gmra.mxu0 %v3562
      %v3651 = vpop.f32.mrf.mxu0
      %v3652 = vadd.f32 0.0, %v3651
      %v3653 = vpop.f32.mrf.mxu0
      %v3654 = vadd.f32 0.0, %v3653
      %3655 = vdwg.mxu0
      %v3656 = vadd.f32 %v3002, %v3577
      %v3657 = vadd.f32 %v3003, %v3579
      %v3658 = vadd.f32 %v3004, %v3582
      %v3659 = vadd.f32 %v3005, %v3584
      %v3660 = vadd.f32 %v3006, %v3587
      %v3661 = vadd.f32 %v3007, %v3589
      %v3662 = vadd.f32 %v3008, %v3592
      %v3663 = vadd.f32 %v3009, %v3594
      %v3664 = vadd.f32 %v3010, %v3597
      %v3665 = vadd.f32 %v3011, %v3599
      %v3666 = vadd.f32 %v3012, %v3602
      %v3667 = vadd.f32 %v3013, %v3604
      %v3668 = vadd.f32 %v3014, %v3607
      %v3669 = vadd.f32 %v3015, %v3609
      %v3670 = vadd.f32 %v3016, %v3612
      %v3671 = vadd.f32 %v3017, %v3614
      %v3672 = vadd.f32 %v3018, %v3617
      %v3673 = vadd.f32 %v3019, %v3619
      %v3674 = vadd.f32 %v3020, %v3622
      %v3675 = vadd.f32 %v3021, %v3624
      %v3676 = vadd.f32 %v3022, %v3627
      %v3677 = vadd.f32 %v3023, %v3629
      %v3678 = vadd.f32 %v3024, %v3632
      %v3679 = vadd.f32 %v3025, %v3634
      %v3680 = vadd.f32 %v3026, %v3637
      %v3681 = vadd.f32 %v3027, %v3639
      %v3682 = vadd.f32 %v3028, %v3642
      %v3683 = vadd.f32 %v3029, %v3644
      %v3684 = vadd.f32 %v3030, %v3647
      %v3685 = vadd.f32 %v3031, %v3649
      %v3686 = vadd.f32 %v3032, %v3652
      %v3687 = vadd.f32 %v3033, %v3654
      %v3688 = vld [vmem:[%s2747] sm:$0xe]
      %v3689 = vld [vmem:[%s2747 + $0xc] sm:$0xe]
      %v3690 = vld [vmem:[%s2747 + $0x18] sm:$0xe]
      %v3691 = vld [vmem:[%s2747 + $0x24] sm:$0xe]
      %v3692 = vld [vmem:[%s2747 + $0x30] sm:$0xe]
      %v3693 = vld [vmem:[%s2747 + $0x3c] sm:$0xe]
      %v3694 = vld [vmem:[%s2747 + $0x48] sm:$0xe]
      %v3695 = vld [vmem:[%s2747 + $0x54] sm:$0xe]
      %v3696 = vld [vmem:[%s2747 + $0x60] sm:$0xe]
      %v3697 = vld [vmem:[%s2747 + $0x6c] sm:$0xe]
      %v3698 = vld [vmem:[%s2747 + $0x78] sm:$0xe]
      %v3699 = vld [vmem:[%s2747 + $0x84] sm:$0xe]
      %v3700 = vld [vmem:[%s2747 + $0x90] sm:$0xe]
      %v3701 = vld [vmem:[%s2747 + $0x9c] sm:$0xe]
      %v3702 = vld [vmem:[%s2747 + $0xa8] sm:$0xe]
      %v3703 = vld [vmem:[%s2747 + $0xb4] sm:$0xe]
      %v3752 = vrot.slane %v3688, 5
      %v3753 = vrot.slane %v3752, 4
      %v3754 = vrot.slane %v3035, 5
      %v3755 = vsel %vm1073, %v3753, %v3754
      %v3756 = vrot.slane %v3754, 4
      %v3757 = vrot.slane %v3036, 5
      %v3758 = vsel %vm1073, %v3756, %v3757
      %v3759 = vrot.slane %v3689, 5
      %v3760 = vrot.slane %v3759, 4
      %v3761 = vrot.slane %v3038, 5
      %v3762 = vsel %vm1073, %v3760, %v3761
      %v3763 = vrot.slane %v3761, 4
      %v3764 = vrot.slane %v3039, 5
      %v3765 = vsel %vm1073, %v3763, %v3764
      %v3766 = vrot.slane %v3690, 5
      %v3767 = vrot.slane %v3766, 4
      %v3768 = vrot.slane %v3041, 5
      %v3769 = vsel %vm1073, %v3767, %v3768
      %v3770 = vrot.slane %v3768, 4
      %v3771 = vrot.slane %v3042, 5
      %v3772 = vsel %vm1073, %v3770, %v3771
      %v3773 = vrot.slane %v3691, 5
      %v3774 = vrot.slane %v3773, 4
      %v3775 = vrot.slane %v3044, 5
      %v3776 = vsel %vm1073, %v3774, %v3775
      %v3777 = vrot.slane %v3775, 4
      %v3778 = vrot.slane %v3045, 5
      %v3779 = vsel %vm1073, %v3777, %v3778
      %v3780 = vrot.slane %v3692, 5
      %v3781 = vrot.slane %v3780, 4
      %v3782 = vrot.slane %v3047, 5
      %v3783 = vsel %vm1073, %v3781, %v3782
      %v3784 = vrot.slane %v3782, 4
      %v3785 = vrot.slane %v3048, 5
      %v3786 = vsel %vm1073, %v3784, %v3785
      %v3787 = vrot.slane %v3693, 5
      %v3788 = vrot.slane %v3787, 4
      %v3789 = vrot.slane %v3050, 5
      %v3790 = vsel %vm1073, %v3788, %v3789
      %v3791 = vrot.slane %v3789, 4
      %v3792 = vrot.slane %v3051, 5
      %v3793 = vsel %vm1073, %v3791, %v3792
      %v3794 = vrot.slane %v3694, 5
      %v3795 = vrot.slane %v3794, 4
      %v3796 = vrot.slane %v3053, 5
      %v3797 = vsel %vm1073, %v3795, %v3796
      %v3798 = vrot.slane %v3796, 4
      %v3799 = vrot.slane %v3054, 5
      %v3800 = vsel %vm1073, %v3798, %v3799
      %v3801 = vrot.slane %v3695, 5
      %v3802 = vrot.slane %v3801, 4
      %v3803 = vrot.slane %v3056, 5
      %v3804 = vsel %vm1073, %v3802, %v3803
      %v3805 = vrot.slane %v3803, 4
      %v3806 = vrot.slane %v3057, 5
      %v3807 = vsel %vm1073, %v3805, %v3806
      %v3808 = vrot.slane %v3696, 5
      %v3809 = vrot.slane %v3808, 4
      %v3810 = vrot.slane %v3059, 5
      %v3811 = vsel %vm1073, %v3809, %v3810
      %v3812 = vrot.slane %v3810, 4
      %v3813 = vrot.slane %v3060, 5
      %v3814 = vsel %vm1073, %v3812, %v3813
      %v3815 = vrot.slane %v3697, 5
      %v3816 = vrot.slane %v3815, 4
      %v3817 = vrot.slane %v3062, 5
      %v3818 = vsel %vm1073, %v3816, %v3817
      %v3819 = vrot.slane %v3817, 4
      %v3820 = vrot.slane %v3063, 5
      %v3821 = vsel %vm1073, %v3819, %v3820
      %v3822 = vrot.slane %v3698, 5
      %v3823 = vrot.slane %v3822, 4
      %v3824 = vrot.slane %v3065, 5
      %v3825 = vsel %vm1073, %v3823, %v3824
      %v3826 = vrot.slane %v3824, 4
      %v3827 = vrot.slane %v3066, 5
      %v3828 = vsel %vm1073, %v3826, %v3827
      %v3829 = vrot.slane %v3699, 5
      %v3830 = vrot.slane %v3829, 4
      %v3831 = vrot.slane %v3068, 5
      %v3832 = vsel %vm1073, %v3830, %v3831
      %v3833 = vrot.slane %v3831, 4
      %v3834 = vrot.slane %v3069, 5
      %v3835 = vsel %vm1073, %v3833, %v3834
      %v3836 = vrot.slane %v3700, 5
      %v3837 = vrot.slane %v3836, 4
      %v3838 = vrot.slane %v3071, 5
      %v3839 = vsel %vm1073, %v3837, %v3838
      %v3840 = vrot.slane %v3838, 4
      %v3841 = vrot.slane %v3072, 5
      %v3842 = vsel %vm1073, %v3840, %v3841
      %v3843 = vrot.slane %v3701, 5
      %v3844 = vrot.slane %v3843, 4
      %v3845 = vrot.slane %v3074, 5
      %v3846 = vsel %vm1073, %v3844, %v3845
      %v3847 = vrot.slane %v3845, 4
      %v3848 = vrot.slane %v3075, 5
      %v3849 = vsel %vm1073, %v3847, %v3848
      %v3850 = vrot.slane %v3702, 5
      %v3851 = vrot.slane %v3850, 4
      %v3852 = vrot.slane %v3077, 5
      %v3853 = vsel %vm1073, %v3851, %v3852
      %v3854 = vrot.slane %v3852, 4
      %v3855 = vrot.slane %v3078, 5
      %v3856 = vsel %vm1073, %v3854, %v3855
      %v3857 = vrot.slane %v3703, 5
      %v3858 = vrot.slane %v3857, 4
      %v3859 = vrot.slane %v3080, 5
      %v3860 = vsel %vm1073, %v3858, %v3859
      %v3861 = vrot.slane %v3859, 4
      %v3862 = vrot.slane %v3081, 5
      %v3863 = vsel %vm1073, %v3861, %v3862
      %s3864 = scalar_lea.vmem %s1, 16
      %v3865 = vld [vmem:[%s3864] sm:$0x3]
      %v3866 = vunpack.c.l.b16 %v3755
      %v3867 = vunpack.c.l.b16 %v3758
      %v3868 = vunpack.c.l.b16 %v3762
      %v3869 = vunpack.c.l.b16 %v3765
      %v3870 = vunpack.c.l.b16 %v3769
      %v3871 = vunpack.c.l.b16 %v3772
      %v3872 = vunpack.c.l.b16 %v3776
      %v3873 = vunpack.c.l.b16 %v3779
      %v3874 = vunpack.c.l.b16 %v3783
      %v3875 = vunpack.c.l.b16 %v3786
      %v3876 = vunpack.c.l.b16 %v3790
      %v3877 = vunpack.c.l.b16 %v3793
      %v3878 = vunpack.c.l.b16 %v3797
      %v3879 = vunpack.c.l.b16 %v3800
      %v3880 = vunpack.c.l.b16 %v3804
      %v3881 = vunpack.c.l.b16 %v3807
      %v3882 = vunpack.c.l.b16 %v3811
      %v3883 = vunpack.c.l.b16 %v3814
      %v3884 = vunpack.c.l.b16 %v3818
      %v3885 = vunpack.c.l.b16 %v3821
      %v3886 = vunpack.c.l.b16 %v3825
      %v3887 = vunpack.c.l.b16 %v3828
      %v3888 = vunpack.c.l.b16 %v3832
      %v3889 = vunpack.c.l.b16 %v3835
      %v3890 = vunpack.c.l.b16 %v3839
      %v3891 = vunpack.c.l.b16 %v3842
      %v3892 = vunpack.c.l.b16 %v3846
      %v3893 = vunpack.c.l.b16 %v3849
      %v3894 = vunpack.c.l.b16 %v3853
      %v3895 = vunpack.c.l.b16 %v3856
      %v3896 = vunpack.c.l.b16 %v3860
      %v3897 = vunpack.c.l.b16 %v3863
      %v3898 = vpack.c.b16 %v3867, %v3866
      %v3899 = vpack.c.b16 %v3869, %v3868
      %v3900 = vpack.c.b16 %v3871, %v3870
      %v3901 = vpack.c.b16 %v3873, %v3872
      %v3902 = vpack.c.b16 %v3875, %v3874
      %v3903 = vpack.c.b16 %v3877, %v3876
      %v3904 = vpack.c.b16 %v3879, %v3878
      %v3905 = vpack.c.b16 %v3881, %v3880
      %v3906 = vpack.c.b16 %v3883, %v3882
      %v3907 = vpack.c.b16 %v3885, %v3884
      %v3908 = vpack.c.b16 %v3887, %v3886
      %v3909 = vpack.c.b16 %v3889, %v3888
      %v3910 = vpack.c.b16 %v3891, %v3890
      %v3911 = vpack.c.b16 %v3893, %v3892
      %v3912 = vpack.c.b16 %v3895, %v3894
      %v3913 = vpack.c.b16 %v3897, %v3896
      %v3915 = vsel %vm658, %v3898, 0
      %v3918 = vsel %vm658, %v3899, 0
      %v3921 = vsel %vm658, %v3900, 0
      %v3924 = vsel %vm658, %v3901, 0
      %v3927 = vsel %vm658, %v3902, 0
      %v3930 = vsel %vm658, %v3903, 0
      %v3933 = vsel %vm658, %v3904, 0
      %v3936 = vsel %vm658, %v3905, 0
      %v3939 = vsel %vm658, %v3906, 0
      %v3942 = vsel %vm658, %v3907, 0
      %v3945 = vsel %vm658, %v3908, 0
      %v3948 = vsel %vm658, %v3909, 0
      %v3951 = vsel %vm658, %v3910, 0
      %v3954 = vsel %vm658, %v3911, 0
      %v3957 = vsel %vm658, %v3912, 0
      %v3960 = vsel %vm658, %v3913, 0
      %v3963 = vand.u32 %v3865, %v710
      %3965 = vmatpush.bf16.msra.mxu0 0
      %3966 = vmatpush.bf16.msra.mxu0 0
      %3967 = vmatpush.bf16.msra.mxu0 0
      %3968 = vmatpush.bf16.msra.mxu0 0
      %3969 = vmatpush.bf16.msra.mxu0 0
      %3970 = vmatpush.bf16.msra.mxu0 0
      %3971 = vmatpush.bf16.msra.mxu0 0
      %3972 = vmatpush.bf16.msra.mxu0 %v3963
      %3973 = vmatmul.bf16.gmra.mxu0 %v3915
      %v3974 = vpop.f32.mrf.mxu0
      %v3975 = vadd.f32 0.0, %v3974
      %v3976 = vpop.f32.mrf.mxu0
      %v3977 = vadd.f32 0.0, %v3976
      %3978 = vmatmul.bf16.gmra.mxu0 %v3918
      %v3979 = vpop.f32.mrf.mxu0
      %v3980 = vadd.f32 0.0, %v3979
      %v3981 = vpop.f32.mrf.mxu0
      %v3982 = vadd.f32 0.0, %v3981
      %3983 = vmatmul.bf16.gmra.mxu0 %v3921
      %v3984 = vpop.f32.mrf.mxu0
      %v3985 = vadd.f32 0.0, %v3984
      %v3986 = vpop.f32.mrf.mxu0
      %v3987 = vadd.f32 0.0, %v3986
      %3988 = vmatmul.bf16.gmra.mxu0 %v3924
      %v3989 = vpop.f32.mrf.mxu0
      %v3990 = vadd.f32 0.0, %v3989
      %v3991 = vpop.f32.mrf.mxu0
      %v3992 = vadd.f32 0.0, %v3991
      %3993 = vmatmul.bf16.gmra.mxu0 %v3927
      %v3994 = vpop.f32.mrf.mxu0
      %v3995 = vadd.f32 0.0, %v3994
      %v3996 = vpop.f32.mrf.mxu0
      %v3997 = vadd.f32 0.0, %v3996
      %3998 = vmatmul.bf16.gmra.mxu0 %v3930
      %v3999 = vpop.f32.mrf.mxu0
      %v4000 = vadd.f32 0.0, %v3999
      %v4001 = vpop.f32.mrf.mxu0
      %v4002 = vadd.f32 0.0, %v4001
      %4003 = vmatmul.bf16.gmra.mxu0 %v3933
      %v4004 = vpop.f32.mrf.mxu0
      %v4005 = vadd.f32 0.0, %v4004
      %v4006 = vpop.f32.mrf.mxu0
      %v4007 = vadd.f32 0.0, %v4006
      %4008 = vmatmul.bf16.gmra.mxu0 %v3936
      %v4009 = vpop.f32.mrf.mxu0
      %v4010 = vadd.f32 0.0, %v4009
      %v4011 = vpop.f32.mrf.mxu0
      %v4012 = vadd.f32 0.0, %v4011
      %4013 = vmatmul.bf16.gmra.mxu0 %v3939
      %v4014 = vpop.f32.mrf.mxu0
      %v4015 = vadd.f32 0.0, %v4014
      %v4016 = vpop.f32.mrf.mxu0
      %v4017 = vadd.f32 0.0, %v4016
      %4018 = vmatmul.bf16.gmra.mxu0 %v3942
      %v4019 = vpop.f32.mrf.mxu0
      %v4020 = vadd.f32 0.0, %v4019
      %v4021 = vpop.f32.mrf.mxu0
      %v4022 = vadd.f32 0.0, %v4021
      %4023 = vmatmul.bf16.gmra.mxu0 %v3945
      %v4024 = vpop.f32.mrf.mxu0
      %v4025 = vadd.f32 0.0, %v4024
      %v4026 = vpop.f32.mrf.mxu0
      %v4027 = vadd.f32 0.0, %v4026
      %4028 = vmatmul.bf16.gmra.mxu0 %v3948
      %v4029 = vpop.f32.mrf.mxu0
      %v4030 = vadd.f32 0.0, %v4029
      %v4031 = vpop.f32.mrf.mxu0
      %v4032 = vadd.f32 0.0, %v4031
      %4033 = vmatmul.bf16.gmra.mxu0 %v3951
      %v4034 = vpop.f32.mrf.mxu0
      %v4035 = vadd.f32 0.0, %v4034
      %v4036 = vpop.f32.mrf.mxu0
      %v4037 = vadd.f32 0.0, %v4036
      %4038 = vmatmul.bf16.gmra.mxu0 %v3954
      %v4039 = vpop.f32.mrf.mxu0
      %v4040 = vadd.f32 0.0, %v4039
      %v4041 = vpop.f32.mrf.mxu0
      %v4042 = vadd.f32 0.0, %v4041
      %4043 = vmatmul.bf16.gmra.mxu0 %v3957
      %v4044 = vpop.f32.mrf.mxu0
      %v4045 = vadd.f32 0.0, %v4044
      %v4046 = vpop.f32.mrf.mxu0
      %v4047 = vadd.f32 0.0, %v4046
      %4048 = vmatmul.bf16.gmra.mxu0 %v3960
      %v4049 = vpop.f32.mrf.mxu0
      %v4050 = vadd.f32 0.0, %v4049
      %v4051 = vpop.f32.mrf.mxu0
      %v4052 = vadd.f32 0.0, %v4051
      %4053 = vdwg.mxu0
      %v4054 = vadd.f32 %v3656, %v3975
      %v4055 = vadd.f32 %v3657, %v3977
      %v4056 = vadd.f32 %v3658, %v3980
      %v4057 = vadd.f32 %v3659, %v3982
      %v4058 = vadd.f32 %v3660, %v3985
      %v4059 = vadd.f32 %v3661, %v3987
      %v4060 = vadd.f32 %v3662, %v3990
      %v4061 = vadd.f32 %v3663, %v3992
      %v4062 = vadd.f32 %v3664, %v3995
      %v4063 = vadd.f32 %v3665, %v3997
      %v4064 = vadd.f32 %v3666, %v4000
      %v4065 = vadd.f32 %v3667, %v4002
      %v4066 = vadd.f32 %v3668, %v4005
      %v4067 = vadd.f32 %v3669, %v4007
      %v4068 = vadd.f32 %v3670, %v4010
      %v4069 = vadd.f32 %v3671, %v4012
      %v4070 = vadd.f32 %v3672, %v4015
      %v4071 = vadd.f32 %v3673, %v4017
      %v4072 = vadd.f32 %v3674, %v4020
      %v4073 = vadd.f32 %v3675, %v4022
      %v4074 = vadd.f32 %v3676, %v4025
      %v4075 = vadd.f32 %v3677, %v4027
      %v4076 = vadd.f32 %v3678, %v4030
      %v4077 = vadd.f32 %v3679, %v4032
      %v4078 = vadd.f32 %v3680, %v4035
      %v4079 = vadd.f32 %v3681, %v4037
      %v4080 = vadd.f32 %v3682, %v4040
      %v4081 = vadd.f32 %v3683, %v4042
      %v4082 = vadd.f32 %v3684, %v4045
      %v4083 = vadd.f32 %v3685, %v4047
      %v4084 = vadd.f32 %v3686, %v4050
      %v4085 = vadd.f32 %v3687, %v4052
      %v4086 = vld [vmem:[%s2] sm:$0x1]
      %v4088 = vperm.slane %v4086, 0
      %v4090 = vadd.f32 %v4054, %v4088
      %v4091 = vadd.f32 %v4055, %v4088
      %v4092 = vadd.f32 %v4056, %v4088
      %v4093 = vadd.f32 %v4057, %v4088
      %v4094 = vadd.f32 %v4058, %v4088
      %v4095 = vadd.f32 %v4059, %v4088
      %v4096 = vadd.f32 %v4060, %v4088
      %v4097 = vadd.f32 %v4061, %v4088
      %v4098 = vadd.f32 %v4062, %v4088
      %v4099 = vadd.f32 %v4063, %v4088
      %v4100 = vadd.f32 %v4064, %v4088
      %v4101 = vadd.f32 %v4065, %v4088
      %v4102 = vadd.f32 %v4066, %v4088
      %v4103 = vadd.f32 %v4067, %v4088
      %v4104 = vadd.f32 %v4068, %v4088
      %v4105 = vadd.f32 %v4069, %v4088
      %v4106 = vadd.f32 %v4070, %v4088
      %v4107 = vadd.f32 %v4071, %v4088
      %v4108 = vadd.f32 %v4072, %v4088
      %v4109 = vadd.f32 %v4073, %v4088
      %v4110 = vadd.f32 %v4074, %v4088
      %v4111 = vadd.f32 %v4075, %v4088
      %v4112 = vadd.f32 %v4076, %v4088
      %v4113 = vadd.f32 %v4077, %v4088
      %v4114 = vadd.f32 %v4078, %v4088
      %v4115 = vadd.f32 %v4079, %v4088
      %v4116 = vadd.f32 %v4080, %v4088
      %v4117 = vadd.f32 %v4081, %v4088
      %v4118 = vadd.f32 %v4082, %v4088
      %v4119 = vadd.f32 %v4083, %v4088
      %v4120 = vadd.f32 %v4084, %v4088
      %v4121 = vadd.f32 %v4085, %v4088
      %v4122 = vsub.f32 0.0, %v4090
      %v4123 = vsub.f32 0.0, %v4091
      %v4124 = vsub.f32 0.0, %v4092
      %v4125 = vsub.f32 0.0, %v4093
      %v4126 = vsub.f32 0.0, %v4094
      %v4127 = vsub.f32 0.0, %v4095
      %v4128 = vsub.f32 0.0, %v4096
      %v4129 = vsub.f32 0.0, %v4097
      %v4130 = vsub.f32 0.0, %v4098
      %v4131 = vsub.f32 0.0, %v4099
      %v4132 = vsub.f32 0.0, %v4100
      %v4133 = vsub.f32 0.0, %v4101
      %v4134 = vsub.f32 0.0, %v4102
      %v4135 = vsub.f32 0.0, %v4103
      %v4136 = vsub.f32 0.0, %v4104
      %v4137 = vsub.f32 0.0, %v4105
      %v4138 = vsub.f32 0.0, %v4106
      %v4139 = vsub.f32 0.0, %v4107
      %v4140 = vsub.f32 0.0, %v4108
      %v4141 = vsub.f32 0.0, %v4109
      %v4142 = vsub.f32 0.0, %v4110
      %v4143 = vsub.f32 0.0, %v4111
      %v4144 = vsub.f32 0.0, %v4112
      %v4145 = vsub.f32 0.0, %v4113
      %v4146 = vsub.f32 0.0, %v4114
      %v4147 = vsub.f32 0.0, %v4115
      %v4148 = vsub.f32 0.0, %v4116
      %v4149 = vsub.f32 0.0, %v4117
      %v4150 = vsub.f32 0.0, %v4118
      %v4151 = vsub.f32 0.0, %v4119
      %v4152 = vsub.f32 0.0, %v4120
      %v4153 = vsub.f32 0.0, %v4121
      %v4154 = vmul.f32 %v4122, 1.442695
      %v4155 = vpow.pop %v4154
      %v4156 = vmul.f32 %v4123, 1.442695
      %v4157 = vpow.pop %v4156
      %v4158 = vmul.f32 %v4124, 1.442695
      %v4159 = vpow.pop %v4158
      %v4160 = vmul.f32 %v4125, 1.442695
      %v4161 = vpow.pop %v4160
      %v4162 = vmul.f32 %v4126, 1.442695
      %v4163 = vpow.pop %v4162
      %v4164 = vmul.f32 %v4127, 1.442695
      %v4165 = vpow.pop %v4164
      %v4166 = vmul.f32 %v4128, 1.442695
      %v4167 = vpow.pop %v4166
      %v4168 = vmul.f32 %v4129, 1.442695
      %v4169 = vpow.pop %v4168
      %v4170 = vmul.f32 %v4130, 1.442695
      %v4171 = vpow.pop %v4170
      %v4172 = vmul.f32 %v4131, 1.442695
      %v4173 = vpow.pop %v4172
      %v4174 = vmul.f32 %v4132, 1.442695
      %v4175 = vpow.pop %v4174
      %v4176 = vmul.f32 %v4133, 1.442695
      %v4177 = vpow.pop %v4176
      %v4178 = vmul.f32 %v4134, 1.442695
      %v4179 = vpow.pop %v4178
      %v4180 = vmul.f32 %v4135, 1.442695
      %v4181 = vpow.pop %v4180
      %v4182 = vmul.f32 %v4136, 1.442695
      %v4183 = vpow.pop %v4182
      %v4184 = vmul.f32 %v4137, 1.442695
      %v4185 = vpow.pop %v4184
      %v4186 = vmul.f32 %v4138, 1.442695
      %v4187 = vpow.pop %v4186
      %v4188 = vmul.f32 %v4139, 1.442695
      %v4189 = vpow.pop %v4188
      %v4190 = vmul.f32 %v4140, 1.442695
      %v4191 = vpow.pop %v4190
      %v4192 = vmul.f32 %v4141, 1.442695
      %v4193 = vpow.pop %v4192
      %v4194 = vmul.f32 %v4142, 1.442695
      %v4195 = vpow.pop %v4194
      %v4196 = vmul.f32 %v4143, 1.442695
      %v4197 = vpow.pop %v4196
      %v4198 = vmul.f32 %v4144, 1.442695
      %v4199 = vpow.pop %v4198
      %v4200 = vmul.f32 %v4145, 1.442695
      %v4201 = vpow.pop %v4200
      %v4202 = vmul.f32 %v4146, 1.442695
      %v4203 = vpow.pop %v4202
      %v4204 = vmul.f32 %v4147, 1.442695
      %v4205 = vpow.pop %v4204
      %v4206 = vmul.f32 %v4148, 1.442695
      %v4207 = vpow.pop %v4206
      %v4208 = vmul.f32 %v4149, 1.442695
      %v4209 = vpow.pop %v4208
      %v4210 = vmul.f32 %v4150, 1.442695
      %v4211 = vpow.pop %v4210
      %v4212 = vmul.f32 %v4151, 1.442695
      %v4213 = vpow.pop %v4212
      %v4214 = vmul.f32 %v4152, 1.442695
      %v4215 = vpow.pop %v4214
      %v4216 = vmul.f32 %v4153, 1.442695
      %v4217 = vpow.pop %v4216
      %v4218 = vadd.f32 %v4155, 1.0
      %v4219 = vadd.f32 %v4157, 1.0
      %v4220 = vadd.f32 %v4159, 1.0
      %v4221 = vadd.f32 %v4161, 1.0
      %v4222 = vadd.f32 %v4163, 1.0
      %v4223 = vadd.f32 %v4165, 1.0
      %v4224 = vadd.f32 %v4167, 1.0
      %v4225 = vadd.f32 %v4169, 1.0
      %v4226 = vadd.f32 %v4171, 1.0
      %v4227 = vadd.f32 %v4173, 1.0
      %v4228 = vadd.f32 %v4175, 1.0
      %v4229 = vadd.f32 %v4177, 1.0
      %v4230 = vadd.f32 %v4179, 1.0
      %v4231 = vadd.f32 %v4181, 1.0
      %v4232 = vadd.f32 %v4183, 1.0
      %v4233 = vadd.f32 %v4185, 1.0
      %v4234 = vadd.f32 %v4187, 1.0
      %v4235 = vadd.f32 %v4189, 1.0
      %v4236 = vadd.f32 %v4191, 1.0
      %v4237 = vadd.f32 %v4193, 1.0
      %v4238 = vadd.f32 %v4195, 1.0
      %v4239 = vadd.f32 %v4197, 1.0
      %v4240 = vadd.f32 %v4199, 1.0
      %v4241 = vadd.f32 %v4201, 1.0
      %v4242 = vadd.f32 %v4203, 1.0
      %v4243 = vadd.f32 %v4205, 1.0
      %v4244 = vadd.f32 %v4207, 1.0
      %v4245 = vadd.f32 %v4209, 1.0
      %v4246 = vadd.f32 %v4211, 1.0
      %v4247 = vadd.f32 %v4213, 1.0
      %v4248 = vadd.f32 %v4215, 1.0
      %v4249 = vadd.f32 %v4217, 1.0
      %v4250 = vrcp.pop %v4218
      %v4251 = vmul.f32 %v4218, %v4250
      %v4252 = vsub.f32 1.0, %v4251
      %v4253 = vmul.f32 %v4250, %v4252
      %v4254 = vadd.f32 %v4250, %v4253
      %vm4255 = vweird.f32 %v4218
      %vm4256 = vweird.f32 %v4250
      %vm4257 = vmor %vm4255, %vm4256
      %v4258 = vsel %vm4257, %v4250, %v4254
      %v4259 = vand.u32 2147483647, %v4218
      %vm4260 = vcmp.eq.f32.partialorder %v4259, 8.507059e+37
      %v4261 = vand.u32 %v4218, 2147483648
      %v4262 = vor.u32 1.1754944e-38, %v4261
      %v4263 = vsel %vm4260, %v4262, %v4258
      %v4264 = vmul.f32 1.0, %v4263
      %v4265 = vrcp.pop %v4219
      %v4266 = vmul.f32 %v4219, %v4265
      %v4267 = vsub.f32 1.0, %v4266
      %v4268 = vmul.f32 %v4265, %v4267
      %v4269 = vadd.f32 %v4265, %v4268
      %vm4270 = vweird.f32 %v4219
      %vm4271 = vweird.f32 %v4265
      %vm4272 = vmor %vm4270, %vm4271
      %v4273 = vsel %vm4272, %v4265, %v4269
      %v4274 = vand.u32 2147483647, %v4219
      %vm4275 = vcmp.eq.f32.partialorder %v4274, 8.507059e+37
      %v4276 = vand.u32 %v4219, 2147483648
      %v4277 = vor.u32 1.1754944e-38, %v4276
      %v4278 = vsel %vm4275, %v4277, %v4273
      %v4279 = vmul.f32 1.0, %v4278
      %v4280 = vrcp.pop %v4220
      %v4281 = vmul.f32 %v4220, %v4280
      %v4282 = vsub.f32 1.0, %v4281
      %v4283 = vmul.f32 %v4280, %v4282
      %v4284 = vadd.f32 %v4280, %v4283
      %vm4285 = vweird.f32 %v4220
      %vm4286 = vweird.f32 %v4280
      %vm4287 = vmor %vm4285, %vm4286
      %v4288 = vsel %vm4287, %v4280, %v4284
      %v4289 = vand.u32 2147483647, %v4220
      %vm4290 = vcmp.eq.f32.partialorder %v4289, 8.507059e+37
      %v4291 = vand.u32 %v4220, 2147483648
      %v4292 = vor.u32 1.1754944e-38, %v4291
      %v4293 = vsel %vm4290, %v4292, %v4288
      %v4294 = vmul.f32 1.0, %v4293
      %v4295 = vrcp.pop %v4221
      %v4296 = vmul.f32 %v4221, %v4295
      %v4297 = vsub.f32 1.0, %v4296
      %v4298 = vmul.f32 %v4295, %v4297
      %v4299 = vadd.f32 %v4295, %v4298
      %vm4300 = vweird.f32 %v4221
      %vm4301 = vweird.f32 %v4295
      %vm4302 = vmor %vm4300, %vm4301
      %v4303 = vsel %vm4302, %v4295, %v4299
      %v4304 = vand.u32 2147483647, %v4221
      %vm4305 = vcmp.eq.f32.partialorder %v4304, 8.507059e+37
      %v4306 = vand.u32 %v4221, 2147483648
      %v4307 = vor.u32 1.1754944e-38, %v4306
      %v4308 = vsel %vm4305, %v4307, %v4303
      %v4309 = vmul.f32 1.0, %v4308
      %v4310 = vrcp.pop %v4222
      %v4311 = vmul.f32 %v4222, %v4310
      %v4312 = vsub.f32 1.0, %v4311
      %v4313 = vmul.f32 %v4310, %v4312
      %v4314 = vadd.f32 %v4310, %v4313
      %vm4315 = vweird.f32 %v4222
      %vm4316 = vweird.f32 %v4310
      %vm4317 = vmor %vm4315, %vm4316
      %v4318 = vsel %vm4317, %v4310, %v4314
      %v4319 = vand.u32 2147483647, %v4222
      %vm4320 = vcmp.eq.f32.partialorder %v4319, 8.507059e+37
      %v4321 = vand.u32 %v4222, 2147483648
      %v4322 = vor.u32 1.1754944e-38, %v4321
      %v4323 = vsel %vm4320, %v4322, %v4318
      %v4324 = vmul.f32 1.0, %v4323
      %v4325 = vrcp.pop %v4223
      %v4326 = vmul.f32 %v4223, %v4325
      %v4327 = vsub.f32 1.0, %v4326
      %v4328 = vmul.f32 %v4325, %v4327
      %v4329 = vadd.f32 %v4325, %v4328
      %vm4330 = vweird.f32 %v4223
      %vm4331 = vweird.f32 %v4325
      %vm4332 = vmor %vm4330, %vm4331
      %v4333 = vsel %vm4332, %v4325, %v4329
      %v4334 = vand.u32 2147483647, %v4223
      %vm4335 = vcmp.eq.f32.partialorder %v4334, 8.507059e+37
      %v4336 = vand.u32 %v4223, 2147483648
      %v4337 = vor.u32 1.1754944e-38, %v4336
      %v4338 = vsel %vm4335, %v4337, %v4333
      %v4339 = vmul.f32 1.0, %v4338
      %v4340 = vrcp.pop %v4224
      %v4341 = vmul.f32 %v4224, %v4340
      %v4342 = vsub.f32 1.0, %v4341
      %v4343 = vmul.f32 %v4340, %v4342
      %v4344 = vadd.f32 %v4340, %v4343
      %vm4345 = vweird.f32 %v4224
      %vm4346 = vweird.f32 %v4340
      %vm4347 = vmor %vm4345, %vm4346
      %v4348 = vsel %vm4347, %v4340, %v4344
      %v4349 = vand.u32 2147483647, %v4224
      %vm4350 = vcmp.eq.f32.partialorder %v4349, 8.507059e+37
      %v4351 = vand.u32 %v4224, 2147483648
      %v4352 = vor.u32 1.1754944e-38, %v4351
      %v4353 = vsel %vm4350, %v4352, %v4348
      %v4354 = vmul.f32 1.0, %v4353
      %v4355 = vrcp.pop %v4225
      %v4356 = vmul.f32 %v4225, %v4355
      %v4357 = vsub.f32 1.0, %v4356
      %v4358 = vmul.f32 %v4355, %v4357
      %v4359 = vadd.f32 %v4355, %v4358
      %vm4360 = vweird.f32 %v4225
      %vm4361 = vweird.f32 %v4355
      %vm4362 = vmor %vm4360, %vm4361
      %v4363 = vsel %vm4362, %v4355, %v4359
      %v4364 = vand.u32 2147483647, %v4225
      %vm4365 = vcmp.eq.f32.partialorder %v4364, 8.507059e+37
      %v4366 = vand.u32 %v4225, 2147483648
      %v4367 = vor.u32 1.1754944e-38, %v4366
      %v4368 = vsel %vm4365, %v4367, %v4363
      %v4369 = vmul.f32 1.0, %v4368
      %v4370 = vrcp.pop %v4226
      %v4371 = vmul.f32 %v4226, %v4370
      %v4372 = vsub.f32 1.0, %v4371
      %v4373 = vmul.f32 %v4370, %v4372
      %v4374 = vadd.f32 %v4370, %v4373
      %vm4375 = vweird.f32 %v4226
      %vm4376 = vweird.f32 %v4370
      %vm4377 = vmor %vm4375, %vm4376
      %v4378 = vsel %vm4377, %v4370, %v4374
      %v4379 = vand.u32 2147483647, %v4226
      %vm4380 = vcmp.eq.f32.partialorder %v4379, 8.507059e+37
      %v4381 = vand.u32 %v4226, 2147483648
      %v4382 = vor.u32 1.1754944e-38, %v4381
      %v4383 = vsel %vm4380, %v4382, %v4378
      %v4384 = vmul.f32 1.0, %v4383
      %v4385 = vrcp.pop %v4227
      %v4386 = vmul.f32 %v4227, %v4385
      %v4387 = vsub.f32 1.0, %v4386
      %v4388 = vmul.f32 %v4385, %v4387
      %v4389 = vadd.f32 %v4385, %v4388
      %vm4390 = vweird.f32 %v4227
      %vm4391 = vweird.f32 %v4385
      %vm4392 = vmor %vm4390, %vm4391
      %v4393 = vsel %vm4392, %v4385, %v4389
      %v4394 = vand.u32 2147483647, %v4227
      %vm4395 = vcmp.eq.f32.partialorder %v4394, 8.507059e+37
      %v4396 = vand.u32 %v4227, 2147483648
      %v4397 = vor.u32 1.1754944e-38, %v4396
      %v4398 = vsel %vm4395, %v4397, %v4393
      %v4399 = vmul.f32 1.0, %v4398
      %v4400 = vrcp.pop %v4228
      %v4401 = vmul.f32 %v4228, %v4400
      %v4402 = vsub.f32 1.0, %v4401
      %v4403 = vmul.f32 %v4400, %v4402
      %v4404 = vadd.f32 %v4400, %v4403
      %vm4405 = vweird.f32 %v4228
      %vm4406 = vweird.f32 %v4400
      %vm4407 = vmor %vm4405, %vm4406
      %v4408 = vsel %vm4407, %v4400, %v4404
      %v4409 = vand.u32 2147483647, %v4228
      %vm4410 = vcmp.eq.f32.partialorder %v4409, 8.507059e+37
      %v4411 = vand.u32 %v4228, 2147483648
      %v4412 = vor.u32 1.1754944e-38, %v4411
      %v4413 = vsel %vm4410, %v4412, %v4408
      %v4414 = vmul.f32 1.0, %v4413
      %v4415 = vrcp.pop %v4229
      %v4416 = vmul.f32 %v4229, %v4415
      %v4417 = vsub.f32 1.0, %v4416
      %v4418 = vmul.f32 %v4415, %v4417
      %v4419 = vadd.f32 %v4415, %v4418
      %vm4420 = vweird.f32 %v4229
      %vm4421 = vweird.f32 %v4415
      %vm4422 = vmor %vm4420, %vm4421
      %v4423 = vsel %vm4422, %v4415, %v4419
      %v4424 = vand.u32 2147483647, %v4229
      %vm4425 = vcmp.eq.f32.partialorder %v4424, 8.507059e+37
      %v4426 = vand.u32 %v4229, 2147483648
      %v4427 = vor.u32 1.1754944e-38, %v4426
      %v4428 = vsel %vm4425, %v4427, %v4423
      %v4429 = vmul.f32 1.0, %v4428
      %v4430 = vrcp.pop %v4230
      %v4431 = vmul.f32 %v4230, %v4430
      %v4432 = vsub.f32 1.0, %v4431
      %v4433 = vmul.f32 %v4430, %v4432
      %v4434 = vadd.f32 %v4430, %v4433
      %vm4435 = vweird.f32 %v4230
      %vm4436 = vweird.f32 %v4430
      %vm4437 = vmor %vm4435, %vm4436
      %v4438 = vsel %vm4437, %v4430, %v4434
      %v4439 = vand.u32 2147483647, %v4230
      %vm4440 = vcmp.eq.f32.partialorder %v4439, 8.507059e+37
      %v4441 = vand.u32 %v4230, 2147483648
      %v4442 = vor.u32 1.1754944e-38, %v4441
      %v4443 = vsel %vm4440, %v4442, %v4438
      %v4444 = vmul.f32 1.0, %v4443
      %v4445 = vrcp.pop %v4231
      %v4446 = vmul.f32 %v4231, %v4445
      %v4447 = vsub.f32 1.0, %v4446
      %v4448 = vmul.f32 %v4445, %v4447
      %v4449 = vadd.f32 %v4445, %v4448
      %vm4450 = vweird.f32 %v4231
      %vm4451 = vweird.f32 %v4445
      %vm4452 = vmor %vm4450, %vm4451
      %v4453 = vsel %vm4452, %v4445, %v4449
      %v4454 = vand.u32 2147483647, %v4231
      %vm4455 = vcmp.eq.f32.partialorder %v4454, 8.507059e+37
      %v4456 = vand.u32 %v4231, 2147483648
      %v4457 = vor.u32 1.1754944e-38, %v4456
      %v4458 = vsel %vm4455, %v4457, %v4453
      %v4459 = vmul.f32 1.0, %v4458
      %v4460 = vrcp.pop %v4232
      %v4461 = vmul.f32 %v4232, %v4460
      %v4462 = vsub.f32 1.0, %v4461
      %v4463 = vmul.f32 %v4460, %v4462
      %v4464 = vadd.f32 %v4460, %v4463
      %vm4465 = vweird.f32 %v4232
      %vm4466 = vweird.f32 %v4460
      %vm4467 = vmor %vm4465, %vm4466
      %v4468 = vsel %vm4467, %v4460, %v4464
      %v4469 = vand.u32 2147483647, %v4232
      %vm4470 = vcmp.eq.f32.partialorder %v4469, 8.507059e+37
      %v4471 = vand.u32 %v4232, 2147483648
      %v4472 = vor.u32 1.1754944e-38, %v4471
      %v4473 = vsel %vm4470, %v4472, %v4468
      %v4474 = vmul.f32 1.0, %v4473
      %v4475 = vrcp.pop %v4233
      %v4476 = vmul.f32 %v4233, %v4475
      %v4477 = vsub.f32 1.0, %v4476
      %v4478 = vmul.f32 %v4475, %v4477
      %v4479 = vadd.f32 %v4475, %v4478
      %vm4480 = vweird.f32 %v4233
      %vm4481 = vweird.f32 %v4475
      %vm4482 = vmor %vm4480, %vm4481
      %v4483 = vsel %vm4482, %v4475, %v4479
      %v4484 = vand.u32 2147483647, %v4233
      %vm4485 = vcmp.eq.f32.partialorder %v4484, 8.507059e+37
      %v4486 = vand.u32 %v4233, 2147483648
      %v4487 = vor.u32 1.1754944e-38, %v4486
      %v4488 = vsel %vm4485, %v4487, %v4483
      %v4489 = vmul.f32 1.0, %v4488
      %v4490 = vrcp.pop %v4234
      %v4491 = vmul.f32 %v4234, %v4490
      %v4492 = vsub.f32 1.0, %v4491
      %v4493 = vmul.f32 %v4490, %v4492
      %v4494 = vadd.f32 %v4490, %v4493
      %vm4495 = vweird.f32 %v4234
      %vm4496 = vweird.f32 %v4490
      %vm4497 = vmor %vm4495, %vm4496
      %v4498 = vsel %vm4497, %v4490, %v4494
      %v4499 = vand.u32 2147483647, %v4234
      %vm4500 = vcmp.eq.f32.partialorder %v4499, 8.507059e+37
      %v4501 = vand.u32 %v4234, 2147483648
      %v4502 = vor.u32 1.1754944e-38, %v4501
      %v4503 = vsel %vm4500, %v4502, %v4498
      %v4504 = vmul.f32 1.0, %v4503
      %v4505 = vrcp.pop %v4235
      %v4506 = vmul.f32 %v4235, %v4505
      %v4507 = vsub.f32 1.0, %v4506
      %v4508 = vmul.f32 %v4505, %v4507
      %v4509 = vadd.f32 %v4505, %v4508
      %vm4510 = vweird.f32 %v4235
      %vm4511 = vweird.f32 %v4505
      %vm4512 = vmor %vm4510, %vm4511
      %v4513 = vsel %vm4512, %v4505, %v4509
      %v4514 = vand.u32 2147483647, %v4235
      %vm4515 = vcmp.eq.f32.partialorder %v4514, 8.507059e+37
      %v4516 = vand.u32 %v4235, 2147483648
      %v4517 = vor.u32 1.1754944e-38, %v4516
      %v4518 = vsel %vm4515, %v4517, %v4513
      %v4519 = vmul.f32 1.0, %v4518
      %v4520 = vrcp.pop %v4236
      %v4521 = vmul.f32 %v4236, %v4520
      %v4522 = vsub.f32 1.0, %v4521
      %v4523 = vmul.f32 %v4520, %v4522
      %v4524 = vadd.f32 %v4520, %v4523
      %vm4525 = vweird.f32 %v4236
      %vm4526 = vweird.f32 %v4520
      %vm4527 = vmor %vm4525, %vm4526
      %v4528 = vsel %vm4527, %v4520, %v4524
      %v4529 = vand.u32 2147483647, %v4236
      %vm4530 = vcmp.eq.f32.partialorder %v4529, 8.507059e+37
      %v4531 = vand.u32 %v4236, 2147483648
      %v4532 = vor.u32 1.1754944e-38, %v4531
      %v4533 = vsel %vm4530, %v4532, %v4528
      %v4534 = vmul.f32 1.0, %v4533
      %v4535 = vrcp.pop %v4237
      %v4536 = vmul.f32 %v4237, %v4535
      %v4537 = vsub.f32 1.0, %v4536
      %v4538 = vmul.f32 %v4535, %v4537
      %v4539 = vadd.f32 %v4535, %v4538
      %vm4540 = vweird.f32 %v4237
      %vm4541 = vweird.f32 %v4535
      %vm4542 = vmor %vm4540, %vm4541
      %v4543 = vsel %vm4542, %v4535, %v4539
      %v4544 = vand.u32 2147483647, %v4237
      %vm4545 = vcmp.eq.f32.partialorder %v4544, 8.507059e+37
      %v4546 = vand.u32 %v4237, 2147483648
      %v4547 = vor.u32 1.1754944e-38, %v4546
      %v4548 = vsel %vm4545, %v4547, %v4543
      %v4549 = vmul.f32 1.0, %v4548
      %v4550 = vrcp.pop %v4238
      %v4551 = vmul.f32 %v4238, %v4550
      %v4552 = vsub.f32 1.0, %v4551
      %v4553 = vmul.f32 %v4550, %v4552
      %v4554 = vadd.f32 %v4550, %v4553
      %vm4555 = vweird.f32 %v4238
      %vm4556 = vweird.f32 %v4550
      %vm4557 = vmor %vm4555, %vm4556
      %v4558 = vsel %vm4557, %v4550, %v4554
      %v4559 = vand.u32 2147483647, %v4238
      %vm4560 = vcmp.eq.f32.partialorder %v4559, 8.507059e+37
      %v4561 = vand.u32 %v4238, 2147483648
      %v4562 = vor.u32 1.1754944e-38, %v4561
      %v4563 = vsel %vm4560, %v4562, %v4558
      %v4564 = vmul.f32 1.0, %v4563
      %v4565 = vrcp.pop %v4239
      %v4566 = vmul.f32 %v4239, %v4565
      %v4567 = vsub.f32 1.0, %v4566
      %v4568 = vmul.f32 %v4565, %v4567
      %v4569 = vadd.f32 %v4565, %v4568
      %vm4570 = vweird.f32 %v4239
      %vm4571 = vweird.f32 %v4565
      %vm4572 = vmor %vm4570, %vm4571
      %v4573 = vsel %vm4572, %v4565, %v4569
      %v4574 = vand.u32 2147483647, %v4239
      %vm4575 = vcmp.eq.f32.partialorder %v4574, 8.507059e+37
      %v4576 = vand.u32 %v4239, 2147483648
      %v4577 = vor.u32 1.1754944e-38, %v4576
      %v4578 = vsel %vm4575, %v4577, %v4573
      %v4579 = vmul.f32 1.0, %v4578
      %v4580 = vrcp.pop %v4240
      %v4581 = vmul.f32 %v4240, %v4580
      %v4582 = vsub.f32 1.0, %v4581
      %v4583 = vmul.f32 %v4580, %v4582
      %v4584 = vadd.f32 %v4580, %v4583
      %vm4585 = vweird.f32 %v4240
      %vm4586 = vweird.f32 %v4580
      %vm4587 = vmor %vm4585, %vm4586
      %v4588 = vsel %vm4587, %v4580, %v4584
      %v4589 = vand.u32 2147483647, %v4240
      %vm4590 = vcmp.eq.f32.partialorder %v4589, 8.507059e+37
      %v4591 = vand.u32 %v4240, 2147483648
      %v4592 = vor.u32 1.1754944e-38, %v4591
      %v4593 = vsel %vm4590, %v4592, %v4588
      %v4594 = vmul.f32 1.0, %v4593
      %v4595 = vrcp.pop %v4241
      %v4596 = vmul.f32 %v4241, %v4595
      %v4597 = vsub.f32 1.0, %v4596
      %v4598 = vmul.f32 %v4595, %v4597
      %v4599 = vadd.f32 %v4595, %v4598
      %vm4600 = vweird.f32 %v4241
      %vm4601 = vweird.f32 %v4595
      %vm4602 = vmor %vm4600, %vm4601
      %v4603 = vsel %vm4602, %v4595, %v4599
      %v4604 = vand.u32 2147483647, %v4241
      %vm4605 = vcmp.eq.f32.partialorder %v4604, 8.507059e+37
      %v4606 = vand.u32 %v4241, 2147483648
      %v4607 = vor.u32 1.1754944e-38, %v4606
      %v4608 = vsel %vm4605, %v4607, %v4603
      %v4609 = vmul.f32 1.0, %v4608
      %v4610 = vrcp.pop %v4242
      %v4611 = vmul.f32 %v4242, %v4610
      %v4612 = vsub.f32 1.0, %v4611
      %v4613 = vmul.f32 %v4610, %v4612
      %v4614 = vadd.f32 %v4610, %v4613
      %vm4615 = vweird.f32 %v4242
      %vm4616 = vweird.f32 %v4610
      %vm4617 = vmor %vm4615, %vm4616
      %v4618 = vsel %vm4617, %v4610, %v4614
      %v4619 = vand.u32 2147483647, %v4242
      %vm4620 = vcmp.eq.f32.partialorder %v4619, 8.507059e+37
      %v4621 = vand.u32 %v4242, 2147483648
      %v4622 = vor.u32 1.1754944e-38, %v4621
      %v4623 = vsel %vm4620, %v4622, %v4618
      %v4624 = vmul.f32 1.0, %v4623
      %v4625 = vrcp.pop %v4243
      %v4626 = vmul.f32 %v4243, %v4625
      %v4627 = vsub.f32 1.0, %v4626
      %v4628 = vmul.f32 %v4625, %v4627
      %v4629 = vadd.f32 %v4625, %v4628
      %vm4630 = vweird.f32 %v4243
      %vm4631 = vweird.f32 %v4625
      %vm4632 = vmor %vm4630, %vm4631
      %v4633 = vsel %vm4632, %v4625, %v4629
      %v4634 = vand.u32 2147483647, %v4243
      %vm4635 = vcmp.eq.f32.partialorder %v4634, 8.507059e+37
      %v4636 = vand.u32 %v4243, 2147483648
      %v4637 = vor.u32 1.1754944e-38, %v4636
      %v4638 = vsel %vm4635, %v4637, %v4633
      %v4639 = vmul.f32 1.0, %v4638
      %v4640 = vrcp.pop %v4244
      %v4641 = vmul.f32 %v4244, %v4640
      %v4642 = vsub.f32 1.0, %v4641
      %v4643 = vmul.f32 %v4640, %v4642
      %v4644 = vadd.f32 %v4640, %v4643
      %vm4645 = vweird.f32 %v4244
      %vm4646 = vweird.f32 %v4640
      %vm4647 = vmor %vm4645, %vm4646
      %v4648 = vsel %vm4647, %v4640, %v4644
      %v4649 = vand.u32 2147483647, %v4244
      %vm4650 = vcmp.eq.f32.partialorder %v4649, 8.507059e+37
      %v4651 = vand.u32 %v4244, 2147483648
      %v4652 = vor.u32 1.1754944e-38, %v4651
      %v4653 = vsel %vm4650, %v4652, %v4648
      %v4654 = vmul.f32 1.0, %v4653
      %v4655 = vrcp.pop %v4245
      %v4656 = vmul.f32 %v4245, %v4655
      %v4657 = vsub.f32 1.0, %v4656
      %v4658 = vmul.f32 %v4655, %v4657
      %v4659 = vadd.f32 %v4655, %v4658
      %vm4660 = vweird.f32 %v4245
      %vm4661 = vweird.f32 %v4655
      %vm4662 = vmor %vm4660, %vm4661
      %v4663 = vsel %vm4662, %v4655, %v4659
      %v4664 = vand.u32 2147483647, %v4245
      %vm4665 = vcmp.eq.f32.partialorder %v4664, 8.507059e+37
      %v4666 = vand.u32 %v4245, 2147483648
      %v4667 = vor.u32 1.1754944e-38, %v4666
      %v4668 = vsel %vm4665, %v4667, %v4663
      %v4669 = vmul.f32 1.0, %v4668
      %v4670 = vrcp.pop %v4246
      %v4671 = vmul.f32 %v4246, %v4670
      %v4672 = vsub.f32 1.0, %v4671
      %v4673 = vmul.f32 %v4670, %v4672
      %v4674 = vadd.f32 %v4670, %v4673
      %vm4675 = vweird.f32 %v4246
      %vm4676 = vweird.f32 %v4670
      %vm4677 = vmor %vm4675, %vm4676
      %v4678 = vsel %vm4677, %v4670, %v4674
      %v4679 = vand.u32 2147483647, %v4246
      %vm4680 = vcmp.eq.f32.partialorder %v4679, 8.507059e+37
      %v4681 = vand.u32 %v4246, 2147483648
      %v4682 = vor.u32 1.1754944e-38, %v4681
      %v4683 = vsel %vm4680, %v4682, %v4678
      %v4684 = vmul.f32 1.0, %v4683
      %v4685 = vrcp.pop %v4247
      %v4686 = vmul.f32 %v4247, %v4685
      %v4687 = vsub.f32 1.0, %v4686
      %v4688 = vmul.f32 %v4685, %v4687
      %v4689 = vadd.f32 %v4685, %v4688
      %vm4690 = vweird.f32 %v4247
      %vm4691 = vweird.f32 %v4685
      %vm4692 = vmor %vm4690, %vm4691
      %v4693 = vsel %vm4692, %v4685, %v4689
      %v4694 = vand.u32 2147483647, %v4247
      %vm4695 = vcmp.eq.f32.partialorder %v4694, 8.507059e+37
      %v4696 = vand.u32 %v4247, 2147483648
      %v4697 = vor.u32 1.1754944e-38, %v4696
      %v4698 = vsel %vm4695, %v4697, %v4693
      %v4699 = vmul.f32 1.0, %v4698
      %v4700 = vrcp.pop %v4248
      %v4701 = vmul.f32 %v4248, %v4700
      %v4702 = vsub.f32 1.0, %v4701
      %v4703 = vmul.f32 %v4700, %v4702
      %v4704 = vadd.f32 %v4700, %v4703
      %vm4705 = vweird.f32 %v4248
      %vm4706 = vweird.f32 %v4700
      %vm4707 = vmor %vm4705, %vm4706
      %v4708 = vsel %vm4707, %v4700, %v4704
      %v4709 = vand.u32 2147483647, %v4248
      %vm4710 = vcmp.eq.f32.partialorder %v4709, 8.507059e+37
      %v4711 = vand.u32 %v4248, 2147483648
      %v4712 = vor.u32 1.1754944e-38, %v4711
      %v4713 = vsel %vm4710, %v4712, %v4708
      %v4714 = vmul.f32 1.0, %v4713
      %v4715 = vrcp.pop %v4249
      %v4716 = vmul.f32 %v4249, %v4715
      %v4717 = vsub.f32 1.0, %v4716
      %v4718 = vmul.f32 %v4715, %v4717
      %v4719 = vadd.f32 %v4715, %v4718
      %vm4720 = vweird.f32 %v4249
      %vm4721 = vweird.f32 %v4715
      %vm4722 = vmor %vm4720, %vm4721
      %v4723 = vsel %vm4722, %v4715, %v4719
      %v4724 = vand.u32 2147483647, %v4249
      %vm4725 = vcmp.eq.f32.partialorder %v4724, 8.507059e+37
      %v4726 = vand.u32 %v4249, 2147483648
      %v4727 = vor.u32 1.1754944e-38, %v4726
      %v4728 = vsel %vm4725, %v4727, %v4723
      %v4729 = vmul.f32 1.0, %v4728
      %v4730 = vmul.f32 %v4090, %v4264
      %v4731 = vmul.f32 %v4091, %v4279
      %v4732 = vmul.f32 %v4092, %v4294
      %v4733 = vmul.f32 %v4093, %v4309
      %v4734 = vmul.f32 %v4094, %v4324
      %v4735 = vmul.f32 %v4095, %v4339
      %v4736 = vmul.f32 %v4096, %v4354
      %v4737 = vmul.f32 %v4097, %v4369
      %v4738 = vmul.f32 %v4098, %v4384
      %v4739 = vmul.f32 %v4099, %v4399
      %v4740 = vmul.f32 %v4100, %v4414
      %v4741 = vmul.f32 %v4101, %v4429
      %v4742 = vmul.f32 %v4102, %v4444
      %v4743 = vmul.f32 %v4103, %v4459
      %v4744 = vmul.f32 %v4104, %v4474
      %v4745 = vmul.f32 %v4105, %v4489
      %v4746 = vmul.f32 %v4106, %v4504
      %v4747 = vmul.f32 %v4107, %v4519
      %v4748 = vmul.f32 %v4108, %v4534
      %v4749 = vmul.f32 %v4109, %v4549
      %v4750 = vmul.f32 %v4110, %v4564
      %v4751 = vmul.f32 %v4111, %v4579
      %v4752 = vmul.f32 %v4112, %v4594
      %v4753 = vmul.f32 %v4113, %v4609
      %v4754 = vmul.f32 %v4114, %v4624
      %v4755 = vmul.f32 %v4115, %v4639
      %v4756 = vmul.f32 %v4116, %v4654
      %v4757 = vmul.f32 %v4117, %v4669
      %v4758 = vmul.f32 %v4118, %v4684
      %v4759 = vmul.f32 %v4119, %v4699
      %v4760 = vmul.f32 %v4120, %v4714
      %v4761 = vmul.f32 %v4121, %v4729
      %v4794 = vrot.slane %v4730, 2
      %v4795 = vrot.slane %v4730, 4
      %v4796 = vrot.slane %v4730, 6
      %v4797 = vrot.slane %v4731, 2
      %v4798 = vrot.slane %v4731, 4
      %v4799 = vrot.slane %v4731, 6
      %v4800 = vrot.slane %v4732, 2
      %v4801 = vrot.slane %v4732, 4
      %v4802 = vrot.slane %v4732, 6
      %v4803 = vrot.slane %v4733, 2
      %v4804 = vrot.slane %v4733, 4
      %v4805 = vrot.slane %v4733, 6
      %v4806 = vrot.slane %v4734, 2
      %v4807 = vrot.slane %v4734, 4
      %v4808 = vrot.slane %v4734, 6
      %v4809 = vrot.slane %v4735, 2
      %v4810 = vrot.slane %v4735, 4
      %v4811 = vrot.slane %v4735, 6
      %v4812 = vrot.slane %v4736, 2
      %v4813 = vrot.slane %v4736, 4
      %v4814 = vrot.slane %v4736, 6
      %v4815 = vrot.slane %v4737, 2
      %v4816 = vrot.slane %v4737, 4
      %v4817 = vrot.slane %v4737, 6
      %v4818 = vrot.slane %v4738, 2
      %v4819 = vrot.slane %v4738, 4
      %v4820 = vrot.slane %v4738, 6
      %v4821 = vrot.slane %v4739, 2
      %v4822 = vrot.slane %v4739, 4
      %v4823 = vrot.slane %v4739, 6
      %v4824 = vrot.slane %v4740, 2
      %v4825 = vrot.slane %v4740, 4
      %v4826 = vrot.slane %v4740, 6
      %v4827 = vrot.slane %v4741, 2
      %v4828 = vrot.slane %v4741, 4
      %v4829 = vrot.slane %v4741, 6
      %v4830 = vrot.slane %v4742, 2
      %v4831 = vrot.slane %v4742, 4
      %v4832 = vrot.slane %v4742, 6
      %v4833 = vrot.slane %v4743, 2
      %v4834 = vrot.slane %v4743, 4
      %v4835 = vrot.slane %v4743, 6
      %v4836 = vrot.slane %v4744, 2
      %v4837 = vrot.slane %v4744, 4
      %v4838 = vrot.slane %v4744, 6
      %v4839 = vrot.slane %v4745, 2
      %v4840 = vrot.slane %v4745, 4
      %v4841 = vrot.slane %v4745, 6
      %v4842 = vrot.slane %v4746, 2
      %v4843 = vrot.slane %v4746, 4
      %v4844 = vrot.slane %v4746, 6
      %v4845 = vrot.slane %v4747, 2
      %v4846 = vrot.slane %v4747, 4
      %v4847 = vrot.slane %v4747, 6
      %v4848 = vrot.slane %v4748, 2
      %v4849 = vrot.slane %v4748, 4
      %v4850 = vrot.slane %v4748, 6
      %v4851 = vrot.slane %v4749, 2
      %v4852 = vrot.slane %v4749, 4
      %v4853 = vrot.slane %v4749, 6
      %v4854 = vrot.slane %v4750, 2
      %v4855 = vrot.slane %v4750, 4
      %v4856 = vrot.slane %v4750, 6
      %v4857 = vrot.slane %v4751, 2
      %v4858 = vrot.slane %v4751, 4
      %v4859 = vrot.slane %v4751, 6
      %v4860 = vrot.slane %v4752, 2
      %v4861 = vrot.slane %v4752, 4
      %v4862 = vrot.slane %v4752, 6
      %v4863 = vrot.slane %v4753, 2
      %v4864 = vrot.slane %v4753, 4
      %v4865 = vrot.slane %v4753, 6
      %v4866 = vrot.slane %v4754, 2
      %v4867 = vrot.slane %v4754, 4
      %v4868 = vrot.slane %v4754, 6
      %v4869 = vrot.slane %v4755, 2
      %v4870 = vrot.slane %v4755, 4
      %v4871 = vrot.slane %v4755, 6
      %v4872 = vrot.slane %v4756, 2
      %v4873 = vrot.slane %v4756, 4
      %v4874 = vrot.slane %v4756, 6
      %v4875 = vrot.slane %v4757, 2
      %v4876 = vrot.slane %v4757, 4
      %v4877 = vrot.slane %v4757, 6
      %v4878 = vrot.slane %v4758, 2
      %v4879 = vrot.slane %v4758, 4
      %v4880 = vrot.slane %v4758, 6
      %v4881 = vrot.slane %v4759, 2
      %v4882 = vrot.slane %v4759, 4
      %v4883 = vrot.slane %v4759, 6
      %v4884 = vrot.slane %v4760, 2
      %v4885 = vrot.slane %v4760, 4
      %v4886 = vrot.slane %v4760, 6
      %v4887 = vrot.slane %v4761, 2
      %v4888 = vrot.slane %v4761, 4
      %v4889 = vrot.slane %v4761, 6
      %vm4986 = vcmask 254976
      %v4987 = vsel %vm4986, %v4730, -inf
      %v4988 = vrot.slane %v4987, 4
      %v4989 = vmax.f32 %v4987, %v4988
      %v4990 = vrot.slane %v4989, 2
      %v4991 = vmax.f32 %v4989, %v4990
      %v4992 = vrot.slane %v4991, 1
      %v4993 = vmax.f32 %v4991, %v4992
      %v4994 = vsel %vm4986, %v4794, -inf
      %v4995 = vrot.slane %v4994, 4
      %v4996 = vmax.f32 %v4994, %v4995
      %v4997 = vrot.slane %v4996, 2
      %v4998 = vmax.f32 %v4996, %v4997
      %v4999 = vrot.slane %v4998, 1
      %v5000 = vmax.f32 %v4998, %v4999
      %v5001 = vsel %vm4986, %v4795, -inf
      %v5002 = vrot.slane %v5001, 4
      %v5003 = vmax.f32 %v5001, %v5002
      %v5004 = vrot.slane %v5003, 2
      %v5005 = vmax.f32 %v5003, %v5004
      %v5006 = vrot.slane %v5005, 1
      %v5007 = vmax.f32 %v5005, %v5006
      %v5008 = vsel %vm4986, %v4796, -inf
      %v5009 = vrot.slane %v5008, 4
      %v5010 = vmax.f32 %v5008, %v5009
      %v5011 = vrot.slane %v5010, 2
      %v5012 = vmax.f32 %v5010, %v5011
      %v5013 = vrot.slane %v5012, 1
      %v5014 = vmax.f32 %v5012, %v5013
      %v5015 = vsel %vm4986, %v4731, -inf
      %v5016 = vrot.slane %v5015, 4
      %v5017 = vmax.f32 %v5015, %v5016
      %v5018 = vrot.slane %v5017, 2
      %v5019 = vmax.f32 %v5017, %v5018
      %v5020 = vrot.slane %v5019, 1
      %v5021 = vmax.f32 %v5019, %v5020
      %v5022 = vsel %vm4986, %v4797, -inf
      %v5023 = vrot.slane %v5022, 4
      %v5024 = vmax.f32 %v5022, %v5023
      %v5025 = vrot.slane %v5024, 2
      %v5026 = vmax.f32 %v5024, %v5025
      %v5027 = vrot.slane %v5026, 1
      %v5028 = vmax.f32 %v5026, %v5027
      %v5029 = vsel %vm4986, %v4798, -inf
      %v5030 = vrot.slane %v5029, 4
      %v5031 = vmax.f32 %v5029, %v5030
      %v5032 = vrot.slane %v5031, 2
      %v5033 = vmax.f32 %v5031, %v5032
      %v5034 = vrot.slane %v5033, 1
      %v5035 = vmax.f32 %v5033, %v5034
      %v5036 = vsel %vm4986, %v4799, -inf
      %v5037 = vrot.slane %v5036, 4
      %v5038 = vmax.f32 %v5036, %v5037
      %v5039 = vrot.slane %v5038, 2
      %v5040 = vmax.f32 %v5038, %v5039
      %v5041 = vrot.slane %v5040, 1
      %v5042 = vmax.f32 %v5040, %v5041
      %v5043 = vsel %vm4986, %v4732, -inf
      %v5044 = vrot.slane %v5043, 4
      %v5045 = vmax.f32 %v5043, %v5044
      %v5046 = vrot.slane %v5045, 2
      %v5047 = vmax.f32 %v5045, %v5046
      %v5048 = vrot.slane %v5047, 1
      %v5049 = vmax.f32 %v5047, %v5048
      %v5050 = vsel %vm4986, %v4800, -inf
      %v5051 = vrot.slane %v5050, 4
      %v5052 = vmax.f32 %v5050, %v5051
      %v5053 = vrot.slane %v5052, 2
      %v5054 = vmax.f32 %v5052, %v5053
      %v5055 = vrot.slane %v5054, 1
      %v5056 = vmax.f32 %v5054, %v5055
      %v5057 = vsel %vm4986, %v4801, -inf
      %v5058 = vrot.slane %v5057, 4
      %v5059 = vmax.f32 %v5057, %v5058
      %v5060 = vrot.slane %v5059, 2
      %v5061 = vmax.f32 %v5059, %v5060
      %v5062 = vrot.slane %v5061, 1
      %v5063 = vmax.f32 %v5061, %v5062
      %v5064 = vsel %vm4986, %v4802, -inf
      %v5065 = vrot.slane %v5064, 4
      %v5066 = vmax.f32 %v5064, %v5065
      %v5067 = vrot.slane %v5066, 2
      %v5068 = vmax.f32 %v5066, %v5067
      %v5069 = vrot.slane %v5068, 1
      %v5070 = vmax.f32 %v5068, %v5069
      %v5071 = vsel %vm4986, %v4733, -inf
      %v5072 = vrot.slane %v5071, 4
      %v5073 = vmax.f32 %v5071, %v5072
      %v5074 = vrot.slane %v5073, 2
      %v5075 = vmax.f32 %v5073, %v5074
      %v5076 = vrot.slane %v5075, 1
      %v5077 = vmax.f32 %v5075, %v5076
      %v5078 = vsel %vm4986, %v4803, -inf
      %v5079 = vrot.slane %v5078, 4
      %v5080 = vmax.f32 %v5078, %v5079
      %v5081 = vrot.slane %v5080, 2
      %v5082 = vmax.f32 %v5080, %v5081
      %v5083 = vrot.slane %v5082, 1
      %v5084 = vmax.f32 %v5082, %v5083
      %v5085 = vsel %vm4986, %v4804, -inf
      %v5086 = vrot.slane %v5085, 4
      %v5087 = vmax.f32 %v5085, %v5086
      %v5088 = vrot.slane %v5087, 2
      %v5089 = vmax.f32 %v5087, %v5088
      %v5090 = vrot.slane %v5089, 1
      %v5091 = vmax.f32 %v5089, %v5090
      %v5092 = vsel %vm4986, %v4805, -inf
      %v5093 = vrot.slane %v5092, 4
      %v5094 = vmax.f32 %v5092, %v5093
      %v5095 = vrot.slane %v5094, 2
      %v5096 = vmax.f32 %v5094, %v5095
      %v5097 = vrot.slane %v5096, 1
      %v5098 = vmax.f32 %v5096, %v5097
      %v5099 = vsel %vm4986, %v4734, -inf
      %v5100 = vrot.slane %v5099, 4
      %v5101 = vmax.f32 %v5099, %v5100
      %v5102 = vrot.slane %v5101, 2
      %v5103 = vmax.f32 %v5101, %v5102
      %v5104 = vrot.slane %v5103, 1
      %v5105 = vmax.f32 %v5103, %v5104
      %v5106 = vsel %vm4986, %v4806, -inf
      %v5107 = vrot.slane %v5106, 4
      %v5108 = vmax.f32 %v5106, %v5107
      %v5109 = vrot.slane %v5108, 2
      %v5110 = vmax.f32 %v5108, %v5109
      %v5111 = vrot.slane %v5110, 1
      %v5112 = vmax.f32 %v5110, %v5111
      %v5113 = vsel %vm4986, %v4807, -inf
      %v5114 = vrot.slane %v5113, 4
      %v5115 = vmax.f32 %v5113, %v5114
      %v5116 = vrot.slane %v5115, 2
      %v5117 = vmax.f32 %v5115, %v5116
      %v5118 = vrot.slane %v5117, 1
      %v5119 = vmax.f32 %v5117, %v5118
      %v5120 = vsel %vm4986, %v4808, -inf
      %v5121 = vrot.slane %v5120, 4
      %v5122 = vmax.f32 %v5120, %v5121
      %v5123 = vrot.slane %v5122, 2
      %v5124 = vmax.f32 %v5122, %v5123
      %v5125 = vrot.slane %v5124, 1
      %v5126 = vmax.f32 %v5124, %v5125
      %v5127 = vsel %vm4986, %v4735, -inf
      %v5128 = vrot.slane %v5127, 4
      %v5129 = vmax.f32 %v5127, %v5128
      %v5130 = vrot.slane %v5129, 2
      %v5131 = vmax.f32 %v5129, %v5130
      %v5132 = vrot.slane %v5131, 1
      %v5133 = vmax.f32 %v5131, %v5132
      %v5134 = vsel %vm4986, %v4809, -inf
      %v5135 = vrot.slane %v5134, 4
      %v5136 = vmax.f32 %v5134, %v5135
      %v5137 = vrot.slane %v5136, 2
      %v5138 = vmax.f32 %v5136, %v5137
      %v5139 = vrot.slane %v5138, 1
      %v5140 = vmax.f32 %v5138, %v5139
      %v5141 = vsel %vm4986, %v4810, -inf
      %v5142 = vrot.slane %v5141, 4
      %v5143 = vmax.f32 %v5141, %v5142
      %v5144 = vrot.slane %v5143, 2
      %v5145 = vmax.f32 %v5143, %v5144
      %v5146 = vrot.slane %v5145, 1
      %v5147 = vmax.f32 %v5145, %v5146
      %v5148 = vsel %vm4986, %v4811, -inf
      %v5149 = vrot.slane %v5148, 4
      %v5150 = vmax.f32 %v5148, %v5149
      %v5151 = vrot.slane %v5150, 2
      %v5152 = vmax.f32 %v5150, %v5151
      %v5153 = vrot.slane %v5152, 1
      %v5154 = vmax.f32 %v5152, %v5153
      %v5155 = vsel %vm4986, %v4736, -inf
      %v5156 = vrot.slane %v5155, 4
      %v5157 = vmax.f32 %v5155, %v5156
      %v5158 = vrot.slane %v5157, 2
      %v5159 = vmax.f32 %v5157, %v5158
      %v5160 = vrot.slane %v5159, 1
      %v5161 = vmax.f32 %v5159, %v5160
      %v5162 = vsel %vm4986, %v4812, -inf
      %v5163 = vrot.slane %v5162, 4
      %v5164 = vmax.f32 %v5162, %v5163
      %v5165 = vrot.slane %v5164, 2
      %v5166 = vmax.f32 %v5164, %v5165
      %v5167 = vrot.slane %v5166, 1
      %v5168 = vmax.f32 %v5166, %v5167
      %v5169 = vsel %vm4986, %v4813, -inf
      %v5170 = vrot.slane %v5169, 4
      %v5171 = vmax.f32 %v5169, %v5170
      %v5172 = vrot.slane %v5171, 2
      %v5173 = vmax.f32 %v5171, %v5172
      %v5174 = vrot.slane %v5173, 1
      %v5175 = vmax.f32 %v5173, %v5174
      %v5176 = vsel %vm4986, %v4814, -inf
      %v5177 = vrot.slane %v5176, 4
      %v5178 = vmax.f32 %v5176, %v5177
      %v5179 = vrot.slane %v5178, 2
      %v5180 = vmax.f32 %v5178, %v5179
      %v5181 = vrot.slane %v5180, 1
      %v5182 = vmax.f32 %v5180, %v5181
      %v5183 = vsel %vm4986, %v4737, -inf
      %v5184 = vrot.slane %v5183, 4
      %v5185 = vmax.f32 %v5183, %v5184
      %v5186 = vrot.slane %v5185, 2
      %v5187 = vmax.f32 %v5185, %v5186
      %v5188 = vrot.slane %v5187, 1
      %v5189 = vmax.f32 %v5187, %v5188
      %v5190 = vsel %vm4986, %v4815, -inf
      %v5191 = vrot.slane %v5190, 4
      %v5192 = vmax.f32 %v5190, %v5191
      %v5193 = vrot.slane %v5192, 2
      %v5194 = vmax.f32 %v5192, %v5193
      %v5195 = vrot.slane %v5194, 1
      %v5196 = vmax.f32 %v5194, %v5195
      %v5197 = vsel %vm4986, %v4816, -inf
      %v5198 = vrot.slane %v5197, 4
      %v5199 = vmax.f32 %v5197, %v5198
      %v5200 = vrot.slane %v5199, 2
      %v5201 = vmax.f32 %v5199, %v5200
      %v5202 = vrot.slane %v5201, 1
      %v5203 = vmax.f32 %v5201, %v5202
      %v5204 = vsel %vm4986, %v4817, -inf
      %v5205 = vrot.slane %v5204, 4
      %v5206 = vmax.f32 %v5204, %v5205
      %v5207 = vrot.slane %v5206, 2
      %v5208 = vmax.f32 %v5206, %v5207
      %v5209 = vrot.slane %v5208, 1
      %v5210 = vmax.f32 %v5208, %v5209
      %v5211 = vsel %vm4986, %v4738, -inf
      %v5212 = vrot.slane %v5211, 4
      %v5213 = vmax.f32 %v5211, %v5212
      %v5214 = vrot.slane %v5213, 2
      %v5215 = vmax.f32 %v5213, %v5214
      %v5216 = vrot.slane %v5215, 1
      %v5217 = vmax.f32 %v5215, %v5216
      %v5218 = vsel %vm4986, %v4818, -inf
      %v5219 = vrot.slane %v5218, 4
      %v5220 = vmax.f32 %v5218, %v5219
      %v5221 = vrot.slane %v5220, 2
      %v5222 = vmax.f32 %v5220, %v5221
      %v5223 = vrot.slane %v5222, 1
      %v5224 = vmax.f32 %v5222, %v5223
      %v5225 = vsel %vm4986, %v4819, -inf
      %v5226 = vrot.slane %v5225, 4
      %v5227 = vmax.f32 %v5225, %v5226
      %v5228 = vrot.slane %v5227, 2
      %v5229 = vmax.f32 %v5227, %v5228
      %v5230 = vrot.slane %v5229, 1
      %v5231 = vmax.f32 %v5229, %v5230
      %v5232 = vsel %vm4986, %v4820, -inf
      %v5233 = vrot.slane %v5232, 4
      %v5234 = vmax.f32 %v5232, %v5233
      %v5235 = vrot.slane %v5234, 2
      %v5236 = vmax.f32 %v5234, %v5235
      %v5237 = vrot.slane %v5236, 1
      %v5238 = vmax.f32 %v5236, %v5237
      %v5239 = vsel %vm4986, %v4739, -inf
      %v5240 = vrot.slane %v5239, 4
      %v5241 = vmax.f32 %v5239, %v5240
      %v5242 = vrot.slane %v5241, 2
      %v5243 = vmax.f32 %v5241, %v5242
      %v5244 = vrot.slane %v5243, 1
      %v5245 = vmax.f32 %v5243, %v5244
      %v5246 = vsel %vm4986, %v4821, -inf
      %v5247 = vrot.slane %v5246, 4
      %v5248 = vmax.f32 %v5246, %v5247
      %v5249 = vrot.slane %v5248, 2
      %v5250 = vmax.f32 %v5248, %v5249
      %v5251 = vrot.slane %v5250, 1
      %v5252 = vmax.f32 %v5250, %v5251
      %v5253 = vsel %vm4986, %v4822, -inf
      %v5254 = vrot.slane %v5253, 4
      %v5255 = vmax.f32 %v5253, %v5254
      %v5256 = vrot.slane %v5255, 2
      %v5257 = vmax.f32 %v5255, %v5256
      %v5258 = vrot.slane %v5257, 1
      %v5259 = vmax.f32 %v5257, %v5258
      %v5260 = vsel %vm4986, %v4823, -inf
      %v5261 = vrot.slane %v5260, 4
      %v5262 = vmax.f32 %v5260, %v5261
      %v5263 = vrot.slane %v5262, 2
      %v5264 = vmax.f32 %v5262, %v5263
      %v5265 = vrot.slane %v5264, 1
      %v5266 = vmax.f32 %v5264, %v5265
      %v5267 = vsel %vm4986, %v4740, -inf
      %v5268 = vrot.slane %v5267, 4
      %v5269 = vmax.f32 %v5267, %v5268
      %v5270 = vrot.slane %v5269, 2
      %v5271 = vmax.f32 %v5269, %v5270
      %v5272 = vrot.slane %v5271, 1
      %v5273 = vmax.f32 %v5271, %v5272
      %v5274 = vsel %vm4986, %v4824, -inf
      %v5275 = vrot.slane %v5274, 4
      %v5276 = vmax.f32 %v5274, %v5275
      %v5277 = vrot.slane %v5276, 2
      %v5278 = vmax.f32 %v5276, %v5277
      %v5279 = vrot.slane %v5278, 1
      %v5280 = vmax.f32 %v5278, %v5279
      %v5281 = vsel %vm4986, %v4825, -inf
      %v5282 = vrot.slane %v5281, 4
      %v5283 = vmax.f32 %v5281, %v5282
      %v5284 = vrot.slane %v5283, 2
      %v5285 = vmax.f32 %v5283, %v5284
      %v5286 = vrot.slane %v5285, 1
      %v5287 = vmax.f32 %v5285, %v5286
      %v5288 = vsel %vm4986, %v4826, -inf
      %v5289 = vrot.slane %v5288, 4
      %v5290 = vmax.f32 %v5288, %v5289
      %v5291 = vrot.slane %v5290, 2
      %v5292 = vmax.f32 %v5290, %v5291
      %v5293 = vrot.slane %v5292, 1
      %v5294 = vmax.f32 %v5292, %v5293
      %v5295 = vsel %vm4986, %v4741, -inf
      %v5296 = vrot.slane %v5295, 4
      %v5297 = vmax.f32 %v5295, %v5296
      %v5298 = vrot.slane %v5297, 2
      %v5299 = vmax.f32 %v5297, %v5298
      %v5300 = vrot.slane %v5299, 1
      %v5301 = vmax.f32 %v5299, %v5300
      %v5302 = vsel %vm4986, %v4827, -inf
      %v5303 = vrot.slane %v5302, 4
      %v5304 = vmax.f32 %v5302, %v5303
      %v5305 = vrot.slane %v5304, 2
      %v5306 = vmax.f32 %v5304, %v5305
      %v5307 = vrot.slane %v5306, 1
      %v5308 = vmax.f32 %v5306, %v5307
      %v5309 = vsel %vm4986, %v4828, -inf
      %v5310 = vrot.slane %v5309, 4
      %v5311 = vmax.f32 %v5309, %v5310
      %v5312 = vrot.slane %v5311, 2
      %v5313 = vmax.f32 %v5311, %v5312
      %v5314 = vrot.slane %v5313, 1
      %v5315 = vmax.f32 %v5313, %v5314
      %v5316 = vsel %vm4986, %v4829, -inf
      %v5317 = vrot.slane %v5316, 4
      %v5318 = vmax.f32 %v5316, %v5317
      %v5319 = vrot.slane %v5318, 2
      %v5320 = vmax.f32 %v5318, %v5319
      %v5321 = vrot.slane %v5320, 1
      %v5322 = vmax.f32 %v5320, %v5321
      %v5323 = vsel %vm4986, %v4742, -inf
      %v5324 = vrot.slane %v5323, 4
      %v5325 = vmax.f32 %v5323, %v5324
      %v5326 = vrot.slane %v5325, 2
      %v5327 = vmax.f32 %v5325, %v5326
      %v5328 = vrot.slane %v5327, 1
      %v5329 = vmax.f32 %v5327, %v5328
      %v5330 = vsel %vm4986, %v4830, -inf
      %v5331 = vrot.slane %v5330, 4
      %v5332 = vmax.f32 %v5330, %v5331
      %v5333 = vrot.slane %v5332, 2
      %v5334 = vmax.f32 %v5332, %v5333
      %v5335 = vrot.slane %v5334, 1
      %v5336 = vmax.f32 %v5334, %v5335
      %v5337 = vsel %vm4986, %v4831, -inf
      %v5338 = vrot.slane %v5337, 4
      %v5339 = vmax.f32 %v5337, %v5338
      %v5340 = vrot.slane %v5339, 2
      %v5341 = vmax.f32 %v5339, %v5340
      %v5342 = vrot.slane %v5341, 1
      %v5343 = vmax.f32 %v5341, %v5342
      %v5344 = vsel %vm4986, %v4832, -inf
      %v5345 = vrot.slane %v5344, 4
      %v5346 = vmax.f32 %v5344, %v5345
      %v5347 = vrot.slane %v5346, 2
      %v5348 = vmax.f32 %v5346, %v5347
      %v5349 = vrot.slane %v5348, 1
      %v5350 = vmax.f32 %v5348, %v5349
      %v5351 = vsel %vm4986, %v4743, -inf
      %v5352 = vrot.slane %v5351, 4
      %v5353 = vmax.f32 %v5351, %v5352
      %v5354 = vrot.slane %v5353, 2
      %v5355 = vmax.f32 %v5353, %v5354
      %v5356 = vrot.slane %v5355, 1
      %v5357 = vmax.f32 %v5355, %v5356
      %v5358 = vsel %vm4986, %v4833, -inf
      %v5359 = vrot.slane %v5358, 4
      %v5360 = vmax.f32 %v5358, %v5359
      %v5361 = vrot.slane %v5360, 2
      %v5362 = vmax.f32 %v5360, %v5361
      %v5363 = vrot.slane %v5362, 1
      %v5364 = vmax.f32 %v5362, %v5363
      %v5365 = vsel %vm4986, %v4834, -inf
      %v5366 = vrot.slane %v5365, 4
      %v5367 = vmax.f32 %v5365, %v5366
      %v5368 = vrot.slane %v5367, 2
      %v5369 = vmax.f32 %v5367, %v5368
      %v5370 = vrot.slane %v5369, 1
      %v5371 = vmax.f32 %v5369, %v5370
      %v5372 = vsel %vm4986, %v4835, -inf
      %v5373 = vrot.slane %v5372, 4
      %v5374 = vmax.f32 %v5372, %v5373
      %v5375 = vrot.slane %v5374, 2
      %v5376 = vmax.f32 %v5374, %v5375
      %v5377 = vrot.slane %v5376, 1
      %v5378 = vmax.f32 %v5376, %v5377
      %v5379 = vsel %vm4986, %v4744, -inf
      %v5380 = vrot.slane %v5379, 4
      %v5381 = vmax.f32 %v5379, %v5380
      %v5382 = vrot.slane %v5381, 2
      %v5383 = vmax.f32 %v5381, %v5382
      %v5384 = vrot.slane %v5383, 1
      %v5385 = vmax.f32 %v5383, %v5384
      %v5386 = vsel %vm4986, %v4836, -inf
      %v5387 = vrot.slane %v5386, 4
      %v5388 = vmax.f32 %v5386, %v5387
      %v5389 = vrot.slane %v5388, 2
      %v5390 = vmax.f32 %v5388, %v5389
      %v5391 = vrot.slane %v5390, 1
      %v5392 = vmax.f32 %v5390, %v5391
      %v5393 = vsel %vm4986, %v4837, -inf
      %v5394 = vrot.slane %v5393, 4
      %v5395 = vmax.f32 %v5393, %v5394
      %v5396 = vrot.slane %v5395, 2
      %v5397 = vmax.f32 %v5395, %v5396
      %v5398 = vrot.slane %v5397, 1
      %v5399 = vmax.f32 %v5397, %v5398
      %v5400 = vsel %vm4986, %v4838, -inf
      %v5401 = vrot.slane %v5400, 4
      %v5402 = vmax.f32 %v5400, %v5401
      %v5403 = vrot.slane %v5402, 2
      %v5404 = vmax.f32 %v5402, %v5403
      %v5405 = vrot.slane %v5404, 1
      %v5406 = vmax.f32 %v5404, %v5405
      %v5407 = vsel %vm4986, %v4745, -inf
      %v5408 = vrot.slane %v5407, 4
      %v5409 = vmax.f32 %v5407, %v5408
      %v5410 = vrot.slane %v5409, 2
      %v5411 = vmax.f32 %v5409, %v5410
      %v5412 = vrot.slane %v5411, 1
      %v5413 = vmax.f32 %v5411, %v5412
      %v5414 = vsel %vm4986, %v4839, -inf
      %v5415 = vrot.slane %v5414, 4
      %v5416 = vmax.f32 %v5414, %v5415
      %v5417 = vrot.slane %v5416, 2
      %v5418 = vmax.f32 %v5416, %v5417
      %v5419 = vrot.slane %v5418, 1
      %v5420 = vmax.f32 %v5418, %v5419
      %v5421 = vsel %vm4986, %v4840, -inf
      %v5422 = vrot.slane %v5421, 4
      %v5423 = vmax.f32 %v5421, %v5422
      %v5424 = vrot.slane %v5423, 2
      %v5425 = vmax.f32 %v5423, %v5424
      %v5426 = vrot.slane %v5425, 1
      %v5427 = vmax.f32 %v5425, %v5426
      %v5428 = vsel %vm4986, %v4841, -inf
      %v5429 = vrot.slane %v5428, 4
      %v5430 = vmax.f32 %v5428, %v5429
      %v5431 = vrot.slane %v5430, 2
      %v5432 = vmax.f32 %v5430, %v5431
      %v5433 = vrot.slane %v5432, 1
      %v5434 = vmax.f32 %v5432, %v5433
      %v5435 = vsel %vm4986, %v4746, -inf
      %v5436 = vrot.slane %v5435, 4
      %v5437 = vmax.f32 %v5435, %v5436
      %v5438 = vrot.slane %v5437, 2
      %v5439 = vmax.f32 %v5437, %v5438
      %v5440 = vrot.slane %v5439, 1
      %v5441 = vmax.f32 %v5439, %v5440
      %v5442 = vsel %vm4986, %v4842, -inf
      %v5443 = vrot.slane %v5442, 4
      %v5444 = vmax.f32 %v5442, %v5443
      %v5445 = vrot.slane %v5444, 2
      %v5446 = vmax.f32 %v5444, %v5445
      %v5447 = vrot.slane %v5446, 1
      %v5448 = vmax.f32 %v5446, %v5447
      %v5449 = vsel %vm4986, %v4843, -inf
      %v5450 = vrot.slane %v5449, 4
      %v5451 = vmax.f32 %v5449, %v5450
      %v5452 = vrot.slane %v5451, 2
      %v5453 = vmax.f32 %v5451, %v5452
      %v5454 = vrot.slane %v5453, 1
      %v5455 = vmax.f32 %v5453, %v5454
      %v5456 = vsel %vm4986, %v4844, -inf
      %v5457 = vrot.slane %v5456, 4
      %v5458 = vmax.f32 %v5456, %v5457
      %v5459 = vrot.slane %v5458, 2
      %v5460 = vmax.f32 %v5458, %v5459
      %v5461 = vrot.slane %v5460, 1
      %v5462 = vmax.f32 %v5460, %v5461
      %v5463 = vsel %vm4986, %v4747, -inf
      %v5464 = vrot.slane %v5463, 4
      %v5465 = vmax.f32 %v5463, %v5464
      %v5466 = vrot.slane %v5465, 2
      %v5467 = vmax.f32 %v5465, %v5466
      %v5468 = vrot.slane %v5467, 1
      %v5469 = vmax.f32 %v5467, %v5468
      %v5470 = vsel %vm4986, %v4845, -inf
      %v5471 = vrot.slane %v5470, 4
      %v5472 = vmax.f32 %v5470, %v5471
      %v5473 = vrot.slane %v5472, 2
      %v5474 = vmax.f32 %v5472, %v5473
      %v5475 = vrot.slane %v5474, 1
      %v5476 = vmax.f32 %v5474, %v5475
      %v5477 = vsel %vm4986, %v4846, -inf
      %v5478 = vrot.slane %v5477, 4
      %v5479 = vmax.f32 %v5477, %v5478
      %v5480 = vrot.slane %v5479, 2
      %v5481 = vmax.f32 %v5479, %v5480
      %v5482 = vrot.slane %v5481, 1
      %v5483 = vmax.f32 %v5481, %v5482
      %v5484 = vsel %vm4986, %v4847, -inf
      %v5485 = vrot.slane %v5484, 4
      %v5486 = vmax.f32 %v5484, %v5485
      %v5487 = vrot.slane %v5486, 2
      %v5488 = vmax.f32 %v5486, %v5487
      %v5489 = vrot.slane %v5488, 1
      %v5490 = vmax.f32 %v5488, %v5489
      %v5491 = vsel %vm4986, %v4748, -inf
      %v5492 = vrot.slane %v5491, 4
      %v5493 = vmax.f32 %v5491, %v5492
      %v5494 = vrot.slane %v5493, 2
      %v5495 = vmax.f32 %v5493, %v5494
      %v5496 = vrot.slane %v5495, 1
      %v5497 = vmax.f32 %v5495, %v5496
      %v5498 = vsel %vm4986, %v4848, -inf
      %v5499 = vrot.slane %v5498, 4
      %v5500 = vmax.f32 %v5498, %v5499
      %v5501 = vrot.slane %v5500, 2
      %v5502 = vmax.f32 %v5500, %v5501
      %v5503 = vrot.slane %v5502, 1
      %v5504 = vmax.f32 %v5502, %v5503
      %v5505 = vsel %vm4986, %v4849, -inf
      %v5506 = vrot.slane %v5505, 4
      %v5507 = vmax.f32 %v5505, %v5506
      %v5508 = vrot.slane %v5507, 2
      %v5509 = vmax.f32 %v5507, %v5508
      %v5510 = vrot.slane %v5509, 1
      %v5511 = vmax.f32 %v5509, %v5510
      %v5512 = vsel %vm4986, %v4850, -inf
      %v5513 = vrot.slane %v5512, 4
      %v5514 = vmax.f32 %v5512, %v5513
      %v5515 = vrot.slane %v5514, 2
      %v5516 = vmax.f32 %v5514, %v5515
      %v5517 = vrot.slane %v5516, 1
      %v5518 = vmax.f32 %v5516, %v5517
      %v5519 = vsel %vm4986, %v4749, -inf
      %v5520 = vrot.slane %v5519, 4
      %v5521 = vmax.f32 %v5519, %v5520
      %v5522 = vrot.slane %v5521, 2
      %v5523 = vmax.f32 %v5521, %v5522
      %v5524 = vrot.slane %v5523, 1
      %v5525 = vmax.f32 %v5523, %v5524
      %v5526 = vsel %vm4986, %v4851, -inf
      %v5527 = vrot.slane %v5526, 4
      %v5528 = vmax.f32 %v5526, %v5527
      %v5529 = vrot.slane %v5528, 2
      %v5530 = vmax.f32 %v5528, %v5529
      %v5531 = vrot.slane %v5530, 1
      %v5532 = vmax.f32 %v5530, %v5531
      %v5533 = vsel %vm4986, %v4852, -inf
      %v5534 = vrot.slane %v5533, 4
      %v5535 = vmax.f32 %v5533, %v5534
      %v5536 = vrot.slane %v5535, 2
      %v5537 = vmax.f32 %v5535, %v5536
      %v5538 = vrot.slane %v5537, 1
      %v5539 = vmax.f32 %v5537, %v5538
      %v5540 = vsel %vm4986, %v4853, -inf
      %v5541 = vrot.slane %v5540, 4
      %v5542 = vmax.f32 %v5540, %v5541
      %v5543 = vrot.slane %v5542, 2
      %v5544 = vmax.f32 %v5542, %v5543
      %v5545 = vrot.slane %v5544, 1
      %v5546 = vmax.f32 %v5544, %v5545
      %v5547 = vsel %vm4986, %v4750, -inf
      %v5548 = vrot.slane %v5547, 4
      %v5549 = vmax.f32 %v5547, %v5548
      %v5550 = vrot.slane %v5549, 2
      %v5551 = vmax.f32 %v5549, %v5550
      %v5552 = vrot.slane %v5551, 1
      %v5553 = vmax.f32 %v5551, %v5552
      %v5554 = vsel %vm4986, %v4854, -inf
      %v5555 = vrot.slane %v5554, 4
      %v5556 = vmax.f32 %v5554, %v5555
      %v5557 = vrot.slane %v5556, 2
      %v5558 = vmax.f32 %v5556, %v5557
      %v5559 = vrot.slane %v5558, 1
      %v5560 = vmax.f32 %v5558, %v5559
      %v5561 = vsel %vm4986, %v4855, -inf
      %v5562 = vrot.slane %v5561, 4
      %v5563 = vmax.f32 %v5561, %v5562
      %v5564 = vrot.slane %v5563, 2
      %v5565 = vmax.f32 %v5563, %v5564
      %v5566 = vrot.slane %v5565, 1
      %v5567 = vmax.f32 %v5565, %v5566
      %v5568 = vsel %vm4986, %v4856, -inf
      %v5569 = vrot.slane %v5568, 4
      %v5570 = vmax.f32 %v5568, %v5569
      %v5571 = vrot.slane %v5570, 2
      %v5572 = vmax.f32 %v5570, %v5571
      %v5573 = vrot.slane %v5572, 1
      %v5574 = vmax.f32 %v5572, %v5573
      %v5575 = vsel %vm4986, %v4751, -inf
      %v5576 = vrot.slane %v5575, 4
      %v5577 = vmax.f32 %v5575, %v5576
      %v5578 = vrot.slane %v5577, 2
      %v5579 = vmax.f32 %v5577, %v5578
      %v5580 = vrot.slane %v5579, 1
      %v5581 = vmax.f32 %v5579, %v5580
      %v5582 = vsel %vm4986, %v4857, -inf
      %v5583 = vrot.slane %v5582, 4
      %v5584 = vmax.f32 %v5582, %v5583
      %v5585 = vrot.slane %v5584, 2
      %v5586 = vmax.f32 %v5584, %v5585
      %v5587 = vrot.slane %v5586, 1
      %v5588 = vmax.f32 %v5586, %v5587
      %v5589 = vsel %vm4986, %v4858, -inf
      %v5590 = vrot.slane %v5589, 4
      %v5591 = vmax.f32 %v5589, %v5590
      %v5592 = vrot.slane %v5591, 2
      %v5593 = vmax.f32 %v5591, %v5592
      %v5594 = vrot.slane %v5593, 1
      %v5595 = vmax.f32 %v5593, %v5594
      %v5596 = vsel %vm4986, %v4859, -inf
      %v5597 = vrot.slane %v5596, 4
      %v5598 = vmax.f32 %v5596, %v5597
      %v5599 = vrot.slane %v5598, 2
      %v5600 = vmax.f32 %v5598, %v5599
      %v5601 = vrot.slane %v5600, 1
      %v5602 = vmax.f32 %v5600, %v5601
      %v5603 = vsel %vm4986, %v4752, -inf
      %v5604 = vrot.slane %v5603, 4
      %v5605 = vmax.f32 %v5603, %v5604
      %v5606 = vrot.slane %v5605, 2
      %v5607 = vmax.f32 %v5605, %v5606
      %v5608 = vrot.slane %v5607, 1
      %v5609 = vmax.f32 %v5607, %v5608
      %v5610 = vsel %vm4986, %v4860, -inf
      %v5611 = vrot.slane %v5610, 4
      %v5612 = vmax.f32 %v5610, %v5611
      %v5613 = vrot.slane %v5612, 2
      %v5614 = vmax.f32 %v5612, %v5613
      %v5615 = vrot.slane %v5614, 1
      %v5616 = vmax.f32 %v5614, %v5615
      %v5617 = vsel %vm4986, %v4861, -inf
      %v5618 = vrot.slane %v5617, 4
      %v5619 = vmax.f32 %v5617, %v5618
      %v5620 = vrot.slane %v5619, 2
      %v5621 = vmax.f32 %v5619, %v5620
      %v5622 = vrot.slane %v5621, 1
      %v5623 = vmax.f32 %v5621, %v5622
      %v5624 = vsel %vm4986, %v4862, -inf
      %v5625 = vrot.slane %v5624, 4
      %v5626 = vmax.f32 %v5624, %v5625
      %v5627 = vrot.slane %v5626, 2
      %v5628 = vmax.f32 %v5626, %v5627
      %v5629 = vrot.slane %v5628, 1
      %v5630 = vmax.f32 %v5628, %v5629
      %v5631 = vsel %vm4986, %v4753, -inf
      %v5632 = vrot.slane %v5631, 4
      %v5633 = vmax.f32 %v5631, %v5632
      %v5634 = vrot.slane %v5633, 2
      %v5635 = vmax.f32 %v5633, %v5634
      %v5636 = vrot.slane %v5635, 1
      %v5637 = vmax.f32 %v5635, %v5636
      %v5638 = vsel %vm4986, %v4863, -inf
      %v5639 = vrot.slane %v5638, 4
      %v5640 = vmax.f32 %v5638, %v5639
      %v5641 = vrot.slane %v5640, 2
      %v5642 = vmax.f32 %v5640, %v5641
      %v5643 = vrot.slane %v5642, 1
      %v5644 = vmax.f32 %v5642, %v5643
      %v5645 = vsel %vm4986, %v4864, -inf
      %v5646 = vrot.slane %v5645, 4
      %v5647 = vmax.f32 %v5645, %v5646
      %v5648 = vrot.slane %v5647, 2
      %v5649 = vmax.f32 %v5647, %v5648
      %v5650 = vrot.slane %v5649, 1
      %v5651 = vmax.f32 %v5649, %v5650
      %v5652 = vsel %vm4986, %v4865, -inf
      %v5653 = vrot.slane %v5652, 4
      %v5654 = vmax.f32 %v5652, %v5653
      %v5655 = vrot.slane %v5654, 2
      %v5656 = vmax.f32 %v5654, %v5655
      %v5657 = vrot.slane %v5656, 1
      %v5658 = vmax.f32 %v5656, %v5657
      %v5659 = vsel %vm4986, %v4754, -inf
      %v5660 = vrot.slane %v5659, 4
      %v5661 = vmax.f32 %v5659, %v5660
      %v5662 = vrot.slane %v5661, 2
      %v5663 = vmax.f32 %v5661, %v5662
      %v5664 = vrot.slane %v5663, 1
      %v5665 = vmax.f32 %v5663, %v5664
      %v5666 = vsel %vm4986, %v4866, -inf
      %v5667 = vrot.slane %v5666, 4
      %v5668 = vmax.f32 %v5666, %v5667
      %v5669 = vrot.slane %v5668, 2
      %v5670 = vmax.f32 %v5668, %v5669
      %v5671 = vrot.slane %v5670, 1
      %v5672 = vmax.f32 %v5670, %v5671
      %v5673 = vsel %vm4986, %v4867, -inf
      %v5674 = vrot.slane %v5673, 4
      %v5675 = vmax.f32 %v5673, %v5674
      %v5676 = vrot.slane %v5675, 2
      %v5677 = vmax.f32 %v5675, %v5676
      %v5678 = vrot.slane %v5677, 1
      %v5679 = vmax.f32 %v5677, %v5678
      %v5680 = vsel %vm4986, %v4868, -inf
      %v5681 = vrot.slane %v5680, 4
      %v5682 = vmax.f32 %v5680, %v5681
      %v5683 = vrot.slane %v5682, 2
      %v5684 = vmax.f32 %v5682, %v5683
      %v5685 = vrot.slane %v5684, 1
      %v5686 = vmax.f32 %v5684, %v5685
      %v5687 = vsel %vm4986, %v4755, -inf
      %v5688 = vrot.slane %v5687, 4
      %v5689 = vmax.f32 %v5687, %v5688
      %v5690 = vrot.slane %v5689, 2
      %v5691 = vmax.f32 %v5689, %v5690
      %v5692 = vrot.slane %v5691, 1
      %v5693 = vmax.f32 %v5691, %v5692
      %v5694 = vsel %vm4986, %v4869, -inf
      %v5695 = vrot.slane %v5694, 4
      %v5696 = vmax.f32 %v5694, %v5695
      %v5697 = vrot.slane %v5696, 2
      %v5698 = vmax.f32 %v5696, %v5697
      %v5699 = vrot.slane %v5698, 1
      %v5700 = vmax.f32 %v5698, %v5699
      %v5701 = vsel %vm4986, %v4870, -inf
      %v5702 = vrot.slane %v5701, 4
      %v5703 = vmax.f32 %v5701, %v5702
      %v5704 = vrot.slane %v5703, 2
      %v5705 = vmax.f32 %v5703, %v5704
      %v5706 = vrot.slane %v5705, 1
      %v5707 = vmax.f32 %v5705, %v5706
      %v5708 = vsel %vm4986, %v4871, -inf
      %v5709 = vrot.slane %v5708, 4
      %v5710 = vmax.f32 %v5708, %v5709
      %v5711 = vrot.slane %v5710, 2
      %v5712 = vmax.f32 %v5710, %v5711
      %v5713 = vrot.slane %v5712, 1
      %v5714 = vmax.f32 %v5712, %v5713
      %v5715 = vsel %vm4986, %v4756, -inf
      %v5716 = vrot.slane %v5715, 4
      %v5717 = vmax.f32 %v5715, %v5716
      %v5718 = vrot.slane %v5717, 2
      %v5719 = vmax.f32 %v5717, %v5718
      %v5720 = vrot.slane %v5719, 1
      %v5721 = vmax.f32 %v5719, %v5720
      %v5722 = vsel %vm4986, %v4872, -inf
      %v5723 = vrot.slane %v5722, 4
      %v5724 = vmax.f32 %v5722, %v5723
      %v5725 = vrot.slane %v5724, 2
      %v5726 = vmax.f32 %v5724, %v5725
      %v5727 = vrot.slane %v5726, 1
      %v5728 = vmax.f32 %v5726, %v5727
      %v5729 = vsel %vm4986, %v4873, -inf
      %v5730 = vrot.slane %v5729, 4
      %v5731 = vmax.f32 %v5729, %v5730
      %v5732 = vrot.slane %v5731, 2
      %v5733 = vmax.f32 %v5731, %v5732
      %v5734 = vrot.slane %v5733, 1
      %v5735 = vmax.f32 %v5733, %v5734
      %v5736 = vsel %vm4986, %v4874, -inf
      %v5737 = vrot.slane %v5736, 4
      %v5738 = vmax.f32 %v5736, %v5737
      %v5739 = vrot.slane %v5738, 2
      %v5740 = vmax.f32 %v5738, %v5739
      %v5741 = vrot.slane %v5740, 1
      %v5742 = vmax.f32 %v5740, %v5741
      %v5743 = vsel %vm4986, %v4757, -inf
      %v5744 = vrot.slane %v5743, 4
      %v5745 = vmax.f32 %v5743, %v5744
      %v5746 = vrot.slane %v5745, 2
      %v5747 = vmax.f32 %v5745, %v5746
      %v5748 = vrot.slane %v5747, 1
      %v5749 = vmax.f32 %v5747, %v5748
      %v5750 = vsel %vm4986, %v4875, -inf
      %v5751 = vrot.slane %v5750, 4
      %v5752 = vmax.f32 %v5750, %v5751
      %v5753 = vrot.slane %v5752, 2
      %v5754 = vmax.f32 %v5752, %v5753
      %v5755 = vrot.slane %v5754, 1
      %v5756 = vmax.f32 %v5754, %v5755
      %v5757 = vsel %vm4986, %v4876, -inf
      %v5758 = vrot.slane %v5757, 4
      %v5759 = vmax.f32 %v5757, %v5758
      %v5760 = vrot.slane %v5759, 2
      %v5761 = vmax.f32 %v5759, %v5760
      %v5762 = vrot.slane %v5761, 1
      %v5763 = vmax.f32 %v5761, %v5762
      %v5764 = vsel %vm4986, %v4877, -inf
      %v5765 = vrot.slane %v5764, 4
      %v5766 = vmax.f32 %v5764, %v5765
      %v5767 = vrot.slane %v5766, 2
      %v5768 = vmax.f32 %v5766, %v5767
      %v5769 = vrot.slane %v5768, 1
      %v5770 = vmax.f32 %v5768, %v5769
      %v5771 = vsel %vm4986, %v4758, -inf
      %v5772 = vrot.slane %v5771, 4
      %v5773 = vmax.f32 %v5771, %v5772
      %v5774 = vrot.slane %v5773, 2
      %v5775 = vmax.f32 %v5773, %v5774
      %v5776 = vrot.slane %v5775, 1
      %v5777 = vmax.f32 %v5775, %v5776
      %v5778 = vsel %vm4986, %v4878, -inf
      %v5779 = vrot.slane %v5778, 4
      %v5780 = vmax.f32 %v5778, %v5779
      %v5781 = vrot.slane %v5780, 2
      %v5782 = vmax.f32 %v5780, %v5781
      %v5783 = vrot.slane %v5782, 1
      %v5784 = vmax.f32 %v5782, %v5783
      %v5785 = vsel %vm4986, %v4879, -inf
      %v5786 = vrot.slane %v5785, 4
      %v5787 = vmax.f32 %v5785, %v5786
      %v5788 = vrot.slane %v5787, 2
      %v5789 = vmax.f32 %v5787, %v5788
      %v5790 = vrot.slane %v5789, 1
      %v5791 = vmax.f32 %v5789, %v5790
      %v5792 = vsel %vm4986, %v4880, -inf
      %v5793 = vrot.slane %v5792, 4
      %v5794 = vmax.f32 %v5792, %v5793
      %v5795 = vrot.slane %v5794, 2
      %v5796 = vmax.f32 %v5794, %v5795
      %v5797 = vrot.slane %v5796, 1
      %v5798 = vmax.f32 %v5796, %v5797
      %v5799 = vsel %vm4986, %v4759, -inf
      %v5800 = vrot.slane %v5799, 4
      %v5801 = vmax.f32 %v5799, %v5800
      %v5802 = vrot.slane %v5801, 2
      %v5803 = vmax.f32 %v5801, %v5802
      %v5804 = vrot.slane %v5803, 1
      %v5805 = vmax.f32 %v5803, %v5804
      %v5806 = vsel %vm4986, %v4881, -inf
      %v5807 = vrot.slane %v5806, 4
      %v5808 = vmax.f32 %v5806, %v5807
      %v5809 = vrot.slane %v5808, 2
      %v5810 = vmax.f32 %v5808, %v5809
      %v5811 = vrot.slane %v5810, 1
      %v5812 = vmax.f32 %v5810, %v5811
      %v5813 = vsel %vm4986, %v4882, -inf
      %v5814 = vrot.slane %v5813, 4
      %v5815 = vmax.f32 %v5813, %v5814
      %v5816 = vrot.slane %v5815, 2
      %v5817 = vmax.f32 %v5815, %v5816
      %v5818 = vrot.slane %v5817, 1
      %v5819 = vmax.f32 %v5817, %v5818
      %v5820 = vsel %vm4986, %v4883, -inf
      %v5821 = vrot.slane %v5820, 4
      %v5822 = vmax.f32 %v5820, %v5821
      %v5823 = vrot.slane %v5822, 2
      %v5824 = vmax.f32 %v5822, %v5823
      %v5825 = vrot.slane %v5824, 1
      %v5826 = vmax.f32 %v5824, %v5825
      %v5827 = vsel %vm4986, %v4760, -inf
      %v5828 = vrot.slane %v5827, 4
      %v5829 = vmax.f32 %v5827, %v5828
      %v5830 = vrot.slane %v5829, 2
      %v5831 = vmax.f32 %v5829, %v5830
      %v5832 = vrot.slane %v5831, 1
      %v5833 = vmax.f32 %v5831, %v5832
      %v5834 = vsel %vm4986, %v4884, -inf
      %v5835 = vrot.slane %v5834, 4
      %v5836 = vmax.f32 %v5834, %v5835
      %v5837 = vrot.slane %v5836, 2
      %v5838 = vmax.f32 %v5836, %v5837
      %v5839 = vrot.slane %v5838, 1
      %v5840 = vmax.f32 %v5838, %v5839
      %v5841 = vsel %vm4986, %v4885, -inf
      %v5842 = vrot.slane %v5841, 4
      %v5843 = vmax.f32 %v5841, %v5842
      %v5844 = vrot.slane %v5843, 2
      %v5845 = vmax.f32 %v5843, %v5844
      %v5846 = vrot.slane %v5845, 1
      %v5847 = vmax.f32 %v5845, %v5846
      %v5848 = vsel %vm4986, %v4886, -inf
      %v5849 = vrot.slane %v5848, 4
      %v5850 = vmax.f32 %v5848, %v5849
      %v5851 = vrot.slane %v5850, 2
      %v5852 = vmax.f32 %v5850, %v5851
      %v5853 = vrot.slane %v5852, 1
      %v5854 = vmax.f32 %v5852, %v5853
      %v5855 = vsel %vm4986, %v4761, -inf
      %v5856 = vrot.slane %v5855, 4
      %v5857 = vmax.f32 %v5855, %v5856
      %v5858 = vrot.slane %v5857, 2
      %v5859 = vmax.f32 %v5857, %v5858
      %v5860 = vrot.slane %v5859, 1
      %v5861 = vmax.f32 %v5859, %v5860
      %v5862 = vsel %vm4986, %v4887, -inf
      %v5863 = vrot.slane %v5862, 4
      %v5864 = vmax.f32 %v5862, %v5863
      %v5865 = vrot.slane %v5864, 2
      %v5866 = vmax.f32 %v5864, %v5865
      %v5867 = vrot.slane %v5866, 1
      %v5868 = vmax.f32 %v5866, %v5867
      %v5869 = vsel %vm4986, %v4888, -inf
      %v5870 = vrot.slane %v5869, 4
      %v5871 = vmax.f32 %v5869, %v5870
      %v5872 = vrot.slane %v5871, 2
      %v5873 = vmax.f32 %v5871, %v5872
      %v5874 = vrot.slane %v5873, 1
      %v5875 = vmax.f32 %v5873, %v5874
      %v5876 = vsel %vm4986, %v4889, -inf
      %v5877 = vrot.slane %v5876, 4
      %v5878 = vmax.f32 %v5876, %v5877
      %v5879 = vrot.slane %v5878, 2
      %v5880 = vmax.f32 %v5878, %v5879
      %v5881 = vrot.slane %v5880, 1
      %v5882 = vmax.f32 %v5880, %v5881
      %vm5883 = vcmask 261120
      %v5884 = vsel %vm5883, %v4993, -inf
      %v5885 = vsel %vm5883, %v5049, -inf
      %v5886 = vmax.f32 %v5884, %v5885
      %v5887 = vsel %vm5883, %v5000, -inf
      %v5888 = vsel %vm5883, %v5056, -inf
      %v5889 = vmax.f32 %v5887, %v5888
      %v5890 = vsel %vm5883, %v5007, -inf
      %v5891 = vsel %vm5883, %v5063, -inf
      %v5892 = vmax.f32 %v5890, %v5891
      %v5893 = vsel %vm5883, %v5014, -inf
      %v5894 = vsel %vm5883, %v5070, -inf
      %v5895 = vmax.f32 %v5893, %v5894
      %v5896 = vsel %vm5883, %v5021, -inf
      %v5897 = vsel %vm5883, %v5077, -inf
      %v5898 = vmax.f32 %v5896, %v5897
      %v5899 = vsel %vm5883, %v5028, -inf
      %v5900 = vsel %vm5883, %v5084, -inf
      %v5901 = vmax.f32 %v5899, %v5900
      %v5902 = vsel %vm5883, %v5035, -inf
      %v5903 = vsel %vm5883, %v5091, -inf
      %v5904 = vmax.f32 %v5902, %v5903
      %v5905 = vsel %vm5883, %v5042, -inf
      %v5906 = vsel %vm5883, %v5098, -inf
      %v5907 = vmax.f32 %v5905, %v5906
      %v5908 = vsel %vm5883, %v5105, -inf
      %v5909 = vsel %vm5883, %v5161, -inf
      %v5910 = vmax.f32 %v5908, %v5909
      %v5911 = vsel %vm5883, %v5112, -inf
      %v5912 = vsel %vm5883, %v5168, -inf
      %v5913 = vmax.f32 %v5911, %v5912
      %v5914 = vsel %vm5883, %v5119, -inf
      %v5915 = vsel %vm5883, %v5175, -inf
      %v5916 = vmax.f32 %v5914, %v5915
      %v5917 = vsel %vm5883, %v5126, -inf
      %v5918 = vsel %vm5883, %v5182, -inf
      %v5919 = vmax.f32 %v5917, %v5918
      %v5920 = vsel %vm5883, %v5133, -inf
      %v5921 = vsel %vm5883, %v5189, -inf
      %v5922 = vmax.f32 %v5920, %v5921
      %v5923 = vsel %vm5883, %v5140, -inf
      %v5924 = vsel %vm5883, %v5196, -inf
      %v5925 = vmax.f32 %v5923, %v5924
      %v5926 = vsel %vm5883, %v5147, -inf
      %v5927 = vsel %vm5883, %v5203, -inf
      %v5928 = vmax.f32 %v5926, %v5927
      %v5929 = vsel %vm5883, %v5154, -inf
      %v5930 = vsel %vm5883, %v5210, -inf
      %v5931 = vmax.f32 %v5929, %v5930
      %v5932 = vsel %vm5883, %v5217, -inf
      %v5933 = vsel %vm5883, %v5273, -inf
      %v5934 = vmax.f32 %v5932, %v5933
      %v5935 = vsel %vm5883, %v5224, -inf
      %v5936 = vsel %vm5883, %v5280, -inf
      %v5937 = vmax.f32 %v5935, %v5936
      %v5938 = vsel %vm5883, %v5231, -inf
      %v5939 = vsel %vm5883, %v5287, -inf
      %v5940 = vmax.f32 %v5938, %v5939
      %v5941 = vsel %vm5883, %v5238, -inf
      %v5942 = vsel %vm5883, %v5294, -inf
      %v5943 = vmax.f32 %v5941, %v5942
      %v5944 = vsel %vm5883, %v5245, -inf
      %v5945 = vsel %vm5883, %v5301, -inf
      %v5946 = vmax.f32 %v5944, %v5945
      %v5947 = vsel %vm5883, %v5252, -inf
      %v5948 = vsel %vm5883, %v5308, -inf
      %v5949 = vmax.f32 %v5947, %v5948
      %v5950 = vsel %vm5883, %v5259, -inf
      %v5951 = vsel %vm5883, %v5315, -inf
      %v5952 = vmax.f32 %v5950, %v5951
      %v5953 = vsel %vm5883, %v5266, -inf
      %v5954 = vsel %vm5883, %v5322, -inf
      %v5955 = vmax.f32 %v5953, %v5954
      %v5956 = vsel %vm5883, %v5329, -inf
      %v5957 = vsel %vm5883, %v5385, -inf
      %v5958 = vmax.f32 %v5956, %v5957
      %v5959 = vsel %vm5883, %v5336, -inf
      %v5960 = vsel %vm5883, %v5392, -inf
      %v5961 = vmax.f32 %v5959, %v5960
      %v5962 = vsel %vm5883, %v5343, -inf
      %v5963 = vsel %vm5883, %v5399, -inf
      %v5964 = vmax.f32 %v5962, %v5963
      %v5965 = vsel %vm5883, %v5350, -inf
      %v5966 = vsel %vm5883, %v5406, -inf
      %v5967 = vmax.f32 %v5965, %v5966
      %v5968 = vsel %vm5883, %v5357, -inf
      %v5969 = vsel %vm5883, %v5413, -inf
      %v5970 = vmax.f32 %v5968, %v5969
      %v5971 = vsel %vm5883, %v5364, -inf
      %v5972 = vsel %vm5883, %v5420, -inf
      %v5973 = vmax.f32 %v5971, %v5972
      %v5974 = vsel %vm5883, %v5371, -inf
      %v5975 = vsel %vm5883, %v5427, -inf
      %v5976 = vmax.f32 %v5974, %v5975
      %v5977 = vsel %vm5883, %v5378, -inf
      %v5978 = vsel %vm5883, %v5434, -inf
      %v5979 = vmax.f32 %v5977, %v5978
      %v5980 = vsel %vm5883, %v5441, -inf
      %v5981 = vsel %vm5883, %v5497, -inf
      %v5982 = vmax.f32 %v5980, %v5981
      %v5983 = vsel %vm5883, %v5448, -inf
      %v5984 = vsel %vm5883, %v5504, -inf
      %v5985 = vmax.f32 %v5983, %v5984
      %v5986 = vsel %vm5883, %v5455, -inf
      %v5987 = vsel %vm5883, %v5511, -inf
      %v5988 = vmax.f32 %v5986, %v5987
      %v5989 = vsel %vm5883, %v5462, -inf
      %v5990 = vsel %vm5883, %v5518, -inf
      %v5991 = vmax.f32 %v5989, %v5990
      %v5992 = vsel %vm5883, %v5469, -inf
      %v5993 = vsel %vm5883, %v5525, -inf
      %v5994 = vmax.f32 %v5992, %v5993
      %v5995 = vsel %vm5883, %v5476, -inf
      %v5996 = vsel %vm5883, %v5532, -inf
      %v5997 = vmax.f32 %v5995, %v5996
      %v5998 = vsel %vm5883, %v5483, -inf
      %v5999 = vsel %vm5883, %v5539, -inf
      %v6000 = vmax.f32 %v5998, %v5999
      %v6001 = vsel %vm5883, %v5490, -inf
      %v6002 = vsel %vm5883, %v5546, -inf
      %v6003 = vmax.f32 %v6001, %v6002
      %v6004 = vsel %vm5883, %v5553, -inf
      %v6005 = vsel %vm5883, %v5609, -inf
      %v6006 = vmax.f32 %v6004, %v6005
      %v6007 = vsel %vm5883, %v5560, -inf
      %v6008 = vsel %vm5883, %v5616, -inf
      %v6009 = vmax.f32 %v6007, %v6008
      %v6010 = vsel %vm5883, %v5567, -inf
      %v6011 = vsel %vm5883, %v5623, -inf
      %v6012 = vmax.f32 %v6010, %v6011
      %v6013 = vsel %vm5883, %v5574, -inf
      %v6014 = vsel %vm5883, %v5630, -inf
      %v6015 = vmax.f32 %v6013, %v6014
      %v6016 = vsel %vm5883, %v5581, -inf
      %v6017 = vsel %vm5883, %v5637, -inf
      %v6018 = vmax.f32 %v6016, %v6017
      %v6019 = vsel %vm5883, %v5588, -inf
      %v6020 = vsel %vm5883, %v5644, -inf
      %v6021 = vmax.f32 %v6019, %v6020
      %v6022 = vsel %vm5883, %v5595, -inf
      %v6023 = vsel %vm5883, %v5651, -inf
      %v6024 = vmax.f32 %v6022, %v6023
      %v6025 = vsel %vm5883, %v5602, -inf
      %v6026 = vsel %vm5883, %v5658, -inf
      %v6027 = vmax.f32 %v6025, %v6026
      %v6028 = vsel %vm5883, %v5665, -inf
      %v6029 = vsel %vm5883, %v5721, -inf
      %v6030 = vmax.f32 %v6028, %v6029
      %v6031 = vsel %vm5883, %v5672, -inf
      %v6032 = vsel %vm5883, %v5728, -inf
      %v6033 = vmax.f32 %v6031, %v6032
      %v6034 = vsel %vm5883, %v5679, -inf
      %v6035 = vsel %vm5883, %v5735, -inf
      %v6036 = vmax.f32 %v6034, %v6035
      %v6037 = vsel %vm5883, %v5686, -inf
      %v6038 = vsel %vm5883, %v5742, -inf
      %v6039 = vmax.f32 %v6037, %v6038
      %v6040 = vsel %vm5883, %v5693, -inf
      %v6041 = vsel %vm5883, %v5749, -inf
      %v6042 = vmax.f32 %v6040, %v6041
      %v6043 = vsel %vm5883, %v5700, -inf
      %v6044 = vsel %vm5883, %v5756, -inf
      %v6045 = vmax.f32 %v6043, %v6044
      %v6046 = vsel %vm5883, %v5707, -inf
      %v6047 = vsel %vm5883, %v5763, -inf
      %v6048 = vmax.f32 %v6046, %v6047
      %v6049 = vsel %vm5883, %v5714, -inf
      %v6050 = vsel %vm5883, %v5770, -inf
      %v6051 = vmax.f32 %v6049, %v6050
      %v6052 = vsel %vm5883, %v5777, -inf
      %v6053 = vsel %vm5883, %v5833, -inf
      %v6054 = vmax.f32 %v6052, %v6053
      %v6055 = vsel %vm5883, %v5784, -inf
      %v6056 = vsel %vm5883, %v5840, -inf
      %v6057 = vmax.f32 %v6055, %v6056
      %v6058 = vsel %vm5883, %v5791, -inf
      %v6059 = vsel %vm5883, %v5847, -inf
      %v6060 = vmax.f32 %v6058, %v6059
      %v6061 = vsel %vm5883, %v5798, -inf
      %v6062 = vsel %vm5883, %v5854, -inf
      %v6063 = vmax.f32 %v6061, %v6062
      %v6064 = vsel %vm5883, %v5805, -inf
      %v6065 = vsel %vm5883, %v5861, -inf
      %v6066 = vmax.f32 %v6064, %v6065
      %v6067 = vsel %vm5883, %v5812, -inf
      %v6068 = vsel %vm5883, %v5868, -inf
      %v6069 = vmax.f32 %v6067, %v6068
      %v6070 = vsel %vm5883, %v5819, -inf
      %v6071 = vsel %vm5883, %v5875, -inf
      %v6072 = vmax.f32 %v6070, %v6071
      %v6073 = vsel %vm5883, %v5826, -inf
      %v6074 = vsel %vm5883, %v5882, -inf
      %v6075 = vmax.f32 %v6073, %v6074
      %v6076 = vpack.c.bf16 %v5886, %v5886
      %v6077 = vpack.c.bf16 %v5889, %v5889
      %v6078 = vpack.c.bf16 %v5892, %v5892
      %v6079 = vpack.c.bf16 %v5895, %v5895
      %v6080 = vpack.c.bf16 %v5898, %v5898
      %v6081 = vpack.c.bf16 %v5901, %v5901
      %v6082 = vpack.c.bf16 %v5904, %v5904
      %v6083 = vpack.c.bf16 %v5907, %v5907
      %v6084 = vpack.c.bf16 %v5910, %v5910
      %v6085 = vpack.c.bf16 %v5913, %v5913
      %v6086 = vpack.c.bf16 %v5916, %v5916
      %v6087 = vpack.c.bf16 %v5919, %v5919
      %v6088 = vpack.c.bf16 %v5922, %v5922
      %v6089 = vpack.c.bf16 %v5925, %v5925
      %v6090 = vpack.c.bf16 %v5928, %v5928
      %v6091 = vpack.c.bf16 %v5931, %v5931
      %v6092 = vpack.c.bf16 %v5934, %v5934
      %v6093 = vpack.c.bf16 %v5937, %v5937
      %v6094 = vpack.c.bf16 %v5940, %v5940
      %v6095 = vpack.c.bf16 %v5943, %v5943
      %v6096 = vpack.c.bf16 %v5946, %v5946
      %v6097 = vpack.c.bf16 %v5949, %v5949
      %v6098 = vpack.c.bf16 %v5952, %v5952
      %v6099 = vpack.c.bf16 %v5955, %v5955
      %v6100 = vpack.c.bf16 %v5958, %v5958
      %v6101 = vpack.c.bf16 %v5961, %v5961
      %v6102 = vpack.c.bf16 %v5964, %v5964
      %v6103 = vpack.c.bf16 %v5967, %v5967
      %v6104 = vpack.c.bf16 %v5970, %v5970
      %v6105 = vpack.c.bf16 %v5973, %v5973
      %v6106 = vpack.c.bf16 %v5976, %v5976
      %v6107 = vpack.c.bf16 %v5979, %v5979
      %v6108 = vpack.c.bf16 %v5982, %v5982
      %v6109 = vpack.c.bf16 %v5985, %v5985
      %v6110 = vpack.c.bf16 %v5988, %v5988
      %v6111 = vpack.c.bf16 %v5991, %v5991
      %v6112 = vpack.c.bf16 %v5994, %v5994
      %v6113 = vpack.c.bf16 %v5997, %v5997
      %v6114 = vpack.c.bf16 %v6000, %v6000
      %v6115 = vpack.c.bf16 %v6003, %v6003
      %v6116 = vpack.c.bf16 %v6006, %v6006
      %v6117 = vpack.c.bf16 %v6009, %v6009
      %v6118 = vpack.c.bf16 %v6012, %v6012
      %v6119 = vpack.c.bf16 %v6015, %v6015
      %v6120 = vpack.c.bf16 %v6018, %v6018
      %v6121 = vpack.c.bf16 %v6021, %v6021
      %v6122 = vpack.c.bf16 %v6024, %v6024
      %v6123 = vpack.c.bf16 %v6027, %v6027
      %v6124 = vpack.c.bf16 %v6030, %v6030
      %v6125 = vpack.c.bf16 %v6033, %v6033
      %v6126 = vpack.c.bf16 %v6036, %v6036
      %v6127 = vpack.c.bf16 %v6039, %v6039
      %v6128 = vpack.c.bf16 %v6042, %v6042
      %v6129 = vpack.c.bf16 %v6045, %v6045
      %v6130 = vpack.c.bf16 %v6048, %v6048
      %v6131 = vpack.c.bf16 %v6051, %v6051
      %v6132 = vpack.c.bf16 %v6054, %v6054
      %v6133 = vpack.c.bf16 %v6057, %v6057
      %v6134 = vpack.c.bf16 %v6060, %v6060
      %v6135 = vpack.c.bf16 %v6063, %v6063
      %v6136 = vpack.c.bf16 %v6066, %v6066
      %v6137 = vpack.c.bf16 %v6069, %v6069
      %v6138 = vpack.c.bf16 %v6072, %v6072
      %v6139 = vpack.c.bf16 %v6075, %v6075
      %v6204 = vunpack.c.l.b16 %v6076
      %v6205 = vunpack.c.l.b16 %v6077
      %v6206 = vunpack.c.l.b16 %v6078
      %v6207 = vunpack.c.l.b16 %v6079
      %v6208 = vunpack.c.l.b16 %v6080
      %v6209 = vunpack.c.l.b16 %v6081
      %v6210 = vunpack.c.l.b16 %v6082
      %v6211 = vunpack.c.l.b16 %v6083
      %v6212 = vunpack.c.l.b16 %v6084
      %v6213 = vunpack.c.l.b16 %v6085
      %v6214 = vunpack.c.l.b16 %v6086
      %v6215 = vunpack.c.l.b16 %v6087
      %v6216 = vunpack.c.l.b16 %v6088
      %v6217 = vunpack.c.l.b16 %v6089
      %v6218 = vunpack.c.l.b16 %v6090
      %v6219 = vunpack.c.l.b16 %v6091
      %v6220 = vunpack.c.l.b16 %v6092
      %v6221 = vunpack.c.l.b16 %v6093
      %v6222 = vunpack.c.l.b16 %v6094
      %v6223 = vunpack.c.l.b16 %v6095
      %v6224 = vunpack.c.l.b16 %v6096
      %v6225 = vunpack.c.l.b16 %v6097
      %v6226 = vunpack.c.l.b16 %v6098
      %v6227 = vunpack.c.l.b16 %v6099
      %v6228 = vunpack.c.l.b16 %v6100
      %v6229 = vunpack.c.l.b16 %v6101
      %v6230 = vunpack.c.l.b16 %v6102
      %v6231 = vunpack.c.l.b16 %v6103
      %v6232 = vunpack.c.l.b16 %v6104
      %v6233 = vunpack.c.l.b16 %v6105
      %v6234 = vunpack.c.l.b16 %v6106
      %v6235 = vunpack.c.l.b16 %v6107
      %v6236 = vunpack.c.l.b16 %v6108
      %v6237 = vunpack.c.l.b16 %v6109
      %v6238 = vunpack.c.l.b16 %v6110
      %v6239 = vunpack.c.l.b16 %v6111
      %v6240 = vunpack.c.l.b16 %v6112
      %v6241 = vunpack.c.l.b16 %v6113
      %v6242 = vunpack.c.l.b16 %v6114
      %v6243 = vunpack.c.l.b16 %v6115
      %v6244 = vunpack.c.l.b16 %v6116
      %v6245 = vunpack.c.l.b16 %v6117
      %v6246 = vunpack.c.l.b16 %v6118
      %v6247 = vunpack.c.l.b16 %v6119
      %v6248 = vunpack.c.l.b16 %v6120
      %v6249 = vunpack.c.l.b16 %v6121
      %v6250 = vunpack.c.l.b16 %v6122
      %v6251 = vunpack.c.l.b16 %v6123
      %v6252 = vunpack.c.l.b16 %v6124
      %v6253 = vunpack.c.l.b16 %v6125
      %v6254 = vunpack.c.l.b16 %v6126
      %v6255 = vunpack.c.l.b16 %v6127
      %v6256 = vunpack.c.l.b16 %v6128
      %v6257 = vunpack.c.l.b16 %v6129
      %v6258 = vunpack.c.l.b16 %v6130
      %v6259 = vunpack.c.l.b16 %v6131
      %v6260 = vunpack.c.l.b16 %v6132
      %v6261 = vunpack.c.l.b16 %v6133
      %v6262 = vunpack.c.l.b16 %v6134
      %v6263 = vunpack.c.l.b16 %v6135
      %v6264 = vunpack.c.l.b16 %v6136
      %v6265 = vunpack.c.l.b16 %v6137
      %v6266 = vunpack.c.l.b16 %v6138
      %v6267 = vunpack.c.l.b16 %v6139
      %vm6268 = vcmask 1041409
      %v6269 = vsel %vm6268, %v6205, %v6204
      %vm6270 = vcmask 1042434
      %v6271 = vsel %vm6270, %v6206, %v6269
      %vm6272 = vcmask 1043459
      %v6273 = vsel %vm6272, %v6207, %v6271
      %vm6274 = vcmask 1044484
      %v6275 = vsel %vm6274, %v6208, %v6273
      %vm6276 = vcmask 1045509
      %v6277 = vsel %vm6276, %v6209, %v6275
      %vm6278 = vcmask 1046534
      %v6279 = vsel %vm6278, %v6210, %v6277
      %vm6280 = vcmask 1047559
      %v6281 = vsel %vm6280, %v6211, %v6279
      %v6282 = vsel %vm6268, %v6213, %v6212
      %v6283 = vsel %vm6270, %v6214, %v6282
      %v6284 = vsel %vm6272, %v6215, %v6283
      %v6285 = vsel %vm6274, %v6216, %v6284
      %v6286 = vsel %vm6276, %v6217, %v6285
      %v6287 = vsel %vm6278, %v6218, %v6286
      %v6288 = vsel %vm6280, %v6219, %v6287
      %v6289 = vsel %vm6268, %v6221, %v6220
      %v6290 = vsel %vm6270, %v6222, %v6289
      %v6291 = vsel %vm6272, %v6223, %v6290
      %v6292 = vsel %vm6274, %v6224, %v6291
      %v6293 = vsel %vm6276, %v6225, %v6292
      %v6294 = vsel %vm6278, %v6226, %v6293
      %v6295 = vsel %vm6280, %v6227, %v6294
      %v6296 = vsel %vm6268, %v6229, %v6228
      %v6297 = vsel %vm6270, %v6230, %v6296
      %v6298 = vsel %vm6272, %v6231, %v6297
      %v6299 = vsel %vm6274, %v6232, %v6298
      %v6300 = vsel %vm6276, %v6233, %v6299
      %v6301 = vsel %vm6278, %v6234, %v6300
      %v6302 = vsel %vm6280, %v6235, %v6301
      %v6303 = vsel %vm6268, %v6237, %v6236
      %v6304 = vsel %vm6270, %v6238, %v6303
      %v6305 = vsel %vm6272, %v6239, %v6304
      %v6306 = vsel %vm6274, %v6240, %v6305
      %v6307 = vsel %vm6276, %v6241, %v6306
      %v6308 = vsel %vm6278, %v6242, %v6307
      %v6309 = vsel %vm6280, %v6243, %v6308
      %v6310 = vsel %vm6268, %v6245, %v6244
      %v6311 = vsel %vm6270, %v6246, %v6310
      %v6312 = vsel %vm6272, %v6247, %v6311
      %v6313 = vsel %vm6274, %v6248, %v6312
      %v6314 = vsel %vm6276, %v6249, %v6313
      %v6315 = vsel %vm6278, %v6250, %v6314
      %v6316 = vsel %vm6280, %v6251, %v6315
      %v6317 = vsel %vm6268, %v6253, %v6252
      %v6318 = vsel %vm6270, %v6254, %v6317
      %v6319 = vsel %vm6272, %v6255, %v6318
      %v6320 = vsel %vm6274, %v6256, %v6319
      %v6321 = vsel %vm6276, %v6257, %v6320
      %v6322 = vsel %vm6278, %v6258, %v6321
      %v6323 = vsel %vm6280, %v6259, %v6322
      %v6324 = vsel %vm6268, %v6261, %v6260
      %v6325 = vsel %vm6270, %v6262, %v6324
      %v6326 = vsel %vm6272, %v6263, %v6325
      %v6327 = vsel %vm6274, %v6264, %v6326
      %v6328 = vsel %vm6276, %v6265, %v6327
      %v6329 = vsel %vm6278, %v6266, %v6328
      %v6330 = vsel %vm6280, %v6267, %v6329
      %v6331 = vpack.c.b16 %v6281, %v6281
      %v6332 = vpack.c.b16 %v6288, %v6288
      %v6333 = vpack.c.b16 %v6295, %v6295
      %v6334 = vpack.c.b16 %v6302, %v6302
      %v6335 = vpack.c.b16 %v6309, %v6309
      %v6336 = vpack.c.b16 %v6316, %v6316
      %v6337 = vpack.c.b16 %v6323, %v6323
      %v6338 = vpack.c.b16 %v6330, %v6330
      %vm6347 = vcmask 257024
      %6348 = vst.msk [vmem:[%s170] sm:$0xf] %vm6347, %v6331
      %6349 = vst.msk [vmem:[%s170 + $0x4] sm:$0xf] %vm6347, %v6332
      %6350 = vst.msk [vmem:[%s170 + $0x8] sm:$0xf] %vm6347, %v6333
      %6351 = vst.msk [vmem:[%s170 + $0xc] sm:$0xf] %vm6347, %v6334
      %6352 = vst.msk [vmem:[%s170 + $0x10] sm:$0xf] %vm6347, %v6335
      %6353 = vst.msk [vmem:[%s170 + $0x14] sm:$0xf] %vm6347, %v6336
      %6354 = vst.msk [vmem:[%s170 + $0x18] sm:$0xf] %vm6347, %v6337
      %6355 = vst.msk [vmem:[%s170 + $0x1c] sm:$0xf] %vm6347, %v6338
      %p6356 = scmp.lt.s32.totalorder %s14, 1
      %s6357 = scalar_select %p6356, %s14, 1
      %s6358 = smul.addr %s6357, 8
      %s6359 = smul.addr %s6358, 4
      %s6360 = scalar_lea.vmem %s3, %s6359
      // Predicated region
      $region33: #{bird_cnn_forward.4} parent=31 // pred_check
        %p6361 = pneg %p100
      $region34: #{bird_cnn_forward.4} parent=31 // pred_check_branch
        %6363 = sbr.rel (%p6361) target = $region36
      $region35: #{bird_cnn_forward.4} parent=31 // pred_region
        _
      $region36: #{bird_cnn_forward.4} parent=31 // pred_fallthru
        _
    $region32: #{bird_cnn_forward.4} parent=5 // pred_fallthru
      _
    %p6364 = scmp.le.s32.totalorder 2, %s9
    // Predicated region
    $region37: #{bird_cnn_forward.4} parent=5 // pred_check
      %p6365 = pneg %p6364
    $region38: #{bird_cnn_forward.4} parent=5 // pred_check_branch
      %6367 = sbr.rel (%p6365) target = $region40
    $region39: #{bird_cnn_forward.4} parent=5 // pred_region
      %s6368 = ssub.s32 %s9, 2
      // Predicated region
      $region41: #{bird_cnn_forward.4} parent=39 // pred_check
        %p6369 = pneg %p106
      $region42: #{bird_cnn_forward.4} parent=39 // pred_check_branch
        %6371 = sbr.rel (%p6369) target = $region44
      $region43: #{bird_cnn_forward.4} parent=39 // pred_region
        %p6372 = scmp.lt.s32.totalorder %s15, 1
        %s6373 = scalar_select %p6372, %s15, 1
        %s6374 = smul.addr %s6373, 8
        %s6375 = smul.addr %s6374, 4
        %s6376 = scalar_lea.vmem %s3, %s6375
      $region44: #{bird_cnn_forward.4} parent=39 // pred_fallthru
        _
    $region40: #{bird_cnn_forward.4} parent=5 // pred_fallthru
      _
  $region6: #{bird_cnn_forward.4} parent=0 // loop_footer
    %s13 = sadd.s32 1, %s9
  $region7: #{bird_cnn_forward.4} parent=0 // loop_footer_branch
    %8 = sbr.rel target = $region3
  $region8: #{bird_cnn_forward.4} parent=0 // loop_exit
    _

// kernel: bird_cnn_forward.5
$region0: #{bird_cnn_forward.5}
  #allocation0 [shape = 'u32[]', space=smem, size = 0x4, offset = 0x4, fixed_abs, tag = 'smem constant byte address 0x4 - core index']
  #allocation1 [shape = 'u32[72,128]{1,0:T(1,128)}', space=vmem, size = 0x9000, scoped, tag = 'internal scratch']
  %s0 = inlined_call_operand.vmem [shape: bf16[2,10,10,32], index: 0, kind: input, shape index: {}]
  %s1 = inlined_call_operand.vmem [shape: bf16[9,32,64], index: 1, kind: input, shape index: {}]
  %s2 = inlined_call_operand.vmem [shape: f32[1,64], index: 2, kind: input, shape index: {}]
  %s3 = inlined_call_operand.vmem [shape: bf16[2,4,4,64], index: 3, kind: output, shape index: {}]
  %s4 = sld [smem:[#allocation0]]
  $region22: #{bird_cnn_forward.5} parent=0
    _
  %s6 = ssub.s32 1, %s4
  %s7 = scalar_select 0, %s6, %s4
  // Predicated region
  $region2: #{bird_cnn_forward.5} parent=0 // pred_check
    _
  $region3: #{bird_cnn_forward.5} parent=0 // pred_check_branch
    %9 = sbr.rel (0) target = $region5
  $region4: #{bird_cnn_forward.5} parent=0 // pred_region
    _
  $region5: #{bird_cnn_forward.5} parent=0 // pred_fallthru
    _
  // Predicated region
  $region6: #{bird_cnn_forward.5} parent=0 // pred_check
    _
  $region7: #{bird_cnn_forward.5} parent=0 // pred_check_branch
    %11 = sbr.rel (0) target = $region9
  $region8: #{bird_cnn_forward.5} parent=0 // pred_region
    _
  $region9: #{bird_cnn_forward.5} parent=0 // pred_fallthru
    _
  // Predicated region
  $region10: #{bird_cnn_forward.5} parent=0 // pred_check
    _
  $region11: #{bird_cnn_forward.5} parent=0 // pred_check_branch
    %13 = sbr.rel (0) target = $region13
  $region12: #{bird_cnn_forward.5} parent=0 // pred_region
    _
  $region13: #{bird_cnn_forward.5} parent=0 // pred_fallthru
    _
  %v15 = vld [vmem:[%s0] sm:$0xf]
  %v16 = vld [vmem:[%s0 + $0x8] sm:$0xf]
  %v17 = vld [vmem:[%s0 + $0x10] sm:$0xf]
  %v18 = vld [vmem:[%s0 + $0x18] sm:$0xf]
  %v19 = vld [vmem:[%s0 + $0x20] sm:$0xf]
  %v20 = vld [vmem:[%s0 + $0x28] sm:$0xf]
  %v21 = vld [vmem:[%s0 + $0x30] sm:$0xf]
  %v22 = vld [vmem:[%s0 + $0x38] sm:$0xf]
  %v23 = vld [vmem:[%s0 + $0x50] sm:$0xf]
  %v24 = vld [vmem:[%s0 + $0x58] sm:$0xf]
  %v25 = vld [vmem:[%s0 + $0x60] sm:$0xf]
  %v26 = vld [vmem:[%s0 + $0x68] sm:$0xf]
  %v27 = vld [vmem:[%s0 + $0x70] sm:$0xf]
  %v28 = vld [vmem:[%s0 + $0x78] sm:$0xf]
  %v29 = vld [vmem:[%s0 + $0x80] sm:$0xf]
  %v30 = vld [vmem:[%s0 + $0x88] sm:$0xf]
  %v31 = vld [vmem:[%s1] sm:$0xf]
  %v32 = vld [vmem:[%s1 + $0x4] sm:$0xf]
  %v33 = vld [vmem:[%s1 + $0x8] sm:$0xf]
  %v34 = vld [vmem:[%s1 + $0xc] sm:$0xf]
  %v35 = vld [vmem:[%s0 + $0x4] sm:$0x1]
  %v36 = vld [vmem:[%s0 + $0xc] sm:$0x1]
  %v37 = vld [vmem:[%s0 + $0x14] sm:$0x1]
  %v38 = vld [vmem:[%s0 + $0x1c] sm:$0x1]
  %v39 = vld [vmem:[%s0 + $0x24] sm:$0x1]
  %v40 = vld [vmem:[%s0 + $0x2c] sm:$0x1]
  %v41 = vld [vmem:[%s0 + $0x34] sm:$0x1]
  %v42 = vld [vmem:[%s0 + $0x3c] sm:$0x1]
  %v43 = vld [vmem:[%s0 + $0x54] sm:$0x1]
  %v44 = vld [vmem:[%s0 + $0x5c] sm:$0x1]
  %v45 = vld [vmem:[%s0 + $0x64] sm:$0x1]
  %v46 = vld [vmem:[%s0 + $0x6c] sm:$0x1]
  %v47 = vld [vmem:[%s0 + $0x74] sm:$0x1]
  %v48 = vld [vmem:[%s0 + $0x7c] sm:$0x1]
  %v49 = vld [vmem:[%s0 + $0x84] sm:$0x1]
  %v50 = vld [vmem:[%s0 + $0x8c] sm:$0x1]
  %vm51 = vsmask.f32 3328
  %vm52 = vsmask.f32 7440
  %vm53 = vmor %vm51, %vm52
  %v55 = vshrl.u32 %v15, 16
  %v57 = vrot.slane %v55, 4
  %v58 = vshll.u32 %v15, 16
  %v60 = vrot.slane %v58, 5
  %v61 = vor.u32 %v57, %v60
  %v62 = vrot.slane %v61, 4
  %v64 = vshll.u32 %v35, 16
  %v66 = vrot.slane %v64, 5
  %v67 = vsel %vm53, %v62, %v66
  %v69 = vshrl.u32 %v16, 16
  %v71 = vrot.slane %v69, 4
  %v72 = vshll.u32 %v16, 16
  %v74 = vrot.slane %v72, 5
  %v75 = vor.u32 %v71, %v74
  %v76 = vrot.slane %v75, 4
  %v78 = vshll.u32 %v36, 16
  %v80 = vrot.slane %v78, 5
  %v81 = vsel %vm53, %v76, %v80
  %v83 = vshrl.u32 %v17, 16
  %v85 = vrot.slane %v83, 4
  %v86 = vshll.u32 %v17, 16
  %v88 = vrot.slane %v86, 5
  %v89 = vor.u32 %v85, %v88
  %v90 = vrot.slane %v89, 4
  %v92 = vshll.u32 %v37, 16
  %v94 = vrot.slane %v92, 5
  %v95 = vsel %vm53, %v90, %v94
  %v97 = vshrl.u32 %v18, 16
  %v99 = vrot.slane %v97, 4
  %v100 = vshll.u32 %v18, 16
  %v102 = vrot.slane %v100, 5
  %v103 = vor.u32 %v99, %v102
  %v104 = vrot.slane %v103, 4
  %v106 = vshll.u32 %v38, 16
  %v108 = vrot.slane %v106, 5
  %v109 = vsel %vm53, %v104, %v108
  %v111 = vshrl.u32 %v19, 16
  %v113 = vrot.slane %v111, 4
  %v114 = vshll.u32 %v19, 16
  %v116 = vrot.slane %v114, 5
  %v117 = vor.u32 %v113, %v116
  %v118 = vrot.slane %v117, 4
  %v120 = vshll.u32 %v39, 16
  %v122 = vrot.slane %v120, 5
  %v123 = vsel %vm53, %v118, %v122
  %v125 = vshrl.u32 %v20, 16
  %v127 = vrot.slane %v125, 4
  %v128 = vshll.u32 %v20, 16
  %v130 = vrot.slane %v128, 5
  %v131 = vor.u32 %v127, %v130
  %v132 = vrot.slane %v131, 4
  %v134 = vshll.u32 %v40, 16
  %v136 = vrot.slane %v134, 5
  %v137 = vsel %vm53, %v132, %v136
  %v139 = vshrl.u32 %v21, 16
  %v141 = vrot.slane %v139, 4
  %v142 = vshll.u32 %v21, 16
  %v144 = vrot.slane %v142, 5
  %v145 = vor.u32 %v141, %v144
  %v146 = vrot.slane %v145, 4
  %v148 = vshll.u32 %v41, 16
  %v150 = vrot.slane %v148, 5
  %v151 = vsel %vm53, %v146, %v150
  %v153 = vshrl.u32 %v22, 16
  %v155 = vrot.slane %v153, 4
  %v156 = vshll.u32 %v22, 16
  %v158 = vrot.slane %v156, 5
  %v159 = vor.u32 %v155, %v158
  %v160 = vrot.slane %v159, 4
  %v162 = vshll.u32 %v42, 16
  %v164 = vrot.slane %v162, 5
  %v165 = vsel %vm53, %v160, %v164
  %v167 = vshrl.u32 %v23, 16
  %v169 = vrot.slane %v167, 4
  %v170 = vshll.u32 %v23, 16
  %v172 = vrot.slane %v170, 5
  %v173 = vor.u32 %v169, %v172
  %v174 = vrot.slane %v173, 4
  %v176 = vshll.u32 %v43, 16
  %v178 = vrot.slane %v176, 5
  %v179 = vsel %vm53, %v174, %v178
  %v181 = vshrl.u32 %v24, 16
  %v183 = vrot.slane %v181, 4
  %v184 = vshll.u32 %v24, 16
  %v186 = vrot.slane %v184, 5
  %v187 = vor.u32 %v183, %v186
  %v188 = vrot.slane %v187, 4
  %v190 = vshll.u32 %v44, 16
  %v192 = vrot.slane %v190, 5
  %v193 = vsel %vm53, %v188, %v192
  %v195 = vshrl.u32 %v25, 16
  %v197 = vrot.slane %v195, 4
  %v198 = vshll.u32 %v25, 16
  %v200 = vrot.slane %v198, 5
  %v201 = vor.u32 %v197, %v200
  %v202 = vrot.slane %v201, 4
  %v204 = vshll.u32 %v45, 16
  %v206 = vrot.slane %v204, 5
  %v207 = vsel %vm53, %v202, %v206
  %v209 = vshrl.u32 %v26, 16
  %v211 = vrot.slane %v209, 4
  %v212 = vshll.u32 %v26, 16
  %v214 = vrot.slane %v212, 5
  %v215 = vor.u32 %v211, %v214
  %v216 = vrot.slane %v215, 4
  %v218 = vshll.u32 %v46, 16
  %v220 = vrot.slane %v218, 5
  %v221 = vsel %vm53, %v216, %v220
  %v223 = vshrl.u32 %v27, 16
  %v225 = vrot.slane %v223, 4
  %v226 = vshll.u32 %v27, 16
  %v228 = vrot.slane %v226, 5
  %v229 = vor.u32 %v225, %v228
  %v230 = vrot.slane %v229, 4
  %v232 = vshll.u32 %v47, 16
  %v234 = vrot.slane %v232, 5
  %v235 = vsel %vm53, %v230, %v234
  %v237 = vshrl.u32 %v28, 16
  %v239 = vrot.slane %v237, 4
  %v240 = vshll.u32 %v28, 16
  %v242 = vrot.slane %v240, 5
  %v243 = vor.u32 %v239, %v242
  %v244 = vrot.slane %v243, 4
  %v246 = vshll.u32 %v48, 16
  %v248 = vrot.slane %v246, 5
  %v249 = vsel %vm53, %v244, %v248
  %v251 = vshrl.u32 %v29, 16
  %v253 = vrot.slane %v251, 4
  %v254 = vshll.u32 %v29, 16
  %v256 = vrot.slane %v254, 5
  %v257 = vor.u32 %v253, %v256
  %v258 = vrot.slane %v257, 4
  %v260 = vshll.u32 %v49, 16
  %v262 = vrot.slane %v260, 5
  %v263 = vsel %vm53, %v258, %v262
  %v265 = vshrl.u32 %v30, 16
  %v267 = vrot.slane %v265, 4
  %v268 = vshll.u32 %v30, 16
  %v270 = vrot.slane %v268, 5
  %v271 = vor.u32 %v267, %v270
  %v272 = vrot.slane %v271, 4
  %v274 = vshll.u32 %v50, 16
  %v276 = vrot.slane %v274, 5
  %v277 = vsel %vm53, %v272, %v276
  %s278 = scalar_lea.vmem %s1, 16
  %v279 = vld [vmem:[%s278] sm:$0xf]
  %v280 = vld [vmem:[%s278 + $0x4] sm:$0xf]
  %v281 = vld [vmem:[%s278 + $0x8] sm:$0xf]
  %v282 = vld [vmem:[%s278 + $0xc] sm:$0xf]
  %v283 = vunpack.c.l.b16 %v67
  %v284 = vunpack.c.l.b16 %v81
  %v285 = vunpack.c.l.b16 %v95
  %v286 = vunpack.c.l.b16 %v109
  %v287 = vunpack.c.l.b16 %v123
  %v288 = vunpack.c.l.b16 %v137
  %v289 = vunpack.c.l.b16 %v151
  %v290 = vunpack.c.l.b16 %v165
  %v291 = vunpack.c.l.b16 %v179
  %v292 = vunpack.c.l.b16 %v193
  %v293 = vunpack.c.l.b16 %v207
  %v294 = vunpack.c.l.b16 %v221
  %v295 = vunpack.c.l.b16 %v235
  %v296 = vunpack.c.l.b16 %v249
  %v297 = vunpack.c.l.b16 %v263
  %v298 = vunpack.c.l.b16 %v277
  %v299 = vpack.c.b16 %v284, %v283
  %v300 = vpack.c.b16 %v286, %v285
  %v301 = vpack.c.b16 %v288, %v287
  %v302 = vpack.c.b16 %v290, %v289
  %v303 = vpack.c.b16 %v292, %v291
  %v304 = vpack.c.b16 %v294, %v293
  %v305 = vpack.c.b16 %v296, %v295
  %v306 = vpack.c.b16 %v298, %v297
  %v311 = vunpack.c.l.b16 %v279
  %v312 = vunpack.c.l.b16 %v280
  %v313 = vunpack.c.l.b16 %v281
  %v314 = vunpack.c.l.b16 %v282
  %v315 = vpack.c.b16 %v312, %v311
  %v316 = vpack.c.b16 %v314, %v313
  %vm319 = vcmask 261120
  %v321 = vsel %vm319, %v299, 0
  %v324 = vsel %vm319, %v300, 0
  %v327 = vsel %vm319, %v301, 0
  %v330 = vsel %vm319, %v302, 0
  %v333 = vsel %vm319, %v303, 0
  %v336 = vsel %vm319, %v304, 0
  %v339 = vsel %vm319, %v305, 0
  %v342 = vsel %vm319, %v306, 0
  %344 = vmatpush.bf16.msra.mxu0 0
  %345 = vmatpush.bf16.msra.mxu0 0
  %346 = vmatpush.bf16.msra.mxu0 0
  %347 = vmatpush.bf16.msra.mxu0 0
  %348 = vmatpush.bf16.msra.mxu0 0
  %349 = vmatpush.bf16.msra.mxu0 0
  %350 = vmatpush.bf16.msra.mxu0 %v316
  %351 = vmatpush.bf16.msra.mxu0 %v315
  %352 = vmatmul.bf16.gmra.mxu0 %v321
  %v353 = vpop.f32.mrf.mxu0
  %v354 = vadd.f32 0.0, %v353
  %v355 = vpop.f32.mrf.mxu0
  %v356 = vadd.f32 0.0, %v355
  %357 = vmatmul.bf16.gmra.mxu0 %v324
  %v358 = vpop.f32.mrf.mxu0
  %v359 = vadd.f32 0.0, %v358
  %v360 = vpop.f32.mrf.mxu0
  %v361 = vadd.f32 0.0, %v360
  %362 = vmatmul.bf16.gmra.mxu0 %v327
  %v363 = vpop.f32.mrf.mxu0
  %v364 = vadd.f32 0.0, %v363
  %v365 = vpop.f32.mrf.mxu0
  %v366 = vadd.f32 0.0, %v365
  %367 = vmatmul.bf16.gmra.mxu0 %v330
  %v368 = vpop.f32.mrf.mxu0
  %v369 = vadd.f32 0.0, %v368
  %v370 = vpop.f32.mrf.mxu0
  %v371 = vadd.f32 0.0, %v370
  %372 = vmatmul.bf16.gmra.mxu0 %v333
  %v373 = vpop.f32.mrf.mxu0
  %v374 = vadd.f32 0.0, %v373
  %v375 = vpop.f32.mrf.mxu0
  %v376 = vadd.f32 0.0, %v375
  %377 = vmatmul.bf16.gmra.mxu0 %v336
  %v378 = vpop.f32.mrf.mxu0
  %v379 = vadd.f32 0.0, %v378
  %v380 = vpop.f32.mrf.mxu0
  %v381 = vadd.f32 0.0, %v380
  %382 = vmatmul.bf16.gmra.mxu0 %v339
  %v383 = vpop.f32.mrf.mxu0
  %v384 = vadd.f32 0.0, %v383
  %v385 = vpop.f32.mrf.mxu0
  %v386 = vadd.f32 0.0, %v385
  %387 = vmatmul.bf16.gmra.mxu0 %v342
  %v388 = vpop.f32.mrf.mxu0
  %v389 = vadd.f32 0.0, %v388
  %v390 = vpop.f32.mrf.mxu0
  %v391 = vadd.f32 0.0, %v390
  %392 = vdwg.mxu0
  %v409 = vunpack.c.l.b16 %v15
  %v410 = vunpack.c.l.b16 %v16
  %v411 = vunpack.c.l.b16 %v17
  %v412 = vunpack.c.l.b16 %v18
  %v413 = vunpack.c.l.b16 %v19
  %v414 = vunpack.c.l.b16 %v20
  %v415 = vunpack.c.l.b16 %v21
  %v416 = vunpack.c.l.b16 %v22
  %v417 = vunpack.c.l.b16 %v23
  %v418 = vunpack.c.l.b16 %v24
  %v419 = vunpack.c.l.b16 %v25
  %v420 = vunpack.c.l.b16 %v26
  %v421 = vunpack.c.l.b16 %v27
  %v422 = vunpack.c.l.b16 %v28
  %v423 = vunpack.c.l.b16 %v29
  %v424 = vunpack.c.l.b16 %v30
  %v425 = vpack.c.b16 %v410, %v409
  %v426 = vpack.c.b16 %v412, %v411
  %v427 = vpack.c.b16 %v414, %v413
  %v428 = vpack.c.b16 %v416, %v415
  %v429 = vpack.c.b16 %v418, %v417
  %v430 = vpack.c.b16 %v420, %v419
  %v431 = vpack.c.b16 %v422, %v421
  %v432 = vpack.c.b16 %v424, %v423
  %v437 = vunpack.c.l.b16 %v31
  %v438 = vunpack.c.l.b16 %v32
  %v439 = vunpack.c.l.b16 %v33
  %v440 = vunpack.c.l.b16 %v34
  %v441 = vpack.c.b16 %v438, %v437
  %v442 = vpack.c.b16 %v440, %v439
  %v446 = vsel %vm319, %v425, 0
  %v449 = vsel %vm319, %v426, 0
  %v452 = vsel %vm319, %v427, 0
  %v455 = vsel %vm319, %v428, 0
  %v458 = vsel %vm319, %v429, 0
  %v461 = vsel %vm319, %v430, 0
  %v464 = vsel %vm319, %v431, 0
  %v467 = vsel %vm319, %v432, 0
  %469 = vmatpush.bf16.msra.mxu0 0
  %470 = vmatpush.bf16.msra.mxu0 0
  %471 = vmatpush.bf16.msra.mxu0 0
  %472 = vmatpush.bf16.msra.mxu0 0
  %473 = vmatpush.bf16.msra.mxu0 0
  %474 = vmatpush.bf16.msra.mxu0 0
  %475 = vmatpush.bf16.msra.mxu0 %v442
  %476 = vmatpush.bf16.msra.mxu0 %v441
  %477 = vmatmul.bf16.gmra.mxu0 %v446
  %v478 = vpop.f32.mrf.mxu0
  %v479 = vadd.f32 %v354, %v478
  %v480 = vpop.f32.mrf.mxu0
  %v481 = vadd.f32 %v356, %v480
  %482 = vmatmul.bf16.gmra.mxu0 %v449
  %v483 = vpop.f32.mrf.mxu0
  %v484 = vadd.f32 %v359, %v483
  %v485 = vpop.f32.mrf.mxu0
  %v486 = vadd.f32 %v361, %v485
  %487 = vmatmul.bf16.gmra.mxu0 %v452
  %v488 = vpop.f32.mrf.mxu0
  %v489 = vadd.f32 %v364, %v488
  %v490 = vpop.f32.mrf.mxu0
  %v491 = vadd.f32 %v366, %v490
  %492 = vmatmul.bf16.gmra.mxu0 %v455
  %v493 = vpop.f32.mrf.mxu0
  %v494 = vadd.f32 %v369, %v493
  %v495 = vpop.f32.mrf.mxu0
  %v496 = vadd.f32 %v371, %v495
  %497 = vmatmul.bf16.gmra.mxu0 %v458
  %v498 = vpop.f32.mrf.mxu0
  %v499 = vadd.f32 %v374, %v498
  %v500 = vpop.f32.mrf.mxu0
  %v501 = vadd.f32 %v376, %v500
  %502 = vmatmul.bf16.gmra.mxu0 %v461
  %v503 = vpop.f32.mrf.mxu0
  %v504 = vadd.f32 %v379, %v503
  %v505 = vpop.f32.mrf.mxu0
  %v506 = vadd.f32 %v381, %v505
  %507 = vmatmul.bf16.gmra.mxu0 %v464
  %v508 = vpop.f32.mrf.mxu0
  %v509 = vadd.f32 %v384, %v508
  %v510 = vpop.f32.mrf.mxu0
  %v511 = vadd.f32 %v386, %v510
  %512 = vmatmul.bf16.gmra.mxu0 %v467
  %v513 = vpop.f32.mrf.mxu0
  %v514 = vadd.f32 %v389, %v513
  %v515 = vpop.f32.mrf.mxu0
  %v516 = vadd.f32 %v391, %v515
  %517 = vdwg.mxu0
  %v518 = vld [vmem:[%s0] sm:$0xe]
  %v519 = vld [vmem:[%s0 + $0x8] sm:$0xe]
  %v520 = vld [vmem:[%s0 + $0x10] sm:$0xe]
  %v521 = vld [vmem:[%s0 + $0x18] sm:$0xe]
  %v522 = vld [vmem:[%s0 + $0x20] sm:$0xe]
  %v523 = vld [vmem:[%s0 + $0x28] sm:$0xe]
  %v524 = vld [vmem:[%s0 + $0x30] sm:$0xe]
  %v525 = vld [vmem:[%s0 + $0x38] sm:$0xe]
  %v526 = vld [vmem:[%s0 + $0x50] sm:$0xe]
  %v527 = vld [vmem:[%s0 + $0x58] sm:$0xe]
  %v528 = vld [vmem:[%s0 + $0x60] sm:$0xe]
  %v529 = vld [vmem:[%s0 + $0x68] sm:$0xe]
  %v530 = vld [vmem:[%s0 + $0x70] sm:$0xe]
  %v531 = vld [vmem:[%s0 + $0x78] sm:$0xe]
  %v532 = vld [vmem:[%s0 + $0x80] sm:$0xe]
  %v533 = vld [vmem:[%s0 + $0x88] sm:$0xe]
  %vm566 = vcmask 1042432
  %vm567 = vcmask 1046532
  %vm568 = vmor %vm566, %vm567
  %v569 = vrot.slane %v518, 5
  %v570 = vrot.slane %v569, 4
  %v571 = vrot.slane %v35, 5
  %v572 = vsel %vm568, %v570, %v571
  %v573 = vrot.slane %v519, 5
  %v574 = vrot.slane %v573, 4
  %v575 = vrot.slane %v36, 5
  %v576 = vsel %vm568, %v574, %v575
  %v577 = vrot.slane %v520, 5
  %v578 = vrot.slane %v577, 4
  %v579 = vrot.slane %v37, 5
  %v580 = vsel %vm568, %v578, %v579
  %v581 = vrot.slane %v521, 5
  %v582 = vrot.slane %v581, 4
  %v583 = vrot.slane %v38, 5
  %v584 = vsel %vm568, %v582, %v583
  %v585 = vrot.slane %v522, 5
  %v586 = vrot.slane %v585, 4
  %v587 = vrot.slane %v39, 5
  %v588 = vsel %vm568, %v586, %v587
  %v589 = vrot.slane %v523, 5
  %v590 = vrot.slane %v589, 4
  %v591 = vrot.slane %v40, 5
  %v592 = vsel %vm568, %v590, %v591
  %v593 = vrot.slane %v524, 5
  %v594 = vrot.slane %v593, 4
  %v595 = vrot.slane %v41, 5
  %v596 = vsel %vm568, %v594, %v595
  %v597 = vrot.slane %v525, 5
  %v598 = vrot.slane %v597, 4
  %v599 = vrot.slane %v42, 5
  %v600 = vsel %vm568, %v598, %v599
  %v601 = vrot.slane %v526, 5
  %v602 = vrot.slane %v601, 4
  %v603 = vrot.slane %v43, 5
  %v604 = vsel %vm568, %v602, %v603
  %v605 = vrot.slane %v527, 5
  %v606 = vrot.slane %v605, 4
  %v607 = vrot.slane %v44, 5
  %v608 = vsel %vm568, %v606, %v607
  %v609 = vrot.slane %v528, 5
  %v610 = vrot.slane %v609, 4
  %v611 = vrot.slane %v45, 5
  %v612 = vsel %vm568, %v610, %v611
  %v613 = vrot.slane %v529, 5
  %v614 = vrot.slane %v613, 4
  %v615 = vrot.slane %v46, 5
  %v616 = vsel %vm568, %v614, %v615
  %v617 = vrot.slane %v530, 5
  %v618 = vrot.slane %v617, 4
  %v619 = vrot.slane %v47, 5
  %v620 = vsel %vm568, %v618, %v619
  %v621 = vrot.slane %v531, 5
  %v622 = vrot.slane %v621, 4
  %v623 = vrot.slane %v48, 5
  %v624 = vsel %vm568, %v622, %v623
  %v625 = vrot.slane %v532, 5
  %v626 = vrot.slane %v625, 4
  %v627 = vrot.slane %v49, 5
  %v628 = vsel %vm568, %v626, %v627
  %v629 = vrot.slane %v533, 5
  %v630 = vrot.slane %v629, 4
  %v631 = vrot.slane %v50, 5
  %v632 = vsel %vm568, %v630, %v631
  %s633 = scalar_lea.vmem %s1, 32
  %v634 = vld [vmem:[%s633] sm:$0xf]
  %v635 = vld [vmem:[%s633 + $0x4] sm:$0xf]
  %v636 = vld [vmem:[%s633 + $0x8] sm:$0xf]
  %v637 = vld [vmem:[%s633 + $0xc] sm:$0xf]
  %v638 = vunpack.c.l.b16 %v572
  %v639 = vunpack.c.l.b16 %v576
  %v640 = vunpack.c.l.b16 %v580
  %v641 = vunpack.c.l.b16 %v584
  %v642 = vunpack.c.l.b16 %v588
  %v643 = vunpack.c.l.b16 %v592
  %v644 = vunpack.c.l.b16 %v596
  %v645 = vunpack.c.l.b16 %v600
  %v646 = vunpack.c.l.b16 %v604
  %v647 = vunpack.c.l.b16 %v608
  %v648 = vunpack.c.l.b16 %v612
  %v649 = vunpack.c.l.b16 %v616
  %v650 = vunpack.c.l.b16 %v620
  %v651 = vunpack.c.l.b16 %v624
  %v652 = vunpack.c.l.b16 %v628
  %v653 = vunpack.c.l.b16 %v632
  %v654 = vpack.c.b16 %v639, %v638
  %v655 = vpack.c.b16 %v641, %v640
  %v656 = vpack.c.b16 %v643, %v642
  %v657 = vpack.c.b16 %v645, %v644
  %v658 = vpack.c.b16 %v647, %v646
  %v659 = vpack.c.b16 %v649, %v648
  %v660 = vpack.c.b16 %v651, %v650
  %v661 = vpack.c.b16 %v653, %v652
  %v666 = vunpack.c.l.b16 %v634
  %v667 = vunpack.c.l.b16 %v635
  %v668 = vunpack.c.l.b16 %v636
  %v669 = vunpack.c.l.b16 %v637
  %v670 = vpack.c.b16 %v667, %v666
  %v671 = vpack.c.b16 %v669, %v668
  %v675 = vsel %vm319, %v654, 0
  %v678 = vsel %vm319, %v655, 0
  %v681 = vsel %vm319, %v656, 0
  %v684 = vsel %vm319, %v657, 0
  %v687 = vsel %vm319, %v658, 0
  %v690 = vsel %vm319, %v659, 0
  %v693 = vsel %vm319, %v660, 0
  %v696 = vsel %vm319, %v661, 0
  %698 = vmatpush.bf16.msra.mxu0 0
  %699 = vmatpush.bf16.msra.mxu0 0
  %700 = vmatpush.bf16.msra.mxu0 0
  %701 = vmatpush.bf16.msra.mxu0 0
  %702 = vmatpush.bf16.msra.mxu0 0
  %703 = vmatpush.bf16.msra.mxu0 0
  %704 = vmatpush.bf16.msra.mxu0 %v671
  %705 = vmatpush.bf16.msra.mxu0 %v670
  %706 = vmatmul.bf16.gmra.mxu0 %v675
  %v707 = vpop.f32.mrf.mxu0
  %v708 = vadd.f32 0.0, %v707
  %v709 = vpop.f32.mrf.mxu0
  %v710 = vadd.f32 0.0, %v709
  %711 = vmatmul.bf16.gmra.mxu0 %v678
  %v712 = vpop.f32.mrf.mxu0
  %v713 = vadd.f32 0.0, %v712
  %v714 = vpop.f32.mrf.mxu0
  %v715 = vadd.f32 0.0, %v714
  %716 = vmatmul.bf16.gmra.mxu0 %v681
  %v717 = vpop.f32.mrf.mxu0
  %v718 = vadd.f32 0.0, %v717
  %v719 = vpop.f32.mrf.mxu0
  %v720 = vadd.f32 0.0, %v719
  %721 = vmatmul.bf16.gmra.mxu0 %v684
  %v722 = vpop.f32.mrf.mxu0
  %v723 = vadd.f32 0.0, %v722
  %v724 = vpop.f32.mrf.mxu0
  %v725 = vadd.f32 0.0, %v724
  %726 = vmatmul.bf16.gmra.mxu0 %v687
  %v727 = vpop.f32.mrf.mxu0
  %v728 = vadd.f32 0.0, %v727
  %v729 = vpop.f32.mrf.mxu0
  %v730 = vadd.f32 0.0, %v729
  %731 = vmatmul.bf16.gmra.mxu0 %v690
  %v732 = vpop.f32.mrf.mxu0
  %v733 = vadd.f32 0.0, %v732
  %v734 = vpop.f32.mrf.mxu0
  %v735 = vadd.f32 0.0, %v734
  %736 = vmatmul.bf16.gmra.mxu0 %v693
  %v737 = vpop.f32.mrf.mxu0
  %v738 = vadd.f32 0.0, %v737
  %v739 = vpop.f32.mrf.mxu0
  %v740 = vadd.f32 0.0, %v739
  %741 = vmatmul.bf16.gmra.mxu0 %v696
  %v742 = vpop.f32.mrf.mxu0
  %v743 = vadd.f32 0.0, %v742
  %v744 = vpop.f32.mrf.mxu0
  %v745 = vadd.f32 0.0, %v744
  %746 = vdwg.mxu0
  %v747 = vadd.f32 %v479, %v708
  %v748 = vadd.f32 %v481, %v710
  %v749 = vadd.f32 %v484, %v713
  %v750 = vadd.f32 %v486, %v715
  %v751 = vadd.f32 %v489, %v718
  %v752 = vadd.f32 %v491, %v720
  %v753 = vadd.f32 %v494, %v723
  %v754 = vadd.f32 %v496, %v725
  %v755 = vadd.f32 %v499, %v728
  %v756 = vadd.f32 %v501, %v730
  %v757 = vadd.f32 %v504, %v733
  %v758 = vadd.f32 %v506, %v735
  %v759 = vadd.f32 %v509, %v738
  %v760 = vadd.f32 %v511, %v740
  %v761 = vadd.f32 %v514, %v743
  %v762 = vadd.f32 %v516, %v745
  %s763 = scalar_lea.vmem %s0, 8
  %v764 = vld [vmem:[%s763] sm:$0xf]
  %v765 = vld [vmem:[%s763 + $0x8] sm:$0xf]
  %v766 = vld [vmem:[%s763 + $0x10] sm:$0xf]
  %v767 = vld [vmem:[%s763 + $0x18] sm:$0xf]
  %v768 = vld [vmem:[%s763 + $0x20] sm:$0xf]
  %v769 = vld [vmem:[%s763 + $0x28] sm:$0xf]
  %v770 = vld [vmem:[%s763 + $0x30] sm:$0xf]
  %v771 = vld [vmem:[%s763 + $0x38] sm:$0xf]
  %v772 = vld [vmem:[%s763 + $0x50] sm:$0xf]
  %v773 = vld [vmem:[%s763 + $0x58] sm:$0xf]
  %v774 = vld [vmem:[%s763 + $0x60] sm:$0xf]
  %v775 = vld [vmem:[%s763 + $0x68] sm:$0xf]
  %v776 = vld [vmem:[%s763 + $0x70] sm:$0xf]
  %v777 = vld [vmem:[%s763 + $0x78] sm:$0xf]
  %v778 = vld [vmem:[%s763 + $0x80] sm:$0xf]
  %v779 = vld [vmem:[%s763 + $0x88] sm:$0xf]
  %s780 = scalar_lea.vmem %s1, 48
  %v781 = vld [vmem:[%s780] sm:$0xf]
  %v782 = vld [vmem:[%s780 + $0x4] sm:$0xf]
  %v783 = vld [vmem:[%s780 + $0x8] sm:$0xf]
  %v784 = vld [vmem:[%s780 + $0xc] sm:$0xf]
  %v801 = vunpack.c.l.b16 %v764
  %v802 = vunpack.c.l.b16 %v765
  %v803 = vunpack.c.l.b16 %v766
  %v804 = vunpack.c.l.b16 %v767
  %v805 = vunpack.c.l.b16 %v768
  %v806 = vunpack.c.l.b16 %v769
  %v807 = vunpack.c.l.b16 %v770
  %v808 = vunpack.c.l.b16 %v771
  %v809 = vunpack.c.l.b16 %v772
  %v810 = vunpack.c.l.b16 %v773
  %v811 = vunpack.c.l.b16 %v774
  %v812 = vunpack.c.l.b16 %v775
  %v813 = vunpack.c.l.b16 %v776
  %v814 = vunpack.c.l.b16 %v777
  %v815 = vunpack.c.l.b16 %v778
  %v816 = vunpack.c.l.b16 %v779
  %v817 = vpack.c.b16 %v802, %v801
  %v818 = vpack.c.b16 %v804, %v803
  %v819 = vpack.c.b16 %v806, %v805
  %v820 = vpack.c.b16 %v808, %v807
  %v821 = vpack.c.b16 %v810, %v809
  %v822 = vpack.c.b16 %v812, %v811
  %v823 = vpack.c.b16 %v814, %v813
  %v824 = vpack.c.b16 %v816, %v815
  %v829 = vunpack.c.l.b16 %v781
  %v830 = vunpack.c.l.b16 %v782
  %v831 = vunpack.c.l.b16 %v783
  %v832 = vunpack.c.l.b16 %v784
  %v833 = vpack.c.b16 %v830, %v829
  %v834 = vpack.c.b16 %v832, %v831
  %v838 = vsel %vm319, %v817, 0
  %v841 = vsel %vm319, %v818, 0
  %v844 = vsel %vm319, %v819, 0
  %v847 = vsel %vm319, %v820, 0
  %v850 = vsel %vm319, %v821, 0
  %v853 = vsel %vm319, %v822, 0
  %v856 = vsel %vm319, %v823, 0
  %v859 = vsel %vm319, %v824, 0
  %861 = vmatpush.bf16.msra.mxu0 0
  %862 = vmatpush.bf16.msra.mxu0 0
  %863 = vmatpush.bf16.msra.mxu0 0
  %864 = vmatpush.bf16.msra.mxu0 0
  %865 = vmatpush.bf16.msra.mxu0 0
  %866 = vmatpush.bf16.msra.mxu0 0
  %867 = vmatpush.bf16.msra.mxu0 %v834
  %868 = vmatpush.bf16.msra.mxu0 %v833
  %869 = vmatmul.bf16.gmra.mxu0 %v838
  %v870 = vpop.f32.mrf.mxu0
  %v871 = vadd.f32 0.0, %v870
  %v872 = vpop.f32.mrf.mxu0
  %v873 = vadd.f32 0.0, %v872
  %874 = vmatmul.bf16.gmra.mxu0 %v841
  %v875 = vpop.f32.mrf.mxu0
  %v876 = vadd.f32 0.0, %v875
  %v877 = vpop.f32.mrf.mxu0
  %v878 = vadd.f32 0.0, %v877
  %879 = vmatmul.bf16.gmra.mxu0 %v844
  %v880 = vpop.f32.mrf.mxu0
  %v881 = vadd.f32 0.0, %v880
  %v882 = vpop.f32.mrf.mxu0
  %v883 = vadd.f32 0.0, %v882
  %884 = vmatmul.bf16.gmra.mxu0 %v847
  %v885 = vpop.f32.mrf.mxu0
  %v886 = vadd.f32 0.0, %v885
  %v887 = vpop.f32.mrf.mxu0
  %v888 = vadd.f32 0.0, %v887
  %889 = vmatmul.bf16.gmra.mxu0 %v850
  %v890 = vpop.f32.mrf.mxu0
  %v891 = vadd.f32 0.0, %v890
  %v892 = vpop.f32.mrf.mxu0
  %v893 = vadd.f32 0.0, %v892
  %894 = vmatmul.bf16.gmra.mxu0 %v853
  %v895 = vpop.f32.mrf.mxu0
  %v896 = vadd.f32 0.0, %v895
  %v897 = vpop.f32.mrf.mxu0
  %v898 = vadd.f32 0.0, %v897
  %899 = vmatmul.bf16.gmra.mxu0 %v856
  %v900 = vpop.f32.mrf.mxu0
  %v901 = vadd.f32 0.0, %v900
  %v902 = vpop.f32.mrf.mxu0
  %v903 = vadd.f32 0.0, %v902
  %904 = vmatmul.bf16.gmra.mxu0 %v859
  %v905 = vpop.f32.mrf.mxu0
  %v906 = vadd.f32 0.0, %v905
  %v907 = vpop.f32.mrf.mxu0
  %v908 = vadd.f32 0.0, %v907
  %909 = vdwg.mxu0
  %v910 = vadd.f32 %v747, %v871
  %v911 = vadd.f32 %v748, %v873
  %v912 = vadd.f32 %v749, %v876
  %v913 = vadd.f32 %v750, %v878
  %v914 = vadd.f32 %v751, %v881
  %v915 = vadd.f32 %v752, %v883
  %v916 = vadd.f32 %v753, %v886
  %v917 = vadd.f32 %v754, %v888
  %v918 = vadd.f32 %v755, %v891
  %v919 = vadd.f32 %v756, %v893
  %v920 = vadd.f32 %v757, %v896
  %v921 = vadd.f32 %v758, %v898
  %v922 = vadd.f32 %v759, %v901
  %v923 = vadd.f32 %v760, %v903
  %v924 = vadd.f32 %v761, %v906
  %v925 = vadd.f32 %v762, %v908
  %v926 = vld [vmem:[%s763] sm:$0xf]
  %v927 = vld [vmem:[%s763 + $0x4] sm:$0x1]
  %v928 = vld [vmem:[%s763 + $0x8] sm:$0xf]
  %v929 = vld [vmem:[%s763 + $0xc] sm:$0x1]
  %v930 = vld [vmem:[%s763 + $0x10] sm:$0xf]
  %v931 = vld [vmem:[%s763 + $0x14] sm:$0x1]
  %v932 = vld [vmem:[%s763 + $0x18] sm:$0xf]
  %v933 = vld [vmem:[%s763 + $0x1c] sm:$0x1]
  %v934 = vld [vmem:[%s763 + $0x20] sm:$0xf]
  %v935 = vld [vmem:[%s763 + $0x24] sm:$0x1]
  %v936 = vld [vmem:[%s763 + $0x28] sm:$0xf]
  %v937 = vld [vmem:[%s763 + $0x2c] sm:$0x1]
  %v938 = vld [vmem:[%s763 + $0x30] sm:$0xf]
  %v939 = vld [vmem:[%s763 + $0x34] sm:$0x1]
  %v940 = vld [vmem:[%s763 + $0x38] sm:$0xf]
  %v941 = vld [vmem:[%s763 + $0x3c] sm:$0x1]
  %v942 = vld [vmem:[%s763 + $0x50] sm:$0xf]
  %v943 = vld [vmem:[%s763 + $0x54] sm:$0x1]
  %v944 = vld [vmem:[%s763 + $0x58] sm:$0xf]
  %v945 = vld [vmem:[%s763 + $0x5c] sm:$0x1]
  %v946 = vld [vmem:[%s763 + $0x60] sm:$0xf]
  %v947 = vld [vmem:[%s763 + $0x64] sm:$0x1]
  %v948 = vld [vmem:[%s763 + $0x68] sm:$0xf]
  %v949 = vld [vmem:[%s763 + $0x6c] sm:$0x1]
  %v950 = vld [vmem:[%s763 + $0x70] sm:$0xf]
  %v951 = vld [vmem:[%s763 + $0x74] sm:$0x1]
  %v952 = vld [vmem:[%s763 + $0x78] sm:$0xf]
  %v953 = vld [vmem:[%s763 + $0x7c] sm:$0x1]
  %v954 = vld [vmem:[%s763 + $0x80] sm:$0xf]
  %v955 = vld [vmem:[%s763 + $0x84] sm:$0x1]
  %v956 = vld [vmem:[%s763 + $0x88] sm:$0xf]
  %v957 = vld [vmem:[%s763 + $0x8c] sm:$0x1]
  %v959 = vshrl.u32 %v926, 16
  %v961 = vrot.slane %v959, 4
  %v962 = vshll.u32 %v926, 16
  %v964 = vrot.slane %v962, 5
  %v965 = vor.u32 %v961, %v964
  %v966 = vrot.slane %v965, 4
  %v968 = vshll.u32 %v927, 16
  %v970 = vrot.slane %v968, 5
  %v971 = vsel %vm53, %v966, %v970
  %v973 = vshrl.u32 %v928, 16
  %v975 = vrot.slane %v973, 4
  %v976 = vshll.u32 %v928, 16
  %v978 = vrot.slane %v976, 5
  %v979 = vor.u32 %v975, %v978
  %v980 = vrot.slane %v979, 4
  %v982 = vshll.u32 %v929, 16
  %v984 = vrot.slane %v982, 5
  %v985 = vsel %vm53, %v980, %v984
  %v987 = vshrl.u32 %v930, 16
  %v989 = vrot.slane %v987, 4
  %v990 = vshll.u32 %v930, 16
  %v992 = vrot.slane %v990, 5
  %v993 = vor.u32 %v989, %v992
  %v994 = vrot.slane %v993, 4
  %v996 = vshll.u32 %v931, 16
  %v998 = vrot.slane %v996, 5
  %v999 = vsel %vm53, %v994, %v998
  %v1001 = vshrl.u32 %v932, 16
  %v1003 = vrot.slane %v1001, 4
  %v1004 = vshll.u32 %v932, 16
  %v1006 = vrot.slane %v1004, 5
  %v1007 = vor.u32 %v1003, %v1006
  %v1008 = vrot.slane %v1007, 4
  %v1010 = vshll.u32 %v933, 16
  %v1012 = vrot.slane %v1010, 5
  %v1013 = vsel %vm53, %v1008, %v1012
  %v1015 = vshrl.u32 %v934, 16
  %v1017 = vrot.slane %v1015, 4
  %v1018 = vshll.u32 %v934, 16
  %v1020 = vrot.slane %v1018, 5
  %v1021 = vor.u32 %v1017, %v1020
  %v1022 = vrot.slane %v1021, 4
  %v1024 = vshll.u32 %v935, 16
  %v1026 = vrot.slane %v1024, 5
  %v1027 = vsel %vm53, %v1022, %v1026
  %v1029 = vshrl.u32 %v936, 16
  %v1031 = vrot.slane %v1029, 4
  %v1032 = vshll.u32 %v936, 16
  %v1034 = vrot.slane %v1032, 5
  %v1035 = vor.u32 %v1031, %v1034
  %v1036 = vrot.slane %v1035, 4
  %v1038 = vshll.u32 %v937, 16
  %v1040 = vrot.slane %v1038, 5
  %v1041 = vsel %vm53, %v1036, %v1040
  %v1043 = vshrl.u32 %v938, 16
  %v1045 = vrot.slane %v1043, 4
  %v1046 = vshll.u32 %v938, 16
  %v1048 = vrot.slane %v1046, 5
  %v1049 = vor.u32 %v1045, %v1048
  %v1050 = vrot.slane %v1049, 4
  %v1052 = vshll.u32 %v939, 16
  %v1054 = vrot.slane %v1052, 5
  %v1055 = vsel %vm53, %v1050, %v1054
  %v1057 = vshrl.u32 %v940, 16
  %v1059 = vrot.slane %v1057, 4
  %v1060 = vshll.u32 %v940, 16
  %v1062 = vrot.slane %v1060, 5
  %v1063 = vor.u32 %v1059, %v1062
  %v1064 = vrot.slane %v1063, 4
  %v1066 = vshll.u32 %v941, 16
  %v1068 = vrot.slane %v1066, 5
  %v1069 = vsel %vm53, %v1064, %v1068
  %v1071 = vshrl.u32 %v942, 16
  %v1073 = vrot.slane %v1071, 4
  %v1074 = vshll.u32 %v942, 16
  %v1076 = vrot.slane %v1074, 5
  %v1077 = vor.u32 %v1073, %v1076
  %v1078 = vrot.slane %v1077, 4
  %v1080 = vshll.u32 %v943, 16
  %v1082 = vrot.slane %v1080, 5
  %v1083 = vsel %vm53, %v1078, %v1082
  %v1085 = vshrl.u32 %v944, 16
  %v1087 = vrot.slane %v1085, 4
  %v1088 = vshll.u32 %v944, 16
  %v1090 = vrot.slane %v1088, 5
  %v1091 = vor.u32 %v1087, %v1090
  %v1092 = vrot.slane %v1091, 4
  %v1094 = vshll.u32 %v945, 16
  %v1096 = vrot.slane %v1094, 5
  %v1097 = vsel %vm53, %v1092, %v1096
  %v1099 = vshrl.u32 %v946, 16
  %v1101 = vrot.slane %v1099, 4
  %v1102 = vshll.u32 %v946, 16
  %v1104 = vrot.slane %v1102, 5
  %v1105 = vor.u32 %v1101, %v1104
  %v1106 = vrot.slane %v1105, 4
  %v1108 = vshll.u32 %v947, 16
  %v1110 = vrot.slane %v1108, 5
  %v1111 = vsel %vm53, %v1106, %v1110
  %v1113 = vshrl.u32 %v948, 16
  %v1115 = vrot.slane %v1113, 4
  %v1116 = vshll.u32 %v948, 16
  %v1118 = vrot.slane %v1116, 5
  %v1119 = vor.u32 %v1115, %v1118
  %v1120 = vrot.slane %v1119, 4
  %v1122 = vshll.u32 %v949, 16
  %v1124 = vrot.slane %v1122, 5
  %v1125 = vsel %vm53, %v1120, %v1124
  %v1127 = vshrl.u32 %v950, 16
  %v1129 = vrot.slane %v1127, 4
  %v1130 = vshll.u32 %v950, 16
  %v1132 = vrot.slane %v1130, 5
  %v1133 = vor.u32 %v1129, %v1132
  %v1134 = vrot.slane %v1133, 4
  %v1136 = vshll.u32 %v951, 16
  %v1138 = vrot.slane %v1136, 5
  %v1139 = vsel %vm53, %v1134, %v1138
  %v1141 = vshrl.u32 %v952, 16
  %v1143 = vrot.slane %v1141, 4
  %v1144 = vshll.u32 %v952, 16
  %v1146 = vrot.slane %v1144, 5
  %v1147 = vor.u32 %v1143, %v1146
  %v1148 = vrot.slane %v1147, 4
  %v1150 = vshll.u32 %v953, 16
  %v1152 = vrot.slane %v1150, 5
  %v1153 = vsel %vm53, %v1148, %v1152
  %v1155 = vshrl.u32 %v954, 16
  %v1157 = vrot.slane %v1155, 4
  %v1158 = vshll.u32 %v954, 16
  %v1160 = vrot.slane %v1158, 5
  %v1161 = vor.u32 %v1157, %v1160
  %v1162 = vrot.slane %v1161, 4
  %v1164 = vshll.u32 %v955, 16
  %v1166 = vrot.slane %v1164, 5
  %v1167 = vsel %vm53, %v1162, %v1166
  %v1169 = vshrl.u32 %v956, 16
  %v1171 = vrot.slane %v1169, 4
  %v1172 = vshll.u32 %v956, 16
  %v1174 = vrot.slane %v1172, 5
  %v1175 = vor.u32 %v1171, %v1174
  %v1176 = vrot.slane %v1175, 4
  %v1178 = vshll.u32 %v957, 16
  %v1180 = vrot.slane %v1178, 5
  %v1181 = vsel %vm53, %v1176, %v1180
  %s1182 = scalar_lea.vmem %s1, 64
  %v1183 = vld [vmem:[%s1182] sm:$0xf]
  %v1184 = vld [vmem:[%s1182 + $0x4] sm:$0xf]
  %v1185 = vld [vmem:[%s1182 + $0x8] sm:$0xf]
  %v1186 = vld [vmem:[%s1182 + $0xc] sm:$0xf]
  %v1187 = vunpack.c.l.b16 %v971
  %v1188 = vunpack.c.l.b16 %v985
  %v1189 = vunpack.c.l.b16 %v999
  %v1190 = vunpack.c.l.b16 %v1013
  %v1191 = vunpack.c.l.b16 %v1027
  %v1192 = vunpack.c.l.b16 %v1041
  %v1193 = vunpack.c.l.b16 %v1055
  %v1194 = vunpack.c.l.b16 %v1069
  %v1195 = vunpack.c.l.b16 %v1083
  %v1196 = vunpack.c.l.b16 %v1097
  %v1197 = vunpack.c.l.b16 %v1111
  %v1198 = vunpack.c.l.b16 %v1125
  %v1199 = vunpack.c.l.b16 %v1139
  %v1200 = vunpack.c.l.b16 %v1153
  %v1201 = vunpack.c.l.b16 %v1167
  %v1202 = vunpack.c.l.b16 %v1181
  %v1203 = vpack.c.b16 %v1188, %v1187
  %v1204 = vpack.c.b16 %v1190, %v1189
  %v1205 = vpack.c.b16 %v1192, %v1191
  %v1206 = vpack.c.b16 %v1194, %v1193
  %v1207 = vpack.c.b16 %v1196, %v1195
  %v1208 = vpack.c.b16 %v1198, %v1197
  %v1209 = vpack.c.b16 %v1200, %v1199
  %v1210 = vpack.c.b16 %v1202, %v1201
  %v1215 = vunpack.c.l.b16 %v1183
  %v1216 = vunpack.c.l.b16 %v1184
  %v1217 = vunpack.c.l.b16 %v1185
  %v1218 = vunpack.c.l.b16 %v1186
  %v1219 = vpack.c.b16 %v1216, %v1215
  %v1220 = vpack.c.b16 %v1218, %v1217
  %v1224 = vsel %vm319, %v1203, 0
  %v1227 = vsel %vm319, %v1204, 0
  %v1230 = vsel %vm319, %v1205, 0
  %v1233 = vsel %vm319, %v1206, 0
  %v1236 = vsel %vm319, %v1207, 0
  %v1239 = vsel %vm319, %v1208, 0
  %v1242 = vsel %vm319, %v1209, 0
  %v1245 = vsel %vm319, %v1210, 0
  %1247 = vmatpush.bf16.msra.mxu0 0
  %1248 = vmatpush.bf16.msra.mxu0 0
  %1249 = vmatpush.bf16.msra.mxu0 0
  %1250 = vmatpush.bf16.msra.mxu0 0
  %1251 = vmatpush.bf16.msra.mxu0 0
  %1252 = vmatpush.bf16.msra.mxu0 0
  %1253 = vmatpush.bf16.msra.mxu0 %v1220
  %1254 = vmatpush.bf16.msra.mxu0 %v1219
  %1255 = vmatmul.bf16.gmra.mxu0 %v1224
  %v1256 = vpop.f32.mrf.mxu0
  %v1257 = vadd.f32 0.0, %v1256
  %v1258 = vpop.f32.mrf.mxu0
  %v1259 = vadd.f32 0.0, %v1258
  %1260 = vmatmul.bf16.gmra.mxu0 %v1227
  %v1261 = vpop.f32.mrf.mxu0
  %v1262 = vadd.f32 0.0, %v1261
  %v1263 = vpop.f32.mrf.mxu0
  %v1264 = vadd.f32 0.0, %v1263
  %1265 = vmatmul.bf16.gmra.mxu0 %v1230
  %v1266 = vpop.f32.mrf.mxu0
  %v1267 = vadd.f32 0.0, %v1266
  %v1268 = vpop.f32.mrf.mxu0
  %v1269 = vadd.f32 0.0, %v1268
  %1270 = vmatmul.bf16.gmra.mxu0 %v1233
  %v1271 = vpop.f32.mrf.mxu0
  %v1272 = vadd.f32 0.0, %v1271
  %v1273 = vpop.f32.mrf.mxu0
  %v1274 = vadd.f32 0.0, %v1273
  %1275 = vmatmul.bf16.gmra.mxu0 %v1236
  %v1276 = vpop.f32.mrf.mxu0
  %v1277 = vadd.f32 0.0, %v1276
  %v1278 = vpop.f32.mrf.mxu0
  %v1279 = vadd.f32 0.0, %v1278
  %1280 = vmatmul.bf16.gmra.mxu0 %v1239
  %v1281 = vpop.f32.mrf.mxu0
  %v1282 = vadd.f32 0.0, %v1281
  %v1283 = vpop.f32.mrf.mxu0
  %v1284 = vadd.f32 0.0, %v1283
  %1285 = vmatmul.bf16.gmra.mxu0 %v1242
  %v1286 = vpop.f32.mrf.mxu0
  %v1287 = vadd.f32 0.0, %v1286
  %v1288 = vpop.f32.mrf.mxu0
  %v1289 = vadd.f32 0.0, %v1288
  %1290 = vmatmul.bf16.gmra.mxu0 %v1245
  %v1291 = vpop.f32.mrf.mxu0
  %v1292 = vadd.f32 0.0, %v1291
  %v1293 = vpop.f32.mrf.mxu0
  %v1294 = vadd.f32 0.0, %v1293
  %1295 = vdwg.mxu0
  %v1296 = vadd.f32 %v910, %v1257
  %v1297 = vadd.f32 %v911, %v1259
  %v1298 = vadd.f32 %v912, %v1262
  %v1299 = vadd.f32 %v913, %v1264
  %v1300 = vadd.f32 %v914, %v1267
  %v1301 = vadd.f32 %v915, %v1269
  %v1302 = vadd.f32 %v916, %v1272
  %v1303 = vadd.f32 %v917, %v1274
  %v1304 = vadd.f32 %v918, %v1277
  %v1305 = vadd.f32 %v919, %v1279
  %v1306 = vadd.f32 %v920, %v1282
  %v1307 = vadd.f32 %v921, %v1284
  %v1308 = vadd.f32 %v922, %v1287
  %v1309 = vadd.f32 %v923, %v1289
  %v1310 = vadd.f32 %v924, %v1292
  %v1311 = vadd.f32 %v925, %v1294
  %v1312 = vld [vmem:[%s763] sm:$0xe]
  %v1313 = vld [vmem:[%s763 + $0x8] sm:$0xe]
  %v1314 = vld [vmem:[%s763 + $0x10] sm:$0xe]
  %v1315 = vld [vmem:[%s763 + $0x18] sm:$0xe]
  %v1316 = vld [vmem:[%s763 + $0x20] sm:$0xe]
  %v1317 = vld [vmem:[%s763 + $0x28] sm:$0xe]
  %v1318 = vld [vmem:[%s763 + $0x30] sm:$0xe]
  %v1319 = vld [vmem:[%s763 + $0x38] sm:$0xe]
  %v1320 = vld [vmem:[%s763 + $0x50] sm:$0xe]
  %v1321 = vld [vmem:[%s763 + $0x58] sm:$0xe]
  %v1322 = vld [vmem:[%s763 + $0x60] sm:$0xe]
  %v1323 = vld [vmem:[%s763 + $0x68] sm:$0xe]
  %v1324 = vld [vmem:[%s763 + $0x70] sm:$0xe]
  %v1325 = vld [vmem:[%s763 + $0x78] sm:$0xe]
  %v1326 = vld [vmem:[%s763 + $0x80] sm:$0xe]
  %v1327 = vld [vmem:[%s763 + $0x88] sm:$0xe]
  %v1360 = vrot.slane %v1312, 5
  %v1361 = vrot.slane %v1360, 4
  %v1362 = vrot.slane %v927, 5
  %v1363 = vsel %vm568, %v1361, %v1362
  %v1364 = vrot.slane %v1313, 5
  %v1365 = vrot.slane %v1364, 4
  %v1366 = vrot.slane %v929, 5
  %v1367 = vsel %vm568, %v1365, %v1366
  %v1368 = vrot.slane %v1314, 5
  %v1369 = vrot.slane %v1368, 4
  %v1370 = vrot.slane %v931, 5
  %v1371 = vsel %vm568, %v1369, %v1370
  %v1372 = vrot.slane %v1315, 5
  %v1373 = vrot.slane %v1372, 4
  %v1374 = vrot.slane %v933, 5
  %v1375 = vsel %vm568, %v1373, %v1374
  %v1376 = vrot.slane %v1316, 5
  %v1377 = vrot.slane %v1376, 4
  %v1378 = vrot.slane %v935, 5
  %v1379 = vsel %vm568, %v1377, %v1378
  %v1380 = vrot.slane %v1317, 5
  %v1381 = vrot.slane %v1380, 4
  %v1382 = vrot.slane %v937, 5
  %v1383 = vsel %vm568, %v1381, %v1382
  %v1384 = vrot.slane %v1318, 5
  %v1385 = vrot.slane %v1384, 4
  %v1386 = vrot.slane %v939, 5
  %v1387 = vsel %vm568, %v1385, %v1386
  %v1388 = vrot.slane %v1319, 5
  %v1389 = vrot.slane %v1388, 4
  %v1390 = vrot.slane %v941, 5
  %v1391 = vsel %vm568, %v1389, %v1390
  %v1392 = vrot.slane %v1320, 5
  %v1393 = vrot.slane %v1392, 4
  %v1394 = vrot.slane %v943, 5
  %v1395 = vsel %vm568, %v1393, %v1394
  %v1396 = vrot.slane %v1321, 5
  %v1397 = vrot.slane %v1396, 4
  %v1398 = vrot.slane %v945, 5
  %v1399 = vsel %vm568, %v1397, %v1398
  %v1400 = vrot.slane %v1322, 5
  %v1401 = vrot.slane %v1400, 4
  %v1402 = vrot.slane %v947, 5
  %v1403 = vsel %vm568, %v1401, %v1402
  %v1404 = vrot.slane %v1323, 5
  %v1405 = vrot.slane %v1404, 4
  %v1406 = vrot.slane %v949, 5
  %v1407 = vsel %vm568, %v1405, %v1406
  %v1408 = vrot.slane %v1324, 5
  %v1409 = vrot.slane %v1408, 4
  %v1410 = vrot.slane %v951, 5
  %v1411 = vsel %vm568, %v1409, %v1410
  %v1412 = vrot.slane %v1325, 5
  %v1413 = vrot.slane %v1412, 4
  %v1414 = vrot.slane %v953, 5
  %v1415 = vsel %vm568, %v1413, %v1414
  %v1416 = vrot.slane %v1326, 5
  %v1417 = vrot.slane %v1416, 4
  %v1418 = vrot.slane %v955, 5
  %v1419 = vsel %vm568, %v1417, %v1418
  %v1420 = vrot.slane %v1327, 5
  %v1421 = vrot.slane %v1420, 4
  %v1422 = vrot.slane %v957, 5
  %v1423 = vsel %vm568, %v1421, %v1422
  %s1424 = scalar_lea.vmem %s1, 80
  %v1425 = vld [vmem:[%s1424] sm:$0xf]
  %v1426 = vld [vmem:[%s1424 + $0x4] sm:$0xf]
  %v1427 = vld [vmem:[%s1424 + $0x8] sm:$0xf]
  %v1428 = vld [vmem:[%s1424 + $0xc] sm:$0xf]
  %v1429 = vunpack.c.l.b16 %v1363
  %v1430 = vunpack.c.l.b16 %v1367
  %v1431 = vunpack.c.l.b16 %v1371
  %v1432 = vunpack.c.l.b16 %v1375
  %v1433 = vunpack.c.l.b16 %v1379
  %v1434 = vunpack.c.l.b16 %v1383
  %v1435 = vunpack.c.l.b16 %v1387
  %v1436 = vunpack.c.l.b16 %v1391
  %v1437 = vunpack.c.l.b16 %v1395
  %v1438 = vunpack.c.l.b16 %v1399
  %v1439 = vunpack.c.l.b16 %v1403
  %v1440 = vunpack.c.l.b16 %v1407
  %v1441 = vunpack.c.l.b16 %v1411
  %v1442 = vunpack.c.l.b16 %v1415
  %v1443 = vunpack.c.l.b16 %v1419
  %v1444 = vunpack.c.l.b16 %v1423
  %v1445 = vpack.c.b16 %v1430, %v1429
  %v1446 = vpack.c.b16 %v1432, %v1431
  %v1447 = vpack.c.b16 %v1434, %v1433
  %v1448 = vpack.c.b16 %v1436, %v1435
  %v1449 = vpack.c.b16 %v1438, %v1437
  %v1450 = vpack.c.b16 %v1440, %v1439
  %v1451 = vpack.c.b16 %v1442, %v1441
  %v1452 = vpack.c.b16 %v1444, %v1443
  %v1457 = vunpack.c.l.b16 %v1425
  %v1458 = vunpack.c.l.b16 %v1426
  %v1459 = vunpack.c.l.b16 %v1427
  %v1460 = vunpack.c.l.b16 %v1428
  %v1461 = vpack.c.b16 %v1458, %v1457
  %v1462 = vpack.c.b16 %v1460, %v1459
  %v1466 = vsel %vm319, %v1445, 0
  %v1469 = vsel %vm319, %v1446, 0
  %v1472 = vsel %vm319, %v1447, 0
  %v1475 = vsel %vm319, %v1448, 0
  %v1478 = vsel %vm319, %v1449, 0
  %v1481 = vsel %vm319, %v1450, 0
  %v1484 = vsel %vm319, %v1451, 0
  %v1487 = vsel %vm319, %v1452, 0
  %1489 = vmatpush.bf16.msra.mxu0 0
  %1490 = vmatpush.bf16.msra.mxu0 0
  %1491 = vmatpush.bf16.msra.mxu0 0
  %1492 = vmatpush.bf16.msra.mxu0 0
  %1493 = vmatpush.bf16.msra.mxu0 0
  %1494 = vmatpush.bf16.msra.mxu0 0
  %1495 = vmatpush.bf16.msra.mxu0 %v1462
  %1496 = vmatpush.bf16.msra.mxu0 %v1461
  %1497 = vmatmul.bf16.gmra.mxu0 %v1466
  %v1498 = vpop.f32.mrf.mxu0
  %v1499 = vadd.f32 0.0, %v1498
  %v1500 = vpop.f32.mrf.mxu0
  %v1501 = vadd.f32 0.0, %v1500
  %1502 = vmatmul.bf16.gmra.mxu0 %v1469
  %v1503 = vpop.f32.mrf.mxu0
  %v1504 = vadd.f32 0.0, %v1503
  %v1505 = vpop.f32.mrf.mxu0
  %v1506 = vadd.f32 0.0, %v1505
  %1507 = vmatmul.bf16.gmra.mxu0 %v1472
  %v1508 = vpop.f32.mrf.mxu0
  %v1509 = vadd.f32 0.0, %v1508
  %v1510 = vpop.f32.mrf.mxu0
  %v1511 = vadd.f32 0.0, %v1510
  %1512 = vmatmul.bf16.gmra.mxu0 %v1475
  %v1513 = vpop.f32.mrf.mxu0
  %v1514 = vadd.f32 0.0, %v1513
  %v1515 = vpop.f32.mrf.mxu0
  %v1516 = vadd.f32 0.0, %v1515
  %1517 = vmatmul.bf16.gmra.mxu0 %v1478
  %v1518 = vpop.f32.mrf.mxu0
  %v1519 = vadd.f32 0.0, %v1518
  %v1520 = vpop.f32.mrf.mxu0
  %v1521 = vadd.f32 0.0, %v1520
  %1522 = vmatmul.bf16.gmra.mxu0 %v1481
  %v1523 = vpop.f32.mrf.mxu0
  %v1524 = vadd.f32 0.0, %v1523
  %v1525 = vpop.f32.mrf.mxu0
  %v1526 = vadd.f32 0.0, %v1525
  %1527 = vmatmul.bf16.gmra.mxu0 %v1484
  %v1528 = vpop.f32.mrf.mxu0
  %v1529 = vadd.f32 0.0, %v1528
  %v1530 = vpop.f32.mrf.mxu0
  %v1531 = vadd.f32 0.0, %v1530
  %1532 = vmatmul.bf16.gmra.mxu0 %v1487
  %v1533 = vpop.f32.mrf.mxu0
  %v1534 = vadd.f32 0.0, %v1533
  %v1535 = vpop.f32.mrf.mxu0
  %v1536 = vadd.f32 0.0, %v1535
  %1537 = vdwg.mxu0
  %v1538 = vadd.f32 %v1296, %v1499
  %v1539 = vadd.f32 %v1297, %v1501
  %v1540 = vadd.f32 %v1298, %v1504
  %v1541 = vadd.f32 %v1299, %v1506
  %v1542 = vadd.f32 %v1300, %v1509
  %v1543 = vadd.f32 %v1301, %v1511
  %v1544 = vadd.f32 %v1302, %v1514
  %v1545 = vadd.f32 %v1303, %v1516
  %v1546 = vadd.f32 %v1304, %v1519
  %v1547 = vadd.f32 %v1305, %v1521
  %v1548 = vadd.f32 %v1306, %v1524
  %v1549 = vadd.f32 %v1307, %v1526
  %v1550 = vadd.f32 %v1308, %v1529
  %v1551 = vadd.f32 %v1309, %v1531
  %v1552 = vadd.f32 %v1310, %v1534
  %v1553 = vadd.f32 %v1311, %v1536
  %s1554 = scalar_lea.vmem %s0, 16
  %v1555 = vld [vmem:[%s1554] sm:$0xf]
  %v1556 = vld [vmem:[%s1554 + $0x8] sm:$0xf]
  %v1557 = vld [vmem:[%s1554 + $0x10] sm:$0xf]
  %v1558 = vld [vmem:[%s1554 + $0x18] sm:$0xf]
  %v1559 = vld [vmem:[%s1554 + $0x20] sm:$0xf]
  %v1560 = vld [vmem:[%s1554 + $0x28] sm:$0xf]
  %v1561 = vld [vmem:[%s1554 + $0x30] sm:$0xf]
  %v1562 = vld [vmem:[%s1554 + $0x38] sm:$0xf]
  %v1563 = vld [vmem:[%s1554 + $0x50] sm:$0xf]
  %v1564 = vld [vmem:[%s1554 + $0x58] sm:$0xf]
  %v1565 = vld [vmem:[%s1554 + $0x60] sm:$0xf]
  %v1566 = vld [vmem:[%s1554 + $0x68] sm:$0xf]
  %v1567 = vld [vmem:[%s1554 + $0x70] sm:$0xf]
  %v1568 = vld [vmem:[%s1554 + $0x78] sm:$0xf]
  %v1569 = vld [vmem:[%s1554 + $0x80] sm:$0xf]
  %v1570 = vld [vmem:[%s1554 + $0x88] sm:$0xf]
  %s1571 = scalar_lea.vmem %s1, 96
  %v1572 = vld [vmem:[%s1571] sm:$0xf]
  %v1573 = vld [vmem:[%s1571 + $0x4] sm:$0xf]
  %v1574 = vld [vmem:[%s1571 + $0x8] sm:$0xf]
  %v1575 = vld [vmem:[%s1571 + $0xc] sm:$0xf]
  %v1592 = vunpack.c.l.b16 %v1555
  %v1593 = vunpack.c.l.b16 %v1556
  %v1594 = vunpack.c.l.b16 %v1557
  %v1595 = vunpack.c.l.b16 %v1558
  %v1596 = vunpack.c.l.b16 %v1559
  %v1597 = vunpack.c.l.b16 %v1560
  %v1598 = vunpack.c.l.b16 %v1561
  %v1599 = vunpack.c.l.b16 %v1562
  %v1600 = vunpack.c.l.b16 %v1563
  %v1601 = vunpack.c.l.b16 %v1564
  %v1602 = vunpack.c.l.b16 %v1565
  %v1603 = vunpack.c.l.b16 %v1566
  %v1604 = vunpack.c.l.b16 %v1567
  %v1605 = vunpack.c.l.b16 %v1568
  %v1606 = vunpack.c.l.b16 %v1569
  %v1607 = vunpack.c.l.b16 %v1570
  %v1608 = vpack.c.b16 %v1593, %v1592
  %v1609 = vpack.c.b16 %v1595, %v1594
  %v1610 = vpack.c.b16 %v1597, %v1596
  %v1611 = vpack.c.b16 %v1599, %v1598
  %v1612 = vpack.c.b16 %v1601, %v1600
  %v1613 = vpack.c.b16 %v1603, %v1602
  %v1614 = vpack.c.b16 %v1605, %v1604
  %v1615 = vpack.c.b16 %v1607, %v1606
  %v1620 = vunpack.c.l.b16 %v1572
  %v1621 = vunpack.c.l.b16 %v1573
  %v1622 = vunpack.c.l.b16 %v1574
  %v1623 = vunpack.c.l.b16 %v1575
  %v1624 = vpack.c.b16 %v1621, %v1620
  %v1625 = vpack.c.b16 %v1623, %v1622
  %v1629 = vsel %vm319, %v1608, 0
  %v1632 = vsel %vm319, %v1609, 0
  %v1635 = vsel %vm319, %v1610, 0
  %v1638 = vsel %vm319, %v1611, 0
  %v1641 = vsel %vm319, %v1612, 0
  %v1644 = vsel %vm319, %v1613, 0
  %v1647 = vsel %vm319, %v1614, 0
  %v1650 = vsel %vm319, %v1615, 0
  %1652 = vmatpush.bf16.msra.mxu0 0
  %1653 = vmatpush.bf16.msra.mxu0 0
  %1654 = vmatpush.bf16.msra.mxu0 0
  %1655 = vmatpush.bf16.msra.mxu0 0
  %1656 = vmatpush.bf16.msra.mxu0 0
  %1657 = vmatpush.bf16.msra.mxu0 0
  %1658 = vmatpush.bf16.msra.mxu0 %v1625
  %1659 = vmatpush.bf16.msra.mxu0 %v1624
  %1660 = vmatmul.bf16.gmra.mxu0 %v1629
  %v1661 = vpop.f32.mrf.mxu0
  %v1662 = vadd.f32 0.0, %v1661
  %v1663 = vpop.f32.mrf.mxu0
  %v1664 = vadd.f32 0.0, %v1663
  %1665 = vmatmul.bf16.gmra.mxu0 %v1632
  %v1666 = vpop.f32.mrf.mxu0
  %v1667 = vadd.f32 0.0, %v1666
  %v1668 = vpop.f32.mrf.mxu0
  %v1669 = vadd.f32 0.0, %v1668
  %1670 = vmatmul.bf16.gmra.mxu0 %v1635
  %v1671 = vpop.f32.mrf.mxu0
  %v1672 = vadd.f32 0.0, %v1671
  %v1673 = vpop.f32.mrf.mxu0
  %v1674 = vadd.f32 0.0, %v1673
  %1675 = vmatmul.bf16.gmra.mxu0 %v1638
  %v1676 = vpop.f32.mrf.mxu0
  %v1677 = vadd.f32 0.0, %v1676
  %v1678 = vpop.f32.mrf.mxu0
  %v1679 = vadd.f32 0.0, %v1678
  %1680 = vmatmul.bf16.gmra.mxu0 %v1641
  %v1681 = vpop.f32.mrf.mxu0
  %v1682 = vadd.f32 0.0, %v1681
  %v1683 = vpop.f32.mrf.mxu0
  %v1684 = vadd.f32 0.0, %v1683
  %1685 = vmatmul.bf16.gmra.mxu0 %v1644
  %v1686 = vpop.f32.mrf.mxu0
  %v1687 = vadd.f32 0.0, %v1686
  %v1688 = vpop.f32.mrf.mxu0
  %v1689 = vadd.f32 0.0, %v1688
  %1690 = vmatmul.bf16.gmra.mxu0 %v1647
  %v1691 = vpop.f32.mrf.mxu0
  %v1692 = vadd.f32 0.0, %v1691
  %v1693 = vpop.f32.mrf.mxu0
  %v1694 = vadd.f32 0.0, %v1693
  %1695 = vmatmul.bf16.gmra.mxu0 %v1650
  %v1696 = vpop.f32.mrf.mxu0
  %v1697 = vadd.f32 0.0, %v1696
  %v1698 = vpop.f32.mrf.mxu0
  %v1699 = vadd.f32 0.0, %v1698
  %1700 = vdwg.mxu0
  %v1701 = vadd.f32 %v1538, %v1662
  %v1702 = vadd.f32 %v1539, %v1664
  %v1703 = vadd.f32 %v1540, %v1667
  %v1704 = vadd.f32 %v1541, %v1669
  %v1705 = vadd.f32 %v1542, %v1672
  %v1706 = vadd.f32 %v1543, %v1674
  %v1707 = vadd.f32 %v1544, %v1677
  %v1708 = vadd.f32 %v1545, %v1679
  %v1709 = vadd.f32 %v1546, %v1682
  %v1710 = vadd.f32 %v1547, %v1684
  %v1711 = vadd.f32 %v1548, %v1687
  %v1712 = vadd.f32 %v1549, %v1689
  %v1713 = vadd.f32 %v1550, %v1692
  %v1714 = vadd.f32 %v1551, %v1694
  %v1715 = vadd.f32 %v1552, %v1697
  %v1716 = vadd.f32 %v1553, %v1699
  %v1717 = vld [vmem:[%s1554] sm:$0xf]
  %v1718 = vld [vmem:[%s1554 + $0x4] sm:$0x1]
  %v1719 = vld [vmem:[%s1554 + $0x8] sm:$0xf]
  %v1720 = vld [vmem:[%s1554 + $0xc] sm:$0x1]
  %v1721 = vld [vmem:[%s1554 + $0x10] sm:$0xf]
  %v1722 = vld [vmem:[%s1554 + $0x14] sm:$0x1]
  %v1723 = vld [vmem:[%s1554 + $0x18] sm:$0xf]
  %v1724 = vld [vmem:[%s1554 + $0x1c] sm:$0x1]
  %v1725 = vld [vmem:[%s1554 + $0x20] sm:$0xf]
  %v1726 = vld [vmem:[%s1554 + $0x24] sm:$0x1]
  %v1727 = vld [vmem:[%s1554 + $0x28] sm:$0xf]
  %v1728 = vld [vmem:[%s1554 + $0x2c] sm:$0x1]
  %v1729 = vld [vmem:[%s1554 + $0x30] sm:$0xf]
  %v1730 = vld [vmem:[%s1554 + $0x34] sm:$0x1]
  %v1731 = vld [vmem:[%s1554 + $0x38] sm:$0xf]
  %v1732 = vld [vmem:[%s1554 + $0x3c] sm:$0x1]
  %v1733 = vld [vmem:[%s1554 + $0x50] sm:$0xf]
  %v1734 = vld [vmem:[%s1554 + $0x54] sm:$0x1]
  %v1735 = vld [vmem:[%s1554 + $0x58] sm:$0xf]
  %v1736 = vld [vmem:[%s1554 + $0x5c] sm:$0x1]
  %v1737 = vld [vmem:[%s1554 + $0x60] sm:$0xf]
  %v1738 = vld [vmem:[%s1554 + $0x64] sm:$0x1]
  %v1739 = vld [vmem:[%s1554 + $0x68] sm:$0xf]
  %v1740 = vld [vmem:[%s1554 + $0x6c] sm:$0x1]
  %v1741 = vld [vmem:[%s1554 + $0x70] sm:$0xf]
  %v1742 = vld [vmem:[%s1554 + $0x74] sm:$0x1]
  %v1743 = vld [vmem:[%s1554 + $0x78] sm:$0xf]
  %v1744 = vld [vmem:[%s1554 + $0x7c] sm:$0x1]
  %v1745 = vld [vmem:[%s1554 + $0x80] sm:$0xf]
  %v1746 = vld [vmem:[%s1554 + $0x84] sm:$0x1]
  %v1747 = vld [vmem:[%s1554 + $0x88] sm:$0xf]
  %v1748 = vld [vmem:[%s1554 + $0x8c] sm:$0x1]
  %v1750 = vshrl.u32 %v1717, 16
  %v1752 = vrot.slane %v1750, 4
  %v1753 = vshll.u32 %v1717, 16
  %v1755 = vrot.slane %v1753, 5
  %v1756 = vor.u32 %v1752, %v1755
  %v1757 = vrot.slane %v1756, 4
  %v1759 = vshll.u32 %v1718, 16
  %v1761 = vrot.slane %v1759, 5
  %v1762 = vsel %vm53, %v1757, %v1761
  %v1764 = vshrl.u32 %v1719, 16
  %v1766 = vrot.slane %v1764, 4
  %v1767 = vshll.u32 %v1719, 16
  %v1769 = vrot.slane %v1767, 5
  %v1770 = vor.u32 %v1766, %v1769
  %v1771 = vrot.slane %v1770, 4
  %v1773 = vshll.u32 %v1720, 16
  %v1775 = vrot.slane %v1773, 5
  %v1776 = vsel %vm53, %v1771, %v1775
  %v1778 = vshrl.u32 %v1721, 16
  %v1780 = vrot.slane %v1778, 4
  %v1781 = vshll.u32 %v1721, 16
  %v1783 = vrot.slane %v1781, 5
  %v1784 = vor.u32 %v1780, %v1783
  %v1785 = vrot.slane %v1784, 4
  %v1787 = vshll.u32 %v1722, 16
  %v1789 = vrot.slane %v1787, 5
  %v1790 = vsel %vm53, %v1785, %v1789
  %v1792 = vshrl.u32 %v1723, 16
  %v1794 = vrot.slane %v1792, 4
  %v1795 = vshll.u32 %v1723, 16
  %v1797 = vrot.slane %v1795, 5
  %v1798 = vor.u32 %v1794, %v1797
  %v1799 = vrot.slane %v1798, 4
  %v1801 = vshll.u32 %v1724, 16
  %v1803 = vrot.slane %v1801, 5
  %v1804 = vsel %vm53, %v1799, %v1803
  %v1806 = vshrl.u32 %v1725, 16
  %v1808 = vrot.slane %v1806, 4
  %v1809 = vshll.u32 %v1725, 16
  %v1811 = vrot.slane %v1809, 5
  %v1812 = vor.u32 %v1808, %v1811
  %v1813 = vrot.slane %v1812, 4
  %v1815 = vshll.u32 %v1726, 16
  %v1817 = vrot.slane %v1815, 5
  %v1818 = vsel %vm53, %v1813, %v1817
  %v1820 = vshrl.u32 %v1727, 16
  %v1822 = vrot.slane %v1820, 4
  %v1823 = vshll.u32 %v1727, 16
  %v1825 = vrot.slane %v1823, 5
  %v1826 = vor.u32 %v1822, %v1825
  %v1827 = vrot.slane %v1826, 4
  %v1829 = vshll.u32 %v1728, 16
  %v1831 = vrot.slane %v1829, 5
  %v1832 = vsel %vm53, %v1827, %v1831
  %v1834 = vshrl.u32 %v1729, 16
  %v1836 = vrot.slane %v1834, 4
  %v1837 = vshll.u32 %v1729, 16
  %v1839 = vrot.slane %v1837, 5
  %v1840 = vor.u32 %v1836, %v1839
  %v1841 = vrot.slane %v1840, 4
  %v1843 = vshll.u32 %v1730, 16
  %v1845 = vrot.slane %v1843, 5
  %v1846 = vsel %vm53, %v1841, %v1845
  %v1848 = vshrl.u32 %v1731, 16
  %v1850 = vrot.slane %v1848, 4
  %v1851 = vshll.u32 %v1731, 16
  %v1853 = vrot.slane %v1851, 5
  %v1854 = vor.u32 %v1850, %v1853
  %v1855 = vrot.slane %v1854, 4
  %v1857 = vshll.u32 %v1732, 16
  %v1859 = vrot.slane %v1857, 5
  %v1860 = vsel %vm53, %v1855, %v1859
  %v1862 = vshrl.u32 %v1733, 16
  %v1864 = vrot.slane %v1862, 4
  %v1865 = vshll.u32 %v1733, 16
  %v1867 = vrot.slane %v1865, 5
  %v1868 = vor.u32 %v1864, %v1867
  %v1869 = vrot.slane %v1868, 4
  %v1871 = vshll.u32 %v1734, 16
  %v1873 = vrot.slane %v1871, 5
  %v1874 = vsel %vm53, %v1869, %v1873
  %v1876 = vshrl.u32 %v1735, 16
  %v1878 = vrot.slane %v1876, 4
  %v1879 = vshll.u32 %v1735, 16
  %v1881 = vrot.slane %v1879, 5
  %v1882 = vor.u32 %v1878, %v1881
  %v1883 = vrot.slane %v1882, 4
  %v1885 = vshll.u32 %v1736, 16
  %v1887 = vrot.slane %v1885, 5
  %v1888 = vsel %vm53, %v1883, %v1887
  %v1890 = vshrl.u32 %v1737, 16
  %v1892 = vrot.slane %v1890, 4
  %v1893 = vshll.u32 %v1737, 16
  %v1895 = vrot.slane %v1893, 5
  %v1896 = vor.u32 %v1892, %v1895
  %v1897 = vrot.slane %v1896, 4
  %v1899 = vshll.u32 %v1738, 16
  %v1901 = vrot.slane %v1899, 5
  %v1902 = vsel %vm53, %v1897, %v1901
  %v1904 = vshrl.u32 %v1739, 16
  %v1906 = vrot.slane %v1904, 4
  %v1907 = vshll.u32 %v1739, 16
  %v1909 = vrot.slane %v1907, 5
  %v1910 = vor.u32 %v1906, %v1909
  %v1911 = vrot.slane %v1910, 4
  %v1913 = vshll.u32 %v1740, 16
  %v1915 = vrot.slane %v1913, 5
  %v1916 = vsel %vm53, %v1911, %v1915
  %v1918 = vshrl.u32 %v1741, 16
  %v1920 = vrot.slane %v1918, 4
  %v1921 = vshll.u32 %v1741, 16
  %v1923 = vrot.slane %v1921, 5
  %v1924 = vor.u32 %v1920, %v1923
  %v1925 = vrot.slane %v1924, 4
  %v1927 = vshll.u32 %v1742, 16
  %v1929 = vrot.slane %v1927, 5
  %v1930 = vsel %vm53, %v1925, %v1929
  %v1932 = vshrl.u32 %v1743, 16
  %v1934 = vrot.slane %v1932, 4
  %v1935 = vshll.u32 %v1743, 16
  %v1937 = vrot.slane %v1935, 5
  %v1938 = vor.u32 %v1934, %v1937
  %v1939 = vrot.slane %v1938, 4
  %v1941 = vshll.u32 %v1744, 16
  %v1943 = vrot.slane %v1941, 5
  %v1944 = vsel %vm53, %v1939, %v1943
  %v1946 = vshrl.u32 %v1745, 16
  %v1948 = vrot.slane %v1946, 4
  %v1949 = vshll.u32 %v1745, 16
  %v1951 = vrot.slane %v1949, 5
  %v1952 = vor.u32 %v1948, %v1951
  %v1953 = vrot.slane %v1952, 4
  %v1955 = vshll.u32 %v1746, 16
  %v1957 = vrot.slane %v1955, 5
  %v1958 = vsel %vm53, %v1953, %v1957
  %v1960 = vshrl.u32 %v1747, 16
  %v1962 = vrot.slane %v1960, 4
  %v1963 = vshll.u32 %v1747, 16
  %v1965 = vrot.slane %v1963, 5
  %v1966 = vor.u32 %v1962, %v1965
  %v1967 = vrot.slane %v1966, 4
  %v1969 = vshll.u32 %v1748, 16
  %v1971 = vrot.slane %v1969, 5
  %v1972 = vsel %vm53, %v1967, %v1971
  %s1973 = scalar_lea.vmem %s1, 112
  %v1974 = vld [vmem:[%s1973] sm:$0xf]
  %v1975 = vld [vmem:[%s1973 + $0x4] sm:$0xf]
  %v1976 = vld [vmem:[%s1973 + $0x8] sm:$0xf]
  %v1977 = vld [vmem:[%s1973 + $0xc] sm:$0xf]
  %v1978 = vunpack.c.l.b16 %v1762
  %v1979 = vunpack.c.l.b16 %v1776
  %v1980 = vunpack.c.l.b16 %v1790
  %v1981 = vunpack.c.l.b16 %v1804
  %v1982 = vunpack.c.l.b16 %v1818
  %v1983 = vunpack.c.l.b16 %v1832
  %v1984 = vunpack.c.l.b16 %v1846
  %v1985 = vunpack.c.l.b16 %v1860
  %v1986 = vunpack.c.l.b16 %v1874
  %v1987 = vunpack.c.l.b16 %v1888
  %v1988 = vunpack.c.l.b16 %v1902
  %v1989 = vunpack.c.l.b16 %v1916
  %v1990 = vunpack.c.l.b16 %v1930
  %v1991 = vunpack.c.l.b16 %v1944
  %v1992 = vunpack.c.l.b16 %v1958
  %v1993 = vunpack.c.l.b16 %v1972
  %v1994 = vpack.c.b16 %v1979, %v1978
  %v1995 = vpack.c.b16 %v1981, %v1980
  %v1996 = vpack.c.b16 %v1983, %v1982
  %v1997 = vpack.c.b16 %v1985, %v1984
  %v1998 = vpack.c.b16 %v1987, %v1986
  %v1999 = vpack.c.b16 %v1989, %v1988
  %v2000 = vpack.c.b16 %v1991, %v1990
  %v2001 = vpack.c.b16 %v1993, %v1992
  %v2006 = vunpack.c.l.b16 %v1974
  %v2007 = vunpack.c.l.b16 %v1975
  %v2008 = vunpack.c.l.b16 %v1976
  %v2009 = vunpack.c.l.b16 %v1977
  %v2010 = vpack.c.b16 %v2007, %v2006
  %v2011 = vpack.c.b16 %v2009, %v2008
  %v2015 = vsel %vm319, %v1994, 0
  %v2018 = vsel %vm319, %v1995, 0
  %v2021 = vsel %vm319, %v1996, 0
  %v2024 = vsel %vm319, %v1997, 0
  %v2027 = vsel %vm319, %v1998, 0
  %v2030 = vsel %vm319, %v1999, 0
  %v2033 = vsel %vm319, %v2000, 0
  %v2036 = vsel %vm319, %v2001, 0
  %2038 = vmatpush.bf16.msra.mxu0 0
  %2039 = vmatpush.bf16.msra.mxu0 0
  %2040 = vmatpush.bf16.msra.mxu0 0
  %2041 = vmatpush.bf16.msra.mxu0 0
  %2042 = vmatpush.bf16.msra.mxu0 0
  %2043 = vmatpush.bf16.msra.mxu0 0
  %2044 = vmatpush.bf16.msra.mxu0 %v2011
  %2045 = vmatpush.bf16.msra.mxu0 %v2010
  %2046 = vmatmul.bf16.gmra.mxu0 %v2015
  %v2047 = vpop.f32.mrf.mxu0
  %v2048 = vadd.f32 0.0, %v2047
  %v2049 = vpop.f32.mrf.mxu0
  %v2050 = vadd.f32 0.0, %v2049
  %2051 = vmatmul.bf16.gmra.mxu0 %v2018
  %v2052 = vpop.f32.mrf.mxu0
  %v2053 = vadd.f32 0.0, %v2052
  %v2054 = vpop.f32.mrf.mxu0
  %v2055 = vadd.f32 0.0, %v2054
  %2056 = vmatmul.bf16.gmra.mxu0 %v2021
  %v2057 = vpop.f32.mrf.mxu0
  %v2058 = vadd.f32 0.0, %v2057
  %v2059 = vpop.f32.mrf.mxu0
  %v2060 = vadd.f32 0.0, %v2059
  %2061 = vmatmul.bf16.gmra.mxu0 %v2024
  %v2062 = vpop.f32.mrf.mxu0
  %v2063 = vadd.f32 0.0, %v2062
  %v2064 = vpop.f32.mrf.mxu0
  %v2065 = vadd.f32 0.0, %v2064
  %2066 = vmatmul.bf16.gmra.mxu0 %v2027
  %v2067 = vpop.f32.mrf.mxu0
  %v2068 = vadd.f32 0.0, %v2067
  %v2069 = vpop.f32.mrf.mxu0
  %v2070 = vadd.f32 0.0, %v2069
  %2071 = vmatmul.bf16.gmra.mxu0 %v2030
  %v2072 = vpop.f32.mrf.mxu0
  %v2073 = vadd.f32 0.0, %v2072
  %v2074 = vpop.f32.mrf.mxu0
  %v2075 = vadd.f32 0.0, %v2074
  %2076 = vmatmul.bf16.gmra.mxu0 %v2033
  %v2077 = vpop.f32.mrf.mxu0
  %v2078 = vadd.f32 0.0, %v2077
  %v2079 = vpop.f32.mrf.mxu0
  %v2080 = vadd.f32 0.0, %v2079
  %2081 = vmatmul.bf16.gmra.mxu0 %v2036
  %v2082 = vpop.f32.mrf.mxu0
  %v2083 = vadd.f32 0.0, %v2082
  %v2084 = vpop.f32.mrf.mxu0
  %v2085 = vadd.f32 0.0, %v2084
  %2086 = vdwg.mxu0
  %v2087 = vadd.f32 %v1701, %v2048
  %v2088 = vadd.f32 %v1702, %v2050
  %v2089 = vadd.f32 %v1703, %v2053
  %v2090 = vadd.f32 %v1704, %v2055
  %v2091 = vadd.f32 %v1705, %v2058
  %v2092 = vadd.f32 %v1706, %v2060
  %v2093 = vadd.f32 %v1707, %v2063
  %v2094 = vadd.f32 %v1708, %v2065
  %v2095 = vadd.f32 %v1709, %v2068
  %v2096 = vadd.f32 %v1710, %v2070
  %v2097 = vadd.f32 %v1711, %v2073
  %v2098 = vadd.f32 %v1712, %v2075
  %v2099 = vadd.f32 %v1713, %v2078
  %v2100 = vadd.f32 %v1714, %v2080
  %v2101 = vadd.f32 %v1715, %v2083
  %v2102 = vadd.f32 %v1716, %v2085
  %v2103 = vld [vmem:[%s1554] sm:$0xe]
  %v2104 = vld [vmem:[%s1554 + $0x8] sm:$0xe]
  %v2105 = vld [vmem:[%s1554 + $0x10] sm:$0xe]
  %v2106 = vld [vmem:[%s1554 + $0x18] sm:$0xe]
  %v2107 = vld [vmem:[%s1554 + $0x20] sm:$0xe]
  %v2108 = vld [vmem:[%s1554 + $0x28] sm:$0xe]
  %v2109 = vld [vmem:[%s1554 + $0x30] sm:$0xe]
  %v2110 = vld [vmem:[%s1554 + $0x38] sm:$0xe]
  %v2111 = vld [vmem:[%s1554 + $0x50] sm:$0xe]
  %v2112 = vld [vmem:[%s1554 + $0x58] sm:$0xe]
  %v2113 = vld [vmem:[%s1554 + $0x60] sm:$0xe]
  %v2114 = vld [vmem:[%s1554 + $0x68] sm:$0xe]
  %v2115 = vld [vmem:[%s1554 + $0x70] sm:$0xe]
  %v2116 = vld [vmem:[%s1554 + $0x78] sm:$0xe]
  %v2117 = vld [vmem:[%s1554 + $0x80] sm:$0xe]
  %v2118 = vld [vmem:[%s1554 + $0x88] sm:$0xe]
  %v2151 = vrot.slane %v2103, 5
  %v2152 = vrot.slane %v2151, 4
  %v2153 = vrot.slane %v1718, 5
  %v2154 = vsel %vm568, %v2152, %v2153
  %v2155 = vrot.slane %v2104, 5
  %v2156 = vrot.slane %v2155, 4
  %v2157 = vrot.slane %v1720, 5
  %v2158 = vsel %vm568, %v2156, %v2157
  %v2159 = vrot.slane %v2105, 5
  %v2160 = vrot.slane %v2159, 4
  %v2161 = vrot.slane %v1722, 5
  %v2162 = vsel %vm568, %v2160, %v2161
  %v2163 = vrot.slane %v2106, 5
  %v2164 = vrot.slane %v2163, 4
  %v2165 = vrot.slane %v1724, 5
  %v2166 = vsel %vm568, %v2164, %v2165
  %v2167 = vrot.slane %v2107, 5
  %v2168 = vrot.slane %v2167, 4
  %v2169 = vrot.slane %v1726, 5
  %v2170 = vsel %vm568, %v2168, %v2169
  %v2171 = vrot.slane %v2108, 5
  %v2172 = vrot.slane %v2171, 4
  %v2173 = vrot.slane %v1728, 5
  %v2174 = vsel %vm568, %v2172, %v2173
  %v2175 = vrot.slane %v2109, 5
  %v2176 = vrot.slane %v2175, 4
  %v2177 = vrot.slane %v1730, 5
  %v2178 = vsel %vm568, %v2176, %v2177
  %v2179 = vrot.slane %v2110, 5
  %v2180 = vrot.slane %v2179, 4
  %v2181 = vrot.slane %v1732, 5
  %v2182 = vsel %vm568, %v2180, %v2181
  %v2183 = vrot.slane %v2111, 5
  %v2184 = vrot.slane %v2183, 4
  %v2185 = vrot.slane %v1734, 5
  %v2186 = vsel %vm568, %v2184, %v2185
  %v2187 = vrot.slane %v2112, 5
  %v2188 = vrot.slane %v2187, 4
  %v2189 = vrot.slane %v1736, 5
  %v2190 = vsel %vm568, %v2188, %v2189
  %v2191 = vrot.slane %v2113, 5
  %v2192 = vrot.slane %v2191, 4
  %v2193 = vrot.slane %v1738, 5
  %v2194 = vsel %vm568, %v2192, %v2193
  %v2195 = vrot.slane %v2114, 5
  %v2196 = vrot.slane %v2195, 4
  %v2197 = vrot.slane %v1740, 5
  %v2198 = vsel %vm568, %v2196, %v2197
  %v2199 = vrot.slane %v2115, 5
  %v2200 = vrot.slane %v2199, 4
  %v2201 = vrot.slane %v1742, 5
  %v2202 = vsel %vm568, %v2200, %v2201
  %v2203 = vrot.slane %v2116, 5
  %v2204 = vrot.slane %v2203, 4
  %v2205 = vrot.slane %v1744, 5
  %v2206 = vsel %vm568, %v2204, %v2205
  %v2207 = vrot.slane %v2117, 5
  %v2208 = vrot.slane %v2207, 4
  %v2209 = vrot.slane %v1746, 5
  %v2210 = vsel %vm568, %v2208, %v2209
  %v2211 = vrot.slane %v2118, 5
  %v2212 = vrot.slane %v2211, 4
  %v2213 = vrot.slane %v1748, 5
  %v2214 = vsel %vm568, %v2212, %v2213
  %s2215 = scalar_lea.vmem %s1, 128
  %v2216 = vld [vmem:[%s2215] sm:$0xf]
  %v2217 = vld [vmem:[%s2215 + $0x4] sm:$0xf]
  %v2218 = vld [vmem:[%s2215 + $0x8] sm:$0xf]
  %v2219 = vld [vmem:[%s2215 + $0xc] sm:$0xf]
  %v2220 = vunpack.c.l.b16 %v2154
  %v2221 = vunpack.c.l.b16 %v2158
  %v2222 = vunpack.c.l.b16 %v2162
  %v2223 = vunpack.c.l.b16 %v2166
  %v2224 = vunpack.c.l.b16 %v2170
  %v2225 = vunpack.c.l.b16 %v2174
  %v2226 = vunpack.c.l.b16 %v2178
  %v2227 = vunpack.c.l.b16 %v2182
  %v2228 = vunpack.c.l.b16 %v2186
  %v2229 = vunpack.c.l.b16 %v2190
  %v2230 = vunpack.c.l.b16 %v2194
  %v2231 = vunpack.c.l.b16 %v2198
  %v2232 = vunpack.c.l.b16 %v2202
  %v2233 = vunpack.c.l.b16 %v2206
  %v2234 = vunpack.c.l.b16 %v2210
  %v2235 = vunpack.c.l.b16 %v2214
  %v2236 = vpack.c.b16 %v2221, %v2220
  %v2237 = vpack.c.b16 %v2223, %v2222
  %v2238 = vpack.c.b16 %v2225, %v2224
  %v2239 = vpack.c.b16 %v2227, %v2226
  %v2240 = vpack.c.b16 %v2229, %v2228
  %v2241 = vpack.c.b16 %v2231, %v2230
  %v2242 = vpack.c.b16 %v2233, %v2232
  %v2243 = vpack.c.b16 %v2235, %v2234
  %v2248 = vunpack.c.l.b16 %v2216
  %v2249 = vunpack.c.l.b16 %v2217
  %v2250 = vunpack.c.l.b16 %v2218
  %v2251 = vunpack.c.l.b16 %v2219
  %v2252 = vpack.c.b16 %v2249, %v2248
  %v2253 = vpack.c.b16 %v2251, %v2250
  %v2257 = vsel %vm319, %v2236, 0
  %v2260 = vsel %vm319, %v2237, 0
  %v2263 = vsel %vm319, %v2238, 0
  %v2266 = vsel %vm319, %v2239, 0
  %v2269 = vsel %vm319, %v2240, 0
  %v2272 = vsel %vm319, %v2241, 0
  %v2275 = vsel %vm319, %v2242, 0
  %v2278 = vsel %vm319, %v2243, 0
  %2280 = vmatpush.bf16.msra.mxu0 0
  %2281 = vmatpush.bf16.msra.mxu0 0
  %2282 = vmatpush.bf16.msra.mxu0 0
  %2283 = vmatpush.bf16.msra.mxu0 0
  %2284 = vmatpush.bf16.msra.mxu0 0
  %2285 = vmatpush.bf16.msra.mxu0 0
  %2286 = vmatpush.bf16.msra.mxu0 %v2253
  %2287 = vmatpush.bf16.msra.mxu0 %v2252
  %2288 = vmatmul.bf16.gmra.mxu0 %v2257
  %v2289 = vpop.f32.mrf.mxu0
  %v2290 = vadd.f32 0.0, %v2289
  %v2291 = vpop.f32.mrf.mxu0
  %v2292 = vadd.f32 0.0, %v2291
  %2293 = vmatmul.bf16.gmra.mxu0 %v2260
  %v2294 = vpop.f32.mrf.mxu0
  %v2295 = vadd.f32 0.0, %v2294
  %v2296 = vpop.f32.mrf.mxu0
  %v2297 = vadd.f32 0.0, %v2296
  %2298 = vmatmul.bf16.gmra.mxu0 %v2263
  %v2299 = vpop.f32.mrf.mxu0
  %v2300 = vadd.f32 0.0, %v2299
  %v2301 = vpop.f32.mrf.mxu0
  %v2302 = vadd.f32 0.0, %v2301
  %2303 = vmatmul.bf16.gmra.mxu0 %v2266
  %v2304 = vpop.f32.mrf.mxu0
  %v2305 = vadd.f32 0.0, %v2304
  %v2306 = vpop.f32.mrf.mxu0
  %v2307 = vadd.f32 0.0, %v2306
  %2308 = vmatmul.bf16.gmra.mxu0 %v2269
  %v2309 = vpop.f32.mrf.mxu0
  %v2310 = vadd.f32 0.0, %v2309
  %v2311 = vpop.f32.mrf.mxu0
  %v2312 = vadd.f32 0.0, %v2311
  %2313 = vmatmul.bf16.gmra.mxu0 %v2272
  %v2314 = vpop.f32.mrf.mxu0
  %v2315 = vadd.f32 0.0, %v2314
  %v2316 = vpop.f32.mrf.mxu0
  %v2317 = vadd.f32 0.0, %v2316
  %2318 = vmatmul.bf16.gmra.mxu0 %v2275
  %v2319 = vpop.f32.mrf.mxu0
  %v2320 = vadd.f32 0.0, %v2319
  %v2321 = vpop.f32.mrf.mxu0
  %v2322 = vadd.f32 0.0, %v2321
  %2323 = vmatmul.bf16.gmra.mxu0 %v2278
  %v2324 = vpop.f32.mrf.mxu0
  %v2325 = vadd.f32 0.0, %v2324
  %v2326 = vpop.f32.mrf.mxu0
  %v2327 = vadd.f32 0.0, %v2326
  %2328 = vdwg.mxu0
  %v2329 = vadd.f32 %v2087, %v2290
  %v2330 = vadd.f32 %v2088, %v2292
  %v2331 = vadd.f32 %v2089, %v2295
  %v2332 = vadd.f32 %v2090, %v2297
  %v2333 = vadd.f32 %v2091, %v2300
  %v2334 = vadd.f32 %v2092, %v2302
  %v2335 = vadd.f32 %v2093, %v2305
  %v2336 = vadd.f32 %v2094, %v2307
  %v2337 = vadd.f32 %v2095, %v2310
  %v2338 = vadd.f32 %v2096, %v2312
  %v2339 = vadd.f32 %v2097, %v2315
  %v2340 = vadd.f32 %v2098, %v2317
  %v2341 = vadd.f32 %v2099, %v2320
  %v2342 = vadd.f32 %v2100, %v2322
  %v2343 = vadd.f32 %v2101, %v2325
  %v2344 = vadd.f32 %v2102, %v2327
  %v2345 = vld [vmem:[%s2] sm:$0x1]
  %v2347 = vperm.slane %v2345, 0
  %v2349 = vadd.f32 %v2329, %v2347
  %v2350 = vadd.f32 %v2330, %v2347
  %v2351 = vadd.f32 %v2331, %v2347
  %v2352 = vadd.f32 %v2332, %v2347
  %v2353 = vadd.f32 %v2333, %v2347
  %v2354 = vadd.f32 %v2334, %v2347
  %v2355 = vadd.f32 %v2335, %v2347
  %v2356 = vadd.f32 %v2336, %v2347
  %v2357 = vadd.f32 %v2337, %v2347
  %v2358 = vadd.f32 %v2338, %v2347
  %v2359 = vadd.f32 %v2339, %v2347
  %v2360 = vadd.f32 %v2340, %v2347
  %v2361 = vadd.f32 %v2341, %v2347
  %v2362 = vadd.f32 %v2342, %v2347
  %v2363 = vadd.f32 %v2343, %v2347
  %v2364 = vadd.f32 %v2344, %v2347
  %v2365 = vsub.f32 0.0, %v2349
  %v2366 = vsub.f32 0.0, %v2350
  %v2367 = vsub.f32 0.0, %v2351
  %v2368 = vsub.f32 0.0, %v2352
  %v2369 = vsub.f32 0.0, %v2353
  %v2370 = vsub.f32 0.0, %v2354
  %v2371 = vsub.f32 0.0, %v2355
  %v2372 = vsub.f32 0.0, %v2356
  %v2373 = vsub.f32 0.0, %v2357
  %v2374 = vsub.f32 0.0, %v2358
  %v2375 = vsub.f32 0.0, %v2359
  %v2376 = vsub.f32 0.0, %v2360
  %v2377 = vsub.f32 0.0, %v2361
  %v2378 = vsub.f32 0.0, %v2362
  %v2379 = vsub.f32 0.0, %v2363
  %v2380 = vsub.f32 0.0, %v2364
  %v2381 = vmul.f32 %v2365, 1.442695
  %v2382 = vpow.pop %v2381
  %v2383 = vmul.f32 %v2366, 1.442695
  %v2384 = vpow.pop %v2383
  %v2385 = vmul.f32 %v2367, 1.442695
  %v2386 = vpow.pop %v2385
  %v2387 = vmul.f32 %v2368, 1.442695
  %v2388 = vpow.pop %v2387
  %v2389 = vmul.f32 %v2369, 1.442695
  %v2390 = vpow.pop %v2389
  %v2391 = vmul.f32 %v2370, 1.442695
  %v2392 = vpow.pop %v2391
  %v2393 = vmul.f32 %v2371, 1.442695
  %v2394 = vpow.pop %v2393
  %v2395 = vmul.f32 %v2372, 1.442695
  %v2396 = vpow.pop %v2395
  %v2397 = vmul.f32 %v2373, 1.442695
  %v2398 = vpow.pop %v2397
  %v2399 = vmul.f32 %v2374, 1.442695
  %v2400 = vpow.pop %v2399
  %v2401 = vmul.f32 %v2375, 1.442695
  %v2402 = vpow.pop %v2401
  %v2403 = vmul.f32 %v2376, 1.442695
  %v2404 = vpow.pop %v2403
  %v2405 = vmul.f32 %v2377, 1.442695
  %v2406 = vpow.pop %v2405
  %v2407 = vmul.f32 %v2378, 1.442695
  %v2408 = vpow.pop %v2407
  %v2409 = vmul.f32 %v2379, 1.442695
  %v2410 = vpow.pop %v2409
  %v2411 = vmul.f32 %v2380, 1.442695
  %v2412 = vpow.pop %v2411
  %v2413 = vadd.f32 %v2382, 1.0
  %v2414 = vadd.f32 %v2384, 1.0
  %v2415 = vadd.f32 %v2386, 1.0
  %v2416 = vadd.f32 %v2388, 1.0
  %v2417 = vadd.f32 %v2390, 1.0
  %v2418 = vadd.f32 %v2392, 1.0
  %v2419 = vadd.f32 %v2394, 1.0
  %v2420 = vadd.f32 %v2396, 1.0
  %v2421 = vadd.f32 %v2398, 1.0
  %v2422 = vadd.f32 %v2400, 1.0
  %v2423 = vadd.f32 %v2402, 1.0
  %v2424 = vadd.f32 %v2404, 1.0
  %v2425 = vadd.f32 %v2406, 1.0
  %v2426 = vadd.f32 %v2408, 1.0
  %v2427 = vadd.f32 %v2410, 1.0
  %v2428 = vadd.f32 %v2412, 1.0
  %v2429 = vrcp.pop %v2413
  %v2430 = vmul.f32 %v2413, %v2429
  %v2431 = vsub.f32 1.0, %v2430
  %v2432 = vmul.f32 %v2429, %v2431
  %v2433 = vadd.f32 %v2429, %v2432
  %vm2434 = vweird.f32 %v2413
  %vm2435 = vweird.f32 %v2429
  %vm2436 = vmor %vm2434, %vm2435
  %v2437 = vsel %vm2436, %v2429, %v2433
  %v2438 = vand.u32 2147483647, %v2413
  %vm2439 = vcmp.eq.f32.partialorder %v2438, 8.507059e+37
  %v2440 = vand.u32 %v2413, 2147483648
  %v2441 = vor.u32 1.1754944e-38, %v2440
  %v2442 = vsel %vm2439, %v2441, %v2437
  %v2443 = vmul.f32 1.0, %v2442
  %v2444 = vrcp.pop %v2414
  %v2445 = vmul.f32 %v2414, %v2444
  %v2446 = vsub.f32 1.0, %v2445
  %v2447 = vmul.f32 %v2444, %v2446
  %v2448 = vadd.f32 %v2444, %v2447
  %vm2449 = vweird.f32 %v2414
  %vm2450 = vweird.f32 %v2444
  %vm2451 = vmor %vm2449, %vm2450
  %v2452 = vsel %vm2451, %v2444, %v2448
  %v2453 = vand.u32 2147483647, %v2414
  %vm2454 = vcmp.eq.f32.partialorder %v2453, 8.507059e+37
  %v2455 = vand.u32 %v2414, 2147483648
  %v2456 = vor.u32 1.1754944e-38, %v2455
  %v2457 = vsel %vm2454, %v2456, %v2452
  %v2458 = vmul.f32 1.0, %v2457
  %v2459 = vrcp.pop %v2415
  %v2460 = vmul.f32 %v2415, %v2459
  %v2461 = vsub.f32 1.0, %v2460
  %v2462 = vmul.f32 %v2459, %v2461
  %v2463 = vadd.f32 %v2459, %v2462
  %vm2464 = vweird.f32 %v2415
  %vm2465 = vweird.f32 %v2459
  %vm2466 = vmor %vm2464, %vm2465
  %v2467 = vsel %vm2466, %v2459, %v2463
  %v2468 = vand.u32 2147483647, %v2415
  %vm2469 = vcmp.eq.f32.partialorder %v2468, 8.507059e+37
  %v2470 = vand.u32 %v2415, 2147483648
  %v2471 = vor.u32 1.1754944e-38, %v2470
  %v2472 = vsel %vm2469, %v2471, %v2467
  %v2473 = vmul.f32 1.0, %v2472
  %v2474 = vrcp.pop %v2416
  %v2475 = vmul.f32 %v2416, %v2474
  %v2476 = vsub.f32 1.0, %v2475
  %v2477 = vmul.f32 %v2474, %v2476
  %v2478 = vadd.f32 %v2474, %v2477
  %vm2479 = vweird.f32 %v2416
  %vm2480 = vweird.f32 %v2474
  %vm2481 = vmor %vm2479, %vm2480
  %v2482 = vsel %vm2481, %v2474, %v2478
  %v2483 = vand.u32 2147483647, %v2416
  %vm2484 = vcmp.eq.f32.partialorder %v2483, 8.507059e+37
  %v2485 = vand.u32 %v2416, 2147483648
  %v2486 = vor.u32 1.1754944e-38, %v2485
  %v2487 = vsel %vm2484, %v2486, %v2482
  %v2488 = vmul.f32 1.0, %v2487
  %v2489 = vrcp.pop %v2417
  %v2490 = vmul.f32 %v2417, %v2489
  %v2491 = vsub.f32 1.0, %v2490
  %v2492 = vmul.f32 %v2489, %v2491
  %v2493 = vadd.f32 %v2489, %v2492
  %vm2494 = vweird.f32 %v2417
  %vm2495 = vweird.f32 %v2489
  %vm2496 = vmor %vm2494, %vm2495
  %v2497 = vsel %vm2496, %v2489, %v2493
  %v2498 = vand.u32 2147483647, %v2417
  %vm2499 = vcmp.eq.f32.partialorder %v2498, 8.507059e+37
  %v2500 = vand.u32 %v2417, 2147483648
  %v2501 = vor.u32 1.1754944e-38, %v2500
  %v2502 = vsel %vm2499, %v2501, %v2497
  %v2503 = vmul.f32 1.0, %v2502
  %v2504 = vrcp.pop %v2418
  %v2505 = vmul.f32 %v2418, %v2504
  %v2506 = vsub.f32 1.0, %v2505
  %v2507 = vmul.f32 %v2504, %v2506
  %v2508 = vadd.f32 %v2504, %v2507
  %vm2509 = vweird.f32 %v2418
  %vm2510 = vweird.f32 %v2504
  %vm2511 = vmor %vm2509, %vm2510
  %v2512 = vsel %vm2511, %v2504, %v2508
  %v2513 = vand.u32 2147483647, %v2418
  %vm2514 = vcmp.eq.f32.partialorder %v2513, 8.507059e+37
  %v2515 = vand.u32 %v2418, 2147483648
  %v2516 = vor.u32 1.1754944e-38, %v2515
  %v2517 = vsel %vm2514, %v2516, %v2512
  %v2518 = vmul.f32 1.0, %v2517
  %v2519 = vrcp.pop %v2419
  %v2520 = vmul.f32 %v2419, %v2519
  %v2521 = vsub.f32 1.0, %v2520
  %v2522 = vmul.f32 %v2519, %v2521
  %v2523 = vadd.f32 %v2519, %v2522
  %vm2524 = vweird.f32 %v2419
  %vm2525 = vweird.f32 %v2519
  %vm2526 = vmor %vm2524, %vm2525
  %v2527 = vsel %vm2526, %v2519, %v2523
  %v2528 = vand.u32 2147483647, %v2419
  %vm2529 = vcmp.eq.f32.partialorder %v2528, 8.507059e+37
  %v2530 = vand.u32 %v2419, 2147483648
  %v2531 = vor.u32 1.1754944e-38, %v2530
  %v2532 = vsel %vm2529, %v2531, %v2527
  %v2533 = vmul.f32 1.0, %v2532
  %v2534 = vrcp.pop %v2420
  %v2535 = vmul.f32 %v2420, %v2534
  %v2536 = vsub.f32 1.0, %v2535
  %v2537 = vmul.f32 %v2534, %v2536
  %v2538 = vadd.f32 %v2534, %v2537
  %vm2539 = vweird.f32 %v2420
  %vm2540 = vweird.f32 %v2534
  %vm2541 = vmor %vm2539, %vm2540
  %v2542 = vsel %vm2541, %v2534, %v2538
  %v2543 = vand.u32 2147483647, %v2420
  %vm2544 = vcmp.eq.f32.partialorder %v2543, 8.507059e+37
  %v2545 = vand.u32 %v2420, 2147483648
  %v2546 = vor.u32 1.1754944e-38, %v2545
  %v2547 = vsel %vm2544, %v2546, %v2542
  %v2548 = vmul.f32 1.0, %v2547
  %v2549 = vrcp.pop %v2421
  %v2550 = vmul.f32 %v2421, %v2549
  %v2551 = vsub.f32 1.0, %v2550
  %v2552 = vmul.f32 %v2549, %v2551
  %v2553 = vadd.f32 %v2549, %v2552
  %vm2554 = vweird.f32 %v2421
  %vm2555 = vweird.f32 %v2549
  %vm2556 = vmor %vm2554, %vm2555
  %v2557 = vsel %vm2556, %v2549, %v2553
  %v2558 = vand.u32 2147483647, %v2421
  %vm2559 = vcmp.eq.f32.partialorder %v2558, 8.507059e+37
  %v2560 = vand.u32 %v2421, 2147483648
  %v2561 = vor.u32 1.1754944e-38, %v2560
  %v2562 = vsel %vm2559, %v2561, %v2557
  %v2563 = vmul.f32 1.0, %v2562
  %v2564 = vrcp.pop %v2422
  %v2565 = vmul.f32 %v2422, %v2564
  %v2566 = vsub.f32 1.0, %v2565
  %v2567 = vmul.f32 %v2564, %v2566
  %v2568 = vadd.f32 %v2564, %v2567
  %vm2569 = vweird.f32 %v2422
  %vm2570 = vweird.f32 %v2564
  %vm2571 = vmor %vm2569, %vm2570
  %v2572 = vsel %vm2571, %v2564, %v2568
  %v2573 = vand.u32 2147483647, %v2422
  %vm2574 = vcmp.eq.f32.partialorder %v2573, 8.507059e+37
  %v2575 = vand.u32 %v2422, 2147483648
  %v2576 = vor.u32 1.1754944e-38, %v2575
  %v2577 = vsel %vm2574, %v2576, %v2572
  %v2578 = vmul.f32 1.0, %v2577
  %v2579 = vrcp.pop %v2423
  %v2580 = vmul.f32 %v2423, %v2579
  %v2581 = vsub.f32 1.0, %v2580
  %v2582 = vmul.f32 %v2579, %v2581
  %v2583 = vadd.f32 %v2579, %v2582
  %vm2584 = vweird.f32 %v2423
  %vm2585 = vweird.f32 %v2579
  %vm2586 = vmor %vm2584, %vm2585
  %v2587 = vsel %vm2586, %v2579, %v2583
  %v2588 = vand.u32 2147483647, %v2423
  %vm2589 = vcmp.eq.f32.partialorder %v2588, 8.507059e+37
  %v2590 = vand.u32 %v2423, 2147483648
  %v2591 = vor.u32 1.1754944e-38, %v2590
  %v2592 = vsel %vm2589, %v2591, %v2587
  %v2593 = vmul.f32 1.0, %v2592
  %v2594 = vrcp.pop %v2424
  %v2595 = vmul.f32 %v2424, %v2594
  %v2596 = vsub.f32 1.0, %v2595
  %v2597 = vmul.f32 %v2594, %v2596
  %v2598 = vadd.f32 %v2594, %v2597
  %vm2599 = vweird.f32 %v2424
  %vm2600 = vweird.f32 %v2594
  %vm2601 = vmor %vm2599, %vm2600
  %v2602 = vsel %vm2601, %v2594, %v2598
  %v2603 = vand.u32 2147483647, %v2424
  %vm2604 = vcmp.eq.f32.partialorder %v2603, 8.507059e+37
  %v2605 = vand.u32 %v2424, 2147483648
  %v2606 = vor.u32 1.1754944e-38, %v2605
  %v2607 = vsel %vm2604, %v2606, %v2602
  %v2608 = vmul.f32 1.0, %v2607
  %v2609 = vrcp.pop %v2425
  %v2610 = vmul.f32 %v2425, %v2609
  %v2611 = vsub.f32 1.0, %v2610
  %v2612 = vmul.f32 %v2609, %v2611
  %v2613 = vadd.f32 %v2609, %v2612
  %vm2614 = vweird.f32 %v2425
  %vm2615 = vweird.f32 %v2609
  %vm2616 = vmor %vm2614, %vm2615
  %v2617 = vsel %vm2616, %v2609, %v2613
  %v2618 = vand.u32 2147483647, %v2425
  %vm2619 = vcmp.eq.f32.partialorder %v2618, 8.507059e+37
  %v2620 = vand.u32 %v2425, 2147483648
  %v2621 = vor.u32 1.1754944e-38, %v2620
  %v2622 = vsel %vm2619, %v2621, %v2617
  %v2623 = vmul.f32 1.0, %v2622
  %v2624 = vrcp.pop %v2426
  %v2625 = vmul.f32 %v2426, %v2624
  %v2626 = vsub.f32 1.0, %v2625
  %v2627 = vmul.f32 %v2624, %v2626
  %v2628 = vadd.f32 %v2624, %v2627
  %vm2629 = vweird.f32 %v2426
  %vm2630 = vweird.f32 %v2624
  %vm2631 = vmor %vm2629, %vm2630
  %v2632 = vsel %vm2631, %v2624, %v2628
  %v2633 = vand.u32 2147483647, %v2426
  %vm2634 = vcmp.eq.f32.partialorder %v2633, 8.507059e+37
  %v2635 = vand.u32 %v2426, 2147483648
  %v2636 = vor.u32 1.1754944e-38, %v2635
  %v2637 = vsel %vm2634, %v2636, %v2632
  %v2638 = vmul.f32 1.0, %v2637
  %v2639 = vrcp.pop %v2427
  %v2640 = vmul.f32 %v2427, %v2639
  %v2641 = vsub.f32 1.0, %v2640
  %v2642 = vmul.f32 %v2639, %v2641
  %v2643 = vadd.f32 %v2639, %v2642
  %vm2644 = vweird.f32 %v2427
  %vm2645 = vweird.f32 %v2639
  %vm2646 = vmor %vm2644, %vm2645
  %v2647 = vsel %vm2646, %v2639, %v2643
  %v2648 = vand.u32 2147483647, %v2427
  %vm2649 = vcmp.eq.f32.partialorder %v2648, 8.507059e+37
  %v2650 = vand.u32 %v2427, 2147483648
  %v2651 = vor.u32 1.1754944e-38, %v2650
  %v2652 = vsel %vm2649, %v2651, %v2647
  %v2653 = vmul.f32 1.0, %v2652
  %v2654 = vrcp.pop %v2428
  %v2655 = vmul.f32 %v2428, %v2654
  %v2656 = vsub.f32 1.0, %v2655
  %v2657 = vmul.f32 %v2654, %v2656
  %v2658 = vadd.f32 %v2654, %v2657
  %vm2659 = vweird.f32 %v2428
  %vm2660 = vweird.f32 %v2654
  %vm2661 = vmor %vm2659, %vm2660
  %v2662 = vsel %vm2661, %v2654, %v2658
  %v2663 = vand.u32 2147483647, %v2428
  %vm2664 = vcmp.eq.f32.partialorder %v2663, 8.507059e+37
  %v2665 = vand.u32 %v2428, 2147483648
  %v2666 = vor.u32 1.1754944e-38, %v2665
  %v2667 = vsel %vm2664, %v2666, %v2662
  %v2668 = vmul.f32 1.0, %v2667
  %v2669 = vmul.f32 %v2349, %v2443
  %v2670 = vmul.f32 %v2350, %v2458
  %v2671 = vmul.f32 %v2351, %v2473
  %v2672 = vmul.f32 %v2352, %v2488
  %v2673 = vmul.f32 %v2353, %v2503
  %v2674 = vmul.f32 %v2354, %v2518
  %v2675 = vmul.f32 %v2355, %v2533
  %v2676 = vmul.f32 %v2356, %v2548
  %v2677 = vmul.f32 %v2357, %v2563
  %v2678 = vmul.f32 %v2358, %v2578
  %v2679 = vmul.f32 %v2359, %v2593
  %v2680 = vmul.f32 %v2360, %v2608
  %v2681 = vmul.f32 %v2361, %v2623
  %v2682 = vmul.f32 %v2362, %v2638
  %v2683 = vmul.f32 %v2363, %v2653
  %v2684 = vmul.f32 %v2364, %v2668
  %v2701 = vrot.slane %v2669, 2
  %v2702 = vrot.slane %v2669, 4
  %v2703 = vrot.slane %v2669, 6
  %v2704 = vrot.slane %v2670, 2
  %v2705 = vrot.slane %v2670, 4
  %v2706 = vrot.slane %v2670, 6
  %v2707 = vrot.slane %v2671, 2
  %v2708 = vrot.slane %v2671, 4
  %v2709 = vrot.slane %v2671, 6
  %v2710 = vrot.slane %v2672, 2
  %v2711 = vrot.slane %v2672, 4
  %v2712 = vrot.slane %v2672, 6
  %v2713 = vrot.slane %v2673, 2
  %v2714 = vrot.slane %v2673, 4
  %v2715 = vrot.slane %v2673, 6
  %v2716 = vrot.slane %v2674, 2
  %v2717 = vrot.slane %v2674, 4
  %v2718 = vrot.slane %v2674, 6
  %v2719 = vrot.slane %v2675, 2
  %v2720 = vrot.slane %v2675, 4
  %v2721 = vrot.slane %v2675, 6
  %v2722 = vrot.slane %v2676, 2
  %v2723 = vrot.slane %v2676, 4
  %v2724 = vrot.slane %v2676, 6
  %v2725 = vrot.slane %v2677, 2
  %v2726 = vrot.slane %v2677, 4
  %v2727 = vrot.slane %v2677, 6
  %v2728 = vrot.slane %v2678, 2
  %v2729 = vrot.slane %v2678, 4
  %v2730 = vrot.slane %v2678, 6
  %v2731 = vrot.slane %v2679, 2
  %v2732 = vrot.slane %v2679, 4
  %v2733 = vrot.slane %v2679, 6
  %v2734 = vrot.slane %v2680, 2
  %v2735 = vrot.slane %v2680, 4
  %v2736 = vrot.slane %v2680, 6
  %v2737 = vrot.slane %v2681, 2
  %v2738 = vrot.slane %v2681, 4
  %v2739 = vrot.slane %v2681, 6
  %v2740 = vrot.slane %v2682, 2
  %v2741 = vrot.slane %v2682, 4
  %v2742 = vrot.slane %v2682, 6
  %v2743 = vrot.slane %v2683, 2
  %v2744 = vrot.slane %v2683, 4
  %v2745 = vrot.slane %v2683, 6
  %v2746 = vrot.slane %v2684, 2
  %v2747 = vrot.slane %v2684, 4
  %v2748 = vrot.slane %v2684, 6
  %vm2797 = vcmask 517120
  %v2798 = vsel %vm2797, %v2669, -inf
  %v2799 = vrot.slane %v2798, 4
  %v2800 = vmax.f32 %v2798, %v2799
  %v2801 = vrot.slane %v2800, 2
  %v2802 = vmax.f32 %v2800, %v2801
  %v2803 = vrot.slane %v2802, 1
  %v2804 = vmax.f32 %v2802, %v2803
  %v2805 = vsel %vm2797, %v2701, -inf
  %v2806 = vrot.slane %v2805, 4
  %v2807 = vmax.f32 %v2805, %v2806
  %v2808 = vrot.slane %v2807, 2
  %v2809 = vmax.f32 %v2807, %v2808
  %v2810 = vrot.slane %v2809, 1
  %v2811 = vmax.f32 %v2809, %v2810
  %v2812 = vsel %vm2797, %v2702, -inf
  %v2813 = vrot.slane %v2812, 4
  %v2814 = vmax.f32 %v2812, %v2813
  %v2815 = vrot.slane %v2814, 2
  %v2816 = vmax.f32 %v2814, %v2815
  %v2817 = vrot.slane %v2816, 1
  %v2818 = vmax.f32 %v2816, %v2817
  %v2819 = vsel %vm2797, %v2703, -inf
  %v2820 = vrot.slane %v2819, 4
  %v2821 = vmax.f32 %v2819, %v2820
  %v2822 = vrot.slane %v2821, 2
  %v2823 = vmax.f32 %v2821, %v2822
  %v2824 = vrot.slane %v2823, 1
  %v2825 = vmax.f32 %v2823, %v2824
  %v2826 = vsel %vm2797, %v2670, -inf
  %v2827 = vrot.slane %v2826, 4
  %v2828 = vmax.f32 %v2826, %v2827
  %v2829 = vrot.slane %v2828, 2
  %v2830 = vmax.f32 %v2828, %v2829
  %v2831 = vrot.slane %v2830, 1
  %v2832 = vmax.f32 %v2830, %v2831
  %v2833 = vsel %vm2797, %v2704, -inf
  %v2834 = vrot.slane %v2833, 4
  %v2835 = vmax.f32 %v2833, %v2834
  %v2836 = vrot.slane %v2835, 2
  %v2837 = vmax.f32 %v2835, %v2836
  %v2838 = vrot.slane %v2837, 1
  %v2839 = vmax.f32 %v2837, %v2838
  %v2840 = vsel %vm2797, %v2705, -inf
  %v2841 = vrot.slane %v2840, 4
  %v2842 = vmax.f32 %v2840, %v2841
  %v2843 = vrot.slane %v2842, 2
  %v2844 = vmax.f32 %v2842, %v2843
  %v2845 = vrot.slane %v2844, 1
  %v2846 = vmax.f32 %v2844, %v2845
  %v2847 = vsel %vm2797, %v2706, -inf
  %v2848 = vrot.slane %v2847, 4
  %v2849 = vmax.f32 %v2847, %v2848
  %v2850 = vrot.slane %v2849, 2
  %v2851 = vmax.f32 %v2849, %v2850
  %v2852 = vrot.slane %v2851, 1
  %v2853 = vmax.f32 %v2851, %v2852
  %v2854 = vsel %vm2797, %v2671, -inf
  %v2855 = vrot.slane %v2854, 4
  %v2856 = vmax.f32 %v2854, %v2855
  %v2857 = vrot.slane %v2856, 2
  %v2858 = vmax.f32 %v2856, %v2857
  %v2859 = vrot.slane %v2858, 1
  %v2860 = vmax.f32 %v2858, %v2859
  %v2861 = vsel %vm2797, %v2707, -inf
  %v2862 = vrot.slane %v2861, 4
  %v2863 = vmax.f32 %v2861, %v2862
  %v2864 = vrot.slane %v2863, 2
  %v2865 = vmax.f32 %v2863, %v2864
  %v2866 = vrot.slane %v2865, 1
  %v2867 = vmax.f32 %v2865, %v2866
  %v2868 = vsel %vm2797, %v2708, -inf
  %v2869 = vrot.slane %v2868, 4
  %v2870 = vmax.f32 %v2868, %v2869
  %v2871 = vrot.slane %v2870, 2
  %v2872 = vmax.f32 %v2870, %v2871
  %v2873 = vrot.slane %v2872, 1
  %v2874 = vmax.f32 %v2872, %v2873
  %v2875 = vsel %vm2797, %v2709, -inf
  %v2876 = vrot.slane %v2875, 4
  %v2877 = vmax.f32 %v2875, %v2876
  %v2878 = vrot.slane %v2877, 2
  %v2879 = vmax.f32 %v2877, %v2878
  %v2880 = vrot.slane %v2879, 1
  %v2881 = vmax.f32 %v2879, %v2880
  %v2882 = vsel %vm2797, %v2672, -inf
  %v2883 = vrot.slane %v2882, 4
  %v2884 = vmax.f32 %v2882, %v2883
  %v2885 = vrot.slane %v2884, 2
  %v2886 = vmax.f32 %v2884, %v2885
  %v2887 = vrot.slane %v2886, 1
  %v2888 = vmax.f32 %v2886, %v2887
  %v2889 = vsel %vm2797, %v2710, -inf
  %v2890 = vrot.slane %v2889, 4
  %v2891 = vmax.f32 %v2889, %v2890
  %v2892 = vrot.slane %v2891, 2
  %v2893 = vmax.f32 %v2891, %v2892
  %v2894 = vrot.slane %v2893, 1
  %v2895 = vmax.f32 %v2893, %v2894
  %v2896 = vsel %vm2797, %v2711, -inf
  %v2897 = vrot.slane %v2896, 4
  %v2898 = vmax.f32 %v2896, %v2897
  %v2899 = vrot.slane %v2898, 2
  %v2900 = vmax.f32 %v2898, %v2899
  %v2901 = vrot.slane %v2900, 1
  %v2902 = vmax.f32 %v2900, %v2901
  %v2903 = vsel %vm2797, %v2712, -inf
  %v2904 = vrot.slane %v2903, 4
  %v2905 = vmax.f32 %v2903, %v2904
  %v2906 = vrot.slane %v2905, 2
  %v2907 = vmax.f32 %v2905, %v2906
  %v2908 = vrot.slane %v2907, 1
  %v2909 = vmax.f32 %v2907, %v2908
  %v2910 = vsel %vm2797, %v2673, -inf
  %v2911 = vrot.slane %v2910, 4
  %v2912 = vmax.f32 %v2910, %v2911
  %v2913 = vrot.slane %v2912, 2
  %v2914 = vmax.f32 %v2912, %v2913
  %v2915 = vrot.slane %v2914, 1
  %v2916 = vmax.f32 %v2914, %v2915
  %v2917 = vsel %vm2797, %v2713, -inf
  %v2918 = vrot.slane %v2917, 4
  %v2919 = vmax.f32 %v2917, %v2918
  %v2920 = vrot.slane %v2919, 2
  %v2921 = vmax.f32 %v2919, %v2920
  %v2922 = vrot.slane %v2921, 1
  %v2923 = vmax.f32 %v2921, %v2922
  %v2924 = vsel %vm2797, %v2714, -inf
  %v2925 = vrot.slane %v2924, 4
  %v2926 = vmax.f32 %v2924, %v2925
  %v2927 = vrot.slane %v2926, 2
  %v2928 = vmax.f32 %v2926, %v2927
  %v2929 = vrot.slane %v2928, 1
  %v2930 = vmax.f32 %v2928, %v2929
  %v2931 = vsel %vm2797, %v2715, -inf
  %v2932 = vrot.slane %v2931, 4
  %v2933 = vmax.f32 %v2931, %v2932
  %v2934 = vrot.slane %v2933, 2
  %v2935 = vmax.f32 %v2933, %v2934
  %v2936 = vrot.slane %v2935, 1
  %v2937 = vmax.f32 %v2935, %v2936
  %v2938 = vsel %vm2797, %v2674, -inf
  %v2939 = vrot.slane %v2938, 4
  %v2940 = vmax.f32 %v2938, %v2939
  %v2941 = vrot.slane %v2940, 2
  %v2942 = vmax.f32 %v2940, %v2941
  %v2943 = vrot.slane %v2942, 1
  %v2944 = vmax.f32 %v2942, %v2943
  %v2945 = vsel %vm2797, %v2716, -inf
  %v2946 = vrot.slane %v2945, 4
  %v2947 = vmax.f32 %v2945, %v2946
  %v2948 = vrot.slane %v2947, 2
  %v2949 = vmax.f32 %v2947, %v2948
  %v2950 = vrot.slane %v2949, 1
  %v2951 = vmax.f32 %v2949, %v2950
  %v2952 = vsel %vm2797, %v2717, -inf
  %v2953 = vrot.slane %v2952, 4
  %v2954 = vmax.f32 %v2952, %v2953
  %v2955 = vrot.slane %v2954, 2
  %v2956 = vmax.f32 %v2954, %v2955
  %v2957 = vrot.slane %v2956, 1
  %v2958 = vmax.f32 %v2956, %v2957
  %v2959 = vsel %vm2797, %v2718, -inf
  %v2960 = vrot.slane %v2959, 4
  %v2961 = vmax.f32 %v2959, %v2960
  %v2962 = vrot.slane %v2961, 2
  %v2963 = vmax.f32 %v2961, %v2962
  %v2964 = vrot.slane %v2963, 1
  %v2965 = vmax.f32 %v2963, %v2964
  %v2966 = vsel %vm2797, %v2675, -inf
  %v2967 = vrot.slane %v2966, 4
  %v2968 = vmax.f32 %v2966, %v2967
  %v2969 = vrot.slane %v2968, 2
  %v2970 = vmax.f32 %v2968, %v2969
  %v2971 = vrot.slane %v2970, 1
  %v2972 = vmax.f32 %v2970, %v2971
  %v2973 = vsel %vm2797, %v2719, -inf
  %v2974 = vrot.slane %v2973, 4
  %v2975 = vmax.f32 %v2973, %v2974
  %v2976 = vrot.slane %v2975, 2
  %v2977 = vmax.f32 %v2975, %v2976
  %v2978 = vrot.slane %v2977, 1
  %v2979 = vmax.f32 %v2977, %v2978
  %v2980 = vsel %vm2797, %v2720, -inf
  %v2981 = vrot.slane %v2980, 4
  %v2982 = vmax.f32 %v2980, %v2981
  %v2983 = vrot.slane %v2982, 2
  %v2984 = vmax.f32 %v2982, %v2983
  %v2985 = vrot.slane %v2984, 1
  %v2986 = vmax.f32 %v2984, %v2985
  %v2987 = vsel %vm2797, %v2721, -inf
  %v2988 = vrot.slane %v2987, 4
  %v2989 = vmax.f32 %v2987, %v2988
  %v2990 = vrot.slane %v2989, 2
  %v2991 = vmax.f32 %v2989, %v2990
  %v2992 = vrot.slane %v2991, 1
  %v2993 = vmax.f32 %v2991, %v2992
  %v2994 = vsel %vm2797, %v2676, -inf
  %v2995 = vrot.slane %v2994, 4
  %v2996 = vmax.f32 %v2994, %v2995
  %v2997 = vrot.slane %v2996, 2
  %v2998 = vmax.f32 %v2996, %v2997
  %v2999 = vrot.slane %v2998, 1
  %v3000 = vmax.f32 %v2998, %v2999
  %v3001 = vsel %vm2797, %v2722, -inf
  %v3002 = vrot.slane %v3001, 4
  %v3003 = vmax.f32 %v3001, %v3002
  %v3004 = vrot.slane %v3003, 2
  %v3005 = vmax.f32 %v3003, %v3004
  %v3006 = vrot.slane %v3005, 1
  %v3007 = vmax.f32 %v3005, %v3006
  %v3008 = vsel %vm2797, %v2723, -inf
  %v3009 = vrot.slane %v3008, 4
  %v3010 = vmax.f32 %v3008, %v3009
  %v3011 = vrot.slane %v3010, 2
  %v3012 = vmax.f32 %v3010, %v3011
  %v3013 = vrot.slane %v3012, 1
  %v3014 = vmax.f32 %v3012, %v3013
  %v3015 = vsel %vm2797, %v2724, -inf
  %v3016 = vrot.slane %v3015, 4
  %v3017 = vmax.f32 %v3015, %v3016
  %v3018 = vrot.slane %v3017, 2
  %v3019 = vmax.f32 %v3017, %v3018
  %v3020 = vrot.slane %v3019, 1
  %v3021 = vmax.f32 %v3019, %v3020
  %v3022 = vsel %vm2797, %v2677, -inf
  %v3023 = vrot.slane %v3022, 4
  %v3024 = vmax.f32 %v3022, %v3023
  %v3025 = vrot.slane %v3024, 2
  %v3026 = vmax.f32 %v3024, %v3025
  %v3027 = vrot.slane %v3026, 1
  %v3028 = vmax.f32 %v3026, %v3027
  %v3029 = vsel %vm2797, %v2725, -inf
  %v3030 = vrot.slane %v3029, 4
  %v3031 = vmax.f32 %v3029, %v3030
  %v3032 = vrot.slane %v3031, 2
  %v3033 = vmax.f32 %v3031, %v3032
  %v3034 = vrot.slane %v3033, 1
  %v3035 = vmax.f32 %v3033, %v3034
  %v3036 = vsel %vm2797, %v2726, -inf
  %v3037 = vrot.slane %v3036, 4
  %v3038 = vmax.f32 %v3036, %v3037
  %v3039 = vrot.slane %v3038, 2
  %v3040 = vmax.f32 %v3038, %v3039
  %v3041 = vrot.slane %v3040, 1
  %v3042 = vmax.f32 %v3040, %v3041
  %v3043 = vsel %vm2797, %v2727, -inf
  %v3044 = vrot.slane %v3043, 4
  %v3045 = vmax.f32 %v3043, %v3044
  %v3046 = vrot.slane %v3045, 2
  %v3047 = vmax.f32 %v3045, %v3046
  %v3048 = vrot.slane %v3047, 1
  %v3049 = vmax.f32 %v3047, %v3048
  %v3050 = vsel %vm2797, %v2678, -inf
  %v3051 = vrot.slane %v3050, 4
  %v3052 = vmax.f32 %v3050, %v3051
  %v3053 = vrot.slane %v3052, 2
  %v3054 = vmax.f32 %v3052, %v3053
  %v3055 = vrot.slane %v3054, 1
  %v3056 = vmax.f32 %v3054, %v3055
  %v3057 = vsel %vm2797, %v2728, -inf
  %v3058 = vrot.slane %v3057, 4
  %v3059 = vmax.f32 %v3057, %v3058
  %v3060 = vrot.slane %v3059, 2
  %v3061 = vmax.f32 %v3059, %v3060
  %v3062 = vrot.slane %v3061, 1
  %v3063 = vmax.f32 %v3061, %v3062
  %v3064 = vsel %vm2797, %v2729, -inf
  %v3065 = vrot.slane %v3064, 4
  %v3066 = vmax.f32 %v3064, %v3065
  %v3067 = vrot.slane %v3066, 2
  %v3068 = vmax.f32 %v3066, %v3067
  %v3069 = vrot.slane %v3068, 1
  %v3070 = vmax.f32 %v3068, %v3069
  %v3071 = vsel %vm2797, %v2730, -inf
  %v3072 = vrot.slane %v3071, 4
  %v3073 = vmax.f32 %v3071, %v3072
  %v3074 = vrot.slane %v3073, 2
  %v3075 = vmax.f32 %v3073, %v3074
  %v3076 = vrot.slane %v3075, 1
  %v3077 = vmax.f32 %v3075, %v3076
  %v3078 = vsel %vm2797, %v2679, -inf
  %v3079 = vrot.slane %v3078, 4
  %v3080 = vmax.f32 %v3078, %v3079
  %v3081 = vrot.slane %v3080, 2
  %v3082 = vmax.f32 %v3080, %v3081
  %v3083 = vrot.slane %v3082, 1
  %v3084 = vmax.f32 %v3082, %v3083
  %v3085 = vsel %vm2797, %v2731, -inf
  %v3086 = vrot.slane %v3085, 4
  %v3087 = vmax.f32 %v3085, %v3086
  %v3088 = vrot.slane %v3087, 2
  %v3089 = vmax.f32 %v3087, %v3088
  %v3090 = vrot.slane %v3089, 1
  %v3091 = vmax.f32 %v3089, %v3090
  %v3092 = vsel %vm2797, %v2732, -inf
  %v3093 = vrot.slane %v3092, 4
  %v3094 = vmax.f32 %v3092, %v3093
  %v3095 = vrot.slane %v3094, 2
  %v3096 = vmax.f32 %v3094, %v3095
  %v3097 = vrot.slane %v3096, 1
  %v3098 = vmax.f32 %v3096, %v3097
  %v3099 = vsel %vm2797, %v2733, -inf
  %v3100 = vrot.slane %v3099, 4
  %v3101 = vmax.f32 %v3099, %v3100
  %v3102 = vrot.slane %v3101, 2
  %v3103 = vmax.f32 %v3101, %v3102
  %v3104 = vrot.slane %v3103, 1
  %v3105 = vmax.f32 %v3103, %v3104
  %v3106 = vsel %vm2797, %v2680, -inf
  %v3107 = vrot.slane %v3106, 4
  %v3108 = vmax.f32 %v3106, %v3107
  %v3109 = vrot.slane %v3108, 2
  %v3110 = vmax.f32 %v3108, %v3109
  %v3111 = vrot.slane %v3110, 1
  %v3112 = vmax.f32 %v3110, %v3111
  %v3113 = vsel %vm2797, %v2734, -inf
  %v3114 = vrot.slane %v3113, 4
  %v3115 = vmax.f32 %v3113, %v3114
  %v3116 = vrot.slane %v3115, 2
  %v3117 = vmax.f32 %v3115, %v3116
  %v3118 = vrot.slane %v3117, 1
  %v3119 = vmax.f32 %v3117, %v3118
  %v3120 = vsel %vm2797, %v2735, -inf
  %v3121 = vrot.slane %v3120, 4
  %v3122 = vmax.f32 %v3120, %v3121
  %v3123 = vrot.slane %v3122, 2
  %v3124 = vmax.f32 %v3122, %v3123
  %v3125 = vrot.slane %v3124, 1
  %v3126 = vmax.f32 %v3124, %v3125
  %v3127 = vsel %vm2797, %v2736, -inf
  %v3128 = vrot.slane %v3127, 4
  %v3129 = vmax.f32 %v3127, %v3128
  %v3130 = vrot.slane %v3129, 2
  %v3131 = vmax.f32 %v3129, %v3130
  %v3132 = vrot.slane %v3131, 1
  %v3133 = vmax.f32 %v3131, %v3132
  %v3134 = vsel %vm2797, %v2681, -inf
  %v3135 = vrot.slane %v3134, 4
  %v3136 = vmax.f32 %v3134, %v3135
  %v3137 = vrot.slane %v3136, 2
  %v3138 = vmax.f32 %v3136, %v3137
  %v3139 = vrot.slane %v3138, 1
  %v3140 = vmax.f32 %v3138, %v3139
  %v3141 = vsel %vm2797, %v2737, -inf
  %v3142 = vrot.slane %v3141, 4
  %v3143 = vmax.f32 %v3141, %v3142
  %v3144 = vrot.slane %v3143, 2
  %v3145 = vmax.f32 %v3143, %v3144
  %v3146 = vrot.slane %v3145, 1
  %v3147 = vmax.f32 %v3145, %v3146
  %v3148 = vsel %vm2797, %v2738, -inf
  %v3149 = vrot.slane %v3148, 4
  %v3150 = vmax.f32 %v3148, %v3149
  %v3151 = vrot.slane %v3150, 2
  %v3152 = vmax.f32 %v3150, %v3151
  %v3153 = vrot.slane %v3152, 1
  %v3154 = vmax.f32 %v3152, %v3153
  %v3155 = vsel %vm2797, %v2739, -inf
  %v3156 = vrot.slane %v3155, 4
  %v3157 = vmax.f32 %v3155, %v3156
  %v3158 = vrot.slane %v3157, 2
  %v3159 = vmax.f32 %v3157, %v3158
  %v3160 = vrot.slane %v3159, 1
  %v3161 = vmax.f32 %v3159, %v3160
  %v3162 = vsel %vm2797, %v2682, -inf
  %v3163 = vrot.slane %v3162, 4
  %v3164 = vmax.f32 %v3162, %v3163
  %v3165 = vrot.slane %v3164, 2
  %v3166 = vmax.f32 %v3164, %v3165
  %v3167 = vrot.slane %v3166, 1
  %v3168 = vmax.f32 %v3166, %v3167
  %v3169 = vsel %vm2797, %v2740, -inf
  %v3170 = vrot.slane %v3169, 4
  %v3171 = vmax.f32 %v3169, %v3170
  %v3172 = vrot.slane %v3171, 2
  %v3173 = vmax.f32 %v3171, %v3172
  %v3174 = vrot.slane %v3173, 1
  %v3175 = vmax.f32 %v3173, %v3174
  %v3176 = vsel %vm2797, %v2741, -inf
  %v3177 = vrot.slane %v3176, 4
  %v3178 = vmax.f32 %v3176, %v3177
  %v3179 = vrot.slane %v3178, 2
  %v3180 = vmax.f32 %v3178, %v3179
  %v3181 = vrot.slane %v3180, 1
  %v3182 = vmax.f32 %v3180, %v3181
  %v3183 = vsel %vm2797, %v2742, -inf
  %v3184 = vrot.slane %v3183, 4
  %v3185 = vmax.f32 %v3183, %v3184
  %v3186 = vrot.slane %v3185, 2
  %v3187 = vmax.f32 %v3185, %v3186
  %v3188 = vrot.slane %v3187, 1
  %v3189 = vmax.f32 %v3187, %v3188
  %v3190 = vsel %vm2797, %v2683, -inf
  %v3191 = vrot.slane %v3190, 4
  %v3192 = vmax.f32 %v3190, %v3191
  %v3193 = vrot.slane %v3192, 2
  %v3194 = vmax.f32 %v3192, %v3193
  %v3195 = vrot.slane %v3194, 1
  %v3196 = vmax.f32 %v3194, %v3195
  %v3197 = vsel %vm2797, %v2743, -inf
  %v3198 = vrot.slane %v3197, 4
  %v3199 = vmax.f32 %v3197, %v3198
  %v3200 = vrot.slane %v3199, 2
  %v3201 = vmax.f32 %v3199, %v3200
  %v3202 = vrot.slane %v3201, 1
  %v3203 = vmax.f32 %v3201, %v3202
  %v3204 = vsel %vm2797, %v2744, -inf
  %v3205 = vrot.slane %v3204, 4
  %v3206 = vmax.f32 %v3204, %v3205
  %v3207 = vrot.slane %v3206, 2
  %v3208 = vmax.f32 %v3206, %v3207
  %v3209 = vrot.slane %v3208, 1
  %v3210 = vmax.f32 %v3208, %v3209
  %v3211 = vsel %vm2797, %v2745, -inf
  %v3212 = vrot.slane %v3211, 4
  %v3213 = vmax.f32 %v3211, %v3212
  %v3214 = vrot.slane %v3213, 2
  %v3215 = vmax.f32 %v3213, %v3214
  %v3216 = vrot.slane %v3215, 1
  %v3217 = vmax.f32 %v3215, %v3216
  %v3218 = vsel %vm2797, %v2684, -inf
  %v3219 = vrot.slane %v3218, 4
  %v3220 = vmax.f32 %v3218, %v3219
  %v3221 = vrot.slane %v3220, 2
  %v3222 = vmax.f32 %v3220, %v3221
  %v3223 = vrot.slane %v3222, 1
  %v3224 = vmax.f32 %v3222, %v3223
  %v3225 = vsel %vm2797, %v2746, -inf
  %v3226 = vrot.slane %v3225, 4
  %v3227 = vmax.f32 %v3225, %v3226
  %v3228 = vrot.slane %v3227, 2
  %v3229 = vmax.f32 %v3227, %v3228
  %v3230 = vrot.slane %v3229, 1
  %v3231 = vmax.f32 %v3229, %v3230
  %v3232 = vsel %vm2797, %v2747, -inf
  %v3233 = vrot.slane %v3232, 4
  %v3234 = vmax.f32 %v3232, %v3233
  %v3235 = vrot.slane %v3234, 2
  %v3236 = vmax.f32 %v3234, %v3235
  %v3237 = vrot.slane %v3236, 1
  %v3238 = vmax.f32 %v3236, %v3237
  %v3239 = vsel %vm2797, %v2748, -inf
  %v3240 = vrot.slane %v3239, 4
  %v3241 = vmax.f32 %v3239, %v3240
  %v3242 = vrot.slane %v3241, 2
  %v3243 = vmax.f32 %v3241, %v3242
  %v3244 = vrot.slane %v3243, 1
  %v3245 = vmax.f32 %v3243, %v3244
  %vm3246 = vcmask 523264
  %v3247 = vsel %vm3246, %v2804, -inf
  %v3248 = vsel %vm3246, %v2832, -inf
  %v3249 = vmax.f32 %v3247, %v3248
  %v3250 = vsel %vm3246, %v2811, -inf
  %v3251 = vsel %vm3246, %v2839, -inf
  %v3252 = vmax.f32 %v3250, %v3251
  %v3253 = vsel %vm3246, %v2818, -inf
  %v3254 = vsel %vm3246, %v2846, -inf
  %v3255 = vmax.f32 %v3253, %v3254
  %v3256 = vsel %vm3246, %v2825, -inf
  %v3257 = vsel %vm3246, %v2853, -inf
  %v3258 = vmax.f32 %v3256, %v3257
  %v3259 = vsel %vm3246, %v2860, -inf
  %v3260 = vsel %vm3246, %v2888, -inf
  %v3261 = vmax.f32 %v3259, %v3260
  %v3262 = vsel %vm3246, %v2867, -inf
  %v3263 = vsel %vm3246, %v2895, -inf
  %v3264 = vmax.f32 %v3262, %v3263
  %v3265 = vsel %vm3246, %v2874, -inf
  %v3266 = vsel %vm3246, %v2902, -inf
  %v3267 = vmax.f32 %v3265, %v3266
  %v3268 = vsel %vm3246, %v2881, -inf
  %v3269 = vsel %vm3246, %v2909, -inf
  %v3270 = vmax.f32 %v3268, %v3269
  %v3271 = vsel %vm3246, %v2916, -inf
  %v3272 = vsel %vm3246, %v2944, -inf
  %v3273 = vmax.f32 %v3271, %v3272
  %v3274 = vsel %vm3246, %v2923, -inf
  %v3275 = vsel %vm3246, %v2951, -inf
  %v3276 = vmax.f32 %v3274, %v3275
  %v3277 = vsel %vm3246, %v2930, -inf
  %v3278 = vsel %vm3246, %v2958, -inf
  %v3279 = vmax.f32 %v3277, %v3278
  %v3280 = vsel %vm3246, %v2937, -inf
  %v3281 = vsel %vm3246, %v2965, -inf
  %v3282 = vmax.f32 %v3280, %v3281
  %v3283 = vsel %vm3246, %v2972, -inf
  %v3284 = vsel %vm3246, %v3000, -inf
  %v3285 = vmax.f32 %v3283, %v3284
  %v3286 = vsel %vm3246, %v2979, -inf
  %v3287 = vsel %vm3246, %v3007, -inf
  %v3288 = vmax.f32 %v3286, %v3287
  %v3289 = vsel %vm3246, %v2986, -inf
  %v3290 = vsel %vm3246, %v3014, -inf
  %v3291 = vmax.f32 %v3289, %v3290
  %v3292 = vsel %vm3246, %v2993, -inf
  %v3293 = vsel %vm3246, %v3021, -inf
  %v3294 = vmax.f32 %v3292, %v3293
  %v3295 = vsel %vm3246, %v3028, -inf
  %v3296 = vsel %vm3246, %v3056, -inf
  %v3297 = vmax.f32 %v3295, %v3296
  %v3298 = vsel %vm3246, %v3035, -inf
  %v3299 = vsel %vm3246, %v3063, -inf
  %v3300 = vmax.f32 %v3298, %v3299
  %v3301 = vsel %vm3246, %v3042, -inf
  %v3302 = vsel %vm3246, %v3070, -inf
  %v3303 = vmax.f32 %v3301, %v3302
  %v3304 = vsel %vm3246, %v3049, -inf
  %v3305 = vsel %vm3246, %v3077, -inf
  %v3306 = vmax.f32 %v3304, %v3305
  %v3307 = vsel %vm3246, %v3084, -inf
  %v3308 = vsel %vm3246, %v3112, -inf
  %v3309 = vmax.f32 %v3307, %v3308
  %v3310 = vsel %vm3246, %v3091, -inf
  %v3311 = vsel %vm3246, %v3119, -inf
  %v3312 = vmax.f32 %v3310, %v3311
  %v3313 = vsel %vm3246, %v3098, -inf
  %v3314 = vsel %vm3246, %v3126, -inf
  %v3315 = vmax.f32 %v3313, %v3314
  %v3316 = vsel %vm3246, %v3105, -inf
  %v3317 = vsel %vm3246, %v3133, -inf
  %v3318 = vmax.f32 %v3316, %v3317
  %v3319 = vsel %vm3246, %v3140, -inf
  %v3320 = vsel %vm3246, %v3168, -inf
  %v3321 = vmax.f32 %v3319, %v3320
  %v3322 = vsel %vm3246, %v3147, -inf
  %v3323 = vsel %vm3246, %v3175, -inf
  %v3324 = vmax.f32 %v3322, %v3323
  %v3325 = vsel %vm3246, %v3154, -inf
  %v3326 = vsel %vm3246, %v3182, -inf
  %v3327 = vmax.f32 %v3325, %v3326
  %v3328 = vsel %vm3246, %v3161, -inf
  %v3329 = vsel %vm3246, %v3189, -inf
  %v3330 = vmax.f32 %v3328, %v3329
  %v3331 = vsel %vm3246, %v3196, -inf
  %v3332 = vsel %vm3246, %v3224, -inf
  %v3333 = vmax.f32 %v3331, %v3332
  %v3334 = vsel %vm3246, %v3203, -inf
  %v3335 = vsel %vm3246, %v3231, -inf
  %v3336 = vmax.f32 %v3334, %v3335
  %v3337 = vsel %vm3246, %v3210, -inf
  %v3338 = vsel %vm3246, %v3238, -inf
  %v3339 = vmax.f32 %v3337, %v3338
  %v3340 = vsel %vm3246, %v3217, -inf
  %v3341 = vsel %vm3246, %v3245, -inf
  %v3342 = vmax.f32 %v3340, %v3341
  %v3343 = vpack.c.bf16 %v3249, %v3249
  %v3344 = vpack.c.bf16 %v3252, %v3252
  %v3345 = vpack.c.bf16 %v3255, %v3255
  %v3346 = vpack.c.bf16 %v3258, %v3258
  %v3347 = vpack.c.bf16 %v3261, %v3261
  %v3348 = vpack.c.bf16 %v3264, %v3264
  %v3349 = vpack.c.bf16 %v3267, %v3267
  %v3350 = vpack.c.bf16 %v3270, %v3270
  %v3351 = vpack.c.bf16 %v3273, %v3273
  %v3352 = vpack.c.bf16 %v3276, %v3276
  %v3353 = vpack.c.bf16 %v3279, %v3279
  %v3354 = vpack.c.bf16 %v3282, %v3282
  %v3355 = vpack.c.bf16 %v3285, %v3285
  %v3356 = vpack.c.bf16 %v3288, %v3288
  %v3357 = vpack.c.bf16 %v3291, %v3291
  %v3358 = vpack.c.bf16 %v3294, %v3294
  %v3359 = vpack.c.bf16 %v3297, %v3297
  %v3360 = vpack.c.bf16 %v3300, %v3300
  %v3361 = vpack.c.bf16 %v3303, %v3303
  %v3362 = vpack.c.bf16 %v3306, %v3306
  %v3363 = vpack.c.bf16 %v3309, %v3309
  %v3364 = vpack.c.bf16 %v3312, %v3312
  %v3365 = vpack.c.bf16 %v3315, %v3315
  %v3366 = vpack.c.bf16 %v3318, %v3318
  %v3367 = vpack.c.bf16 %v3321, %v3321
  %v3368 = vpack.c.bf16 %v3324, %v3324
  %v3369 = vpack.c.bf16 %v3327, %v3327
  %v3370 = vpack.c.bf16 %v3330, %v3330
  %v3371 = vpack.c.bf16 %v3333, %v3333
  %v3372 = vpack.c.bf16 %v3336, %v3336
  %v3373 = vpack.c.bf16 %v3339, %v3339
  %v3374 = vpack.c.bf16 %v3342, %v3342
  %v3407 = vrot.slane %v3343, 2
  %v3408 = vrot.slane %v3344, 2
  %v3409 = vrot.slane %v3345, 2
  %v3410 = vrot.slane %v3346, 2
  %v3411 = vrot.slane %v3347, 2
  %v3412 = vrot.slane %v3348, 2
  %v3413 = vrot.slane %v3349, 2
  %v3414 = vrot.slane %v3350, 2
  %v3415 = vrot.slane %v3351, 2
  %v3416 = vrot.slane %v3352, 2
  %v3417 = vrot.slane %v3353, 2
  %v3418 = vrot.slane %v3354, 2
  %v3419 = vrot.slane %v3355, 2
  %v3420 = vrot.slane %v3356, 2
  %v3421 = vrot.slane %v3357, 2
  %v3422 = vrot.slane %v3358, 2
  %v3423 = vrot.slane %v3359, 2
  %v3424 = vrot.slane %v3360, 2
  %v3425 = vrot.slane %v3361, 2
  %v3426 = vrot.slane %v3362, 2
  %v3427 = vrot.slane %v3363, 2
  %v3428 = vrot.slane %v3364, 2
  %v3429 = vrot.slane %v3365, 2
  %v3430 = vrot.slane %v3366, 2
  %v3431 = vrot.slane %v3367, 2
  %v3432 = vrot.slane %v3368, 2
  %v3433 = vrot.slane %v3369, 2
  %v3434 = vrot.slane %v3370, 2
  %v3435 = vrot.slane %v3371, 2
  %v3436 = vrot.slane %v3372, 2
  %v3437 = vrot.slane %v3373, 2
  %v3438 = vrot.slane %v3374, 2
  %vm3439 = vcmask 1041408
  %v3442 = vsel %vm3439, %v3343, %v3407
  %v3445 = vsel %vm3439, %v3344, %v3408
  %v3448 = vsel %vm3439, %v3345, %v3409
  %v3451 = vsel %vm3439, %v3346, %v3410
  %v3454 = vsel %vm3439, %v3347, %v3411
  %v3457 = vsel %vm3439, %v3348, %v3412
  %v3460 = vsel %vm3439, %v3349, %v3413
  %v3463 = vsel %vm3439, %v3350, %v3414
  %v3466 = vsel %vm3439, %v3351, %v3415
  %v3469 = vsel %vm3439, %v3352, %v3416
  %v3472 = vsel %vm3439, %v3353, %v3417
  %v3475 = vsel %vm3439, %v3354, %v3418
  %v3478 = vsel %vm3439, %v3355, %v3419
  %v3481 = vsel %vm3439, %v3356, %v3420
  %v3484 = vsel %vm3439, %v3357, %v3421
  %v3487 = vsel %vm3439, %v3358, %v3422
  %v3490 = vsel %vm3439, %v3359, %v3423
  %v3493 = vsel %vm3439, %v3360, %v3424
  %v3496 = vsel %vm3439, %v3361, %v3425
  %v3499 = vsel %vm3439, %v3362, %v3426
  %v3502 = vsel %vm3439, %v3363, %v3427
  %v3505 = vsel %vm3439, %v3364, %v3428
  %v3508 = vsel %vm3439, %v3365, %v3429
  %v3511 = vsel %vm3439, %v3366, %v3430
  %v3514 = vsel %vm3439, %v3367, %v3431
  %v3517 = vsel %vm3439, %v3368, %v3432
  %v3520 = vsel %vm3439, %v3369, %v3433
  %v3523 = vsel %vm3439, %v3370, %v3434
  %v3526 = vsel %vm3439, %v3371, %v3435
  %v3529 = vsel %vm3439, %v3372, %v3436
  %v3532 = vsel %vm3439, %v3373, %v3437
  %v3535 = vsel %vm3439, %v3374, %v3438
  %3536 = vst [vmem:[#allocation1] ss:$2 sm:$0xff] %v3442
  %v3537 = vld.sshfl [vmem:[#allocation1] sm:$0xff pattern:$0x75643120]
  %s3539 = scalar_lea.vmem [#allocation1], 16
  %3540 = vst [vmem:[%s3539] ss:$2 sm:$0xff] %v3445
  %v3541 = vld.sshfl [vmem:[#allocation1 + $0x10] sm:$0xff pattern:$0x75643120]
  %s3543 = scalar_lea.vmem [#allocation1], 32
  %3544 = vst [vmem:[%s3543] ss:$2 sm:$0xff] %v3448
  %v3545 = vld.sshfl [vmem:[#allocation1 + $0x20] sm:$0xff pattern:$0x75643120]
  %s3547 = scalar_lea.vmem [#allocation1], 48
  %3548 = vst [vmem:[%s3547] ss:$2 sm:$0xff] %v3451
  %v3549 = vld.sshfl [vmem:[#allocation1 + $0x30] sm:$0xff pattern:$0x75643120]
  %3551 = vst [vmem:[#allocation1] ss:$2 sm:$0xff] %v3454
  %v3552 = vld.sshfl [vmem:[#allocation1] sm:$0xff pattern:$0x75643120]
  %3554 = vst [vmem:[%s3539] ss:$2 sm:$0xff] %v3457
  %v3555 = vld.sshfl [vmem:[#allocation1 + $0x10] sm:$0xff pattern:$0x75643120]
  %3557 = vst [vmem:[%s3543] ss:$2 sm:$0xff] %v3460
  %v3558 = vld.sshfl [vmem:[#allocation1 + $0x20] sm:$0xff pattern:$0x75643120]
  %3560 = vst [vmem:[%s3547] ss:$2 sm:$0xff] %v3463
  %v3561 = vld.sshfl [vmem:[#allocation1 + $0x30] sm:$0xff pattern:$0x75643120]
  %3563 = vst [vmem:[#allocation1] ss:$2 sm:$0xff] %v3466
  %v3564 = vld.sshfl [vmem:[#allocation1] sm:$0xff pattern:$0x75643120]
  %3566 = vst [vmem:[%s3539] ss:$2 sm:$0xff] %v3469
  %v3567 = vld.sshfl [vmem:[#allocation1 + $0x10] sm:$0xff pattern:$0x75643120]
  %3569 = vst [vmem:[%s3543] ss:$2 sm:$0xff] %v3472
  %v3570 = vld.sshfl [vmem:[#allocation1 + $0x20] sm:$0xff pattern:$0x75643120]
  %3572 = vst [vmem:[%s3547] ss:$2 sm:$0xff] %v3475
  %v3573 = vld.sshfl [vmem:[#allocation1 + $0x30] sm:$0xff pattern:$0x75643120]
  %3575 = vst [vmem:[#allocation1] ss:$2 sm:$0xff] %v3478
  %v3576 = vld.sshfl [vmem:[#allocation1] sm:$0xff pattern:$0x75643120]
  %3578 = vst [vmem:[%s3539] ss:$2 sm:$0xff] %v3481
  %v3579 = vld.sshfl [vmem:[#allocation1 + $0x10] sm:$0xff pattern:$0x75643120]
  %3581 = vst [vmem:[%s3543] ss:$2 sm:$0xff] %v3484
  %v3582 = vld.sshfl [vmem:[#allocation1 + $0x20] sm:$0xff pattern:$0x75643120]
  %3584 = vst [vmem:[%s3547] ss:$2 sm:$0xff] %v3487
  %v3585 = vld.sshfl [vmem:[#allocation1 + $0x30] sm:$0xff pattern:$0x75643120]
  %3587 = vst [vmem:[#allocation1] ss:$2 sm:$0xff] %v3490
  %v3588 = vld.sshfl [vmem:[#allocation1] sm:$0xff pattern:$0x75643120]
  %3590 = vst [vmem:[%s3539] ss:$2 sm:$0xff] %v3493
  %v3591 = vld.sshfl [vmem:[#allocation1 + $0x10] sm:$0xff pattern:$0x75643120]
  %3593 = vst [vmem:[%s3543] ss:$2 sm:$0xff] %v3496
  %v3594 = vld.sshfl [vmem:[#allocation1 + $0x20] sm:$0xff pattern:$0x75643120]
  %3596 = vst [vmem:[%s3547] ss:$2 sm:$0xff] %v3499
  %v3597 = vld.sshfl [vmem:[#allocation1 + $0x30] sm:$0xff pattern:$0x75643120]
  %3599 = vst [vmem:[#allocation1] ss:$2 sm:$0xff] %v3502
  %v3600 = vld.sshfl [vmem:[#allocation1] sm:$0xff pattern:$0x75643120]
  %3602 = vst [vmem:[%s3539] ss:$2 sm:$0xff] %v3505
  %v3603 = vld.sshfl [vmem:[#allocation1 + $0x10] sm:$0xff pattern:$0x75643120]
  %3605 = vst [vmem:[%s3543] ss:$2 sm:$0xff] %v3508
  %v3606 = vld.sshfl [vmem:[#allocation1 + $0x20] sm:$0xff pattern:$0x75643120]
  %3608 = vst [vmem:[%s3547] ss:$2 sm:$0xff] %v3511
  %v3609 = vld.sshfl [vmem:[#allocation1 + $0x30] sm:$0xff pattern:$0x75643120]
  %3611 = vst [vmem:[#allocation1] ss:$2 sm:$0xff] %v3514
  %v3612 = vld.sshfl [vmem:[#allocation1] sm:$0xff pattern:$0x75643120]
  %3614 = vst [vmem:[%s3539] ss:$2 sm:$0xff] %v3517
  %v3615 = vld.sshfl [vmem:[#allocation1 + $0x10] sm:$0xff pattern:$0x75643120]
  %3617 = vst [vmem:[%s3543] ss:$2 sm:$0xff] %v3520
  %v3618 = vld.sshfl [vmem:[#allocation1 + $0x20] sm:$0xff pattern:$0x75643120]
  %3620 = vst [vmem:[%s3547] ss:$2 sm:$0xff] %v3523
  %v3621 = vld.sshfl [vmem:[#allocation1 + $0x30] sm:$0xff pattern:$0x75643120]
  %3623 = vst [vmem:[#allocation1] ss:$2 sm:$0xff] %v3526
  %v3624 = vld.sshfl [vmem:[#allocation1] sm:$0xff pattern:$0x75643120]
  %3626 = vst [vmem:[%s3539] ss:$2 sm:$0xff] %v3529
  %v3627 = vld.sshfl [vmem:[#allocation1 + $0x10] sm:$0xff pattern:$0x75643120]
  %3629 = vst [vmem:[%s3543] ss:$2 sm:$0xff] %v3532
  %v3630 = vld.sshfl [vmem:[#allocation1 + $0x20] sm:$0xff pattern:$0x75643120]
  %3632 = vst [vmem:[%s3547] ss:$2 sm:$0xff] %v3535
  %v3633 = vld.sshfl [vmem:[#allocation1 + $0x30] sm:$0xff pattern:$0x75643120]
  %v3635 = vunpack.c.l.b16 %v3537
  %v3636 = vunpack.c.l.b16 %v3541
  %v3637 = vunpack.c.l.b16 %v3545
  %v3638 = vunpack.c.l.b16 %v3549
  %v3639 = vunpack.c.l.b16 %v3552
  %v3640 = vunpack.c.l.b16 %v3555
  %v3641 = vunpack.c.l.b16 %v3558
  %v3642 = vunpack.c.l.b16 %v3561
  %v3643 = vunpack.c.l.b16 %v3564
  %v3644 = vunpack.c.l.b16 %v3567
  %v3645 = vunpack.c.l.b16 %v3570
  %v3646 = vunpack.c.l.b16 %v3573
  %v3647 = vunpack.c.l.b16 %v3576
  %v3648 = vunpack.c.l.b16 %v3579
  %v3649 = vunpack.c.l.b16 %v3582
  %v3650 = vunpack.c.l.b16 %v3585
  %v3651 = vunpack.c.l.b16 %v3588
  %v3652 = vunpack.c.l.b16 %v3591
  %v3653 = vunpack.c.l.b16 %v3594
  %v3654 = vunpack.c.l.b16 %v3597
  %v3655 = vunpack.c.l.b16 %v3600
  %v3656 = vunpack.c.l.b16 %v3603
  %v3657 = vunpack.c.l.b16 %v3606
  %v3658 = vunpack.c.l.b16 %v3609
  %v3659 = vunpack.c.l.b16 %v3612
  %v3660 = vunpack.c.l.b16 %v3615
  %v3661 = vunpack.c.l.b16 %v3618
  %v3662 = vunpack.c.l.b16 %v3621
  %v3663 = vunpack.c.l.b16 %v3624
  %v3664 = vunpack.c.l.b16 %v3627
  %v3665 = vunpack.c.l.b16 %v3630
  %v3666 = vunpack.c.l.b16 %v3633
  %v3667 = vrot.slane %v3636, 7
  %vm3668 = vcmask 1041409
  %v3669 = vsel %vm3668, %v3667, %v3635
  %v3670 = vrot.slane %v3637, 6
  %vm3671 = vcmask 1042434
  %v3672 = vsel %vm3671, %v3670, %v3669
  %v3673 = vrot.slane %v3638, 5
  %vm3674 = vcmask 1043459
  %v3675 = vsel %vm3674, %v3673, %v3672
  %v3676 = vrot.slane %v3640, 7
  %v3677 = vsel %vm3668, %v3676, %v3639
  %v3678 = vrot.slane %v3641, 6
  %v3679 = vsel %vm3671, %v3678, %v3677
  %v3680 = vrot.slane %v3642, 5
  %v3681 = vsel %vm3674, %v3680, %v3679
  %v3682 = vrot.slane %v3644, 7
  %v3683 = vsel %vm3668, %v3682, %v3643
  %v3684 = vrot.slane %v3645, 6
  %v3685 = vsel %vm3671, %v3684, %v3683
  %v3686 = vrot.slane %v3646, 5
  %v3687 = vsel %vm3674, %v3686, %v3685
  %v3688 = vrot.slane %v3648, 7
  %v3689 = vsel %vm3668, %v3688, %v3647
  %v3690 = vrot.slane %v3649, 6
  %v3691 = vsel %vm3671, %v3690, %v3689
  %v3692 = vrot.slane %v3650, 5
  %v3693 = vsel %vm3674, %v3692, %v3691
  %v3694 = vrot.slane %v3652, 7
  %v3695 = vsel %vm3668, %v3694, %v3651
  %v3696 = vrot.slane %v3653, 6
  %v3697 = vsel %vm3671, %v3696, %v3695
  %v3698 = vrot.slane %v3654, 5
  %v3699 = vsel %vm3674, %v3698, %v3697
  %v3700 = vrot.slane %v3656, 7
  %v3701 = vsel %vm3668, %v3700, %v3655
  %v3702 = vrot.slane %v3657, 6
  %v3703 = vsel %vm3671, %v3702, %v3701
  %v3704 = vrot.slane %v3658, 5
  %v3705 = vsel %vm3674, %v3704, %v3703
  %v3706 = vrot.slane %v3660, 7
  %v3707 = vsel %vm3668, %v3706, %v3659
  %v3708 = vrot.slane %v3661, 6
  %v3709 = vsel %vm3671, %v3708, %v3707
  %v3710 = vrot.slane %v3662, 5
  %v3711 = vsel %vm3674, %v3710, %v3709
  %v3712 = vrot.slane %v3664, 7
  %v3713 = vsel %vm3668, %v3712, %v3663
  %v3714 = vrot.slane %v3665, 6
  %v3715 = vsel %vm3671, %v3714, %v3713
  %v3716 = vrot.slane %v3666, 5
  %v3717 = vsel %vm3674, %v3716, %v3715
  %v3718 = vpack.c.b16 %v3675, %v3675
  %v3719 = vpack.c.b16 %v3681, %v3681
  %v3720 = vpack.c.b16 %v3687, %v3687
  %v3721 = vpack.c.b16 %v3693, %v3693
  %v3722 = vpack.c.b16 %v3699, %v3699
  %v3723 = vpack.c.b16 %v3705, %v3705
  %v3724 = vpack.c.b16 %v3711, %v3711
  %v3725 = vpack.c.b16 %v3717, %v3717
  %v3726 = vrot.slane %v3718, 2
  %v3727 = vrot.slane %v3719, 2
  %v3728 = vrot.slane %v3720, 2
  %v3729 = vrot.slane %v3721, 2
  %v3730 = vrot.slane %v3722, 2
  %v3731 = vrot.slane %v3723, 2
  %v3732 = vrot.slane %v3724, 2
  %v3733 = vrot.slane %v3725, 2
  %v3736 = vsel %vm3439, %v3718, %v3726
  %v3739 = vsel %vm3439, %v3719, %v3727
  %v3742 = vsel %vm3439, %v3720, %v3728
  %v3745 = vsel %vm3439, %v3721, %v3729
  %v3748 = vsel %vm3439, %v3722, %v3730
  %v3751 = vsel %vm3439, %v3723, %v3731
  %v3754 = vsel %vm3439, %v3724, %v3732
  %v3757 = vsel %vm3439, %v3725, %v3733
  %3766 = vst.msk [vmem:[%s3] sm:$0x3] %vm2797, %v3736
  %3767 = vst.msk [vmem:[%s3 + $0x2] sm:$0x3] %vm2797, %v3739
  %3768 = vst.msk [vmem:[%s3 + $0x4] sm:$0x3] %vm2797, %v3742
  %3769 = vst.msk [vmem:[%s3 + $0x6] sm:$0x3] %vm2797, %v3745
  %3770 = vst.msk [vmem:[%s3 + $0x8] sm:$0x3] %vm2797, %v3748
  %3771 = vst.msk [vmem:[%s3 + $0xa] sm:$0x3] %vm2797, %v3751
  %3772 = vst.msk [vmem:[%s3 + $0xc] sm:$0x3] %vm2797, %v3754
  %3773 = vst.msk [vmem:[%s3 + $0xe] sm:$0x3] %vm2797, %v3757
  // Predicated region
  $region14: #{bird_cnn_forward.5} parent=0 // pred_check
    _
  $region15: #{bird_cnn_forward.5} parent=0 // pred_check_branch
    %3775 = sbr.rel (0) target = $region17
  $region16: #{bird_cnn_forward.5} parent=0 // pred_region
    _
  $region17: #{bird_cnn_forward.5} parent=0 // pred_fallthru
    _
  // Predicated region
  $region18: #{bird_cnn_forward.5} parent=0 // pred_check
    _
  $region19: #{bird_cnn_forward.5} parent=0 // pred_check_branch
    %3777 = sbr.rel (0) target = $region21
  $region20: #{bird_cnn_forward.5} parent=0 // pred_region
    _
  $region21: #{bird_cnn_forward.5} parent=0 // pred_fallthru
    _

</llo_original>
